<compile_context>
chip_gen: v7x
topology: tpu7x:2x2x1
jax: 0.10.0
libtpu: 0.0.40
codegen_flags: <defaults>
</compile_context>

<pallas_src>
import functools

import jax
import jax.numpy as jnp
from jax.experimental import pallas as pl
from jax.experimental.pallas import tpu as pltpu

_LANE = 128


def _round_up(c, m=_LANE):
    return ((c + m - 1) // m) * m


# ----------------------------------------------------------------------------
# Fused Pallas kernel: concat -> 3x (3x3 conv + bias + ReLU), one batch element
# ----------------------------------------------------------------------------
def _fused_upconv_kernel(up_ref, br_ref, w1_ref, b1_ref, w2_ref, b2_ref,
                         w3_ref, b3_ref, o_ref, xpad_ref, *,
                         p, h0, w0, c_up, c_br,
                         cin1_p, cout1_p, cout2_p, cout3_p, c_out):
    # xpad_ref is a spatially padded, lane-padded (channels -> multiple of 128)
    # activation buffer reused by every layer; its spatial halo is kept at
    # zero so the 3x3 taps implement `padding=p` zero padding.
    xpad_ref[...] = jnp.zeros_like(xpad_ref)

    # Fused channel concat: write `up` and `bridge` into adjacent channel
    # ranges of the padded buffer (== cat([up, bridge], channel)).
    xpad_ref[p:p + h0, p:p + w0, 0:c_up] = up_ref[0]
    xpad_ref[p:p + h0, p:p + w0, c_up:c_up + c_br] = br_ref[0]

    def conv3x3_bias_relu(h_in, w_in, cin_p, w_ref, b_ref, cout_p):
        """3x3 conv over xpad_ref[:h_in+2p, :w_in+2p, :cin_p] + bias + ReLU."""
        h_out, w_out = h_in + 2 * p - 2, w_in + 2 * p - 2
        acc = jnp.zeros((h_out * w_out, cout_p), jnp.float32)
        # 9 lane-dense (H*W, Cin_p) x (Cin_p, Cout_p) MXU matmuls (stencil taps).
        for dy in range(3):
            for dx in range(3):
                patch = xpad_ref[dy:dy + h_out, dx:dx + w_out, 0:cin_p]
                acc = acc + jnp.dot(patch.reshape(h_out * w_out, cin_p),
                                    w_ref[dy, dx],
                                    preferred_element_type=jnp.float32)
        acc = jnp.maximum(acc + b_ref[0], 0.0)  # bias + ReLU in f32
        return acc, h_out, w_out

    # Layer 1 (input = concat[up, bridge]); its output is written back into the
    # interior of xpad_ref so it becomes layer 2's padded input (stays in VMEM).
    a1, h1, w1 = conv3x3_bias_relu(h0, w0, cin1_p, w1_ref, b1_ref, cout1_p)
    xpad_ref[p:p + h1, p:p + w1, 0:cout1_p] = a1.reshape(h1, w1, cout1_p)

    # Layer 2.
    a2, h2, w2 = conv3x3_bias_relu(h1, w1, cout1_p, w2_ref, b2_ref, cout2_p)
    xpad_ref[p:p + h2, p:p + w2, 0:cout2_p] = a2.reshape(h2, w2, cout2_p)

    # Layer 3: store only the real output channels straight to HBM.
    a3, h3, w3 = conv3x3_bias_relu(h2, w2, cout2_p, w3_ref, b3_ref, cout3_p)
    o_ref[0] = a3[:, 0:c_out].reshape(h3, w3, c_out).astype(o_ref.dtype)


# ----------------------------------------------------------------------------
# Glue: bilinear upsample (scale=2, align_corners=True), matching
# torch.nn.functional.interpolate(mode='bilinear', align_corners=True)
# ----------------------------------------------------------------------------
def upsample_bilinear_x2_align_corners(x_nhwc):
    # TODO(synk): kept as one cheap plain-JAX elementwise pass; folding it into
    # the Pallas kernel (interpolation-matrix matmuls) would save one HBM
    # round trip of `up` but is not done here.
    n, h, w, c = x_nhwc.shape
    ho, wo = 2 * h, 2 * w

    def coords(in_size, out_size):
        if in_size == 1 or out_size == 1:
            z = jnp.zeros((out_size,), jnp.float32)
            zi = jnp.zeros((out_size,), jnp.int32)
            return z, zi, zi
        src = jnp.arange(out_size, dtype=jnp.float32) * (in_size - 1) / (out_size - 1)
        i0 = jnp.floor(src).astype(jnp.int32)
        i1 = jnp.minimum(i0 + 1, in_size - 1)
        return src - i0.astype(jnp.float32), i0, i1

    wh, h0, h1 = coords(h, ho)
    ww, w0, w1 = coords(w, wo)
    xh = (x_nhwc[:, h0] * (1.0 - wh)[None, :, None, None]
          + x_nhwc[:, h1] * wh[None, :, None, None])
    return (xh[:, :, w0] * (1.0 - ww)[None, None, :, None]
            + xh[:, :, w1] * ww[None, None, :, None])


# ----------------------------------------------------------------------------
# UpConvBlock: parameters + forward
# ----------------------------------------------------------------------------
def init_upconv_params(key, input_dim, output_dim):
    """Kaiming-normal (fan_in, relu) weights + tiny-normal biases.

    Weight layout is (kh, kw, Cin, Cout) for NHWC kernels
    (PyTorch Conv2d weight (Cout, Cin, kh, kw) == w.transpose(2, 3, 1, 0)).
    """
    params = []
    dims = [(input_dim, output_dim), (output_dim, output_dim), (output_dim, output_dim)]
    for i, (cin, cout) in enumerate(dims):
        kw_key, kb_key = jax.random.split(jax.random.fold_in(key, i))
        fan_in = cin * 3 * 3
        std = (2.0 / fan_in) ** 0.5  # kaiming_normal_, mode='fan_in', relu
        w = std * jax.random.normal(kw_key, (3, 3, cin, cout), jnp.float32)
        # TODO(synk): torch truncated_normal_ approximated with a clipped normal.
        b = jnp.clip(jax.random.normal(kb_key, (cout,), jnp.float32), -2.0, 2.0) * 0.001
        params.append((w, b))
    return params


def upconv_block_forward(params, x_nhwc, bridge_nhwc, padding=1):
    """UpConvBlock.forward: upsample(x), concat with bridge, 3x (conv3x3+ReLU)."""
    p = int(padding)
    up = upsample_bilinear_x2_align_corners(x_nhwc)
    # PyTorch asserts the widths match; we check both spatial dims (needed for concat).
    assert up.shape[1] == bridge_nhwc.shape[1] and up.shape[2] == bridge_nhwc.shape[2], \
        (up.shape, bridge_nhwc.shape)
    assert up.shape[0] == bridge_nhwc.shape[0]

    (w1, b1), (w2, b2), (w3, b3) = params
    n, h0, w0, c_up = up.shape
    c_br = bridge_nhwc.shape[3]
    c_in1 = c_up + c_br
    assert w1.shape[0] == 3 and w1.shape[1] == 3 and w1.shape[2] == c_in1
    c_mid1, c_mid2, c_out = w1.shape[3], w2.shape[3], w3.shape[3]
    assert w2.shape[2] == c_mid1 and w3.shape[2] == c_mid2

    # Per-layer output spatial sizes (stride 1, kernel 3, zero padding p).
    h1, w1o = h0 + 2 * p - 2, w0 + 2 * p - 2
    h2, w2o = h1 + 2 * p - 2, w1o + 2 * p - 2
    h3, w3o = h2 + 2 * p - 2, w2o + 2 * p - 2
    assert h3 > 0 and w3o > 0

    # Lane-dense (128-padded) channel counts used inside the kernel.
    cin1_p = _round_up(c_in1)
    cout1_p = _round_up(c_mid1)
    cout2_p = _round_up(c_mid2)
    cout3_p = _round_up(c_out)

    # Zero-pad weights / biases once (tiny tensors) so all matmuls are lane-dense.
    w1p = jnp.pad(w1, ((0, 0), (0, 0), (0, cin1_p - c_in1), (0, cout1_p - c_mid1)))
    w2p = jnp.pad(w2, ((0, 0), (0, 0), (0, cout1_p - c_mid1), (0, cout2_p - c_mid2)))
    w3p = jnp.pad(w3, ((0, 0), (0, 0), (0, cout2_p - c_mid2), (0, cout3_p - c_out)))
    b1p = jnp.pad(b1, (0, cout1_p - c_mid1)).reshape(1, cout1_p)
    b2p = jnp.pad(b2, (0, cout2_p - c_mid2)).reshape(1, cout2_p)
    b3p = jnp.pad(b3, (0, cout3_p - c_out)).reshape(1, cout3_p)

    # Shared padded activation scratch, sized for the largest layer input.
    # TODO(synk): for large spatial sizes (v7x: 64 MiB VMEM) add a row-block
    # grid axis with a 3-pixel halo instead of whole-image-per-batch blocks.
    h_pad = max(h0, h1, h2) + 2 * p
    w_pad = max(w0, w1o, w2o) + 2 * p
    c_pad = max(cin1_p, cout1_p, cout2_p)

    kernel = functools.partial(
        _fused_upconv_kernel, p=p, h0=h0, w0=w0, c_up=c_up, c_br=c_br,
        cin1_p=cin1_p, cout1_p=cout1_p, cout2_p=cout2_p, cout3_p=cout3_p,
        c_out=c_out)

    flops = 2 * n * 9 * (h1 * w1o * c_in1 * c_mid1
                         + h2 * w2o * c_mid1 * c_mid2
                         + h3 * w3o * c_mid2 * c_out)
    bytes_accessed = 4 * (up.size + bridge_nhwc.size + w1p.size + w2p.size
                          + w3p.size + n * h3 * w3o * c_out)

    return pl.pallas_call(
        kernel,
        out_shape=jax.ShapeDtypeStruct((n, h3, w3o, c_out), jnp.float32),
        grid=(n,),
        in_specs=[
            pl.BlockSpec((1, h0, w0, c_up), lambda i: (i, 0, 0, 0)),
            pl.BlockSpec((1, h0, w0, c_br), lambda i: (i, 0, 0, 0)),
            pl.BlockSpec((3, 3, cin1_p, cout1_p), lambda i: (0, 0, 0, 0)),
            pl.BlockSpec((1, cout1_p), lambda i: (0, 0)),
            pl.BlockSpec((3, 3, cout1_p, cout2_p), lambda i: (0, 0, 0, 0)),
            pl.BlockSpec((1, cout2_p), lambda i: (0, 0)),
            pl.BlockSpec((3, 3, cout2_p, cout3_p), lambda i: (0, 0, 0, 0)),
            pl.BlockSpec((1, cout3_p), lambda i: (0, 0)),
        ],
        out_specs=pl.BlockSpec((1, h3, w3o, c_out), lambda i: (i, 0, 0, 0)),
        scratch_shapes=[pltpu.VMEM((h_pad, w_pad, c_pad), jnp.float32)],
        compiler_params=pltpu.CompilerParams(
            dimension_semantics=("parallel",),
            vmem_limit_bytes=32 * 1024 * 1024),
        cost_estimate=pl.CostEstimate(flops=flops, transcendentals=0,
                                      bytes_accessed=bytes_accessed),
    )(up, bridge_nhwc, w1p, b1p, w2p, b2p, w3p, b3p)


# ----------------------------------------------------------------------------
# Pure-JAX reference (for a numerical cross-check in __main__)
# ----------------------------------------------------------------------------
def upconv_block_reference(params, x_nhwc, bridge_nhwc, padding=1):
    p = int(padding)
    out = jnp.concatenate(
        [upsample_bilinear_x2_align_corners(x_nhwc), bridge_nhwc], axis=-1)
    for (w, b) in params:
        out = jax.lax.conv_general_dilated(
            out, w, window_strides=(1, 1), padding=[(p, p), (p, p)],
            dimension_numbers=("NHWC", "HWIO", "NHWC"),
            precision=jax.lax.Precision.HIGHEST)
        out = jnp.maximum(out + b, 0.0)
    return out


if __name__ == "__main__":
    key = jax.random.PRNGKey(0)
    k_x, k_bridge, k_params = jax.random.split(key, 3)

    # Small shapes; NCHW equivalents: x [2, 4, 8, 8], bridge [2, 4, 16, 16].
    n, c_x, h, w = 2, 4, 8, 8
    c_b = 4
    x_nhwc = jax.random.normal(k_x, (n, h, w, c_x), jnp.float32)
    bridge_nhwc = jax.random.normal(k_bridge, (n, 2 * h, 2 * w, c_b), jnp.float32)

    input_dim = c_x + c_b      # channels after concat
    output_dim = 4
    padding = 1                # int(padding) in the torch module

    params = init_upconv_params(k_params, input_dim, output_dim)

    fwd = jax.jit(functools.partial(upconv_block_forward, padding=padding))
    out = fwd(params, x_nhwc, bridge_nhwc)
    out = jax.block_until_ready(out)

    expected_shape = (n, 2 * h, 2 * w, output_dim)   # padding=1 -> 'same'
    assert out.shape == expected_shape, (out.shape, expected_shape)

    # Numerical cross-check against the pure-JAX reference.
    ref = jax.jit(functools.partial(upconv_block_reference, padding=padding))(
        params, x_nhwc, bridge_nhwc)
    ref = jax.block_until_ready(ref)
    max_err = float(jnp.max(jnp.abs(out - ref)))
    assert max_err < 2e-2, f"max abs error {max_err}"

    print("KERNEL_OK")
</pallas_src>

<mosaic_0001>
module attributes {stable_mosaic.version = 11 : i64} {
  func.func @_fused_upconv_kernel(%arg0: i32, %arg1: memref<1x16x16x4xf32, #tpu.memory_space<vmem>>, %arg2: memref<1x16x16x4xf32, #tpu.memory_space<vmem>>, %arg3: memref<3x3x128x128xf32, #tpu.memory_space<vmem>>, %arg4: memref<1x128xf32, #tpu.memory_space<vmem>>, %arg5: memref<3x3x128x128xf32, #tpu.memory_space<vmem>>, %arg6: memref<1x128xf32, #tpu.memory_space<vmem>>, %arg7: memref<3x3x128x128xf32, #tpu.memory_space<vmem>>, %arg8: memref<1x128xf32, #tpu.memory_space<vmem>>, %arg9: memref<1x16x16x4xf32, #tpu.memory_space<vmem>>, %arg10: memref<18x18x128xf32, #tpu.memory_space<vmem>>) attributes {dimension_semantics = [#tpu.dimension_semantics<parallel>], iteration_bounds = array<i64: 2>, scalar_prefetch = 0 : i64, scratch_operands = 1 : i64, tpu.core_type = #tpu.core_type<tc>, window_params = [{transform_indices = @transform_0, window_bounds = array<i64: 1, 16, 16, 4>}, {transform_indices = @transform_1, window_bounds = array<i64: 1, 16, 16, 4>}, {pipeline_mode = #tpu.pipeline_mode<synchronous>, transform_indices = @transform_2, window_bounds = array<i64: 3, 3, 128, 128>}, {pipeline_mode = #tpu.pipeline_mode<synchronous>, transform_indices = @transform_3, window_bounds = array<i64: 1, 128>}, {pipeline_mode = #tpu.pipeline_mode<synchronous>, transform_indices = @transform_4, window_bounds = array<i64: 3, 3, 128, 128>}, {pipeline_mode = #tpu.pipeline_mode<synchronous>, transform_indices = @transform_5, window_bounds = array<i64: 1, 128>}, {pipeline_mode = #tpu.pipeline_mode<synchronous>, transform_indices = @transform_6, window_bounds = array<i64: 3, 3, 128, 128>}, {pipeline_mode = #tpu.pipeline_mode<synchronous>, transform_indices = @transform_7, window_bounds = array<i64: 1, 128>}, {transform_indices = @transform_8, window_bounds = array<i64: 1, 16, 16, 4>}]} {
    %cst = arith.constant 0.000000e+00 : f32
    %0 = vector.broadcast %cst : f32 to vector<18x18x128xf32>
    %c0 = arith.constant 0 : index
    %c0_0 = arith.constant 0 : index
    %c0_1 = arith.constant 0 : index
    %1 = vector.load %arg10[%c0, %c0_0, %c0_1] : memref<18x18x128xf32, #tpu.memory_space<vmem>>, vector<18x18x128xf32>
    tpu.vector_store %arg10[%c0, %c0_0, %c0_1], %0 {strides = array<i32>} : memref<18x18x128xf32, #tpu.memory_space<vmem>>, vector<18x18x128xf32>,
    %c0_2 = arith.constant 0 : index
    %c0_3 = arith.constant 0 : index
    %c0_4 = arith.constant 0 : index
    %c0_5 = arith.constant 0 : index
    %2 = vector.load %arg1[%c0_2, %c0_3, %c0_4, %c0_5] : memref<1x16x16x4xf32, #tpu.memory_space<vmem>>, vector<1x16x16x4xf32>
    %3 = vector.shape_cast %2 : vector<1x16x16x4xf32> to vector<16x16x4xf32>
    %c1 = arith.constant 1 : index
    %c1_6 = arith.constant 1 : index
    %c0_7 = arith.constant 0 : index
    %4 = vector.load %arg10[%c1, %c1_6, %c0_7] : memref<18x18x128xf32, #tpu.memory_space<vmem>>, vector<16x16x4xf32>
    tpu.vector_store %arg10[%c1, %c1_6, %c0_7], %3 {strides = array<i32>} : memref<18x18x128xf32, #tpu.memory_space<vmem>>, vector<16x16x4xf32>,
    %c0_8 = arith.constant 0 : index
    %c0_9 = arith.constant 0 : index
    %c0_10 = arith.constant 0 : index
    %c0_11 = arith.constant 0 : index
    %5 = vector.load %arg2[%c0_8, %c0_9, %c0_10, %c0_11] : memref<1x16x16x4xf32, #tpu.memory_space<vmem>>, vector<1x16x16x4xf32>
    %6 = vector.shape_cast %5 : vector<1x16x16x4xf32> to vector<16x16x4xf32>
    %c1_12 = arith.constant 1 : index
    %c1_13 = arith.constant 1 : index
    %c4 = arith.constant 4 : index
    %7 = vector.load %arg10[%c1_12, %c1_13, %c4] : memref<18x18x128xf32, #tpu.memory_space<vmem>>, vector<16x16x4xf32>
    tpu.vector_store %arg10[%c1_12, %c1_13, %c4], %6 {strides = array<i32>} : memref<18x18x128xf32, #tpu.memory_space<vmem>>, vector<16x16x4xf32>,
    %cst_14 = arith.constant 0.000000e+00 : f32
    %8 = vector.broadcast %cst_14 : f32 to vector<256x128xf32>
    %c0_15 = arith.constant 0 : index
    %c0_16 = arith.constant 0 : index
    %c0_17 = arith.constant 0 : index
    %9 = vector.load %arg10[%c0_15, %c0_16, %c0_17] : memref<18x18x128xf32, #tpu.memory_space<vmem>>, vector<16x16x128xf32>
    %10 = vector.shape_cast %9 : vector<16x16x128xf32> to vector<256x128xf32>
    %c0_18 = arith.constant 0 : index
    %c0_19 = arith.constant 0 : index
    %c0_20 = arith.constant 0 : index
    %c0_21 = arith.constant 0 : index
    %11 = vector.load %arg3[%c0_18, %c0_19, %c0_20, %c0_21] : memref<3x3x128x128xf32, #tpu.memory_space<vmem>>, vector<1x1x128x128xf32>
    %12 = vector.shape_cast %11 : vector<1x1x128x128xf32> to vector<128x128xf32>
    %cst_22 = arith.constant dense<0.000000e+00> : vector<256x128xf32>
    %13 = tpu.matmul %10, %12, %cst_22 {dimension_numbers = #tpu.dot_dimension_numbers<[1], [0], [0], [1], [0, 0, 1, 1], [], []>} : vector<256x128xf32>, vector<128x128xf32>, vector<256x128xf32> -> vector<256x128xf32>
    %14 = arith.addf %8, %13 : vector<256x128xf32>
    %c0_23 = arith.constant 0 : index
    %c1_24 = arith.constant 1 : index
    %c0_25 = arith.constant 0 : index
    %15 = vector.load %arg10[%c0_23, %c1_24, %c0_25] : memref<18x18x128xf32, #tpu.memory_space<vmem>>, vector<16x16x128xf32>
    %16 = vector.shape_cast %15 : vector<16x16x128xf32> to vector<256x128xf32>
    %c0_26 = arith.constant 0 : index
    %c1_27 = arith.constant 1 : index
    %c0_28 = arith.constant 0 : index
    %c0_29 = arith.constant 0 : index
    %17 = vector.load %arg3[%c0_26, %c1_27, %c0_28, %c0_29] : memref<3x3x128x128xf32, #tpu.memory_space<vmem>>, vector<1x1x128x128xf32>
    %18 = vector.shape_cast %17 : vector<1x1x128x128xf32> to vector<128x128xf32>
    %cst_30 = arith.constant dense<0.000000e+00> : vector<256x128xf32>
    %19 = tpu.matmul %16, %18, %cst_30 {dimension_numbers = #tpu.dot_dimension_numbers<[1], [0], [0], [1], [0, 0, 1, 1], [], []>} : vector<256x128xf32>, vector<128x128xf32>, vector<256x128xf32> -> vector<256x128xf32>
    %20 = arith.addf %14, %19 : vector<256x128xf32>
    %c0_31 = arith.constant 0 : index
    %c2 = arith.constant 2 : index
    %c0_32 = arith.constant 0 : index
    %21 = vector.load %arg10[%c0_31, %c2, %c0_32] : memref<18x18x128xf32, #tpu.memory_space<vmem>>, vector<16x16x128xf32>
    %22 = vector.shape_cast %21 : vector<16x16x128xf32> to vector<256x128xf32>
    %c0_33 = arith.constant 0 : index
    %c2_34 = arith.constant 2 : index
    %c0_35 = arith.constant 0 : index
    %c0_36 = arith.constant 0 : index
    %23 = vector.load %arg3[%c0_33, %c2_34, %c0_35, %c0_36] : memref<3x3x128x128xf32, #tpu.memory_space<vmem>>, vector<1x1x128x128xf32>
    %24 = vector.shape_cast %23 : vector<1x1x128x128xf32> to vector<128x128xf32>
    %cst_37 = arith.constant dense<0.000000e+00> : vector<256x128xf32>
    %25 = tpu.matmul %22, %24, %cst_37 {dimension_numbers = #tpu.dot_dimension_numbers<[1], [0], [0], [1], [0, 0, 1, 1], [], []>} : vector<256x128xf32>, vector<128x128xf32>, vector<256x128xf32> -> vector<256x128xf32>
    %26 = arith.addf %20, %25 : vector<256x128xf32>
    %c1_38 = arith.constant 1 : index
    %c0_39 = arith.constant 0 : index
    %c0_40 = arith.constant 0 : index
    %27 = vector.load %arg10[%c1_38, %c0_39, %c0_40] : memref<18x18x128xf32, #tpu.memory_space<vmem>>, vector<16x16x128xf32>
    %28 = vector.shape_cast %27 : vector<16x16x128xf32> to vector<256x128xf32>
    %c1_41 = arith.constant 1 : index
    %c0_42 = arith.constant 0 : index
    %c0_43 = arith.constant 0 : index
    %c0_44 = arith.constant 0 : index
    %29 = vector.load %arg3[%c1_41, %c0_42, %c0_43, %c0_44] : memref<3x3x128x128xf32, #tpu.memory_space<vmem>>, vector<1x1x128x128xf32>
    %30 = vector.shape_cast %29 : vector<1x1x128x128xf32> to vector<128x128xf32>
    %cst_45 = arith.constant dense<0.000000e+00> : vector<256x128xf32>
    %31 = tpu.matmul %28, %30, %cst_45 {dimension_numbers = #tpu.dot_dimension_numbers<[1], [0], [0], [1], [0, 0, 1, 1], [], []>} : vector<256x128xf32>, vector<128x128xf32>, vector<256x128xf32> -> vector<256x128xf32>
    %32 = arith.addf %26, %31 : vector<256x128xf32>
    %c1_46 = arith.constant 1 : index
    %c1_47 = arith.constant 1 : index
    %c0_48 = arith.constant 0 : index
    %33 = vector.load %arg10[%c1_46, %c1_47, %c0_48] : memref<18x18x128xf32, #tpu.memory_space<vmem>>, vector<16x16x128xf32>
    %34 = vector.shape_cast %33 : vector<16x16x128xf32> to vector<256x128xf32>
    %c1_49 = arith.constant 1 : index
    %c1_50 = arith.constant 1 : index
    %c0_51 = arith.constant 0 : index
    %c0_52 = arith.constant 0 : index
    %35 = vector.load %arg3[%c1_49, %c1_50, %c0_51, %c0_52] : memref<3x3x128x128xf32, #tpu.memory_space<vmem>>, vector<1x1x128x128xf32>
    %36 = vector.shape_cast %35 : vector<1x1x128x128xf32> to vector<128x128xf32>
    %cst_53 = arith.constant dense<0.000000e+00> : vector<256x128xf32>
    %37 = tpu.matmul %34, %36, %cst_53 {dimension_numbers = #tpu.dot_dimension_numbers<[1], [0], [0], [1], [0, 0, 1, 1], [], []>} : vector<256x128xf32>, vector<128x128xf32>, vector<256x128xf32> -> vector<256x128xf32>
    %38 = arith.addf %32, %37 : vector<256x128xf32>
    %c1_54 = arith.constant 1 : index
    %c2_55 = arith.constant 2 : index
    %c0_56 = arith.constant 0 : index
    %39 = vector.load %arg10[%c1_54, %c2_55, %c0_56] : memref<18x18x128xf32, #tpu.memory_space<vmem>>, vector<16x16x128xf32>
    %40 = vector.shape_cast %39 : vector<16x16x128xf32> to vector<256x128xf32>
    %c1_57 = arith.constant 1 : index
    %c2_58 = arith.constant 2 : index
    %c0_59 = arith.constant 0 : index
    %c0_60 = arith.constant 0 : index
    %41 = vector.load %arg3[%c1_57, %c2_58, %c0_59, %c0_60] : memref<3x3x128x128xf32, #tpu.memory_space<vmem>>, vector<1x1x128x128xf32>
    %42 = vector.shape_cast %41 : vector<1x1x128x128xf32> to vector<128x128xf32>
    %cst_61 = arith.constant dense<0.000000e+00> : vector<256x128xf32>
    %43 = tpu.matmul %40, %42, %cst_61 {dimension_numbers = #tpu.dot_dimension_numbers<[1], [0], [0], [1], [0, 0, 1, 1], [], []>} : vector<256x128xf32>, vector<128x128xf32>, vector<256x128xf32> -> vector<256x128xf32>
    %44 = arith.addf %38, %43 : vector<256x128xf32>
    %c2_62 = arith.constant 2 : index
    %c0_63 = arith.constant 0 : index
    %c0_64 = arith.constant 0 : index
    %45 = vector.load %arg10[%c2_62, %c0_63, %c0_64] : memref<18x18x128xf32, #tpu.memory_space<vmem>>, vector<16x16x128xf32>
    %46 = vector.shape_cast %45 : vector<16x16x128xf32> to vector<256x128xf32>
    %c2_65 = arith.constant 2 : index
    %c0_66 = arith.constant 0 : index
    %c0_67 = arith.constant 0 : index
    %c0_68 = arith.constant 0 : index
    %47 = vector.load %arg3[%c2_65, %c0_66, %c0_67, %c0_68] : memref<3x3x128x128xf32, #tpu.memory_space<vmem>>, vector<1x1x128x128xf32>
    %48 = vector.shape_cast %47 : vector<1x1x128x128xf32> to vector<128x128xf32>
    %cst_69 = arith.constant dense<0.000000e+00> : vector<256x128xf32>
    %49 = tpu.matmul %46, %48, %cst_69 {dimension_numbers = #tpu.dot_dimension_numbers<[1], [0], [0], [1], [0, 0, 1, 1], [], []>} : vector<256x128xf32>, vector<128x128xf32>, vector<256x128xf32> -> vector<256x128xf32>
    %50 = arith.addf %44, %49 : vector<256x128xf32>
    %c2_70 = arith.constant 2 : index
    %c1_71 = arith.constant 1 : index
    %c0_72 = arith.constant 0 : index
    %51 = vector.load %arg10[%c2_70, %c1_71, %c0_72] : memref<18x18x128xf32, #tpu.memory_space<vmem>>, vector<16x16x128xf32>
    %52 = vector.shape_cast %51 : vector<16x16x128xf32> to vector<256x128xf32>
    %c2_73 = arith.constant 2 : index
    %c1_74 = arith.constant 1 : index
    %c0_75 = arith.constant 0 : index
    %c0_76 = arith.constant 0 : index
    %53 = vector.load %arg3[%c2_73, %c1_74, %c0_75, %c0_76] : memref<3x3x128x128xf32, #tpu.memory_space<vmem>>, vector<1x1x128x128xf32>
    %54 = vector.shape_cast %53 : vector<1x1x128x128xf32> to vector<128x128xf32>
    %cst_77 = arith.constant dense<0.000000e+00> : vector<256x128xf32>
    %55 = tpu.matmul %52, %54, %cst_77 {dimension_numbers = #tpu.dot_dimension_numbers<[1], [0], [0], [1], [0, 0, 1, 1], [], []>} : vector<256x128xf32>, vector<128x128xf32>, vector<256x128xf32> -> vector<256x128xf32>
    %56 = arith.addf %50, %55 : vector<256x128xf32>
    %c2_78 = arith.constant 2 : index
    %c2_79 = arith.constant 2 : index
    %c0_80 = arith.constant 0 : index
    %57 = vector.load %arg10[%c2_78, %c2_79, %c0_80] : memref<18x18x128xf32, #tpu.memory_space<vmem>>, vector<16x16x128xf32>
    %58 = vector.shape_cast %57 : vector<16x16x128xf32> to vector<256x128xf32>
    %c2_81 = arith.constant 2 : index
    %c2_82 = arith.constant 2 : index
    %c0_83 = arith.constant 0 : index
    %c0_84 = arith.constant 0 : index
    %59 = vector.load %arg3[%c2_81, %c2_82, %c0_83, %c0_84] : memref<3x3x128x128xf32, #tpu.memory_space<vmem>>, vector<1x1x128x128xf32>
    %60 = vector.shape_cast %59 : vector<1x1x128x128xf32> to vector<128x128xf32>
    %cst_85 = arith.constant dense<0.000000e+00> : vector<256x128xf32>
    %61 = tpu.matmul %58, %60, %cst_85 {dimension_numbers = #tpu.dot_dimension_numbers<[1], [0], [0], [1], [0, 0, 1, 1], [], []>} : vector<256x128xf32>, vector<128x128xf32>, vector<256x128xf32> -> vector<256x128xf32>
    %62 = arith.addf %56, %61 : vector<256x128xf32>
    %c0_86 = arith.constant 0 : index
    %c0_87 = arith.constant 0 : index
    %63 = vector.load %arg4[%c0_86, %c0_87] : memref<1x128xf32, #tpu.memory_space<vmem>>, vector<1x128xf32>
    %64 = vector.shape_cast %63 : vector<1x128xf32> to vector<128xf32>
    %65 = vector.shape_cast %64 : vector<128xf32> to vector<1x128xf32>
    %66 = vector.broadcast %65 : vector<1x128xf32> to vector<256x128xf32>
    %67 = arith.addf %62, %66 : vector<256x128xf32>
    %cst_88 = arith.constant 0.000000e+00 : f32
    %68 = vector.broadcast %cst_88 : f32 to vector<256x128xf32>
    %69 = arith.maximumf %67, %68 : vector<256x128xf32>
    %70 = vector.shape_cast %69 : vector<256x128xf32> to vector<16x16x128xf32>
    %c1_89 = arith.constant 1 : index
    %c1_90 = arith.constant 1 : index
    %c0_91 = arith.constant 0 : index
    %71 = vector.load %arg10[%c1_89, %c1_90, %c0_91] : memref<18x18x128xf32, #tpu.memory_space<vmem>>, vector<16x16x128xf32>
    tpu.vector_store %arg10[%c1_89, %c1_90, %c0_91], %70 {strides = array<i32>} : memref<18x18x128xf32, #tpu.memory_space<vmem>>, vector<16x16x128xf32>,
    %cst_92 = arith.constant 0.000000e+00 : f32
    %72 = vector.broadcast %cst_92 : f32 to vector<256x128xf32>
    %c0_93 = arith.constant 0 : index
    %c0_94 = arith.constant 0 : index
    %c0_95 = arith.constant 0 : index
    %73 = vector.load %arg10[%c0_93, %c0_94, %c0_95] : memref<18x18x128xf32, #tpu.memory_space<vmem>>, vector<16x16x128xf32>
    %74 = vector.shape_cast %73 : vector<16x16x128xf32> to vector<256x128xf32>
    %c0_96 = arith.constant 0 : index
    %c0_97 = arith.constant 0 : index
    %c0_98 = arith.constant 0 : index
    %c0_99 = arith.constant 0 : index
    %75 = vector.load %arg5[%c0_96, %c0_97, %c0_98, %c0_99] : memref<3x3x128x128xf32, #tpu.memory_space<vmem>>, vector<1x1x128x128xf32>
    %76 = vector.shape_cast %75 : vector<1x1x128x128xf32> to vector<128x128xf32>
    %cst_100 = arith.constant dense<0.000000e+00> : vector<256x128xf32>
    %77 = tpu.matmul %74, %76, %cst_100 {dimension_numbers = #tpu.dot_dimension_numbers<[1], [0], [0], [1], [0, 0, 1, 1], [], []>} : vector<256x128xf32>, vector<128x128xf32>, vector<256x128xf32> -> vector<256x128xf32>
    %78 = arith.addf %72, %77 : vector<256x128xf32>
    %c0_101 = arith.constant 0 : index
    %c1_102 = arith.constant 1 : index
    %c0_103 = arith.constant 0 : index
    %79 = vector.load %arg10[%c0_101, %c1_102, %c0_103] : memref<18x18x128xf32, #tpu.memory_space<vmem>>, vector<16x16x128xf32>
    %80 = vector.shape_cast %79 : vector<16x16x128xf32> to vector<256x128xf32>
    %c0_104 = arith.constant 0 : index
    %c1_105 = arith.constant 1 : index
    %c0_106 = arith.constant 0 : index
    %c0_107 = arith.constant 0 : index
    %81 = vector.load %arg5[%c0_104, %c1_105, %c0_106, %c0_107] : memref<3x3x128x128xf32, #tpu.memory_space<vmem>>, vector<1x1x128x128xf32>
    %82 = vector.shape_cast %81 : vector<1x1x128x128xf32> to vector<128x128xf32>
    %cst_108 = arith.constant dense<0.000000e+00> : vector<256x128xf32>
    %83 = tpu.matmul %80, %82, %cst_108 {dimension_numbers = #tpu.dot_dimension_numbers<[1], [0], [0], [1], [0, 0, 1, 1], [], []>} : vector<256x128xf32>, vector<128x128xf32>, vector<256x128xf32> -> vector<256x128xf32>
    %84 = arith.addf %78, %83 : vector<256x128xf32>
    %c0_109 = arith.constant 0 : index
    %c2_110 = arith.constant 2 : index
    %c0_111 = arith.constant 0 : index
    %85 = vector.load %arg10[%c0_109, %c2_110, %c0_111] : memref<18x18x128xf32, #tpu.memory_space<vmem>>, vector<16x16x128xf32>
    %86 = vector.shape_cast %85 : vector<16x16x128xf32> to vector<256x128xf32>
    %c0_112 = arith.constant 0 : index
    %c2_113 = arith.constant 2 : index
    %c0_114 = arith.constant 0 : index
    %c0_115 = arith.constant 0 : index
    %87 = vector.load %arg5[%c0_112, %c2_113, %c0_114, %c0_115] : memref<3x3x128x128xf32, #tpu.memory_space<vmem>>, vector<1x1x128x128xf32>
    %88 = vector.shape_cast %87 : vector<1x1x128x128xf32> to vector<128x128xf32>
    %cst_116 = arith.constant dense<0.000000e+00> : vector<256x128xf32>
    %89 = tpu.matmul %86, %88, %cst_116 {dimension_numbers = #tpu.dot_dimension_numbers<[1], [0], [0], [1], [0, 0, 1, 1], [], []>} : vector<256x128xf32>, vector<128x128xf32>, vector<256x128xf32> -> vector<256x128xf32>
    %90 = arith.addf %84, %89 : vector<256x128xf32>
    %c1_117 = arith.constant 1 : index
    %c0_118 = arith.constant 0 : index
    %c0_119 = arith.constant 0 : index
    %91 = vector.load %arg10[%c1_117, %c0_118, %c0_119] : memref<18x18x128xf32, #tpu.memory_space<vmem>>, vector<16x16x128xf32>
    %92 = vector.shape_cast %91 : vector<16x16x128xf32> to vector<256x128xf32>
    %c1_120 = arith.constant 1 : index
    %c0_121 = arith.constant 0 : index
    %c0_122 = arith.constant 0 : index
    %c0_123 = arith.constant 0 : index
    %93 = vector.load %arg5[%c1_120, %c0_121, %c0_122, %c0_123] : memref<3x3x128x128xf32, #tpu.memory_space<vmem>>, vector<1x1x128x128xf32>
    %94 = vector.shape_cast %93 : vector<1x1x128x128xf32> to vector<128x128xf32>
    %cst_124 = arith.constant dense<0.000000e+00> : vector<256x128xf32>
    %95 = tpu.matmul %92, %94, %cst_124 {dimension_numbers = #tpu.dot_dimension_numbers<[1], [0], [0], [1], [0, 0, 1, 1], [], []>} : vector<256x128xf32>, vector<128x128xf32>, vector<256x128xf32> -> vector<256x128xf32>
    %96 = arith.addf %90, %95 : vector<256x128xf32>
    %c1_125 = arith.constant 1 : index
    %c1_126 = arith.constant 1 : index
    %c0_127 = arith.constant 0 : index
    %97 = vector.load %arg10[%c1_125, %c1_126, %c0_127] : memref<18x18x128xf32, #tpu.memory_space<vmem>>, vector<16x16x128xf32>
    %98 = vector.shape_cast %97 : vector<16x16x128xf32> to vector<256x128xf32>
    %c1_128 = arith.constant 1 : index
    %c1_129 = arith.constant 1 : index
    %c0_130 = arith.constant 0 : index
    %c0_131 = arith.constant 0 : index
    %99 = vector.load %arg5[%c1_128, %c1_129, %c0_130, %c0_131] : memref<3x3x128x128xf32, #tpu.memory_space<vmem>>, vector<1x1x128x128xf32>
    %100 = vector.shape_cast %99 : vector<1x1x128x128xf32> to vector<128x128xf32>
    %cst_132 = arith.constant dense<0.000000e+00> : vector<256x128xf32>
    %101 = tpu.matmul %98, %100, %cst_132 {dimension_numbers = #tpu.dot_dimension_numbers<[1], [0], [0], [1], [0, 0, 1, 1], [], []>} : vector<256x128xf32>, vector<128x128xf32>, vector<256x128xf32> -> vector<256x128xf32>
    %102 = arith.addf %96, %101 : vector<256x128xf32>
    %c1_133 = arith.constant 1 : index
    %c2_134 = arith.constant 2 : index
    %c0_135 = arith.constant 0 : index
    %103 = vector.load %arg10[%c1_133, %c2_134, %c0_135] : memref<18x18x128xf32, #tpu.memory_space<vmem>>, vector<16x16x128xf32>
    %104 = vector.shape_cast %103 : vector<16x16x128xf32> to vector<256x128xf32>
    %c1_136 = arith.constant 1 : index
    %c2_137 = arith.constant 2 : index
    %c0_138 = arith.constant 0 : index
    %c0_139 = arith.constant 0 : index
    %105 = vector.load %arg5[%c1_136, %c2_137, %c0_138, %c0_139] : memref<3x3x128x128xf32, #tpu.memory_space<vmem>>, vector<1x1x128x128xf32>
    %106 = vector.shape_cast %105 : vector<1x1x128x128xf32> to vector<128x128xf32>
    %cst_140 = arith.constant dense<0.000000e+00> : vector<256x128xf32>
    %107 = tpu.matmul %104, %106, %cst_140 {dimension_numbers = #tpu.dot_dimension_numbers<[1], [0], [0], [1], [0, 0, 1, 1], [], []>} : vector<256x128xf32>, vector<128x128xf32>, vector<256x128xf32> -> vector<256x128xf32>
    %108 = arith.addf %102, %107 : vector<256x128xf32>
    %c2_141 = arith.constant 2 : index
    %c0_142 = arith.constant 0 : index
    %c0_143 = arith.constant 0 : index
    %109 = vector.load %arg10[%c2_141, %c0_142, %c0_143] : memref<18x18x128xf32, #tpu.memory_space<vmem>>, vector<16x16x128xf32>
    %110 = vector.shape_cast %109 : vector<16x16x128xf32> to vector<256x128xf32>
    %c2_144 = arith.constant 2 : index
    %c0_145 = arith.constant 0 : index
    %c0_146 = arith.constant 0 : index
    %c0_147 = arith.constant 0 : index
    %111 = vector.load %arg5[%c2_144, %c0_145, %c0_146, %c0_147] : memref<3x3x128x128xf32, #tpu.memory_space<vmem>>, vector<1x1x128x128xf32>
    %112 = vector.shape_cast %111 : vector<1x1x128x128xf32> to vector<128x128xf32>
    %cst_148 = arith.constant dense<0.000000e+00> : vector<256x128xf32>
    %113 = tpu.matmul %110, %112, %cst_148 {dimension_numbers = #tpu.dot_dimension_numbers<[1], [0], [0], [1], [0, 0, 1, 1], [], []>} : vector<256x128xf32>, vector<128x128xf32>, vector<256x128xf32> -> vector<256x128xf32>
    %114 = arith.addf %108, %113 : vector<256x128xf32>
    %c2_149 = arith.constant 2 : index
    %c1_150 = arith.constant 1 : index
    %c0_151 = arith.constant 0 : index
    %115 = vector.load %arg10[%c2_149, %c1_150, %c0_151] : memref<18x18x128xf32, #tpu.memory_space<vmem>>, vector<16x16x128xf32>
    %116 = vector.shape_cast %115 : vector<16x16x128xf32> to vector<256x128xf32>
    %c2_152 = arith.constant 2 : index
    %c1_153 = arith.constant 1 : index
    %c0_154 = arith.constant 0 : index
    %c0_155 = arith.constant 0 : index
    %117 = vector.load %arg5[%c2_152, %c1_153, %c0_154, %c0_155] : memref<3x3x128x128xf32, #tpu.memory_space<vmem>>, vector<1x1x128x128xf32>
    %118 = vector.shape_cast %117 : vector<1x1x128x128xf32> to vector<128x128xf32>
    %cst_156 = arith.constant dense<0.000000e+00> : vector<256x128xf32>
    %119 = tpu.matmul %116, %118, %cst_156 {dimension_numbers = #tpu.dot_dimension_numbers<[1], [0], [0], [1], [0, 0, 1, 1], [], []>} : vector<256x128xf32>, vector<128x128xf32>, vector<256x128xf32> -> vector<256x128xf32>
    %120 = arith.addf %114, %119 : vector<256x128xf32>
    %c2_157 = arith.constant 2 : index
    %c2_158 = arith.constant 2 : index
    %c0_159 = arith.constant 0 : index
    %121 = vector.load %arg10[%c2_157, %c2_158, %c0_159] : memref<18x18x128xf32, #tpu.memory_space<vmem>>, vector<16x16x128xf32>
    %122 = vector.shape_cast %121 : vector<16x16x128xf32> to vector<256x128xf32>
    %c2_160 = arith.constant 2 : index
    %c2_161 = arith.constant 2 : index
    %c0_162 = arith.constant 0 : index
    %c0_163 = arith.constant 0 : index
    %123 = vector.load %arg5[%c2_160, %c2_161, %c0_162, %c0_163] : memref<3x3x128x128xf32, #tpu.memory_space<vmem>>, vector<1x1x128x128xf32>
    %124 = vector.shape_cast %123 : vector<1x1x128x128xf32> to vector<128x128xf32>
    %cst_164 = arith.constant dense<0.000000e+00> : vector<256x128xf32>
    %125 = tpu.matmul %122, %124, %cst_164 {dimension_numbers = #tpu.dot_dimension_numbers<[1], [0], [0], [1], [0, 0, 1, 1], [], []>} : vector<256x128xf32>, vector<128x128xf32>, vector<256x128xf32> -> vector<256x128xf32>
    %126 = arith.addf %120, %125 : vector<256x128xf32>
    %c0_165 = arith.constant 0 : index
    %c0_166 = arith.constant 0 : index
    %127 = vector.load %arg6[%c0_165, %c0_166] : memref<1x128xf32, #tpu.memory_space<vmem>>, vector<1x128xf32>
    %128 = vector.shape_cast %127 : vector<1x128xf32> to vector<128xf32>
    %129 = vector.shape_cast %128 : vector<128xf32> to vector<1x128xf32>
    %130 = vector.broadcast %129 : vector<1x128xf32> to vector<256x128xf32>
    %131 = arith.addf %126, %130 : vector<256x128xf32>
    %cst_167 = arith.constant 0.000000e+00 : f32
    %132 = vector.broadcast %cst_167 : f32 to vector<256x128xf32>
    %133 = arith.maximumf %131, %132 : vector<256x128xf32>
    %134 = vector.shape_cast %133 : vector<256x128xf32> to vector<16x16x128xf32>
    %c1_168 = arith.constant 1 : index
    %c1_169 = arith.constant 1 : index
    %c0_170 = arith.constant 0 : index
    %135 = vector.load %arg10[%c1_168, %c1_169, %c0_170] : memref<18x18x128xf32, #tpu.memory_space<vmem>>, vector<16x16x128xf32>
    tpu.vector_store %arg10[%c1_168, %c1_169, %c0_170], %134 {strides = array<i32>} : memref<18x18x128xf32, #tpu.memory_space<vmem>>, vector<16x16x128xf32>,
    %cst_171 = arith.constant 0.000000e+00 : f32
    %136 = vector.broadcast %cst_171 : f32 to vector<256x128xf32>
    %c0_172 = arith.constant 0 : index
    %c0_173 = arith.constant 0 : index
    %c0_174 = arith.constant 0 : index
    %137 = vector.load %arg10[%c0_172, %c0_173, %c0_174] : memref<18x18x128xf32, #tpu.memory_space<vmem>>, vector<16x16x128xf32>
    %138 = vector.shape_cast %137 : vector<16x16x128xf32> to vector<256x128xf32>
    %c0_175 = arith.constant 0 : index
    %c0_176 = arith.constant 0 : index
    %c0_177 = arith.constant 0 : index
    %c0_178 = arith.constant 0 : index
    %139 = vector.load %arg7[%c0_175, %c0_176, %c0_177, %c0_178] : memref<3x3x128x128xf32, #tpu.memory_space<vmem>>, vector<1x1x128x128xf32>
    %140 = vector.shape_cast %139 : vector<1x1x128x128xf32> to vector<128x128xf32>
    %cst_179 = arith.constant dense<0.000000e+00> : vector<256x128xf32>
    %141 = tpu.matmul %138, %140, %cst_179 {dimension_numbers = #tpu.dot_dimension_numbers<[1], [0], [0], [1], [0, 0, 1, 1], [], []>} : vector<256x128xf32>, vector<128x128xf32>, vector<256x128xf32> -> vector<256x128xf32>
    %142 = arith.addf %136, %141 : vector<256x128xf32>
    %c0_180 = arith.constant 0 : index
    %c1_181 = arith.constant 1 : index
    %c0_182 = arith.constant 0 : index
    %143 = vector.load %arg10[%c0_180, %c1_181, %c0_182] : memref<18x18x128xf32, #tpu.memory_space<vmem>>, vector<16x16x128xf32>
    %144 = vector.shape_cast %143 : vector<16x16x128xf32> to vector<256x128xf32>
    %c0_183 = arith.constant 0 : index
    %c1_184 = arith.constant 1 : index
    %c0_185 = arith.constant 0 : index
    %c0_186 = arith.constant 0 : index
    %145 = vector.load %arg7[%c0_183, %c1_184, %c0_185, %c0_186] : memref<3x3x128x128xf32, #tpu.memory_space<vmem>>, vector<1x1x128x128xf32>
    %146 = vector.shape_cast %145 : vector<1x1x128x128xf32> to vector<128x128xf32>
    %cst_187 = arith.constant dense<0.000000e+00> : vector<256x128xf32>
    %147 = tpu.matmul %144, %146, %cst_187 {dimension_numbers = #tpu.dot_dimension_numbers<[1], [0], [0], [1], [0, 0, 1, 1], [], []>} : vector<256x128xf32>, vector<128x128xf32>, vector<256x128xf32> -> vector<256x128xf32>
    %148 = arith.addf %142, %147 : vector<256x128xf32>
    %c0_188 = arith.constant 0 : index
    %c2_189 = arith.constant 2 : index
    %c0_190 = arith.constant 0 : index
    %149 = vector.load %arg10[%c0_188, %c2_189, %c0_190] : memref<18x18x128xf32, #tpu.memory_space<vmem>>, vector<16x16x128xf32>
    %150 = vector.shape_cast %149 : vector<16x16x128xf32> to vector<256x128xf32>
    %c0_191 = arith.constant 0 : index
    %c2_192 = arith.constant 2 : index
    %c0_193 = arith.constant 0 : index
    %c0_194 = arith.constant 0 : index
    %151 = vector.load %arg7[%c0_191, %c2_192, %c0_193, %c0_194] : memref<3x3x128x128xf32, #tpu.memory_space<vmem>>, vector<1x1x128x128xf32>
    %152 = vector.shape_cast %151 : vector<1x1x128x128xf32> to vector<128x128xf32>
    %cst_195 = arith.constant dense<0.000000e+00> : vector<256x128xf32>
    %153 = tpu.matmul %150, %152, %cst_195 {dimension_numbers = #tpu.dot_dimension_numbers<[1], [0], [0], [1], [0, 0, 1, 1], [], []>} : vector<256x128xf32>, vector<128x128xf32>, vector<256x128xf32> -> vector<256x128xf32>
    %154 = arith.addf %148, %153 : vector<256x128xf32>
    %c1_196 = arith.constant 1 : index
    %c0_197 = arith.constant 0 : index
    %c0_198 = arith.constant 0 : index
    %155 = vector.load %arg10[%c1_196, %c0_197, %c0_198] : memref<18x18x128xf32, #tpu.memory_space<vmem>>, vector<16x16x128xf32>
    %156 = vector.shape_cast %155 : vector<16x16x128xf32> to vector<256x128xf32>
    %c1_199 = arith.constant 1 : index
    %c0_200 = arith.constant 0 : index
    %c0_201 = arith.constant 0 : index
    %c0_202 = arith.constant 0 : index
    %157 = vector.load %arg7[%c1_199, %c0_200, %c0_201, %c0_202] : memref<3x3x128x128xf32, #tpu.memory_space<vmem>>, vector<1x1x128x128xf32>
    %158 = vector.shape_cast %157 : vector<1x1x128x128xf32> to vector<128x128xf32>
    %cst_203 = arith.constant dense<0.000000e+00> : vector<256x128xf32>
    %159 = tpu.matmul %156, %158, %cst_203 {dimension_numbers = #tpu.dot_dimension_numbers<[1], [0], [0], [1], [0, 0, 1, 1], [], []>} : vector<256x128xf32>, vector<128x128xf32>, vector<256x128xf32> -> vector<256x128xf32>
    %160 = arith.addf %154, %159 : vector<256x128xf32>
    %c1_204 = arith.constant 1 : index
    %c1_205 = arith.constant 1 : index
    %c0_206 = arith.constant 0 : index
    %161 = vector.load %arg10[%c1_204, %c1_205, %c0_206] : memref<18x18x128xf32, #tpu.memory_space<vmem>>, vector<16x16x128xf32>
    %162 = vector.shape_cast %161 : vector<16x16x128xf32> to vector<256x128xf32>
    %c1_207 = arith.constant 1 : index
    %c1_208 = arith.constant 1 : index
    %c0_209 = arith.constant 0 : index
    %c0_210 = arith.constant 0 : index
    %163 = vector.load %arg7[%c1_207, %c1_208, %c0_209, %c0_210] : memref<3x3x128x128xf32, #tpu.memory_space<vmem>>, vector<1x1x128x128xf32>
    %164 = vector.shape_cast %163 : vector<1x1x128x128xf32> to vector<128x128xf32>
    %cst_211 = arith.constant dense<0.000000e+00> : vector<256x128xf32>
    %165 = tpu.matmul %162, %164, %cst_211 {dimension_numbers = #tpu.dot_dimension_numbers<[1], [0], [0], [1], [0, 0, 1, 1], [], []>} : vector<256x128xf32>, vector<128x128xf32>, vector<256x128xf32> -> vector<256x128xf32>
    %166 = arith.addf %160, %165 : vector<256x128xf32>
    %c1_212 = arith.constant 1 : index
    %c2_213 = arith.constant 2 : index
    %c0_214 = arith.constant 0 : index
    %167 = vector.load %arg10[%c1_212, %c2_213, %c0_214] : memref<18x18x128xf32, #tpu.memory_space<vmem>>, vector<16x16x128xf32>
    %168 = vector.shape_cast %167 : vector<16x16x128xf32> to vector<256x128xf32>
    %c1_215 = arith.constant 1 : index
    %c2_216 = arith.constant 2 : index
    %c0_217 = arith.constant 0 : index
    %c0_218 = arith.constant 0 : index
    %169 = vector.load %arg7[%c1_215, %c2_216, %c0_217, %c0_218] : memref<3x3x128x128xf32, #tpu.memory_space<vmem>>, vector<1x1x128x128xf32>
    %170 = vector.shape_cast %169 : vector<1x1x128x128xf32> to vector<128x128xf32>
    %cst_219 = arith.constant dense<0.000000e+00> : vector<256x128xf32>
    %171 = tpu.matmul %168, %170, %cst_219 {dimension_numbers = #tpu.dot_dimension_numbers<[1], [0], [0], [1], [0, 0, 1, 1], [], []>} : vector<256x128xf32>, vector<128x128xf32>, vector<256x128xf32> -> vector<256x128xf32>
    %172 = arith.addf %166, %171 : vector<256x128xf32>
    %c2_220 = arith.constant 2 : index
    %c0_221 = arith.constant 0 : index
    %c0_222 = arith.constant 0 : index
    %173 = vector.load %arg10[%c2_220, %c0_221, %c0_222] : memref<18x18x128xf32, #tpu.memory_space<vmem>>, vector<16x16x128xf32>
    %174 = vector.shape_cast %173 : vector<16x16x128xf32> to vector<256x128xf32>
    %c2_223 = arith.constant 2 : index
    %c0_224 = arith.constant 0 : index
    %c0_225 = arith.constant 0 : index
    %c0_226 = arith.constant 0 : index
    %175 = vector.load %arg7[%c2_223, %c0_224, %c0_225, %c0_226] : memref<3x3x128x128xf32, #tpu.memory_space<vmem>>, vector<1x1x128x128xf32>
    %176 = vector.shape_cast %175 : vector<1x1x128x128xf32> to vector<128x128xf32>
    %cst_227 = arith.constant dense<0.000000e+00> : vector<256x128xf32>
    %177 = tpu.matmul %174, %176, %cst_227 {dimension_numbers = #tpu.dot_dimension_numbers<[1], [0], [0], [1], [0, 0, 1, 1], [], []>} : vector<256x128xf32>, vector<128x128xf32>, vector<256x128xf32> -> vector<256x128xf32>
    %178 = arith.addf %172, %177 : vector<256x128xf32>
    %c2_228 = arith.constant 2 : index
    %c1_229 = arith.constant 1 : index
    %c0_230 = arith.constant 0 : index
    %179 = vector.load %arg10[%c2_228, %c1_229, %c0_230] : memref<18x18x128xf32, #tpu.memory_space<vmem>>, vector<16x16x128xf32>
    %180 = vector.shape_cast %179 : vector<16x16x128xf32> to vector<256x128xf32>
    %c2_231 = arith.constant 2 : index
    %c1_232 = arith.constant 1 : index
    %c0_233 = arith.constant 0 : index
    %c0_234 = arith.constant 0 : index
    %181 = vector.load %arg7[%c2_231, %c1_232, %c0_233, %c0_234] : memref<3x3x128x128xf32, #tpu.memory_space<vmem>>, vector<1x1x128x128xf32>
    %182 = vector.shape_cast %181 : vector<1x1x128x128xf32> to vector<128x128xf32>
    %cst_235 = arith.constant dense<0.000000e+00> : vector<256x128xf32>
    %183 = tpu.matmul %180, %182, %cst_235 {dimension_numbers = #tpu.dot_dimension_numbers<[1], [0], [0], [1], [0, 0, 1, 1], [], []>} : vector<256x128xf32>, vector<128x128xf32>, vector<256x128xf32> -> vector<256x128xf32>
    %184 = arith.addf %178, %183 : vector<256x128xf32>
    %c2_236 = arith.constant 2 : index
    %c2_237 = arith.constant 2 : index
    %c0_238 = arith.constant 0 : index
    %185 = vector.load %arg10[%c2_236, %c2_237, %c0_238] : memref<18x18x128xf32, #tpu.memory_space<vmem>>, vector<16x16x128xf32>
    %186 = vector.shape_cast %185 : vector<16x16x128xf32> to vector<256x128xf32>
    %c2_239 = arith.constant 2 : index
    %c2_240 = arith.constant 2 : index
    %c0_241 = arith.constant 0 : index
    %c0_242 = arith.constant 0 : index
    %187 = vector.load %arg7[%c2_239, %c2_240, %c0_241, %c0_242] : memref<3x3x128x128xf32, #tpu.memory_space<vmem>>, vector<1x1x128x128xf32>
    %188 = vector.shape_cast %187 : vector<1x1x128x128xf32> to vector<128x128xf32>
    %cst_243 = arith.constant dense<0.000000e+00> : vector<256x128xf32>
    %189 = tpu.matmul %186, %188, %cst_243 {dimension_numbers = #tpu.dot_dimension_numbers<[1], [0], [0], [1], [0, 0, 1, 1], [], []>} : vector<256x128xf32>, vector<128x128xf32>, vector<256x128xf32> -> vector<256x128xf32>
    %190 = arith.addf %184, %189 : vector<256x128xf32>
    %c0_244 = arith.constant 0 : index
    %c0_245 = arith.constant 0 : index
    %191 = vector.load %arg8[%c0_244, %c0_245] : memref<1x128xf32, #tpu.memory_space<vmem>>, vector<1x128xf32>
    %192 = vector.shape_cast %191 : vector<1x128xf32> to vector<128xf32>
    %193 = vector.shape_cast %192 : vector<128xf32> to vector<1x128xf32>
    %194 = vector.broadcast %193 : vector<1x128xf32> to vector<256x128xf32>
    %195 = arith.addf %190, %194 : vector<256x128xf32>
    %cst_246 = arith.constant 0.000000e+00 : f32
    %196 = vector.broadcast %cst_246 : f32 to vector<256x128xf32>
    %197 = arith.maximumf %195, %196 : vector<256x128xf32>
    %198 = vector.extract_strided_slice %197 {offsets = [0, 0], sizes = [256, 4], strides = [1, 1]} : vector<256x128xf32> to vector<256x4xf32>
    %199 = vector.shape_cast %198 : vector<256x4xf32> to vector<16x16x4xf32>
    %c0_247 = arith.constant 0 : index
    %c0_248 = arith.constant 0 : index
    %c0_249 = arith.constant 0 : index
    %c0_250 = arith.constant 0 : index
    %200 = vector.load %arg9[%c0_247, %c0_248, %c0_249, %c0_250] : memref<1x16x16x4xf32, #tpu.memory_space<vmem>>, vector<1x16x16x4xf32>
    %201 = vector.shape_cast %200 : vector<1x16x16x4xf32> to vector<16x16x4xf32>
    %202 = vector.shape_cast %199 : vector<16x16x4xf32> to vector<1x16x16x4xf32>
    tpu.vector_store %arg9[%c0_247, %c0_248, %c0_249, %c0_250], %202 {strides = array<i32>} : memref<1x16x16x4xf32, #tpu.memory_space<vmem>>, vector<1x16x16x4xf32>,
    return
  }
  func.func @transform_0(%arg0: i32) -> (i32, i32, i32, i32) {
    %c0_i32 = arith.constant 0 : i32
    %c0_i32_0 = arith.constant 0 : i32
    %c0_i32_1 = arith.constant 0 : i32
    %c0_i32_2 = arith.constant 0 : i32
    return %arg0, %c0_i32, %c0_i32_0, %c0_i32_1 : i32, i32, i32, i32
  }
  func.func @transform_1(%arg0: i32) -> (i32, i32, i32, i32) {
    %c0_i32 = arith.constant 0 : i32
    %c0_i32_0 = arith.constant 0 : i32
    %c0_i32_1 = arith.constant 0 : i32
    %c0_i32_2 = arith.constant 0 : i32
    return %arg0, %c0_i32, %c0_i32_0, %c0_i32_1 : i32, i32, i32, i32
  }
  func.func @transform_2(%arg0: i32) -> (i32, i32, i32, i32) {
    %c0_i32 = arith.constant 0 : i32
    %c0_i32_0 = arith.constant 0 : i32
    %c0_i32_1 = arith.constant 0 : i32
    %c0_i32_2 = arith.constant 0 : i32
    %c0_i32_3 = arith.constant 0 : i32
    return %c0_i32, %c0_i32_0, %c0_i32_1, %c0_i32_2 : i32, i32, i32, i32
  }
  func.func @transform_3(%arg0: i32) -> (i32, i32) {
    %c0_i32 = arith.constant 0 : i32
    %c0_i32_0 = arith.constant 0 : i32
    %c0_i32_1 = arith.constant 0 : i32
    return %c0_i32, %c0_i32_0 : i32, i32
  }
  func.func @transform_4(%arg0: i32) -> (i32, i32, i32, i32) {
    %c0_i32 = arith.constant 0 : i32
    %c0_i32_0 = arith.constant 0 : i32
    %c0_i32_1 = arith.constant 0 : i32
    %c0_i32_2 = arith.constant 0 : i32
    %c0_i32_3 = arith.constant 0 : i32
    return %c0_i32, %c0_i32_0, %c0_i32_1, %c0_i32_2 : i32, i32, i32, i32
  }
  func.func @transform_5(%arg0: i32) -> (i32, i32) {
    %c0_i32 = arith.constant 0 : i32
    %c0_i32_0 = arith.constant 0 : i32
    %c0_i32_1 = arith.constant 0 : i32
    return %c0_i32, %c0_i32_0 : i32, i32
  }
  func.func @transform_6(%arg0: i32) -> (i32, i32, i32, i32) {
    %c0_i32 = arith.constant 0 : i32
    %c0_i32_0 = arith.constant 0 : i32
    %c0_i32_1 = arith.constant 0 : i32
    %c0_i32_2 = arith.constant 0 : i32
    %c0_i32_3 = arith.constant 0 : i32
    return %c0_i32, %c0_i32_0, %c0_i32_1, %c0_i32_2 : i32, i32, i32, i32
  }
  func.func @transform_7(%arg0: i32) -> (i32, i32) {
    %c0_i32 = arith.constant 0 : i32
    %c0_i32_0 = arith.constant 0 : i32
    %c0_i32_1 = arith.constant 0 : i32
    return %c0_i32, %c0_i32_0 : i32, i32
  }
  func.func @transform_8(%arg0: i32) -> (i32, i32, i32, i32) {
    %c0_i32 = arith.constant 0 : i32
    %c0_i32_0 = arith.constant 0 : i32
    %c0_i32_1 = arith.constant 0 : i32
    %c0_i32_2 = arith.constant 0 : i32
    return %arg0, %c0_i32, %c0_i32_0, %c0_i32_1 : i32, i32, i32, i32
  }
}

</mosaic_0001>

<llo_original>
// kernel: upconv_block_forward.1
$region0: #{upconv_block_forward.1}
  #allocation0 [shape = 'u32[]', space=smem, size = 0x4, offset = 0x4, fixed_abs, tag = 'smem constant byte address 0x4 - core index']
  #allocation1 [shape = 'u32[144,128]{1,0:T(1,128)}', space=vmem, size = 0x12000, scoped, tag = 'internal scratch']
  #allocation2 [shape = 'f32[18,18,128]{2,1,0:T(8,128)}', space=vmem, size = 0x36000, scoped, tag = 'scratch operand']
  %s0 = inlined_call_operand.vmem [shape: f32[2,16,16,4], index: 0, kind: input, shape index: {}]
  %s1 = inlined_call_operand.vmem [shape: f32[2,16,16,4], index: 1, kind: input, shape index: {}]
  %s2 = inlined_call_operand.vmem [shape: f32[3,3,128,128], index: 2, kind: input, shape index: {}]
  %s3 = inlined_call_operand.vmem [shape: f32[1,128], index: 3, kind: input, shape index: {}]
  %s4 = inlined_call_operand.vmem [shape: f32[3,3,128,128], index: 4, kind: input, shape index: {}]
  %s5 = inlined_call_operand.vmem [shape: f32[1,128], index: 5, kind: input, shape index: {}]
  %s6 = inlined_call_operand.vmem [shape: f32[3,3,128,128], index: 6, kind: input, shape index: {}]
  %s7 = inlined_call_operand.vmem [shape: f32[1,128], index: 7, kind: input, shape index: {}]
  %s8 = inlined_call_operand.vmem [shape: f32[2,16,16,4], index: 8, kind: output, shape index: {}]
  %s9 = sld [smem:[#allocation0]]
  $region65: #{upconv_block_forward.1} parent=0
    _
  %s11 = ssub.s32 1, %s9
  %s12 = scalar_select 0, %s11, %s9
  loop: start=0, step=1, limit=4
  $region2: #{upconv_block_forward.1} parent=0 // loop_pre_header
    _
  $region3: #{upconv_block_forward.1} parent=0 // loop_header
    %s14 = sphi 0, %s18
    %p15 = scmp.ge.s32.totalorder %s14, 4
    %s24 = sphi 0, %s26
    %s27 = sphi 0, %s24
    %s28 = sphi 0, %s27
    %s44 = sphi 0, %s28
    %s50 = sphi 0, %s52
    %s53 = sphi 0, %s50
    %s54 = sphi 0, %s53
    %s70 = sphi 0, %s54
    %s74 = sphi 0, %s74
    %s76 = sphi 0, %s74
    %s77 = sphi 0, %s76
    %s91 = sphi 0, %s77
    %s95 = sphi 0, %s95
    %s97 = sphi 0, %s95
    %s98 = sphi 0, %s97
    %s112 = sphi 0, %s98
    %s116 = sphi 0, %s116
    %s118 = sphi 0, %s116
    %s119 = sphi 0, %s118
    %s133 = sphi 0, %s119
    %s137 = sphi 0, %s137
    %s139 = sphi 0, %s137
    %s140 = sphi 0, %s139
    %s154 = sphi 0, %s140
    %s158 = sphi 0, %s158
    %s160 = sphi 0, %s158
    %s161 = sphi 0, %s160
    %s175 = sphi 0, %s161
    %s179 = sphi 0, %s179
    %s181 = sphi 0, %s179
    %s182 = sphi 0, %s181
    %s196 = sphi 0, %s182
    %s202 = sphi 0, %s204
    %s205 = sphi 0, %s202
    %s206 = sphi 0, %s205
    %s222 = sphi 0, %s206
  $region4: #{upconv_block_forward.1} parent=0 // loop_header_branch
    %17 = sbr.rel (%p15) target = $region8
  $region5: #{upconv_block_forward.1} parent=0 // loop_body
    %s19 = ssub.s32 %s14, 1
    %s20 = ssub.s32 %s14, 2
    %s21 = sadd.s32 %s14, 1
    %s22 = ssub.s32 %s14, %s21
    %p23 = scmp.eq.s32.totalorder %s22, 0
    %s25 = sadd.s32 %s24, 1
    %s26 = scalar_select %p23, %s24, %s25
    %p29 = pneg %p23
    %p30 = scmp.eq.s32.totalorder %s14, 1
    %p31 = por %p29, %p30
    %p32 = scmp.ne.s32.totalorder %s24, %s27
    %p33 = scmp.eq.s32.totalorder %s14, 0
    %p34 = por %p32, %p33
    %p35 = scmp.ne.s32.totalorder %s24, %s27
    %p36 = scmp.eq.s32.totalorder %s19, 1
    %p37 = por %p35, %p36
    %p38 = scmp.ne.s32.totalorder %s27, %s28
    %p39 = scmp.eq.s32.totalorder %s19, 0
    %p40 = por %p38, %p39
    %p41 = scmp.ne.s32.totalorder %s27, %s28
    %p42 = scmp.eq.s32.totalorder %s20, 1
    %p43 = por %p41, %p42
    %p45 = scmp.ne.s32.totalorder %s28, %s44
    %p46 = scmp.eq.s32.totalorder %s20, 0
    %p47 = por %p45, %p46
    %s48 = ssub.s32 %s14, %s21
    %p49 = scmp.eq.s32.totalorder %s48, 0
    %s51 = sadd.s32 %s50, 1
    %s52 = scalar_select %p49, %s50, %s51
    %p55 = pneg %p49
    %p56 = scmp.eq.s32.totalorder %s14, 1
    %p57 = por %p55, %p56
    %p58 = scmp.ne.s32.totalorder %s50, %s53
    %p59 = scmp.eq.s32.totalorder %s14, 0
    %p60 = por %p58, %p59
    %p61 = scmp.ne.s32.totalorder %s50, %s53
    %p62 = scmp.eq.s32.totalorder %s19, 1
    %p63 = por %p61, %p62
    %p64 = scmp.ne.s32.totalorder %s53, %s54
    %p65 = scmp.eq.s32.totalorder %s19, 0
    %p66 = por %p64, %p65
    %p67 = scmp.ne.s32.totalorder %s53, %s54
    %p68 = scmp.eq.s32.totalorder %s20, 1
    %p69 = por %p67, %p68
    %p71 = scmp.ne.s32.totalorder %s54, %s70
    %p72 = scmp.eq.s32.totalorder %s20, 0
    %p73 = por %p71, %p72
    %s75 = sadd.s32 %s74, 1
    %p78 = scmp.eq.s32.totalorder %s14, 1
    %p79 = scmp.ne.s32.totalorder %s74, %s76
    %p80 = scmp.eq.s32.totalorder %s14, 0
    %p81 = por %p79, %p80
    %p82 = scmp.ne.s32.totalorder %s74, %s76
    %p83 = scmp.eq.s32.totalorder %s19, 1
    %p84 = por %p82, %p83
    %p85 = scmp.ne.s32.totalorder %s76, %s77
    %p86 = scmp.eq.s32.totalorder %s19, 0
    %p87 = por %p85, %p86
    %p88 = scmp.ne.s32.totalorder %s76, %s77
    %p89 = scmp.eq.s32.totalorder %s20, 1
    %p90 = por %p88, %p89
    %p92 = scmp.ne.s32.totalorder %s77, %s91
    %p93 = scmp.eq.s32.totalorder %s20, 0
    %p94 = por %p92, %p93
    %s96 = sadd.s32 %s95, 1
    %p99 = scmp.eq.s32.totalorder %s14, 1
    %p100 = scmp.ne.s32.totalorder %s95, %s97
    %p101 = scmp.eq.s32.totalorder %s14, 0
    %p102 = por %p100, %p101
    %p103 = scmp.ne.s32.totalorder %s95, %s97
    %p104 = scmp.eq.s32.totalorder %s19, 1
    %p105 = por %p103, %p104
    %p106 = scmp.ne.s32.totalorder %s97, %s98
    %p107 = scmp.eq.s32.totalorder %s19, 0
    %p108 = por %p106, %p107
    %p109 = scmp.ne.s32.totalorder %s97, %s98
    %p110 = scmp.eq.s32.totalorder %s20, 1
    %p111 = por %p109, %p110
    %p113 = scmp.ne.s32.totalorder %s98, %s112
    %p114 = scmp.eq.s32.totalorder %s20, 0
    %p115 = por %p113, %p114
    %s117 = sadd.s32 %s116, 1
    %p120 = scmp.eq.s32.totalorder %s14, 1
    %p121 = scmp.ne.s32.totalorder %s116, %s118
    %p122 = scmp.eq.s32.totalorder %s14, 0
    %p123 = por %p121, %p122
    %p124 = scmp.ne.s32.totalorder %s116, %s118
    %p125 = scmp.eq.s32.totalorder %s19, 1
    %p126 = por %p124, %p125
    %p127 = scmp.ne.s32.totalorder %s118, %s119
    %p128 = scmp.eq.s32.totalorder %s19, 0
    %p129 = por %p127, %p128
    %p130 = scmp.ne.s32.totalorder %s118, %s119
    %p131 = scmp.eq.s32.totalorder %s20, 1
    %p132 = por %p130, %p131
    %p134 = scmp.ne.s32.totalorder %s119, %s133
    %p135 = scmp.eq.s32.totalorder %s20, 0
    %p136 = por %p134, %p135
    %s138 = sadd.s32 %s137, 1
    %p141 = scmp.eq.s32.totalorder %s14, 1
    %p142 = scmp.ne.s32.totalorder %s137, %s139
    %p143 = scmp.eq.s32.totalorder %s14, 0
    %p144 = por %p142, %p143
    %p145 = scmp.ne.s32.totalorder %s137, %s139
    %p146 = scmp.eq.s32.totalorder %s19, 1
    %p147 = por %p145, %p146
    %p148 = scmp.ne.s32.totalorder %s139, %s140
    %p149 = scmp.eq.s32.totalorder %s19, 0
    %p150 = por %p148, %p149
    %p151 = scmp.ne.s32.totalorder %s139, %s140
    %p152 = scmp.eq.s32.totalorder %s20, 1
    %p153 = por %p151, %p152
    %p155 = scmp.ne.s32.totalorder %s140, %s154
    %p156 = scmp.eq.s32.totalorder %s20, 0
    %p157 = por %p155, %p156
    %s159 = sadd.s32 %s158, 1
    %p162 = scmp.eq.s32.totalorder %s14, 1
    %p163 = scmp.ne.s32.totalorder %s158, %s160
    %p164 = scmp.eq.s32.totalorder %s14, 0
    %p165 = por %p163, %p164
    %p166 = scmp.ne.s32.totalorder %s158, %s160
    %p167 = scmp.eq.s32.totalorder %s19, 1
    %p168 = por %p166, %p167
    %p169 = scmp.ne.s32.totalorder %s160, %s161
    %p170 = scmp.eq.s32.totalorder %s19, 0
    %p171 = por %p169, %p170
    %p172 = scmp.ne.s32.totalorder %s160, %s161
    %p173 = scmp.eq.s32.totalorder %s20, 1
    %p174 = por %p172, %p173
    %p176 = scmp.ne.s32.totalorder %s161, %s175
    %p177 = scmp.eq.s32.totalorder %s20, 0
    %p178 = por %p176, %p177
    %s180 = sadd.s32 %s179, 1
    %p183 = scmp.eq.s32.totalorder %s14, 1
    %p184 = scmp.ne.s32.totalorder %s179, %s181
    %p185 = scmp.eq.s32.totalorder %s14, 0
    %p186 = por %p184, %p185
    %p187 = scmp.ne.s32.totalorder %s179, %s181
    %p188 = scmp.eq.s32.totalorder %s19, 1
    %p189 = por %p187, %p188
    %p190 = scmp.ne.s32.totalorder %s181, %s182
    %p191 = scmp.eq.s32.totalorder %s19, 0
    %p192 = por %p190, %p191
    %p193 = scmp.ne.s32.totalorder %s181, %s182
    %p194 = scmp.eq.s32.totalorder %s20, 1
    %p195 = por %p193, %p194
    %p197 = scmp.ne.s32.totalorder %s182, %s196
    %p198 = scmp.eq.s32.totalorder %s20, 0
    %p199 = por %p197, %p198
    %s200 = ssub.s32 %s14, %s21
    %p201 = scmp.eq.s32.totalorder %s200, 0
    %s203 = sadd.s32 %s202, 1
    %s204 = scalar_select %p201, %s202, %s203
    %p207 = pneg %p201
    %p208 = scmp.eq.s32.totalorder %s14, 1
    %p209 = por %p207, %p208
    %p210 = scmp.ne.s32.totalorder %s202, %s205
    %p211 = scmp.eq.s32.totalorder %s14, 0
    %p212 = por %p210, %p211
    %p213 = scmp.ne.s32.totalorder %s202, %s205
    %p214 = scmp.eq.s32.totalorder %s19, 1
    %p215 = por %p213, %p214
    %p216 = scmp.ne.s32.totalorder %s205, %s206
    %p217 = scmp.eq.s32.totalorder %s19, 0
    %p218 = por %p216, %p217
    %p219 = scmp.ne.s32.totalorder %s205, %s206
    %p220 = scmp.eq.s32.totalorder %s20, 1
    %p221 = por %p219, %p220
    %p223 = scmp.ne.s32.totalorder %s206, %s222
    %p224 = scmp.eq.s32.totalorder %s20, 0
    %p225 = por %p223, %p224
    %p226 = scmp.le.s32.totalorder 1, %s14
    %p227 = scmp.lt.s32.totalorder %s14, 3
    %p228 = pnand %p226, %p227
    %p229 = pneg %p228
    // Predicated region
    $region9: #{upconv_block_forward.1} parent=5 // pred_check
      _
    $region10: #{upconv_block_forward.1} parent=5 // pred_check_branch
      %231 = sbr.rel (%p228) target = $region12
    $region11: #{upconv_block_forward.1} parent=5 // pred_region
      %s232 = ssub.s32 %s14, 1
      // Predicated region
      $region13: #{upconv_block_forward.1} parent=11 // pred_check
        %p233 = pneg %p87
      $region14: #{upconv_block_forward.1} parent=11 // pred_check_branch
        %235 = sbr.rel (%p233) target = $region16
      $region15: #{upconv_block_forward.1} parent=11 // pred_region
        _
      $region16: #{upconv_block_forward.1} parent=11 // pred_fallthru
        _
      // Predicated region
      $region17: #{upconv_block_forward.1} parent=11 // pred_check
        %p236 = pneg %p108
      $region18: #{upconv_block_forward.1} parent=11 // pred_check_branch
        %238 = sbr.rel (%p236) target = $region20
      $region19: #{upconv_block_forward.1} parent=11 // pred_region
        _
      $region20: #{upconv_block_forward.1} parent=11 // pred_fallthru
        _
      // Predicated region
      $region21: #{upconv_block_forward.1} parent=11 // pred_check
        %p239 = pneg %p129
      $region22: #{upconv_block_forward.1} parent=11 // pred_check_branch
        %241 = sbr.rel (%p239) target = $region24
      $region23: #{upconv_block_forward.1} parent=11 // pred_region
        _
      $region24: #{upconv_block_forward.1} parent=11 // pred_fallthru
        _
      // Predicated region
      $region25: #{upconv_block_forward.1} parent=11 // pred_check
        %p242 = pneg %p150
      $region26: #{upconv_block_forward.1} parent=11 // pred_check_branch
        %244 = sbr.rel (%p242) target = $region28
      $region27: #{upconv_block_forward.1} parent=11 // pred_region
        _
      $region28: #{upconv_block_forward.1} parent=11 // pred_fallthru
        _
      // Predicated region
      $region29: #{upconv_block_forward.1} parent=11 // pred_check
        %p245 = pneg %p171
      $region30: #{upconv_block_forward.1} parent=11 // pred_check_branch
        %247 = sbr.rel (%p245) target = $region32
      $region31: #{upconv_block_forward.1} parent=11 // pred_region
        _
      $region32: #{upconv_block_forward.1} parent=11 // pred_fallthru
        _
      // Predicated region
      $region33: #{upconv_block_forward.1} parent=11 // pred_check
        %p248 = pneg %p192
      $region34: #{upconv_block_forward.1} parent=11 // pred_check_branch
        %250 = sbr.rel (%p248) target = $region36
      $region35: #{upconv_block_forward.1} parent=11 // pred_region
        _
      $region36: #{upconv_block_forward.1} parent=11 // pred_fallthru
        _
    $region12: #{upconv_block_forward.1} parent=5 // pred_fallthru
      _
    %p251 = scmp.lt.s32.totalorder %s14, 2
    // Predicated region
    $region37: #{upconv_block_forward.1} parent=5 // pred_check
      %p252 = pneg %p251
    $region38: #{upconv_block_forward.1} parent=5 // pred_check_branch
      %254 = sbr.rel (%p252) target = $region40
    $region39: #{upconv_block_forward.1} parent=5 // pred_region
      // Predicated region
      $region41: #{upconv_block_forward.1} parent=39 // pred_check
        %p255 = pneg %p34
      $region42: #{upconv_block_forward.1} parent=39 // pred_check_branch
        %257 = sbr.rel (%p255) target = $region44
      $region43: #{upconv_block_forward.1} parent=39 // pred_region
        %p258 = scmp.lt.s32.totalorder %s14, 1
        %s259 = scalar_select %p258, %s14, 1
        %s260 = smul.addr %s259, 32
        %s261 = smul.addr %s260, 8
        %s262 = scalar_lea.vmem %s0, %s261
      $region44: #{upconv_block_forward.1} parent=39 // pred_fallthru
        _
      // Predicated region
      $region45: #{upconv_block_forward.1} parent=39 // pred_check
        %p263 = pneg %p60
      $region46: #{upconv_block_forward.1} parent=39 // pred_check_branch
        %265 = sbr.rel (%p263) target = $region48
      $region47: #{upconv_block_forward.1} parent=39 // pred_region
        %p266 = scmp.lt.s32.totalorder %s14, 1
        %s267 = scalar_select %p266, %s14, 1
        %s268 = smul.addr %s267, 32
        %s269 = smul.addr %s268, 8
        %s270 = scalar_lea.vmem %s1, %s269
      $region48: #{upconv_block_forward.1} parent=39 // pred_fallthru
        _
    $region40: #{upconv_block_forward.1} parent=5 // pred_fallthru
      _
    %p271 = scmp.le.s32.totalorder 1, %s14
    %p272 = scmp.lt.s32.totalorder %s14, 3
    %p273 = pnand %p271, %p272
    %p274 = pneg %p273
    // Predicated region
    $region49: #{upconv_block_forward.1} parent=5 // pred_check
      _
    $region50: #{upconv_block_forward.1} parent=5 // pred_check_branch
      %276 = sbr.rel (%p273) target = $region52
    $region51: #{upconv_block_forward.1} parent=5 // pred_region
      %s277 = ssub.s32 %s14, 1
      %p278 = scmp.lt.s32.totalorder %s19, 1
      %s279 = scalar_select %p278, %s19, 1
      %s280 = smul.addr %s279, 32
      %s281 = smul.addr %s280, 8
      %s282 = scalar_lea.vmem %s0, %s281
      %p283 = pneg %p40
      %p284 = pneg %p37
      %p285 = scmp.lt.s32.totalorder %s19, 1
      %s286 = scalar_select %p285, %s19, 1
      %s287 = smul.addr %s286, 32
      %s288 = smul.addr %s287, 8
      %s289 = scalar_lea.vmem %s1, %s288
      %p290 = pneg %p66
      %p291 = pneg %p63
      %p292 = pneg %p87
      %p293 = pneg %p84
      %p294 = pneg %p108
      %p295 = pneg %p105
      %p296 = pneg %p129
      %p297 = pneg %p126
      %p298 = pneg %p150
      %p299 = pneg %p147
      %p300 = pneg %p171
      %p301 = pneg %p168
      %p302 = pneg %p192
      %p303 = pneg %p189
      %p304 = pneg %p218
      %p305 = pneg %p215
      %p306 = scmp.lt.s32.totalorder %s19, 1
      %s307 = scalar_select %p306, %s19, 1
      %s308 = smul.addr %s307, 32
      %s309 = smul.addr %s308, 8
      %s310 = scalar_lea.vmem %s8, %s309
      %p311 = scmp.lt.s32.totalorder %s19, 1
      %s312 = scalar_select %p311, %s19, 1
      %s313 = smul.addr %s312, 32
      %s314 = smul.addr %s313, 8
      %s315 = scalar_lea.vmem %s0, %s314
      %p316 = scmp.lt.s32.totalorder %s19, 1
      %s317 = scalar_select %p316, %s19, 1
      %s318 = smul.addr %s317, 32
      %s319 = smul.addr %s318, 8
      %s320 = scalar_lea.vmem %s1, %s319
      %p321 = scmp.lt.s32.totalorder %s19, 1
      %s322 = scalar_select %p321, %s19, 1
      %s323 = smul.addr %s322, 32
      %s324 = smul.addr %s323, 8
      %s325 = scalar_lea.vmem %s8, %s324
      %326 = vst [vmem:[#allocation2] sm:$0xff] 0.0
      %327 = vst [vmem:[#allocation2 + $0x8] sm:$0xff] 0.0
      %328 = vst [vmem:[#allocation2 + $0x10] sm:$0x3] 0.0
      %329 = vst [vmem:[#allocation2 + $0x18] sm:$0xff] 0.0
      %330 = vst [vmem:[#allocation2 + $0x20] sm:$0xff] 0.0
      %331 = vst [vmem:[#allocation2 + $0x28] sm:$0x3] 0.0
      %332 = vst [vmem:[#allocation2 + $0x30] sm:$0xff] 0.0
      %333 = vst [vmem:[#allocation2 + $0x38] sm:$0xff] 0.0
      %334 = vst [vmem:[#allocation2 + $0x40] sm:$0x3] 0.0
      %335 = vst [vmem:[#allocation2 + $0x48] sm:$0xff] 0.0
      %336 = vst [vmem:[#allocation2 + $0x50] sm:$0xff] 0.0
      %337 = vst [vmem:[#allocation2 + $0x58] sm:$0x3] 0.0
      %338 = vst [vmem:[#allocation2 + $0x60] sm:$0xff] 0.0
      %339 = vst [vmem:[#allocation2 + $0x68] sm:$0xff] 0.0
      %340 = vst [vmem:[#allocation2 + $0x70] sm:$0x3] 0.0
      %341 = vst [vmem:[#allocation2 + $0x78] sm:$0xff] 0.0
      %342 = vst [vmem:[#allocation2 + $0x80] sm:$0xff] 0.0
      %343 = vst [vmem:[#allocation2 + $0x88] sm:$0x3] 0.0
      %344 = vst [vmem:[#allocation2 + $0x90] sm:$0xff] 0.0
      %345 = vst [vmem:[#allocation2 + $0x98] sm:$0xff] 0.0
      %346 = vst [vmem:[#allocation2 + $0xa0] sm:$0x3] 0.0
      %347 = vst [vmem:[#allocation2 + $0xa8] sm:$0xff] 0.0
      %348 = vst [vmem:[#allocation2 + $0xb0] sm:$0xff] 0.0
      %349 = vst [vmem:[#allocation2 + $0xb8] sm:$0x3] 0.0
      %350 = vst [vmem:[#allocation2 + $0xc0] sm:$0xff] 0.0
      %351 = vst [vmem:[#allocation2 + $0xc8] sm:$0xff] 0.0
      %352 = vst [vmem:[#allocation2 + $0xd0] sm:$0x3] 0.0
      %353 = vst [vmem:[#allocation2 + $0xd8] sm:$0xff] 0.0
      %354 = vst [vmem:[#allocation2 + $0xe0] sm:$0xff] 0.0
      %355 = vst [vmem:[#allocation2 + $0xe8] sm:$0x3] 0.0
      %356 = vst [vmem:[#allocation2 + $0xf0] sm:$0xff] 0.0
      %357 = vst [vmem:[#allocation2 + $0xf8] sm:$0xff] 0.0
      %358 = vst [vmem:[#allocation2 + $0x100] sm:$0x3] 0.0
      %359 = vst [vmem:[#allocation2 + $0x108] sm:$0xff] 0.0
      %360 = vst [vmem:[#allocation2 + $0x110] sm:$0xff] 0.0
      %361 = vst [vmem:[#allocation2 + $0x118] sm:$0x3] 0.0
      %362 = vst [vmem:[#allocation2 + $0x120] sm:$0xff] 0.0
      %363 = vst [vmem:[#allocation2 + $0x128] sm:$0xff] 0.0
      %364 = vst [vmem:[#allocation2 + $0x130] sm:$0x3] 0.0
      %365 = vst [vmem:[#allocation2 + $0x138] sm:$0xff] 0.0
      %366 = vst [vmem:[#allocation2 + $0x140] sm:$0xff] 0.0
      %367 = vst [vmem:[#allocation2 + $0x148] sm:$0x3] 0.0
      %368 = vst [vmem:[#allocation2 + $0x150] sm:$0xff] 0.0
      %369 = vst [vmem:[#allocation2 + $0x158] sm:$0xff] 0.0
      %370 = vst [vmem:[#allocation2 + $0x160] sm:$0x3] 0.0
      %371 = vst [vmem:[#allocation2 + $0x168] sm:$0xff] 0.0
      %372 = vst [vmem:[#allocation2 + $0x170] sm:$0xff] 0.0
      %373 = vst [vmem:[#allocation2 + $0x178] sm:$0x3] 0.0
      %374 = vst [vmem:[#allocation2 + $0x180] sm:$0xff] 0.0
      %375 = vst [vmem:[#allocation2 + $0x188] sm:$0xff] 0.0
      %376 = vst [vmem:[#allocation2 + $0x190] sm:$0x3] 0.0
      %377 = vst [vmem:[#allocation2 + $0x198] sm:$0xff] 0.0
      %378 = vst [vmem:[#allocation2 + $0x1a0] sm:$0xff] 0.0
      %379 = vst [vmem:[#allocation2 + $0x1a8] sm:$0x3] 0.0
      %v380 = vld [vmem:[%s315] sm:$0xff]
      %v381 = vld [vmem:[%s315 + $0x8] sm:$0xff]
      %v382 = vld [vmem:[%s315 + $0x10] sm:$0xff]
      %v383 = vld [vmem:[%s315 + $0x18] sm:$0xff]
      %v384 = vld [vmem:[%s315 + $0x20] sm:$0xff]
      %v385 = vld [vmem:[%s315 + $0x28] sm:$0xff]
      %v386 = vld [vmem:[%s315 + $0x30] sm:$0xff]
      %v387 = vld [vmem:[%s315 + $0x38] sm:$0xff]
      %v388 = vld [vmem:[%s315 + $0x40] sm:$0xff]
      %v389 = vld [vmem:[%s315 + $0x48] sm:$0xff]
      %v390 = vld [vmem:[%s315 + $0x50] sm:$0xff]
      %v391 = vld [vmem:[%s315 + $0x58] sm:$0xff]
      %v392 = vld [vmem:[%s315 + $0x60] sm:$0xff]
      %v393 = vld [vmem:[%s315 + $0x68] sm:$0xff]
      %v394 = vld [vmem:[%s315 + $0x70] sm:$0xff]
      %v395 = vld [vmem:[%s315 + $0x78] sm:$0xff]
      %v396 = vld [vmem:[%s315 + $0x80] sm:$0xff]
      %v397 = vld [vmem:[%s315 + $0x88] sm:$0xff]
      %v398 = vld [vmem:[%s315 + $0x90] sm:$0xff]
      %v399 = vld [vmem:[%s315 + $0x98] sm:$0xff]
      %v400 = vld [vmem:[%s315 + $0xa0] sm:$0xff]
      %v401 = vld [vmem:[%s315 + $0xa8] sm:$0xff]
      %v402 = vld [vmem:[%s315 + $0xb0] sm:$0xff]
      %v403 = vld [vmem:[%s315 + $0xb8] sm:$0xff]
      %v404 = vld [vmem:[%s315 + $0xc0] sm:$0xff]
      %v405 = vld [vmem:[%s315 + $0xc8] sm:$0xff]
      %v406 = vld [vmem:[%s315 + $0xd0] sm:$0xff]
      %v407 = vld [vmem:[%s315 + $0xd8] sm:$0xff]
      %v408 = vld [vmem:[%s315 + $0xe0] sm:$0xff]
      %v409 = vld [vmem:[%s315 + $0xe8] sm:$0xff]
      %v410 = vld [vmem:[%s315 + $0xf0] sm:$0xff]
      %v411 = vld [vmem:[%s315 + $0xf8] sm:$0xff]
      %s412 = scalar_lea.vmem [#allocation2], 24
      %vm413 = vcmask 31744
      %414 = vst.msk [vmem:[%s412 + $0x1] sm:$0xff] %vm413, %v380
      %415 = vst.msk [vmem:[%s412 + $0x9] sm:$0xff] %vm413, %v381
      %416 = vst.msk [vmem:[%s412 + $0x19] sm:$0xff] %vm413, %v382
      %417 = vst.msk [vmem:[%s412 + $0x21] sm:$0xff] %vm413, %v383
      %418 = vst.msk [vmem:[%s412 + $0x31] sm:$0xff] %vm413, %v384
      %419 = vst.msk [vmem:[%s412 + $0x39] sm:$0xff] %vm413, %v385
      %420 = vst.msk [vmem:[%s412 + $0x49] sm:$0xff] %vm413, %v386
      %421 = vst.msk [vmem:[%s412 + $0x51] sm:$0xff] %vm413, %v387
      %422 = vst.msk [vmem:[%s412 + $0x61] sm:$0xff] %vm413, %v388
      %423 = vst.msk [vmem:[%s412 + $0x69] sm:$0xff] %vm413, %v389
      %424 = vst.msk [vmem:[%s412 + $0x79] sm:$0xff] %vm413, %v390
      %425 = vst.msk [vmem:[%s412 + $0x81] sm:$0xff] %vm413, %v391
      %426 = vst.msk [vmem:[%s412 + $0x91] sm:$0xff] %vm413, %v392
      %427 = vst.msk [vmem:[%s412 + $0x99] sm:$0xff] %vm413, %v393
      %428 = vst.msk [vmem:[%s412 + $0xa9] sm:$0xff] %vm413, %v394
      %429 = vst.msk [vmem:[%s412 + $0xb1] sm:$0xff] %vm413, %v395
      %430 = vst.msk [vmem:[%s412 + $0xc1] sm:$0xff] %vm413, %v396
      %431 = vst.msk [vmem:[%s412 + $0xc9] sm:$0xff] %vm413, %v397
      %432 = vst.msk [vmem:[%s412 + $0xd9] sm:$0xff] %vm413, %v398
      %433 = vst.msk [vmem:[%s412 + $0xe1] sm:$0xff] %vm413, %v399
      %434 = vst.msk [vmem:[%s412 + $0xf1] sm:$0xff] %vm413, %v400
      %435 = vst.msk [vmem:[%s412 + $0xf9] sm:$0xff] %vm413, %v401
      %436 = vst.msk [vmem:[%s412 + $0x109] sm:$0xff] %vm413, %v402
      %437 = vst.msk [vmem:[%s412 + $0x111] sm:$0xff] %vm413, %v403
      %438 = vst.msk [vmem:[%s412 + $0x121] sm:$0xff] %vm413, %v404
      %439 = vst.msk [vmem:[%s412 + $0x129] sm:$0xff] %vm413, %v405
      %440 = vst.msk [vmem:[%s412 + $0x139] sm:$0xff] %vm413, %v406
      %441 = vst.msk [vmem:[%s412 + $0x141] sm:$0xff] %vm413, %v407
      %442 = vst.msk [vmem:[%s412 + $0x151] sm:$0xff] %vm413, %v408
      %443 = vst.msk [vmem:[%s412 + $0x159] sm:$0xff] %vm413, %v409
      %444 = vst.msk [vmem:[%s412 + $0x169] sm:$0xff] %vm413, %v410
      %445 = vst.msk [vmem:[%s412 + $0x171] sm:$0xff] %vm413, %v411
      %v446 = vld [vmem:[%s320] sm:$0xff]
      %v447 = vld [vmem:[%s320 + $0x8] sm:$0xff]
      %v448 = vld [vmem:[%s320 + $0x10] sm:$0xff]
      %v449 = vld [vmem:[%s320 + $0x18] sm:$0xff]
      %v450 = vld [vmem:[%s320 + $0x20] sm:$0xff]
      %v451 = vld [vmem:[%s320 + $0x28] sm:$0xff]
      %v452 = vld [vmem:[%s320 + $0x30] sm:$0xff]
      %v453 = vld [vmem:[%s320 + $0x38] sm:$0xff]
      %v454 = vld [vmem:[%s320 + $0x40] sm:$0xff]
      %v455 = vld [vmem:[%s320 + $0x48] sm:$0xff]
      %v456 = vld [vmem:[%s320 + $0x50] sm:$0xff]
      %v457 = vld [vmem:[%s320 + $0x58] sm:$0xff]
      %v458 = vld [vmem:[%s320 + $0x60] sm:$0xff]
      %v459 = vld [vmem:[%s320 + $0x68] sm:$0xff]
      %v460 = vld [vmem:[%s320 + $0x70] sm:$0xff]
      %v461 = vld [vmem:[%s320 + $0x78] sm:$0xff]
      %v462 = vld [vmem:[%s320 + $0x80] sm:$0xff]
      %v463 = vld [vmem:[%s320 + $0x88] sm:$0xff]
      %v464 = vld [vmem:[%s320 + $0x90] sm:$0xff]
      %v465 = vld [vmem:[%s320 + $0x98] sm:$0xff]
      %v466 = vld [vmem:[%s320 + $0xa0] sm:$0xff]
      %v467 = vld [vmem:[%s320 + $0xa8] sm:$0xff]
      %v468 = vld [vmem:[%s320 + $0xb0] sm:$0xff]
      %v469 = vld [vmem:[%s320 + $0xb8] sm:$0xff]
      %v470 = vld [vmem:[%s320 + $0xc0] sm:$0xff]
      %v471 = vld [vmem:[%s320 + $0xc8] sm:$0xff]
      %v472 = vld [vmem:[%s320 + $0xd0] sm:$0xff]
      %v473 = vld [vmem:[%s320 + $0xd8] sm:$0xff]
      %v474 = vld [vmem:[%s320 + $0xe0] sm:$0xff]
      %v475 = vld [vmem:[%s320 + $0xe8] sm:$0xff]
      %v476 = vld [vmem:[%s320 + $0xf0] sm:$0xff]
      %v477 = vld [vmem:[%s320 + $0xf8] sm:$0xff]
      %510 = vrot.lane.b32.xlu0 %v446, 4
      %v511 = vpop.permute.xlu0 %510
      %512 = vrot.lane.b32.xlu0 %v447, 4
      %v513 = vpop.permute.xlu0 %512
      %514 = vrot.lane.b32.xlu0 %v448, 4
      %v515 = vpop.permute.xlu0 %514
      %516 = vrot.lane.b32.xlu0 %v449, 4
      %v517 = vpop.permute.xlu0 %516
      %518 = vrot.lane.b32.xlu0 %v450, 4
      %v519 = vpop.permute.xlu0 %518
      %520 = vrot.lane.b32.xlu0 %v451, 4
      %v521 = vpop.permute.xlu0 %520
      %522 = vrot.lane.b32.xlu0 %v452, 4
      %v523 = vpop.permute.xlu0 %522
      %524 = vrot.lane.b32.xlu0 %v453, 4
      %v525 = vpop.permute.xlu0 %524
      %526 = vrot.lane.b32.xlu0 %v454, 4
      %v527 = vpop.permute.xlu0 %526
      %528 = vrot.lane.b32.xlu0 %v455, 4
      %v529 = vpop.permute.xlu0 %528
      %530 = vrot.lane.b32.xlu0 %v456, 4
      %v531 = vpop.permute.xlu0 %530
      %532 = vrot.lane.b32.xlu0 %v457, 4
      %v533 = vpop.permute.xlu0 %532
      %534 = vrot.lane.b32.xlu0 %v458, 4
      %v535 = vpop.permute.xlu0 %534
      %536 = vrot.lane.b32.xlu0 %v459, 4
      %v537 = vpop.permute.xlu0 %536
      %538 = vrot.lane.b32.xlu0 %v460, 4
      %v539 = vpop.permute.xlu0 %538
      %540 = vrot.lane.b32.xlu0 %v461, 4
      %v541 = vpop.permute.xlu0 %540
      %542 = vrot.lane.b32.xlu0 %v462, 4
      %v543 = vpop.permute.xlu0 %542
      %544 = vrot.lane.b32.xlu0 %v463, 4
      %v545 = vpop.permute.xlu0 %544
      %546 = vrot.lane.b32.xlu0 %v464, 4
      %v547 = vpop.permute.xlu0 %546
      %548 = vrot.lane.b32.xlu0 %v465, 4
      %v549 = vpop.permute.xlu0 %548
      %550 = vrot.lane.b32.xlu0 %v466, 4
      %v551 = vpop.permute.xlu0 %550
      %552 = vrot.lane.b32.xlu0 %v467, 4
      %v553 = vpop.permute.xlu0 %552
      %554 = vrot.lane.b32.xlu0 %v468, 4
      %v555 = vpop.permute.xlu0 %554
      %556 = vrot.lane.b32.xlu0 %v469, 4
      %v557 = vpop.permute.xlu0 %556
      %558 = vrot.lane.b32.xlu0 %v470, 4
      %v559 = vpop.permute.xlu0 %558
      %560 = vrot.lane.b32.xlu0 %v471, 4
      %v561 = vpop.permute.xlu0 %560
      %562 = vrot.lane.b32.xlu0 %v472, 4
      %v563 = vpop.permute.xlu0 %562
      %564 = vrot.lane.b32.xlu0 %v473, 4
      %v565 = vpop.permute.xlu0 %564
      %566 = vrot.lane.b32.xlu0 %v474, 4
      %v567 = vpop.permute.xlu0 %566
      %568 = vrot.lane.b32.xlu0 %v475, 4
      %v569 = vpop.permute.xlu0 %568
      %570 = vrot.lane.b32.xlu0 %v476, 4
      %v571 = vpop.permute.xlu0 %570
      %572 = vrot.lane.b32.xlu0 %v477, 4
      %v573 = vpop.permute.xlu0 %572
      %vm606 = vcmask 64544
      %607 = vst.msk [vmem:[%s412 + $0x1] sm:$0xff] %vm606, %v511
      %608 = vst.msk [vmem:[%s412 + $0x9] sm:$0xff] %vm606, %v513
      %609 = vst.msk [vmem:[%s412 + $0x19] sm:$0xff] %vm606, %v515
      %610 = vst.msk [vmem:[%s412 + $0x21] sm:$0xff] %vm606, %v517
      %611 = vst.msk [vmem:[%s412 + $0x31] sm:$0xff] %vm606, %v519
      %612 = vst.msk [vmem:[%s412 + $0x39] sm:$0xff] %vm606, %v521
      %613 = vst.msk [vmem:[%s412 + $0x49] sm:$0xff] %vm606, %v523
      %614 = vst.msk [vmem:[%s412 + $0x51] sm:$0xff] %vm606, %v525
      %615 = vst.msk [vmem:[%s412 + $0x61] sm:$0xff] %vm606, %v527
      %616 = vst.msk [vmem:[%s412 + $0x69] sm:$0xff] %vm606, %v529
      %617 = vst.msk [vmem:[%s412 + $0x79] sm:$0xff] %vm606, %v531
      %618 = vst.msk [vmem:[%s412 + $0x81] sm:$0xff] %vm606, %v533
      %619 = vst.msk [vmem:[%s412 + $0x91] sm:$0xff] %vm606, %v535
      %620 = vst.msk [vmem:[%s412 + $0x99] sm:$0xff] %vm606, %v537
      %621 = vst.msk [vmem:[%s412 + $0xa9] sm:$0xff] %vm606, %v539
      %622 = vst.msk [vmem:[%s412 + $0xb1] sm:$0xff] %vm606, %v541
      %623 = vst.msk [vmem:[%s412 + $0xc1] sm:$0xff] %vm606, %v543
      %624 = vst.msk [vmem:[%s412 + $0xc9] sm:$0xff] %vm606, %v545
      %625 = vst.msk [vmem:[%s412 + $0xd9] sm:$0xff] %vm606, %v547
      %626 = vst.msk [vmem:[%s412 + $0xe1] sm:$0xff] %vm606, %v549
      %627 = vst.msk [vmem:[%s412 + $0xf1] sm:$0xff] %vm606, %v551
      %628 = vst.msk [vmem:[%s412 + $0xf9] sm:$0xff] %vm606, %v553
      %629 = vst.msk [vmem:[%s412 + $0x109] sm:$0xff] %vm606, %v555
      %630 = vst.msk [vmem:[%s412 + $0x111] sm:$0xff] %vm606, %v557
      %631 = vst.msk [vmem:[%s412 + $0x121] sm:$0xff] %vm606, %v559
      %632 = vst.msk [vmem:[%s412 + $0x129] sm:$0xff] %vm606, %v561
      %633 = vst.msk [vmem:[%s412 + $0x139] sm:$0xff] %vm606, %v563
      %634 = vst.msk [vmem:[%s412 + $0x141] sm:$0xff] %vm606, %v565
      %635 = vst.msk [vmem:[%s412 + $0x151] sm:$0xff] %vm606, %v567
      %636 = vst.msk [vmem:[%s412 + $0x159] sm:$0xff] %vm606, %v569
      %637 = vst.msk [vmem:[%s412 + $0x169] sm:$0xff] %vm606, %v571
      %638 = vst.msk [vmem:[%s412 + $0x171] sm:$0xff] %vm606, %v573
      %v639 = vld [vmem:[#allocation2] sm:$0xff]
      %v640 = vld [vmem:[#allocation2 + $0x8] sm:$0xff]
      %v641 = vld [vmem:[#allocation2 + $0x18] sm:$0xff]
      %v642 = vld [vmem:[#allocation2 + $0x20] sm:$0xff]
      %v643 = vld [vmem:[#allocation2 + $0x30] sm:$0xff]
      %v644 = vld [vmem:[#allocation2 + $0x38] sm:$0xff]
      %v645 = vld [vmem:[#allocation2 + $0x48] sm:$0xff]
      %v646 = vld [vmem:[#allocation2 + $0x50] sm:$0xff]
      %v647 = vld [vmem:[#allocation2 + $0x60] sm:$0xff]
      %v648 = vld [vmem:[#allocation2 + $0x68] sm:$0xff]
      %v649 = vld [vmem:[#allocation2 + $0x78] sm:$0xff]
      %v650 = vld [vmem:[#allocation2 + $0x80] sm:$0xff]
      %v651 = vld [vmem:[#allocation2 + $0x90] sm:$0xff]
      %v652 = vld [vmem:[#allocation2 + $0x98] sm:$0xff]
      %v653 = vld [vmem:[#allocation2 + $0xa8] sm:$0xff]
      %v654 = vld [vmem:[#allocation2 + $0xb0] sm:$0xff]
      %v655 = vld [vmem:[#allocation2 + $0xc0] sm:$0xff]
      %v656 = vld [vmem:[#allocation2 + $0xc8] sm:$0xff]
      %v657 = vld [vmem:[#allocation2 + $0xd8] sm:$0xff]
      %v658 = vld [vmem:[#allocation2 + $0xe0] sm:$0xff]
      %v659 = vld [vmem:[#allocation2 + $0xf0] sm:$0xff]
      %v660 = vld [vmem:[#allocation2 + $0xf8] sm:$0xff]
      %v661 = vld [vmem:[#allocation2 + $0x108] sm:$0xff]
      %v662 = vld [vmem:[#allocation2 + $0x110] sm:$0xff]
      %v663 = vld [vmem:[#allocation2 + $0x120] sm:$0xff]
      %v664 = vld [vmem:[#allocation2 + $0x128] sm:$0xff]
      %v665 = vld [vmem:[#allocation2 + $0x138] sm:$0xff]
      %v666 = vld [vmem:[#allocation2 + $0x140] sm:$0xff]
      %v667 = vld [vmem:[#allocation2 + $0x150] sm:$0xff]
      %v668 = vld [vmem:[#allocation2 + $0x158] sm:$0xff]
      %v669 = vld [vmem:[#allocation2 + $0x168] sm:$0xff]
      %v670 = vld [vmem:[#allocation2 + $0x170] sm:$0xff]
      %v671 = vld [vmem:[%s2] sm:$0xff]
      %v672 = vld [vmem:[%s2 + $0x8] sm:$0xff]
      %v673 = vld [vmem:[%s2 + $0x10] sm:$0xff]
      %v674 = vld [vmem:[%s2 + $0x18] sm:$0xff]
      %v675 = vld [vmem:[%s2 + $0x20] sm:$0xff]
      %v676 = vld [vmem:[%s2 + $0x28] sm:$0xff]
      %v677 = vld [vmem:[%s2 + $0x30] sm:$0xff]
      %v678 = vld [vmem:[%s2 + $0x38] sm:$0xff]
      %v679 = vld [vmem:[%s2 + $0x40] sm:$0xff]
      %v680 = vld [vmem:[%s2 + $0x48] sm:$0xff]
      %v681 = vld [vmem:[%s2 + $0x50] sm:$0xff]
      %v682 = vld [vmem:[%s2 + $0x58] sm:$0xff]
      %v683 = vld [vmem:[%s2 + $0x60] sm:$0xff]
      %v684 = vld [vmem:[%s2 + $0x68] sm:$0xff]
      %v685 = vld [vmem:[%s2 + $0x70] sm:$0xff]
      %v686 = vld [vmem:[%s2 + $0x78] sm:$0xff]
      %v687 = vld [vmem:[#allocation2 + $0x1] sm:$0xff]
      %v688 = vld [vmem:[#allocation2 + $0x9] sm:$0xff]
      %v689 = vld [vmem:[#allocation2 + $0x19] sm:$0xff]
      %v690 = vld [vmem:[#allocation2 + $0x21] sm:$0xff]
      %v691 = vld [vmem:[#allocation2 + $0x31] sm:$0xff]
      %v692 = vld [vmem:[#allocation2 + $0x39] sm:$0xff]
      %v693 = vld [vmem:[#allocation2 + $0x49] sm:$0xff]
      %v694 = vld [vmem:[#allocation2 + $0x51] sm:$0xff]
      %v695 = vld [vmem:[#allocation2 + $0x61] sm:$0xff]
      %v696 = vld [vmem:[#allocation2 + $0x69] sm:$0xff]
      %v697 = vld [vmem:[#allocation2 + $0x79] sm:$0xff]
      %v698 = vld [vmem:[#allocation2 + $0x81] sm:$0xff]
      %v699 = vld [vmem:[#allocation2 + $0x91] sm:$0xff]
      %v700 = vld [vmem:[#allocation2 + $0x99] sm:$0xff]
      %v701 = vld [vmem:[#allocation2 + $0xa9] sm:$0xff]
      %v702 = vld [vmem:[#allocation2 + $0xb1] sm:$0xff]
      %v703 = vld [vmem:[#allocation2 + $0xc1] sm:$0xff]
      %v704 = vld [vmem:[#allocation2 + $0xc9] sm:$0xff]
      %v705 = vld [vmem:[#allocation2 + $0xd9] sm:$0xff]
      %v706 = vld [vmem:[#allocation2 + $0xe1] sm:$0xff]
      %v707 = vld [vmem:[#allocation2 + $0xf1] sm:$0xff]
      %v708 = vld [vmem:[#allocation2 + $0xf9] sm:$0xff]
      %v709 = vld [vmem:[#allocation2 + $0x109] sm:$0xff]
      %v710 = vld [vmem:[#allocation2 + $0x111] sm:$0xff]
      %v711 = vld [vmem:[#allocation2 + $0x121] sm:$0xff]
      %v712 = vld [vmem:[#allocation2 + $0x129] sm:$0xff]
      %v713 = vld [vmem:[#allocation2 + $0x139] sm:$0xff]
      %v714 = vld [vmem:[#allocation2 + $0x141] sm:$0xff]
      %v715 = vld [vmem:[#allocation2 + $0x151] sm:$0xff]
      %v716 = vld [vmem:[#allocation2 + $0x159] sm:$0xff]
      %v717 = vld [vmem:[#allocation2 + $0x169] sm:$0xff]
      %v718 = vld [vmem:[#allocation2 + $0x171] sm:$0xff]
      %s719 = scalar_lea.vmem %s2, 128
      %v720 = vld [vmem:[%s719] sm:$0xff]
      %v721 = vld [vmem:[%s719 + $0x8] sm:$0xff]
      %v722 = vld [vmem:[%s719 + $0x10] sm:$0xff]
      %v723 = vld [vmem:[%s719 + $0x18] sm:$0xff]
      %v724 = vld [vmem:[%s719 + $0x20] sm:$0xff]
      %v725 = vld [vmem:[%s719 + $0x28] sm:$0xff]
      %v726 = vld [vmem:[%s719 + $0x30] sm:$0xff]
      %v727 = vld [vmem:[%s719 + $0x38] sm:$0xff]
      %v728 = vld [vmem:[%s719 + $0x40] sm:$0xff]
      %v729 = vld [vmem:[%s719 + $0x48] sm:$0xff]
      %v730 = vld [vmem:[%s719 + $0x50] sm:$0xff]
      %v731 = vld [vmem:[%s719 + $0x58] sm:$0xff]
      %v732 = vld [vmem:[%s719 + $0x60] sm:$0xff]
      %v733 = vld [vmem:[%s719 + $0x68] sm:$0xff]
      %v734 = vld [vmem:[%s719 + $0x70] sm:$0xff]
      %v735 = vld [vmem:[%s719 + $0x78] sm:$0xff]
      %736 = vmatprep.subr.mxu0 0.0
      %737 = vmatpush1.msra.mxu0 %v720
      %738 = vmatprep.subr.mxu0 0.0
      %739 = vmatpush1.msra.mxu0 %v721
      %740 = vmatprep.subr.mxu0 0.0
      %741 = vmatpush1.msra.mxu0 %v722
      %742 = vmatprep.subr.mxu0 0.0
      %743 = vmatpush1.msra.mxu0 %v723
      %744 = vmatprep.subr.mxu0 0.0
      %745 = vmatpush1.msra.mxu0 %v724
      %746 = vmatprep.subr.mxu0 0.0
      %747 = vmatpush1.msra.mxu0 %v725
      %748 = vmatprep.subr.mxu0 0.0
      %749 = vmatpush1.msra.mxu0 %v726
      %750 = vmatprep.subr.mxu0 0.0
      %751 = vmatpush1.msra.mxu0 %v727
      %752 = vmatprep.subr.mxu0 0.0
      %753 = vmatpush1.msra.mxu0 %v728
      %754 = vmatprep.subr.mxu0 0.0
      %755 = vmatpush1.msra.mxu0 %v729
      %756 = vmatprep.subr.mxu0 0.0
      %757 = vmatpush1.msra.mxu0 %v730
      %758 = vmatprep.subr.mxu0 0.0
      %759 = vmatpush1.msra.mxu0 %v731
      %760 = vmatprep.subr.mxu0 0.0
      %761 = vmatpush1.msra.mxu0 %v732
      %762 = vmatprep.subr.mxu0 0.0
      %763 = vmatpush1.msra.mxu0 %v733
      %764 = vmatprep.subr.mxu0 0.0
      %765 = vmatpush1.msra.mxu0 %v734
      %766 = vmatprep.subr.mxu0 0.0
      %767 = vmatpush1.msra.mxu0 %v735
      %768 = vmatprep.subr.mxu0 0.0
      %769 = vmatpush1.msra.mxu0 0.0
      %770 = vmatprep.subr.mxu0 0.0
      %771 = vmatpush1.msra.mxu0 0.0
      %772 = vmatprep.subr.mxu0 0.0
      %773 = vmatpush1.msra.mxu0 0.0
      %774 = vmatprep.subr.mxu0 0.0
      %775 = vmatpush1.msra.mxu0 0.0
      %776 = vmatprep.subr.mxu0 0.0
      %777 = vmatpush1.msra.mxu0 0.0
      %778 = vmatprep.subr.mxu0 0.0
      %779 = vmatpush1.msra.mxu0 0.0
      %780 = vmatprep.subr.mxu0 0.0
      %781 = vmatpush1.msra.mxu0 0.0
      %782 = vmatprep.subr.mxu0 0.0
      %783 = vmatpush1.msra.mxu0 0.0
      %784 = vmatprep.subr.mxu0 0.0
      %785 = vmatpush1.msra.mxu0 0.0
      %786 = vmatprep.subr.mxu0 0.0
      %787 = vmatpush1.msra.mxu0 0.0
      %788 = vmatprep.subr.mxu0 0.0
      %789 = vmatpush1.msra.mxu0 0.0
      %790 = vmatprep.subr.mxu0 0.0
      %791 = vmatpush1.msra.mxu0 0.0
      %792 = vmatprep.subr.mxu0 0.0
      %793 = vmatpush1.msra.mxu0 0.0
      %794 = vmatprep.subr.mxu0 0.0
      %795 = vmatpush1.msra.mxu0 0.0
      %796 = vmatprep.subr.mxu0 0.0
      %797 = vmatpush1.msra.mxu0 0.0
      %798 = vmatprep.subr.mxu0 0.0
      %799 = vmatpush1.msra.mxu0 0.0
      %800 = vmatprep.mubr.f32.mxu0 0.0
      %801 = vmatmul.mubr.f32.gmra.mrb[0].mxu0 %v687
      %v802 = vpop.f32.mrb[0].mxu0
      %v803 = vadd.f32 0.0, %v802
      %v804 = vpop.f32.mrb[0].mxu0
      %805 = vmatprep.mubr.f32.mxu0 0.0
      %806 = vmatmul.mubr.f32.gmra.mrb[0].mxu0 %v688
      %v807 = vpop.f32.mrb[0].mxu0
      %v808 = vadd.f32 0.0, %v807
      %v809 = vpop.f32.mrb[0].mxu0
      %810 = vmatprep.mubr.f32.mxu0 0.0
      %811 = vmatmul.mubr.f32.gmra.mrb[0].mxu0 %v689
      %v812 = vpop.f32.mrb[0].mxu0
      %v813 = vadd.f32 0.0, %v812
      %v814 = vpop.f32.mrb[0].mxu0
      %815 = vmatprep.mubr.f32.mxu0 0.0
      %816 = vmatmul.mubr.f32.gmra.mrb[0].mxu0 %v690
      %v817 = vpop.f32.mrb[0].mxu0
      %v818 = vadd.f32 0.0, %v817
      %v819 = vpop.f32.mrb[0].mxu0
      %820 = vmatprep.mubr.f32.mxu0 0.0
      %821 = vmatmul.mubr.f32.gmra.mrb[0].mxu0 %v691
      %v822 = vpop.f32.mrb[0].mxu0
      %v823 = vadd.f32 0.0, %v822
      %v824 = vpop.f32.mrb[0].mxu0
      %825 = vmatprep.mubr.f32.mxu0 0.0
      %826 = vmatmul.mubr.f32.gmra.mrb[0].mxu0 %v692
      %v827 = vpop.f32.mrb[0].mxu0
      %v828 = vadd.f32 0.0, %v827
      %v829 = vpop.f32.mrb[0].mxu0
      %830 = vmatprep.mubr.f32.mxu0 0.0
      %831 = vmatmul.mubr.f32.gmra.mrb[0].mxu0 %v693
      %v832 = vpop.f32.mrb[0].mxu0
      %v833 = vadd.f32 0.0, %v832
      %v834 = vpop.f32.mrb[0].mxu0
      %835 = vmatprep.mubr.f32.mxu0 0.0
      %836 = vmatmul.mubr.f32.gmra.mrb[0].mxu0 %v694
      %v837 = vpop.f32.mrb[0].mxu0
      %v838 = vadd.f32 0.0, %v837
      %v839 = vpop.f32.mrb[0].mxu0
      %840 = vmatprep.mubr.f32.mxu0 0.0
      %841 = vmatmul.mubr.f32.gmra.mrb[0].mxu0 %v695
      %v842 = vpop.f32.mrb[0].mxu0
      %v843 = vadd.f32 0.0, %v842
      %v844 = vpop.f32.mrb[0].mxu0
      %845 = vmatprep.mubr.f32.mxu0 0.0
      %846 = vmatmul.mubr.f32.gmra.mrb[0].mxu0 %v696
      %v847 = vpop.f32.mrb[0].mxu0
      %v848 = vadd.f32 0.0, %v847
      %v849 = vpop.f32.mrb[0].mxu0
      %850 = vmatprep.mubr.f32.mxu0 0.0
      %851 = vmatmul.mubr.f32.gmra.mrb[0].mxu0 %v697
      %v852 = vpop.f32.mrb[0].mxu0
      %v853 = vadd.f32 0.0, %v852
      %v854 = vpop.f32.mrb[0].mxu0
      %855 = vmatprep.mubr.f32.mxu0 0.0
      %856 = vmatmul.mubr.f32.gmra.mrb[0].mxu0 %v698
      %v857 = vpop.f32.mrb[0].mxu0
      %v858 = vadd.f32 0.0, %v857
      %v859 = vpop.f32.mrb[0].mxu0
      %860 = vmatprep.mubr.f32.mxu0 0.0
      %861 = vmatmul.mubr.f32.gmra.mrb[0].mxu0 %v699
      %v862 = vpop.f32.mrb[0].mxu0
      %v863 = vadd.f32 0.0, %v862
      %v864 = vpop.f32.mrb[0].mxu0
      %865 = vmatprep.mubr.f32.mxu0 0.0
      %866 = vmatmul.mubr.f32.gmra.mrb[0].mxu0 %v700
      %v867 = vpop.f32.mrb[0].mxu0
      %v868 = vadd.f32 0.0, %v867
      %v869 = vpop.f32.mrb[0].mxu0
      %870 = vmatprep.mubr.f32.mxu0 0.0
      %871 = vmatmul.mubr.f32.gmra.mrb[0].mxu0 %v701
      %v872 = vpop.f32.mrb[0].mxu0
      %v873 = vadd.f32 0.0, %v872
      %v874 = vpop.f32.mrb[0].mxu0
      %875 = vmatprep.mubr.f32.mxu0 0.0
      %876 = vmatmul.mubr.f32.gmra.mrb[0].mxu0 %v702
      %v877 = vpop.f32.mrb[0].mxu0
      %v878 = vadd.f32 0.0, %v877
      %v879 = vpop.f32.mrb[0].mxu0
      %880 = vmatprep.mubr.f32.mxu0 0.0
      %881 = vmatmul.mubr.f32.gmra.mrb[0].mxu0 %v703
      %v882 = vpop.f32.mrb[0].mxu0
      %v883 = vadd.f32 0.0, %v882
      %v884 = vpop.f32.mrb[0].mxu0
      %885 = vmatprep.mubr.f32.mxu0 0.0
      %886 = vmatmul.mubr.f32.gmra.mrb[0].mxu0 %v704
      %v887 = vpop.f32.mrb[0].mxu0
      %v888 = vadd.f32 0.0, %v887
      %v889 = vpop.f32.mrb[0].mxu0
      %890 = vmatprep.mubr.f32.mxu0 0.0
      %891 = vmatmul.mubr.f32.gmra.mrb[0].mxu0 %v705
      %v892 = vpop.f32.mrb[0].mxu0
      %v893 = vadd.f32 0.0, %v892
      %v894 = vpop.f32.mrb[0].mxu0
      %895 = vmatprep.mubr.f32.mxu0 0.0
      %896 = vmatmul.mubr.f32.gmra.mrb[0].mxu0 %v706
      %v897 = vpop.f32.mrb[0].mxu0
      %v898 = vadd.f32 0.0, %v897
      %v899 = vpop.f32.mrb[0].mxu0
      %900 = vmatprep.mubr.f32.mxu0 0.0
      %901 = vmatmul.mubr.f32.gmra.mrb[0].mxu0 %v707
      %v902 = vpop.f32.mrb[0].mxu0
      %v903 = vadd.f32 0.0, %v902
      %v904 = vpop.f32.mrb[0].mxu0
      %905 = vmatprep.mubr.f32.mxu0 0.0
      %906 = vmatmul.mubr.f32.gmra.mrb[0].mxu0 %v708
      %v907 = vpop.f32.mrb[0].mxu0
      %v908 = vadd.f32 0.0, %v907
      %v909 = vpop.f32.mrb[0].mxu0
      %910 = vmatprep.mubr.f32.mxu0 0.0
      %911 = vmatmul.mubr.f32.gmra.mrb[0].mxu0 %v709
      %v912 = vpop.f32.mrb[0].mxu0
      %v913 = vadd.f32 0.0, %v912
      %v914 = vpop.f32.mrb[0].mxu0
      %915 = vmatprep.mubr.f32.mxu0 0.0
      %916 = vmatmul.mubr.f32.gmra.mrb[0].mxu0 %v710
      %v917 = vpop.f32.mrb[0].mxu0
      %v918 = vadd.f32 0.0, %v917
      %v919 = vpop.f32.mrb[0].mxu0
      %920 = vmatprep.mubr.f32.mxu0 0.0
      %921 = vmatmul.mubr.f32.gmra.mrb[0].mxu0 %v711
      %v922 = vpop.f32.mrb[0].mxu0
      %v923 = vadd.f32 0.0, %v922
      %v924 = vpop.f32.mrb[0].mxu0
      %925 = vmatprep.mubr.f32.mxu0 0.0
      %926 = vmatmul.mubr.f32.gmra.mrb[0].mxu0 %v712
      %v927 = vpop.f32.mrb[0].mxu0
      %v928 = vadd.f32 0.0, %v927
      %v929 = vpop.f32.mrb[0].mxu0
      %930 = vmatprep.mubr.f32.mxu0 0.0
      %931 = vmatmul.mubr.f32.gmra.mrb[0].mxu0 %v713
      %v932 = vpop.f32.mrb[0].mxu0
      %v933 = vadd.f32 0.0, %v932
      %v934 = vpop.f32.mrb[0].mxu0
      %935 = vmatprep.mubr.f32.mxu0 0.0
      %936 = vmatmul.mubr.f32.gmra.mrb[0].mxu0 %v714
      %v937 = vpop.f32.mrb[0].mxu0
      %v938 = vadd.f32 0.0, %v937
      %v939 = vpop.f32.mrb[0].mxu0
      %940 = vmatprep.mubr.f32.mxu0 0.0
      %941 = vmatmul.mubr.f32.gmra.mrb[0].mxu0 %v715
      %v942 = vpop.f32.mrb[0].mxu0
      %v943 = vadd.f32 0.0, %v942
      %v944 = vpop.f32.mrb[0].mxu0
      %945 = vmatprep.mubr.f32.mxu0 0.0
      %946 = vmatmul.mubr.f32.gmra.mrb[0].mxu0 %v716
      %v947 = vpop.f32.mrb[0].mxu0
      %v948 = vadd.f32 0.0, %v947
      %v949 = vpop.f32.mrb[0].mxu0
      %950 = vmatprep.mubr.f32.mxu0 0.0
      %951 = vmatmul.mubr.f32.gmra.mrb[0].mxu0 %v717
      %v952 = vpop.f32.mrb[0].mxu0
      %v953 = vadd.f32 0.0, %v952
      %v954 = vpop.f32.mrb[0].mxu0
      %955 = vmatprep.mubr.f32.mxu0 0.0
      %956 = vmatmul.mubr.f32.gmra.mrb[0].mxu0 %v718
      %v957 = vpop.f32.mrb[0].mxu0
      %v958 = vadd.f32 0.0, %v957
      %v959 = vpop.f32.mrb[0].mxu0
      %960 = vdwg.mxu0
      %961 = vmatprep.subr.mxu0 0.0
      %962 = vmatpush1.msra.mxu0 %v671
      %963 = vmatprep.subr.mxu0 0.0
      %964 = vmatpush1.msra.mxu0 %v672
      %965 = vmatprep.subr.mxu0 0.0
      %966 = vmatpush1.msra.mxu0 %v673
      %967 = vmatprep.subr.mxu0 0.0
      %968 = vmatpush1.msra.mxu0 %v674
      %969 = vmatprep.subr.mxu0 0.0
      %970 = vmatpush1.msra.mxu0 %v675
      %971 = vmatprep.subr.mxu0 0.0
      %972 = vmatpush1.msra.mxu0 %v676
      %973 = vmatprep.subr.mxu0 0.0
      %974 = vmatpush1.msra.mxu0 %v677
      %975 = vmatprep.subr.mxu0 0.0
      %976 = vmatpush1.msra.mxu0 %v678
      %977 = vmatprep.subr.mxu0 0.0
      %978 = vmatpush1.msra.mxu0 %v679
      %979 = vmatprep.subr.mxu0 0.0
      %980 = vmatpush1.msra.mxu0 %v680
      %981 = vmatprep.subr.mxu0 0.0
      %982 = vmatpush1.msra.mxu0 %v681
      %983 = vmatprep.subr.mxu0 0.0
      %984 = vmatpush1.msra.mxu0 %v682
      %985 = vmatprep.subr.mxu0 0.0
      %986 = vmatpush1.msra.mxu0 %v683
      %987 = vmatprep.subr.mxu0 0.0
      %988 = vmatpush1.msra.mxu0 %v684
      %989 = vmatprep.subr.mxu0 0.0
      %990 = vmatpush1.msra.mxu0 %v685
      %991 = vmatprep.subr.mxu0 0.0
      %992 = vmatpush1.msra.mxu0 %v686
      %993 = vmatprep.subr.mxu0 0.0
      %994 = vmatpush1.msra.mxu0 0.0
      %995 = vmatprep.subr.mxu0 0.0
      %996 = vmatpush1.msra.mxu0 0.0
      %997 = vmatprep.subr.mxu0 0.0
      %998 = vmatpush1.msra.mxu0 0.0
      %999 = vmatprep.subr.mxu0 0.0
      %1000 = vmatpush1.msra.mxu0 0.0
      %1001 = vmatprep.subr.mxu0 0.0
      %1002 = vmatpush1.msra.mxu0 0.0
      %1003 = vmatprep.subr.mxu0 0.0
      %1004 = vmatpush1.msra.mxu0 0.0
      %1005 = vmatprep.subr.mxu0 0.0
      %1006 = vmatpush1.msra.mxu0 0.0
      %1007 = vmatprep.subr.mxu0 0.0
      %1008 = vmatpush1.msra.mxu0 0.0
      %1009 = vmatprep.subr.mxu0 0.0
      %1010 = vmatpush1.msra.mxu0 0.0
      %1011 = vmatprep.subr.mxu0 0.0
      %1012 = vmatpush1.msra.mxu0 0.0
      %1013 = vmatprep.subr.mxu0 0.0
      %1014 = vmatpush1.msra.mxu0 0.0
      %1015 = vmatprep.subr.mxu0 0.0
      %1016 = vmatpush1.msra.mxu0 0.0
      %1017 = vmatprep.subr.mxu0 0.0
      %1018 = vmatpush1.msra.mxu0 0.0
      %1019 = vmatprep.subr.mxu0 0.0
      %1020 = vmatpush1.msra.mxu0 0.0
      %1021 = vmatprep.subr.mxu0 0.0
      %1022 = vmatpush1.msra.mxu0 0.0
      %1023 = vmatprep.subr.mxu0 0.0
      %1024 = vmatpush1.msra.mxu0 0.0
      %1025 = vmatprep.mubr.f32.mxu0 0.0
      %1026 = vmatmul.mubr.f32.gmra.mrb[0].mxu0 %v639
      %v1027 = vpop.f32.mrb[0].mxu0
      %v1028 = vadd.f32 %v803, %v1027
      %v1029 = vpop.f32.mrb[0].mxu0
      %1030 = vmatprep.mubr.f32.mxu0 0.0
      %1031 = vmatmul.mubr.f32.gmra.mrb[0].mxu0 %v640
      %v1032 = vpop.f32.mrb[0].mxu0
      %v1033 = vadd.f32 %v808, %v1032
      %v1034 = vpop.f32.mrb[0].mxu0
      %1035 = vmatprep.mubr.f32.mxu0 0.0
      %1036 = vmatmul.mubr.f32.gmra.mrb[0].mxu0 %v641
      %v1037 = vpop.f32.mrb[0].mxu0
      %v1038 = vadd.f32 %v813, %v1037
      %v1039 = vpop.f32.mrb[0].mxu0
      %1040 = vmatprep.mubr.f32.mxu0 0.0
      %1041 = vmatmul.mubr.f32.gmra.mrb[0].mxu0 %v642
      %v1042 = vpop.f32.mrb[0].mxu0
      %v1043 = vadd.f32 %v818, %v1042
      %v1044 = vpop.f32.mrb[0].mxu0
      %1045 = vmatprep.mubr.f32.mxu0 0.0
      %1046 = vmatmul.mubr.f32.gmra.mrb[0].mxu0 %v643
      %v1047 = vpop.f32.mrb[0].mxu0
      %v1048 = vadd.f32 %v823, %v1047
      %v1049 = vpop.f32.mrb[0].mxu0
      %1050 = vmatprep.mubr.f32.mxu0 0.0
      %1051 = vmatmul.mubr.f32.gmra.mrb[0].mxu0 %v644
      %v1052 = vpop.f32.mrb[0].mxu0
      %v1053 = vadd.f32 %v828, %v1052
      %v1054 = vpop.f32.mrb[0].mxu0
      %1055 = vmatprep.mubr.f32.mxu0 0.0
      %1056 = vmatmul.mubr.f32.gmra.mrb[0].mxu0 %v645
      %v1057 = vpop.f32.mrb[0].mxu0
      %v1058 = vadd.f32 %v833, %v1057
      %v1059 = vpop.f32.mrb[0].mxu0
      %1060 = vmatprep.mubr.f32.mxu0 0.0
      %1061 = vmatmul.mubr.f32.gmra.mrb[0].mxu0 %v646
      %v1062 = vpop.f32.mrb[0].mxu0
      %v1063 = vadd.f32 %v838, %v1062
      %v1064 = vpop.f32.mrb[0].mxu0
      %1065 = vmatprep.mubr.f32.mxu0 0.0
      %1066 = vmatmul.mubr.f32.gmra.mrb[0].mxu0 %v647
      %v1067 = vpop.f32.mrb[0].mxu0
      %v1068 = vadd.f32 %v843, %v1067
      %v1069 = vpop.f32.mrb[0].mxu0
      %1070 = vmatprep.mubr.f32.mxu0 0.0
      %1071 = vmatmul.mubr.f32.gmra.mrb[0].mxu0 %v648
      %v1072 = vpop.f32.mrb[0].mxu0
      %v1073 = vadd.f32 %v848, %v1072
      %v1074 = vpop.f32.mrb[0].mxu0
      %1075 = vmatprep.mubr.f32.mxu0 0.0
      %1076 = vmatmul.mubr.f32.gmra.mrb[0].mxu0 %v649
      %v1077 = vpop.f32.mrb[0].mxu0
      %v1078 = vadd.f32 %v853, %v1077
      %v1079 = vpop.f32.mrb[0].mxu0
      %1080 = vmatprep.mubr.f32.mxu0 0.0
      %1081 = vmatmul.mubr.f32.gmra.mrb[0].mxu0 %v650
      %v1082 = vpop.f32.mrb[0].mxu0
      %v1083 = vadd.f32 %v858, %v1082
      %v1084 = vpop.f32.mrb[0].mxu0
      %1085 = vmatprep.mubr.f32.mxu0 0.0
      %1086 = vmatmul.mubr.f32.gmra.mrb[0].mxu0 %v651
      %v1087 = vpop.f32.mrb[0].mxu0
      %v1088 = vadd.f32 %v863, %v1087
      %v1089 = vpop.f32.mrb[0].mxu0
      %1090 = vmatprep.mubr.f32.mxu0 0.0
      %1091 = vmatmul.mubr.f32.gmra.mrb[0].mxu0 %v652
      %v1092 = vpop.f32.mrb[0].mxu0
      %v1093 = vadd.f32 %v868, %v1092
      %v1094 = vpop.f32.mrb[0].mxu0
      %1095 = vmatprep.mubr.f32.mxu0 0.0
      %1096 = vmatmul.mubr.f32.gmra.mrb[0].mxu0 %v653
      %v1097 = vpop.f32.mrb[0].mxu0
      %v1098 = vadd.f32 %v873, %v1097
      %v1099 = vpop.f32.mrb[0].mxu0
      %1100 = vmatprep.mubr.f32.mxu0 0.0
      %1101 = vmatmul.mubr.f32.gmra.mrb[0].mxu0 %v654
      %v1102 = vpop.f32.mrb[0].mxu0
      %v1103 = vadd.f32 %v878, %v1102
      %v1104 = vpop.f32.mrb[0].mxu0
      %1105 = vmatprep.mubr.f32.mxu0 0.0
      %1106 = vmatmul.mubr.f32.gmra.mrb[0].mxu0 %v655
      %v1107 = vpop.f32.mrb[0].mxu0
      %v1108 = vadd.f32 %v883, %v1107
      %v1109 = vpop.f32.mrb[0].mxu0
      %1110 = vmatprep.mubr.f32.mxu0 0.0
      %1111 = vmatmul.mubr.f32.gmra.mrb[0].mxu0 %v656
      %v1112 = vpop.f32.mrb[0].mxu0
      %v1113 = vadd.f32 %v888, %v1112
      %v1114 = vpop.f32.mrb[0].mxu0
      %1115 = vmatprep.mubr.f32.mxu0 0.0
      %1116 = vmatmul.mubr.f32.gmra.mrb[0].mxu0 %v657
      %v1117 = vpop.f32.mrb[0].mxu0
      %v1118 = vadd.f32 %v893, %v1117
      %v1119 = vpop.f32.mrb[0].mxu0
      %1120 = vmatprep.mubr.f32.mxu0 0.0
      %1121 = vmatmul.mubr.f32.gmra.mrb[0].mxu0 %v658
      %v1122 = vpop.f32.mrb[0].mxu0
      %v1123 = vadd.f32 %v898, %v1122
      %v1124 = vpop.f32.mrb[0].mxu0
      %1125 = vmatprep.mubr.f32.mxu0 0.0
      %1126 = vmatmul.mubr.f32.gmra.mrb[0].mxu0 %v659
      %v1127 = vpop.f32.mrb[0].mxu0
      %v1128 = vadd.f32 %v903, %v1127
      %v1129 = vpop.f32.mrb[0].mxu0
      %1130 = vmatprep.mubr.f32.mxu0 0.0
      %1131 = vmatmul.mubr.f32.gmra.mrb[0].mxu0 %v660
      %v1132 = vpop.f32.mrb[0].mxu0
      %v1133 = vadd.f32 %v908, %v1132
      %v1134 = vpop.f32.mrb[0].mxu0
      %1135 = vmatprep.mubr.f32.mxu0 0.0
      %1136 = vmatmul.mubr.f32.gmra.mrb[0].mxu0 %v661
      %v1137 = vpop.f32.mrb[0].mxu0
      %v1138 = vadd.f32 %v913, %v1137
      %v1139 = vpop.f32.mrb[0].mxu0
      %1140 = vmatprep.mubr.f32.mxu0 0.0
      %1141 = vmatmul.mubr.f32.gmra.mrb[0].mxu0 %v662
      %v1142 = vpop.f32.mrb[0].mxu0
      %v1143 = vadd.f32 %v918, %v1142
      %v1144 = vpop.f32.mrb[0].mxu0
      %1145 = vmatprep.mubr.f32.mxu0 0.0
      %1146 = vmatmul.mubr.f32.gmra.mrb[0].mxu0 %v663
      %v1147 = vpop.f32.mrb[0].mxu0
      %v1148 = vadd.f32 %v923, %v1147
      %v1149 = vpop.f32.mrb[0].mxu0
      %1150 = vmatprep.mubr.f32.mxu0 0.0
      %1151 = vmatmul.mubr.f32.gmra.mrb[0].mxu0 %v664
      %v1152 = vpop.f32.mrb[0].mxu0
      %v1153 = vadd.f32 %v928, %v1152
      %v1154 = vpop.f32.mrb[0].mxu0
      %1155 = vmatprep.mubr.f32.mxu0 0.0
      %1156 = vmatmul.mubr.f32.gmra.mrb[0].mxu0 %v665
      %v1157 = vpop.f32.mrb[0].mxu0
      %v1158 = vadd.f32 %v933, %v1157
      %v1159 = vpop.f32.mrb[0].mxu0
      %1160 = vmatprep.mubr.f32.mxu0 0.0
      %1161 = vmatmul.mubr.f32.gmra.mrb[0].mxu0 %v666
      %v1162 = vpop.f32.mrb[0].mxu0
      %v1163 = vadd.f32 %v938, %v1162
      %v1164 = vpop.f32.mrb[0].mxu0
      %1165 = vmatprep.mubr.f32.mxu0 0.0
      %1166 = vmatmul.mubr.f32.gmra.mrb[0].mxu0 %v667
      %v1167 = vpop.f32.mrb[0].mxu0
      %v1168 = vadd.f32 %v943, %v1167
      %v1169 = vpop.f32.mrb[0].mxu0
      %1170 = vmatprep.mubr.f32.mxu0 0.0
      %1171 = vmatmul.mubr.f32.gmra.mrb[0].mxu0 %v668
      %v1172 = vpop.f32.mrb[0].mxu0
      %v1173 = vadd.f32 %v948, %v1172
      %v1174 = vpop.f32.mrb[0].mxu0
      %1175 = vmatprep.mubr.f32.mxu0 0.0
      %1176 = vmatmul.mubr.f32.gmra.mrb[0].mxu0 %v669
      %v1177 = vpop.f32.mrb[0].mxu0
      %v1178 = vadd.f32 %v953, %v1177
      %v1179 = vpop.f32.mrb[0].mxu0
      %1180 = vmatprep.mubr.f32.mxu0 0.0
      %1181 = vmatmul.mubr.f32.gmra.mrb[0].mxu0 %v670
      %v1182 = vpop.f32.mrb[0].mxu0
      %v1183 = vadd.f32 %v958, %v1182
      %v1184 = vpop.f32.mrb[0].mxu0
      %1185 = vdwg.mxu0
      %v1186 = vld [vmem:[#allocation2 + $0x2] sm:$0xff]
      %v1187 = vld [vmem:[#allocation2 + $0xa] sm:$0xff]
      %v1188 = vld [vmem:[#allocation2 + $0x1a] sm:$0xff]
      %v1189 = vld [vmem:[#allocation2 + $0x22] sm:$0xff]
      %v1190 = vld [vmem:[#allocation2 + $0x32] sm:$0xff]
      %v1191 = vld [vmem:[#allocation2 + $0x3a] sm:$0xff]
      %v1192 = vld [vmem:[#allocation2 + $0x4a] sm:$0xff]
      %v1193 = vld [vmem:[#allocation2 + $0x52] sm:$0xff]
      %v1194 = vld [vmem:[#allocation2 + $0x62] sm:$0xff]
      %v1195 = vld [vmem:[#allocation2 + $0x6a] sm:$0xff]
      %v1196 = vld [vmem:[#allocation2 + $0x7a] sm:$0xff]
      %v1197 = vld [vmem:[#allocation2 + $0x82] sm:$0xff]
      %v1198 = vld [vmem:[#allocation2 + $0x92] sm:$0xff]
      %v1199 = vld [vmem:[#allocation2 + $0x9a] sm:$0xff]
      %v1200 = vld [vmem:[#allocation2 + $0xaa] sm:$0xff]
      %v1201 = vld [vmem:[#allocation2 + $0xb2] sm:$0xff]
      %v1202 = vld [vmem:[#allocation2 + $0xc2] sm:$0xff]
      %v1203 = vld [vmem:[#allocation2 + $0xca] sm:$0xff]
      %v1204 = vld [vmem:[#allocation2 + $0xda] sm:$0xff]
      %v1205 = vld [vmem:[#allocation2 + $0xe2] sm:$0xff]
      %v1206 = vld [vmem:[#allocation2 + $0xf2] sm:$0xff]
      %v1207 = vld [vmem:[#allocation2 + $0xfa] sm:$0xff]
      %v1208 = vld [vmem:[#allocation2 + $0x10a] sm:$0xff]
      %v1209 = vld [vmem:[#allocation2 + $0x112] sm:$0xff]
      %v1210 = vld [vmem:[#allocation2 + $0x122] sm:$0xff]
      %v1211 = vld [vmem:[#allocation2 + $0x12a] sm:$0xff]
      %v1212 = vld [vmem:[#allocation2 + $0x13a] sm:$0xff]
      %v1213 = vld [vmem:[#allocation2 + $0x142] sm:$0xff]
      %v1214 = vld [vmem:[#allocation2 + $0x152] sm:$0xff]
      %v1215 = vld [vmem:[#allocation2 + $0x15a] sm:$0xff]
      %v1216 = vld [vmem:[#allocation2 + $0x16a] sm:$0xff]
      %v1217 = vld [vmem:[#allocation2 + $0x172] sm:$0xff]
      %s1218 = scalar_lea.vmem %s2, 256
      %v1219 = vld [vmem:[%s1218] sm:$0xff]
      %v1220 = vld [vmem:[%s1218 + $0x8] sm:$0xff]
      %v1221 = vld [vmem:[%s1218 + $0x10] sm:$0xff]
      %v1222 = vld [vmem:[%s1218 + $0x18] sm:$0xff]
      %v1223 = vld [vmem:[%s1218 + $0x20] sm:$0xff]
      %v1224 = vld [vmem:[%s1218 + $0x28] sm:$0xff]
      %v1225 = vld [vmem:[%s1218 + $0x30] sm:$0xff]
      %v1226 = vld [vmem:[%s1218 + $0x38] sm:$0xff]
      %v1227 = vld [vmem:[%s1218 + $0x40] sm:$0xff]
      %v1228 = vld [vmem:[%s1218 + $0x48] sm:$0xff]
      %v1229 = vld [vmem:[%s1218 + $0x50] sm:$0xff]
      %v1230 = vld [vmem:[%s1218 + $0x58] sm:$0xff]
      %v1231 = vld [vmem:[%s1218 + $0x60] sm:$0xff]
      %v1232 = vld [vmem:[%s1218 + $0x68] sm:$0xff]
      %v1233 = vld [vmem:[%s1218 + $0x70] sm:$0xff]
      %v1234 = vld [vmem:[%s1218 + $0x78] sm:$0xff]
      %1235 = vmatprep.subr.mxu0 0.0
      %1236 = vmatpush1.msra.mxu0 %v1219
      %1237 = vmatprep.subr.mxu0 0.0
      %1238 = vmatpush1.msra.mxu0 %v1220
      %1239 = vmatprep.subr.mxu0 0.0
      %1240 = vmatpush1.msra.mxu0 %v1221
      %1241 = vmatprep.subr.mxu0 0.0
      %1242 = vmatpush1.msra.mxu0 %v1222
      %1243 = vmatprep.subr.mxu0 0.0
      %1244 = vmatpush1.msra.mxu0 %v1223
      %1245 = vmatprep.subr.mxu0 0.0
      %1246 = vmatpush1.msra.mxu0 %v1224
      %1247 = vmatprep.subr.mxu0 0.0
      %1248 = vmatpush1.msra.mxu0 %v1225
      %1249 = vmatprep.subr.mxu0 0.0
      %1250 = vmatpush1.msra.mxu0 %v1226
      %1251 = vmatprep.subr.mxu0 0.0
      %1252 = vmatpush1.msra.mxu0 %v1227
      %1253 = vmatprep.subr.mxu0 0.0
      %1254 = vmatpush1.msra.mxu0 %v1228
      %1255 = vmatprep.subr.mxu0 0.0
      %1256 = vmatpush1.msra.mxu0 %v1229
      %1257 = vmatprep.subr.mxu0 0.0
      %1258 = vmatpush1.msra.mxu0 %v1230
      %1259 = vmatprep.subr.mxu0 0.0
      %1260 = vmatpush1.msra.mxu0 %v1231
      %1261 = vmatprep.subr.mxu0 0.0
      %1262 = vmatpush1.msra.mxu0 %v1232
      %1263 = vmatprep.subr.mxu0 0.0
      %1264 = vmatpush1.msra.mxu0 %v1233
      %1265 = vmatprep.subr.mxu0 0.0
      %1266 = vmatpush1.msra.mxu0 %v1234
      %1267 = vmatprep.subr.mxu0 0.0
      %1268 = vmatpush1.msra.mxu0 0.0
      %1269 = vmatprep.subr.mxu0 0.0
      %1270 = vmatpush1.msra.mxu0 0.0
      %1271 = vmatprep.subr.mxu0 0.0
      %1272 = vmatpush1.msra.mxu0 0.0
      %1273 = vmatprep.subr.mxu0 0.0
      %1274 = vmatpush1.msra.mxu0 0.0
      %1275 = vmatprep.subr.mxu0 0.0
      %1276 = vmatpush1.msra.mxu0 0.0
      %1277 = vmatprep.subr.mxu0 0.0
      %1278 = vmatpush1.msra.mxu0 0.0
      %1279 = vmatprep.subr.mxu0 0.0
      %1280 = vmatpush1.msra.mxu0 0.0
      %1281 = vmatprep.subr.mxu0 0.0
      %1282 = vmatpush1.msra.mxu0 0.0
      %1283 = vmatprep.subr.mxu0 0.0
      %1284 = vmatpush1.msra.mxu0 0.0
      %1285 = vmatprep.subr.mxu0 0.0
      %1286 = vmatpush1.msra.mxu0 0.0
      %1287 = vmatprep.subr.mxu0 0.0
      %1288 = vmatpush1.msra.mxu0 0.0
      %1289 = vmatprep.subr.mxu0 0.0
      %1290 = vmatpush1.msra.mxu0 0.0
      %1291 = vmatprep.subr.mxu0 0.0
      %1292 = vmatpush1.msra.mxu0 0.0
      %1293 = vmatprep.subr.mxu0 0.0
      %1294 = vmatpush1.msra.mxu0 0.0
      %1295 = vmatprep.subr.mxu0 0.0
      %1296 = vmatpush1.msra.mxu0 0.0
      %1297 = vmatprep.subr.mxu0 0.0
      %1298 = vmatpush1.msra.mxu0 0.0
      %1299 = vmatprep.mubr.f32.mxu0 0.0
      %1300 = vmatmul.mubr.f32.gmra.mrb[0].mxu0 %v1186
      %v1301 = vpop.f32.mrb[0].mxu0
      %v1302 = vadd.f32 0.0, %v1301
      %v1303 = vpop.f32.mrb[0].mxu0
      %1304 = vmatprep.mubr.f32.mxu0 0.0
      %1305 = vmatmul.mubr.f32.gmra.mrb[0].mxu0 %v1187
      %v1306 = vpop.f32.mrb[0].mxu0
      %v1307 = vadd.f32 0.0, %v1306
      %v1308 = vpop.f32.mrb[0].mxu0
      %1309 = vmatprep.mubr.f32.mxu0 0.0
      %1310 = vmatmul.mubr.f32.gmra.mrb[0].mxu0 %v1188
      %v1311 = vpop.f32.mrb[0].mxu0
      %v1312 = vadd.f32 0.0, %v1311
      %v1313 = vpop.f32.mrb[0].mxu0
      %1314 = vmatprep.mubr.f32.mxu0 0.0
      %1315 = vmatmul.mubr.f32.gmra.mrb[0].mxu0 %v1189
      %v1316 = vpop.f32.mrb[0].mxu0
      %v1317 = vadd.f32 0.0, %v1316
      %v1318 = vpop.f32.mrb[0].mxu0
      %1319 = vmatprep.mubr.f32.mxu0 0.0
      %1320 = vmatmul.mubr.f32.gmra.mrb[0].mxu0 %v1190
      %v1321 = vpop.f32.mrb[0].mxu0
      %v1322 = vadd.f32 0.0, %v1321
      %v1323 = vpop.f32.mrb[0].mxu0
      %1324 = vmatprep.mubr.f32.mxu0 0.0
      %1325 = vmatmul.mubr.f32.gmra.mrb[0].mxu0 %v1191
      %v1326 = vpop.f32.mrb[0].mxu0
      %v1327 = vadd.f32 0.0, %v1326
      %v1328 = vpop.f32.mrb[0].mxu0
      %1329 = vmatprep.mubr.f32.mxu0 0.0
      %1330 = vmatmul.mubr.f32.gmra.mrb[0].mxu0 %v1192
      %v1331 = vpop.f32.mrb[0].mxu0
      %v1332 = vadd.f32 0.0, %v1331
      %v1333 = vpop.f32.mrb[0].mxu0
      %1334 = vmatprep.mubr.f32.mxu0 0.0
      %1335 = vmatmul.mubr.f32.gmra.mrb[0].mxu0 %v1193
      %v1336 = vpop.f32.mrb[0].mxu0
      %v1337 = vadd.f32 0.0, %v1336
      %v1338 = vpop.f32.mrb[0].mxu0
      %1339 = vmatprep.mubr.f32.mxu0 0.0
      %1340 = vmatmul.mubr.f32.gmra.mrb[0].mxu0 %v1194
      %v1341 = vpop.f32.mrb[0].mxu0
      %v1342 = vadd.f32 0.0, %v1341
      %v1343 = vpop.f32.mrb[0].mxu0
      %1344 = vmatprep.mubr.f32.mxu0 0.0
      %1345 = vmatmul.mubr.f32.gmra.mrb[0].mxu0 %v1195
      %v1346 = vpop.f32.mrb[0].mxu0
      %v1347 = vadd.f32 0.0, %v1346
      %v1348 = vpop.f32.mrb[0].mxu0
      %1349 = vmatprep.mubr.f32.mxu0 0.0
      %1350 = vmatmul.mubr.f32.gmra.mrb[0].mxu0 %v1196
      %v1351 = vpop.f32.mrb[0].mxu0
      %v1352 = vadd.f32 0.0, %v1351
      %v1353 = vpop.f32.mrb[0].mxu0
      %1354 = vmatprep.mubr.f32.mxu0 0.0
      %1355 = vmatmul.mubr.f32.gmra.mrb[0].mxu0 %v1197
      %v1356 = vpop.f32.mrb[0].mxu0
      %v1357 = vadd.f32 0.0, %v1356
      %v1358 = vpop.f32.mrb[0].mxu0
      %1359 = vmatprep.mubr.f32.mxu0 0.0
      %1360 = vmatmul.mubr.f32.gmra.mrb[0].mxu0 %v1198
      %v1361 = vpop.f32.mrb[0].mxu0
      %v1362 = vadd.f32 0.0, %v1361
      %v1363 = vpop.f32.mrb[0].mxu0
      %1364 = vmatprep.mubr.f32.mxu0 0.0
      %1365 = vmatmul.mubr.f32.gmra.mrb[0].mxu0 %v1199
      %v1366 = vpop.f32.mrb[0].mxu0
      %v1367 = vadd.f32 0.0, %v1366
      %v1368 = vpop.f32.mrb[0].mxu0
      %1369 = vmatprep.mubr.f32.mxu0 0.0
      %1370 = vmatmul.mubr.f32.gmra.mrb[0].mxu0 %v1200
      %v1371 = vpop.f32.mrb[0].mxu0
      %v1372 = vadd.f32 0.0, %v1371
      %v1373 = vpop.f32.mrb[0].mxu0
      %1374 = vmatprep.mubr.f32.mxu0 0.0
      %1375 = vmatmul.mubr.f32.gmra.mrb[0].mxu0 %v1201
      %v1376 = vpop.f32.mrb[0].mxu0
      %v1377 = vadd.f32 0.0, %v1376
      %v1378 = vpop.f32.mrb[0].mxu0
      %1379 = vmatprep.mubr.f32.mxu0 0.0
      %1380 = vmatmul.mubr.f32.gmra.mrb[0].mxu0 %v1202
      %v1381 = vpop.f32.mrb[0].mxu0
      %v1382 = vadd.f32 0.0, %v1381
      %v1383 = vpop.f32.mrb[0].mxu0
      %1384 = vmatprep.mubr.f32.mxu0 0.0
      %1385 = vmatmul.mubr.f32.gmra.mrb[0].mxu0 %v1203
      %v1386 = vpop.f32.mrb[0].mxu0
      %v1387 = vadd.f32 0.0, %v1386
      %v1388 = vpop.f32.mrb[0].mxu0
      %1389 = vmatprep.mubr.f32.mxu0 0.0
      %1390 = vmatmul.mubr.f32.gmra.mrb[0].mxu0 %v1204
      %v1391 = vpop.f32.mrb[0].mxu0
      %v1392 = vadd.f32 0.0, %v1391
      %v1393 = vpop.f32.mrb[0].mxu0
      %1394 = vmatprep.mubr.f32.mxu0 0.0
      %1395 = vmatmul.mubr.f32.gmra.mrb[0].mxu0 %v1205
      %v1396 = vpop.f32.mrb[0].mxu0
      %v1397 = vadd.f32 0.0, %v1396
      %v1398 = vpop.f32.mrb[0].mxu0
      %1399 = vmatprep.mubr.f32.mxu0 0.0
      %1400 = vmatmul.mubr.f32.gmra.mrb[0].mxu0 %v1206
      %v1401 = vpop.f32.mrb[0].mxu0
      %v1402 = vadd.f32 0.0, %v1401
      %v1403 = vpop.f32.mrb[0].mxu0
      %1404 = vmatprep.mubr.f32.mxu0 0.0
      %1405 = vmatmul.mubr.f32.gmra.mrb[0].mxu0 %v1207
      %v1406 = vpop.f32.mrb[0].mxu0
      %v1407 = vadd.f32 0.0, %v1406
      %v1408 = vpop.f32.mrb[0].mxu0
      %1409 = vmatprep.mubr.f32.mxu0 0.0
      %1410 = vmatmul.mubr.f32.gmra.mrb[0].mxu0 %v1208
      %v1411 = vpop.f32.mrb[0].mxu0
      %v1412 = vadd.f32 0.0, %v1411
      %v1413 = vpop.f32.mrb[0].mxu0
      %1414 = vmatprep.mubr.f32.mxu0 0.0
      %1415 = vmatmul.mubr.f32.gmra.mrb[0].mxu0 %v1209
      %v1416 = vpop.f32.mrb[0].mxu0
      %v1417 = vadd.f32 0.0, %v1416
      %v1418 = vpop.f32.mrb[0].mxu0
      %1419 = vmatprep.mubr.f32.mxu0 0.0
      %1420 = vmatmul.mubr.f32.gmra.mrb[0].mxu0 %v1210
      %v1421 = vpop.f32.mrb[0].mxu0
      %v1422 = vadd.f32 0.0, %v1421
      %v1423 = vpop.f32.mrb[0].mxu0
      %1424 = vmatprep.mubr.f32.mxu0 0.0
      %1425 = vmatmul.mubr.f32.gmra.mrb[0].mxu0 %v1211
      %v1426 = vpop.f32.mrb[0].mxu0
      %v1427 = vadd.f32 0.0, %v1426
      %v1428 = vpop.f32.mrb[0].mxu0
      %1429 = vmatprep.mubr.f32.mxu0 0.0
      %1430 = vmatmul.mubr.f32.gmra.mrb[0].mxu0 %v1212
      %v1431 = vpop.f32.mrb[0].mxu0
      %v1432 = vadd.f32 0.0, %v1431
      %v1433 = vpop.f32.mrb[0].mxu0
      %1434 = vmatprep.mubr.f32.mxu0 0.0
      %1435 = vmatmul.mubr.f32.gmra.mrb[0].mxu0 %v1213
      %v1436 = vpop.f32.mrb[0].mxu0
      %v1437 = vadd.f32 0.0, %v1436
      %v1438 = vpop.f32.mrb[0].mxu0
      %1439 = vmatprep.mubr.f32.mxu0 0.0
      %1440 = vmatmul.mubr.f32.gmra.mrb[0].mxu0 %v1214
      %v1441 = vpop.f32.mrb[0].mxu0
      %v1442 = vadd.f32 0.0, %v1441
      %v1443 = vpop.f32.mrb[0].mxu0
      %1444 = vmatprep.mubr.f32.mxu0 0.0
      %1445 = vmatmul.mubr.f32.gmra.mrb[0].mxu0 %v1215
      %v1446 = vpop.f32.mrb[0].mxu0
      %v1447 = vadd.f32 0.0, %v1446
      %v1448 = vpop.f32.mrb[0].mxu0
      %1449 = vmatprep.mubr.f32.mxu0 0.0
      %1450 = vmatmul.mubr.f32.gmra.mrb[0].mxu0 %v1216
      %v1451 = vpop.f32.mrb[0].mxu0
      %v1452 = vadd.f32 0.0, %v1451
      %v1453 = vpop.f32.mrb[0].mxu0
      %1454 = vmatprep.mubr.f32.mxu0 0.0
      %1455 = vmatmul.mubr.f32.gmra.mrb[0].mxu0 %v1217
      %v1456 = vpop.f32.mrb[0].mxu0
      %v1457 = vadd.f32 0.0, %v1456
      %v1458 = vpop.f32.mrb[0].mxu0
      %1459 = vdwg.mxu0
      %v1460 = vadd.f32 %v1028, %v1302
      %v1461 = vadd.f32 %v1033, %v1307
      %v1462 = vadd.f32 %v1038, %v1312
      %v1463 = vadd.f32 %v1043, %v1317
      %v1464 = vadd.f32 %v1048, %v1322
      %v1465 = vadd.f32 %v1053, %v1327
      %v1466 = vadd.f32 %v1058, %v1332
      %v1467 = vadd.f32 %v1063, %v1337
      %v1468 = vadd.f32 %v1068, %v1342
      %v1469 = vadd.f32 %v1073, %v1347
      %v1470 = vadd.f32 %v1078, %v1352
      %v1471 = vadd.f32 %v1083, %v1357
      %v1472 = vadd.f32 %v1088, %v1362
      %v1473 = vadd.f32 %v1093, %v1367
      %v1474 = vadd.f32 %v1098, %v1372
      %v1475 = vadd.f32 %v1103, %v1377
      %v1476 = vadd.f32 %v1108, %v1382
      %v1477 = vadd.f32 %v1113, %v1387
      %v1478 = vadd.f32 %v1118, %v1392
      %v1479 = vadd.f32 %v1123, %v1397
      %v1480 = vadd.f32 %v1128, %v1402
      %v1481 = vadd.f32 %v1133, %v1407
      %v1482 = vadd.f32 %v1138, %v1412
      %v1483 = vadd.f32 %v1143, %v1417
      %v1484 = vadd.f32 %v1148, %v1422
      %v1485 = vadd.f32 %v1153, %v1427
      %v1486 = vadd.f32 %v1158, %v1432
      %v1487 = vadd.f32 %v1163, %v1437
      %v1488 = vadd.f32 %v1168, %v1442
      %v1489 = vadd.f32 %v1173, %v1447
      %v1490 = vadd.f32 %v1178, %v1452
      %v1491 = vadd.f32 %v1183, %v1457
      %v1492 = vld [vmem:[%s412] sm:$0xff]
      %v1493 = vld [vmem:[%s412 + $0x8] sm:$0xff]
      %v1494 = vld [vmem:[%s412 + $0x18] sm:$0xff]
      %v1495 = vld [vmem:[%s412 + $0x20] sm:$0xff]
      %v1496 = vld [vmem:[%s412 + $0x30] sm:$0xff]
      %v1497 = vld [vmem:[%s412 + $0x38] sm:$0xff]
      %v1498 = vld [vmem:[%s412 + $0x48] sm:$0xff]
      %v1499 = vld [vmem:[%s412 + $0x50] sm:$0xff]
      %v1500 = vld [vmem:[%s412 + $0x60] sm:$0xff]
      %v1501 = vld [vmem:[%s412 + $0x68] sm:$0xff]
      %v1502 = vld [vmem:[%s412 + $0x78] sm:$0xff]
      %v1503 = vld [vmem:[%s412 + $0x80] sm:$0xff]
      %v1504 = vld [vmem:[%s412 + $0x90] sm:$0xff]
      %v1505 = vld [vmem:[%s412 + $0x98] sm:$0xff]
      %v1506 = vld [vmem:[%s412 + $0xa8] sm:$0xff]
      %v1507 = vld [vmem:[%s412 + $0xb0] sm:$0xff]
      %v1508 = vld [vmem:[%s412 + $0xc0] sm:$0xff]
      %v1509 = vld [vmem:[%s412 + $0xc8] sm:$0xff]
      %v1510 = vld [vmem:[%s412 + $0xd8] sm:$0xff]
      %v1511 = vld [vmem:[%s412 + $0xe0] sm:$0xff]
      %v1512 = vld [vmem:[%s412 + $0xf0] sm:$0xff]
      %v1513 = vld [vmem:[%s412 + $0xf8] sm:$0xff]
      %v1514 = vld [vmem:[%s412 + $0x108] sm:$0xff]
      %v1515 = vld [vmem:[%s412 + $0x110] sm:$0xff]
      %v1516 = vld [vmem:[%s412 + $0x120] sm:$0xff]
      %v1517 = vld [vmem:[%s412 + $0x128] sm:$0xff]
      %v1518 = vld [vmem:[%s412 + $0x138] sm:$0xff]
      %v1519 = vld [vmem:[%s412 + $0x140] sm:$0xff]
      %v1520 = vld [vmem:[%s412 + $0x150] sm:$0xff]
      %v1521 = vld [vmem:[%s412 + $0x158] sm:$0xff]
      %v1522 = vld [vmem:[%s412 + $0x168] sm:$0xff]
      %v1523 = vld [vmem:[%s412 + $0x170] sm:$0xff]
      %s1524 = scalar_lea.vmem %s2, 384
      %v1525 = vld [vmem:[%s1524] sm:$0xff]
      %v1526 = vld [vmem:[%s1524 + $0x8] sm:$0xff]
      %v1527 = vld [vmem:[%s1524 + $0x10] sm:$0xff]
      %v1528 = vld [vmem:[%s1524 + $0x18] sm:$0xff]
      %v1529 = vld [vmem:[%s1524 + $0x20] sm:$0xff]
      %v1530 = vld [vmem:[%s1524 + $0x28] sm:$0xff]
      %v1531 = vld [vmem:[%s1524 + $0x30] sm:$0xff]
      %v1532 = vld [vmem:[%s1524 + $0x38] sm:$0xff]
      %v1533 = vld [vmem:[%s1524 + $0x40] sm:$0xff]
      %v1534 = vld [vmem:[%s1524 + $0x48] sm:$0xff]
      %v1535 = vld [vmem:[%s1524 + $0x50] sm:$0xff]
      %v1536 = vld [vmem:[%s1524 + $0x58] sm:$0xff]
      %v1537 = vld [vmem:[%s1524 + $0x60] sm:$0xff]
      %v1538 = vld [vmem:[%s1524 + $0x68] sm:$0xff]
      %v1539 = vld [vmem:[%s1524 + $0x70] sm:$0xff]
      %v1540 = vld [vmem:[%s1524 + $0x78] sm:$0xff]
      %1541 = vmatprep.subr.mxu0 0.0
      %1542 = vmatpush1.msra.mxu0 %v1525
      %1543 = vmatprep.subr.mxu0 0.0
      %1544 = vmatpush1.msra.mxu0 %v1526
      %1545 = vmatprep.subr.mxu0 0.0
      %1546 = vmatpush1.msra.mxu0 %v1527
      %1547 = vmatprep.subr.mxu0 0.0
      %1548 = vmatpush1.msra.mxu0 %v1528
      %1549 = vmatprep.subr.mxu0 0.0
      %1550 = vmatpush1.msra.mxu0 %v1529
      %1551 = vmatprep.subr.mxu0 0.0
      %1552 = vmatpush1.msra.mxu0 %v1530
      %1553 = vmatprep.subr.mxu0 0.0
      %1554 = vmatpush1.msra.mxu0 %v1531
      %1555 = vmatprep.subr.mxu0 0.0
      %1556 = vmatpush1.msra.mxu0 %v1532
      %1557 = vmatprep.subr.mxu0 0.0
      %1558 = vmatpush1.msra.mxu0 %v1533
      %1559 = vmatprep.subr.mxu0 0.0
      %1560 = vmatpush1.msra.mxu0 %v1534
      %1561 = vmatprep.subr.mxu0 0.0
      %1562 = vmatpush1.msra.mxu0 %v1535
      %1563 = vmatprep.subr.mxu0 0.0
      %1564 = vmatpush1.msra.mxu0 %v1536
      %1565 = vmatprep.subr.mxu0 0.0
      %1566 = vmatpush1.msra.mxu0 %v1537
      %1567 = vmatprep.subr.mxu0 0.0
      %1568 = vmatpush1.msra.mxu0 %v1538
      %1569 = vmatprep.subr.mxu0 0.0
      %1570 = vmatpush1.msra.mxu0 %v1539
      %1571 = vmatprep.subr.mxu0 0.0
      %1572 = vmatpush1.msra.mxu0 %v1540
      %1573 = vmatprep.subr.mxu0 0.0
      %1574 = vmatpush1.msra.mxu0 0.0
      %1575 = vmatprep.subr.mxu0 0.0
      %1576 = vmatpush1.msra.mxu0 0.0
      %1577 = vmatprep.subr.mxu0 0.0
      %1578 = vmatpush1.msra.mxu0 0.0
      %1579 = vmatprep.subr.mxu0 0.0
      %1580 = vmatpush1.msra.mxu0 0.0
      %1581 = vmatprep.subr.mxu0 0.0
      %1582 = vmatpush1.msra.mxu0 0.0
      %1583 = vmatprep.subr.mxu0 0.0
      %1584 = vmatpush1.msra.mxu0 0.0
      %1585 = vmatprep.subr.mxu0 0.0
      %1586 = vmatpush1.msra.mxu0 0.0
      %1587 = vmatprep.subr.mxu0 0.0
      %1588 = vmatpush1.msra.mxu0 0.0
      %1589 = vmatprep.subr.mxu0 0.0
      %1590 = vmatpush1.msra.mxu0 0.0
      %1591 = vmatprep.subr.mxu0 0.0
      %1592 = vmatpush1.msra.mxu0 0.0
      %1593 = vmatprep.subr.mxu0 0.0
      %1594 = vmatpush1.msra.mxu0 0.0
      %1595 = vmatprep.subr.mxu0 0.0
      %1596 = vmatpush1.msra.mxu0 0.0
      %1597 = vmatprep.subr.mxu0 0.0
      %1598 = vmatpush1.msra.mxu0 0.0
      %1599 = vmatprep.subr.mxu0 0.0
      %1600 = vmatpush1.msra.mxu0 0.0
      %1601 = vmatprep.subr.mxu0 0.0
      %1602 = vmatpush1.msra.mxu0 0.0
      %1603 = vmatprep.subr.mxu0 0.0
      %1604 = vmatpush1.msra.mxu0 0.0
      %1605 = vmatprep.mubr.f32.mxu0 0.0
      %1606 = vmatmul.mubr.f32.gmra.mrb[0].mxu0 %v1492
      %v1607 = vpop.f32.mrb[0].mxu0
      %v1608 = vadd.f32 0.0, %v1607
      %v1609 = vpop.f32.mrb[0].mxu0
      %1610 = vmatprep.mubr.f32.mxu0 0.0
      %1611 = vmatmul.mubr.f32.gmra.mrb[0].mxu0 %v1493
      %v1612 = vpop.f32.mrb[0].mxu0
      %v1613 = vadd.f32 0.0, %v1612
      %v1614 = vpop.f32.mrb[0].mxu0
      %1615 = vmatprep.mubr.f32.mxu0 0.0
      %1616 = vmatmul.mubr.f32.gmra.mrb[0].mxu0 %v1494
      %v1617 = vpop.f32.mrb[0].mxu0
      %v1618 = vadd.f32 0.0, %v1617
      %v1619 = vpop.f32.mrb[0].mxu0
      %1620 = vmatprep.mubr.f32.mxu0 0.0
      %1621 = vmatmul.mubr.f32.gmra.mrb[0].mxu0 %v1495
      %v1622 = vpop.f32.mrb[0].mxu0
      %v1623 = vadd.f32 0.0, %v1622
      %v1624 = vpop.f32.mrb[0].mxu0
      %1625 = vmatprep.mubr.f32.mxu0 0.0
      %1626 = vmatmul.mubr.f32.gmra.mrb[0].mxu0 %v1496
      %v1627 = vpop.f32.mrb[0].mxu0
      %v1628 = vadd.f32 0.0, %v1627
      %v1629 = vpop.f32.mrb[0].mxu0
      %1630 = vmatprep.mubr.f32.mxu0 0.0
      %1631 = vmatmul.mubr.f32.gmra.mrb[0].mxu0 %v1497
      %v1632 = vpop.f32.mrb[0].mxu0
      %v1633 = vadd.f32 0.0, %v1632
      %v1634 = vpop.f32.mrb[0].mxu0
      %1635 = vmatprep.mubr.f32.mxu0 0.0
      %1636 = vmatmul.mubr.f32.gmra.mrb[0].mxu0 %v1498
      %v1637 = vpop.f32.mrb[0].mxu0
      %v1638 = vadd.f32 0.0, %v1637
      %v1639 = vpop.f32.mrb[0].mxu0
      %1640 = vmatprep.mubr.f32.mxu0 0.0
      %1641 = vmatmul.mubr.f32.gmra.mrb[0].mxu0 %v1499
      %v1642 = vpop.f32.mrb[0].mxu0
      %v1643 = vadd.f32 0.0, %v1642
      %v1644 = vpop.f32.mrb[0].mxu0
      %1645 = vmatprep.mubr.f32.mxu0 0.0
      %1646 = vmatmul.mubr.f32.gmra.mrb[0].mxu0 %v1500
      %v1647 = vpop.f32.mrb[0].mxu0
      %v1648 = vadd.f32 0.0, %v1647
      %v1649 = vpop.f32.mrb[0].mxu0
      %1650 = vmatprep.mubr.f32.mxu0 0.0
      %1651 = vmatmul.mubr.f32.gmra.mrb[0].mxu0 %v1501
      %v1652 = vpop.f32.mrb[0].mxu0
      %v1653 = vadd.f32 0.0, %v1652
      %v1654 = vpop.f32.mrb[0].mxu0
      %1655 = vmatprep.mubr.f32.mxu0 0.0
      %1656 = vmatmul.mubr.f32.gmra.mrb[0].mxu0 %v1502
      %v1657 = vpop.f32.mrb[0].mxu0
      %v1658 = vadd.f32 0.0, %v1657
      %v1659 = vpop.f32.mrb[0].mxu0
      %1660 = vmatprep.mubr.f32.mxu0 0.0
      %1661 = vmatmul.mubr.f32.gmra.mrb[0].mxu0 %v1503
      %v1662 = vpop.f32.mrb[0].mxu0
      %v1663 = vadd.f32 0.0, %v1662
      %v1664 = vpop.f32.mrb[0].mxu0
      %1665 = vmatprep.mubr.f32.mxu0 0.0
      %1666 = vmatmul.mubr.f32.gmra.mrb[0].mxu0 %v1504
      %v1667 = vpop.f32.mrb[0].mxu0
      %v1668 = vadd.f32 0.0, %v1667
      %v1669 = vpop.f32.mrb[0].mxu0
      %1670 = vmatprep.mubr.f32.mxu0 0.0
      %1671 = vmatmul.mubr.f32.gmra.mrb[0].mxu0 %v1505
      %v1672 = vpop.f32.mrb[0].mxu0
      %v1673 = vadd.f32 0.0, %v1672
      %v1674 = vpop.f32.mrb[0].mxu0
      %1675 = vmatprep.mubr.f32.mxu0 0.0
      %1676 = vmatmul.mubr.f32.gmra.mrb[0].mxu0 %v1506
      %v1677 = vpop.f32.mrb[0].mxu0
      %v1678 = vadd.f32 0.0, %v1677
      %v1679 = vpop.f32.mrb[0].mxu0
      %1680 = vmatprep.mubr.f32.mxu0 0.0
      %1681 = vmatmul.mubr.f32.gmra.mrb[0].mxu0 %v1507
      %v1682 = vpop.f32.mrb[0].mxu0
      %v1683 = vadd.f32 0.0, %v1682
      %v1684 = vpop.f32.mrb[0].mxu0
      %1685 = vmatprep.mubr.f32.mxu0 0.0
      %1686 = vmatmul.mubr.f32.gmra.mrb[0].mxu0 %v1508
      %v1687 = vpop.f32.mrb[0].mxu0
      %v1688 = vadd.f32 0.0, %v1687
      %v1689 = vpop.f32.mrb[0].mxu0
      %1690 = vmatprep.mubr.f32.mxu0 0.0
      %1691 = vmatmul.mubr.f32.gmra.mrb[0].mxu0 %v1509
      %v1692 = vpop.f32.mrb[0].mxu0
      %v1693 = vadd.f32 0.0, %v1692
      %v1694 = vpop.f32.mrb[0].mxu0
      %1695 = vmatprep.mubr.f32.mxu0 0.0
      %1696 = vmatmul.mubr.f32.gmra.mrb[0].mxu0 %v1510
      %v1697 = vpop.f32.mrb[0].mxu0
      %v1698 = vadd.f32 0.0, %v1697
      %v1699 = vpop.f32.mrb[0].mxu0
      %1700 = vmatprep.mubr.f32.mxu0 0.0
      %1701 = vmatmul.mubr.f32.gmra.mrb[0].mxu0 %v1511
      %v1702 = vpop.f32.mrb[0].mxu0
      %v1703 = vadd.f32 0.0, %v1702
      %v1704 = vpop.f32.mrb[0].mxu0
      %1705 = vmatprep.mubr.f32.mxu0 0.0
      %1706 = vmatmul.mubr.f32.gmra.mrb[0].mxu0 %v1512
      %v1707 = vpop.f32.mrb[0].mxu0
      %v1708 = vadd.f32 0.0, %v1707
      %v1709 = vpop.f32.mrb[0].mxu0
      %1710 = vmatprep.mubr.f32.mxu0 0.0
      %1711 = vmatmul.mubr.f32.gmra.mrb[0].mxu0 %v1513
      %v1712 = vpop.f32.mrb[0].mxu0
      %v1713 = vadd.f32 0.0, %v1712
      %v1714 = vpop.f32.mrb[0].mxu0
      %1715 = vmatprep.mubr.f32.mxu0 0.0
      %1716 = vmatmul.mubr.f32.gmra.mrb[0].mxu0 %v1514
      %v1717 = vpop.f32.mrb[0].mxu0
      %v1718 = vadd.f32 0.0, %v1717
      %v1719 = vpop.f32.mrb[0].mxu0
      %1720 = vmatprep.mubr.f32.mxu0 0.0
      %1721 = vmatmul.mubr.f32.gmra.mrb[0].mxu0 %v1515
      %v1722 = vpop.f32.mrb[0].mxu0
      %v1723 = vadd.f32 0.0, %v1722
      %v1724 = vpop.f32.mrb[0].mxu0
      %1725 = vmatprep.mubr.f32.mxu0 0.0
      %1726 = vmatmul.mubr.f32.gmra.mrb[0].mxu0 %v1516
      %v1727 = vpop.f32.mrb[0].mxu0
      %v1728 = vadd.f32 0.0, %v1727
      %v1729 = vpop.f32.mrb[0].mxu0
      %1730 = vmatprep.mubr.f32.mxu0 0.0
      %1731 = vmatmul.mubr.f32.gmra.mrb[0].mxu0 %v1517
      %v1732 = vpop.f32.mrb[0].mxu0
      %v1733 = vadd.f32 0.0, %v1732
      %v1734 = vpop.f32.mrb[0].mxu0
      %1735 = vmatprep.mubr.f32.mxu0 0.0
      %1736 = vmatmul.mubr.f32.gmra.mrb[0].mxu0 %v1518
      %v1737 = vpop.f32.mrb[0].mxu0
      %v1738 = vadd.f32 0.0, %v1737
      %v1739 = vpop.f32.mrb[0].mxu0
      %1740 = vmatprep.mubr.f32.mxu0 0.0
      %1741 = vmatmul.mubr.f32.gmra.mrb[0].mxu0 %v1519
      %v1742 = vpop.f32.mrb[0].mxu0
      %v1743 = vadd.f32 0.0, %v1742
      %v1744 = vpop.f32.mrb[0].mxu0
      %1745 = vmatprep.mubr.f32.mxu0 0.0
      %1746 = vmatmul.mubr.f32.gmra.mrb[0].mxu0 %v1520
      %v1747 = vpop.f32.mrb[0].mxu0
      %v1748 = vadd.f32 0.0, %v1747
      %v1749 = vpop.f32.mrb[0].mxu0
      %1750 = vmatprep.mubr.f32.mxu0 0.0
      %1751 = vmatmul.mubr.f32.gmra.mrb[0].mxu0 %v1521
      %v1752 = vpop.f32.mrb[0].mxu0
      %v1753 = vadd.f32 0.0, %v1752
      %v1754 = vpop.f32.mrb[0].mxu0
      %1755 = vmatprep.mubr.f32.mxu0 0.0
      %1756 = vmatmul.mubr.f32.gmra.mrb[0].mxu0 %v1522
      %v1757 = vpop.f32.mrb[0].mxu0
      %v1758 = vadd.f32 0.0, %v1757
      %v1759 = vpop.f32.mrb[0].mxu0
      %1760 = vmatprep.mubr.f32.mxu0 0.0
      %1761 = vmatmul.mubr.f32.gmra.mrb[0].mxu0 %v1523
      %v1762 = vpop.f32.mrb[0].mxu0
      %v1763 = vadd.f32 0.0, %v1762
      %v1764 = vpop.f32.mrb[0].mxu0
      %1765 = vdwg.mxu0
      %v1766 = vadd.f32 %v1460, %v1608
      %v1767 = vadd.f32 %v1461, %v1613
      %v1768 = vadd.f32 %v1462, %v1618
      %v1769 = vadd.f32 %v1463, %v1623
      %v1770 = vadd.f32 %v1464, %v1628
      %v1771 = vadd.f32 %v1465, %v1633
      %v1772 = vadd.f32 %v1466, %v1638
      %v1773 = vadd.f32 %v1467, %v1643
      %v1774 = vadd.f32 %v1468, %v1648
      %v1775 = vadd.f32 %v1469, %v1653
      %v1776 = vadd.f32 %v1470, %v1658
      %v1777 = vadd.f32 %v1471, %v1663
      %v1778 = vadd.f32 %v1472, %v1668
      %v1779 = vadd.f32 %v1473, %v1673
      %v1780 = vadd.f32 %v1474, %v1678
      %v1781 = vadd.f32 %v1475, %v1683
      %v1782 = vadd.f32 %v1476, %v1688
      %v1783 = vadd.f32 %v1477, %v1693
      %v1784 = vadd.f32 %v1478, %v1698
      %v1785 = vadd.f32 %v1479, %v1703
      %v1786 = vadd.f32 %v1480, %v1708
      %v1787 = vadd.f32 %v1481, %v1713
      %v1788 = vadd.f32 %v1482, %v1718
      %v1789 = vadd.f32 %v1483, %v1723
      %v1790 = vadd.f32 %v1484, %v1728
      %v1791 = vadd.f32 %v1485, %v1733
      %v1792 = vadd.f32 %v1486, %v1738
      %v1793 = vadd.f32 %v1487, %v1743
      %v1794 = vadd.f32 %v1488, %v1748
      %v1795 = vadd.f32 %v1489, %v1753
      %v1796 = vadd.f32 %v1490, %v1758
      %v1797 = vadd.f32 %v1491, %v1763
      %v1798 = vld [vmem:[%s412 + $0x1] sm:$0xff]
      %v1799 = vld [vmem:[%s412 + $0x9] sm:$0xff]
      %v1800 = vld [vmem:[%s412 + $0x19] sm:$0xff]
      %v1801 = vld [vmem:[%s412 + $0x21] sm:$0xff]
      %v1802 = vld [vmem:[%s412 + $0x31] sm:$0xff]
      %v1803 = vld [vmem:[%s412 + $0x39] sm:$0xff]
      %v1804 = vld [vmem:[%s412 + $0x49] sm:$0xff]
      %v1805 = vld [vmem:[%s412 + $0x51] sm:$0xff]
      %v1806 = vld [vmem:[%s412 + $0x61] sm:$0xff]
      %v1807 = vld [vmem:[%s412 + $0x69] sm:$0xff]
      %v1808 = vld [vmem:[%s412 + $0x79] sm:$0xff]
      %v1809 = vld [vmem:[%s412 + $0x81] sm:$0xff]
      %v1810 = vld [vmem:[%s412 + $0x91] sm:$0xff]
      %v1811 = vld [vmem:[%s412 + $0x99] sm:$0xff]
      %v1812 = vld [vmem:[%s412 + $0xa9] sm:$0xff]
      %v1813 = vld [vmem:[%s412 + $0xb1] sm:$0xff]
      %v1814 = vld [vmem:[%s412 + $0xc1] sm:$0xff]
      %v1815 = vld [vmem:[%s412 + $0xc9] sm:$0xff]
      %v1816 = vld [vmem:[%s412 + $0xd9] sm:$0xff]
      %v1817 = vld [vmem:[%s412 + $0xe1] sm:$0xff]
      %v1818 = vld [vmem:[%s412 + $0xf1] sm:$0xff]
      %v1819 = vld [vmem:[%s412 + $0xf9] sm:$0xff]
      %v1820 = vld [vmem:[%s412 + $0x109] sm:$0xff]
      %v1821 = vld [vmem:[%s412 + $0x111] sm:$0xff]
      %v1822 = vld [vmem:[%s412 + $0x121] sm:$0xff]
      %v1823 = vld [vmem:[%s412 + $0x129] sm:$0xff]
      %v1824 = vld [vmem:[%s412 + $0x139] sm:$0xff]
      %v1825 = vld [vmem:[%s412 + $0x141] sm:$0xff]
      %v1826 = vld [vmem:[%s412 + $0x151] sm:$0xff]
      %v1827 = vld [vmem:[%s412 + $0x159] sm:$0xff]
      %v1828 = vld [vmem:[%s412 + $0x169] sm:$0xff]
      %v1829 = vld [vmem:[%s412 + $0x171] sm:$0xff]
      %s1830 = scalar_lea.vmem %s2, 512
      %v1831 = vld [vmem:[%s1830] sm:$0xff]
      %v1832 = vld [vmem:[%s1830 + $0x8] sm:$0xff]
      %v1833 = vld [vmem:[%s1830 + $0x10] sm:$0xff]
      %v1834 = vld [vmem:[%s1830 + $0x18] sm:$0xff]
      %v1835 = vld [vmem:[%s1830 + $0x20] sm:$0xff]
      %v1836 = vld [vmem:[%s1830 + $0x28] sm:$0xff]
      %v1837 = vld [vmem:[%s1830 + $0x30] sm:$0xff]
      %v1838 = vld [vmem:[%s1830 + $0x38] sm:$0xff]
      %v1839 = vld [vmem:[%s1830 + $0x40] sm:$0xff]
      %v1840 = vld [vmem:[%s1830 + $0x48] sm:$0xff]
      %v1841 = vld [vmem:[%s1830 + $0x50] sm:$0xff]
      %v1842 = vld [vmem:[%s1830 + $0x58] sm:$0xff]
      %v1843 = vld [vmem:[%s1830 + $0x60] sm:$0xff]
      %v1844 = vld [vmem:[%s1830 + $0x68] sm:$0xff]
      %v1845 = vld [vmem:[%s1830 + $0x70] sm:$0xff]
      %v1846 = vld [vmem:[%s1830 + $0x78] sm:$0xff]
      %1847 = vmatprep.subr.mxu0 0.0
      %1848 = vmatpush1.msra.mxu0 %v1831
      %1849 = vmatprep.subr.mxu0 0.0
      %1850 = vmatpush1.msra.mxu0 %v1832
      %1851 = vmatprep.subr.mxu0 0.0
      %1852 = vmatpush1.msra.mxu0 %v1833
      %1853 = vmatprep.subr.mxu0 0.0
      %1854 = vmatpush1.msra.mxu0 %v1834
      %1855 = vmatprep.subr.mxu0 0.0
      %1856 = vmatpush1.msra.mxu0 %v1835
      %1857 = vmatprep.subr.mxu0 0.0
      %1858 = vmatpush1.msra.mxu0 %v1836
      %1859 = vmatprep.subr.mxu0 0.0
      %1860 = vmatpush1.msra.mxu0 %v1837
      %1861 = vmatprep.subr.mxu0 0.0
      %1862 = vmatpush1.msra.mxu0 %v1838
      %1863 = vmatprep.subr.mxu0 0.0
      %1864 = vmatpush1.msra.mxu0 %v1839
      %1865 = vmatprep.subr.mxu0 0.0
      %1866 = vmatpush1.msra.mxu0 %v1840
      %1867 = vmatprep.subr.mxu0 0.0
      %1868 = vmatpush1.msra.mxu0 %v1841
      %1869 = vmatprep.subr.mxu0 0.0
      %1870 = vmatpush1.msra.mxu0 %v1842
      %1871 = vmatprep.subr.mxu0 0.0
      %1872 = vmatpush1.msra.mxu0 %v1843
      %1873 = vmatprep.subr.mxu0 0.0
      %1874 = vmatpush1.msra.mxu0 %v1844
      %1875 = vmatprep.subr.mxu0 0.0
      %1876 = vmatpush1.msra.mxu0 %v1845
      %1877 = vmatprep.subr.mxu0 0.0
      %1878 = vmatpush1.msra.mxu0 %v1846
      %1879 = vmatprep.subr.mxu0 0.0
      %1880 = vmatpush1.msra.mxu0 0.0
      %1881 = vmatprep.subr.mxu0 0.0
      %1882 = vmatpush1.msra.mxu0 0.0
      %1883 = vmatprep.subr.mxu0 0.0
      %1884 = vmatpush1.msra.mxu0 0.0
      %1885 = vmatprep.subr.mxu0 0.0
      %1886 = vmatpush1.msra.mxu0 0.0
      %1887 = vmatprep.subr.mxu0 0.0
      %1888 = vmatpush1.msra.mxu0 0.0
      %1889 = vmatprep.subr.mxu0 0.0
      %1890 = vmatpush1.msra.mxu0 0.0
      %1891 = vmatprep.subr.mxu0 0.0
      %1892 = vmatpush1.msra.mxu0 0.0
      %1893 = vmatprep.subr.mxu0 0.0
      %1894 = vmatpush1.msra.mxu0 0.0
      %1895 = vmatprep.subr.mxu0 0.0
      %1896 = vmatpush1.msra.mxu0 0.0
      %1897 = vmatprep.subr.mxu0 0.0
      %1898 = vmatpush1.msra.mxu0 0.0
      %1899 = vmatprep.subr.mxu0 0.0
      %1900 = vmatpush1.msra.mxu0 0.0
      %1901 = vmatprep.subr.mxu0 0.0
      %1902 = vmatpush1.msra.mxu0 0.0
      %1903 = vmatprep.subr.mxu0 0.0
      %1904 = vmatpush1.msra.mxu0 0.0
      %1905 = vmatprep.subr.mxu0 0.0
      %1906 = vmatpush1.msra.mxu0 0.0
      %1907 = vmatprep.subr.mxu0 0.0
      %1908 = vmatpush1.msra.mxu0 0.0
      %1909 = vmatprep.subr.mxu0 0.0
      %1910 = vmatpush1.msra.mxu0 0.0
      %1911 = vmatprep.mubr.f32.mxu0 0.0
      %1912 = vmatmul.mubr.f32.gmra.mrb[0].mxu0 %v1798
      %v1913 = vpop.f32.mrb[0].mxu0
      %v1914 = vadd.f32 0.0, %v1913
      %v1915 = vpop.f32.mrb[0].mxu0
      %1916 = vmatprep.mubr.f32.mxu0 0.0
      %1917 = vmatmul.mubr.f32.gmra.mrb[0].mxu0 %v1799
      %v1918 = vpop.f32.mrb[0].mxu0
      %v1919 = vadd.f32 0.0, %v1918
      %v1920 = vpop.f32.mrb[0].mxu0
      %1921 = vmatprep.mubr.f32.mxu0 0.0
      %1922 = vmatmul.mubr.f32.gmra.mrb[0].mxu0 %v1800
      %v1923 = vpop.f32.mrb[0].mxu0
      %v1924 = vadd.f32 0.0, %v1923
      %v1925 = vpop.f32.mrb[0].mxu0
      %1926 = vmatprep.mubr.f32.mxu0 0.0
      %1927 = vmatmul.mubr.f32.gmra.mrb[0].mxu0 %v1801
      %v1928 = vpop.f32.mrb[0].mxu0
      %v1929 = vadd.f32 0.0, %v1928
      %v1930 = vpop.f32.mrb[0].mxu0
      %1931 = vmatprep.mubr.f32.mxu0 0.0
      %1932 = vmatmul.mubr.f32.gmra.mrb[0].mxu0 %v1802
      %v1933 = vpop.f32.mrb[0].mxu0
      %v1934 = vadd.f32 0.0, %v1933
      %v1935 = vpop.f32.mrb[0].mxu0
      %1936 = vmatprep.mubr.f32.mxu0 0.0
      %1937 = vmatmul.mubr.f32.gmra.mrb[0].mxu0 %v1803
      %v1938 = vpop.f32.mrb[0].mxu0
      %v1939 = vadd.f32 0.0, %v1938
      %v1940 = vpop.f32.mrb[0].mxu0
      %1941 = vmatprep.mubr.f32.mxu0 0.0
      %1942 = vmatmul.mubr.f32.gmra.mrb[0].mxu0 %v1804
      %v1943 = vpop.f32.mrb[0].mxu0
      %v1944 = vadd.f32 0.0, %v1943
      %v1945 = vpop.f32.mrb[0].mxu0
      %1946 = vmatprep.mubr.f32.mxu0 0.0
      %1947 = vmatmul.mubr.f32.gmra.mrb[0].mxu0 %v1805
      %v1948 = vpop.f32.mrb[0].mxu0
      %v1949 = vadd.f32 0.0, %v1948
      %v1950 = vpop.f32.mrb[0].mxu0
      %1951 = vmatprep.mubr.f32.mxu0 0.0
      %1952 = vmatmul.mubr.f32.gmra.mrb[0].mxu0 %v1806
      %v1953 = vpop.f32.mrb[0].mxu0
      %v1954 = vadd.f32 0.0, %v1953
      %v1955 = vpop.f32.mrb[0].mxu0
      %1956 = vmatprep.mubr.f32.mxu0 0.0
      %1957 = vmatmul.mubr.f32.gmra.mrb[0].mxu0 %v1807
      %v1958 = vpop.f32.mrb[0].mxu0
      %v1959 = vadd.f32 0.0, %v1958
      %v1960 = vpop.f32.mrb[0].mxu0
      %1961 = vmatprep.mubr.f32.mxu0 0.0
      %1962 = vmatmul.mubr.f32.gmra.mrb[0].mxu0 %v1808
      %v1963 = vpop.f32.mrb[0].mxu0
      %v1964 = vadd.f32 0.0, %v1963
      %v1965 = vpop.f32.mrb[0].mxu0
      %1966 = vmatprep.mubr.f32.mxu0 0.0
      %1967 = vmatmul.mubr.f32.gmra.mrb[0].mxu0 %v1809
      %v1968 = vpop.f32.mrb[0].mxu0
      %v1969 = vadd.f32 0.0, %v1968
      %v1970 = vpop.f32.mrb[0].mxu0
      %1971 = vmatprep.mubr.f32.mxu0 0.0
      %1972 = vmatmul.mubr.f32.gmra.mrb[0].mxu0 %v1810
      %v1973 = vpop.f32.mrb[0].mxu0
      %v1974 = vadd.f32 0.0, %v1973
      %v1975 = vpop.f32.mrb[0].mxu0
      %1976 = vmatprep.mubr.f32.mxu0 0.0
      %1977 = vmatmul.mubr.f32.gmra.mrb[0].mxu0 %v1811
      %v1978 = vpop.f32.mrb[0].mxu0
      %v1979 = vadd.f32 0.0, %v1978
      %v1980 = vpop.f32.mrb[0].mxu0
      %1981 = vmatprep.mubr.f32.mxu0 0.0
      %1982 = vmatmul.mubr.f32.gmra.mrb[0].mxu0 %v1812
      %v1983 = vpop.f32.mrb[0].mxu0
      %v1984 = vadd.f32 0.0, %v1983
      %v1985 = vpop.f32.mrb[0].mxu0
      %1986 = vmatprep.mubr.f32.mxu0 0.0
      %1987 = vmatmul.mubr.f32.gmra.mrb[0].mxu0 %v1813
      %v1988 = vpop.f32.mrb[0].mxu0
      %v1989 = vadd.f32 0.0, %v1988
      %v1990 = vpop.f32.mrb[0].mxu0
      %1991 = vmatprep.mubr.f32.mxu0 0.0
      %1992 = vmatmul.mubr.f32.gmra.mrb[0].mxu0 %v1814
      %v1993 = vpop.f32.mrb[0].mxu0
      %v1994 = vadd.f32 0.0, %v1993
      %v1995 = vpop.f32.mrb[0].mxu0
      %1996 = vmatprep.mubr.f32.mxu0 0.0
      %1997 = vmatmul.mubr.f32.gmra.mrb[0].mxu0 %v1815
      %v1998 = vpop.f32.mrb[0].mxu0
      %v1999 = vadd.f32 0.0, %v1998
      %v2000 = vpop.f32.mrb[0].mxu0
      %2001 = vmatprep.mubr.f32.mxu0 0.0
      %2002 = vmatmul.mubr.f32.gmra.mrb[0].mxu0 %v1816
      %v2003 = vpop.f32.mrb[0].mxu0
      %v2004 = vadd.f32 0.0, %v2003
      %v2005 = vpop.f32.mrb[0].mxu0
      %2006 = vmatprep.mubr.f32.mxu0 0.0
      %2007 = vmatmul.mubr.f32.gmra.mrb[0].mxu0 %v1817
      %v2008 = vpop.f32.mrb[0].mxu0
      %v2009 = vadd.f32 0.0, %v2008
      %v2010 = vpop.f32.mrb[0].mxu0
      %2011 = vmatprep.mubr.f32.mxu0 0.0
      %2012 = vmatmul.mubr.f32.gmra.mrb[0].mxu0 %v1818
      %v2013 = vpop.f32.mrb[0].mxu0
      %v2014 = vadd.f32 0.0, %v2013
      %v2015 = vpop.f32.mrb[0].mxu0
      %2016 = vmatprep.mubr.f32.mxu0 0.0
      %2017 = vmatmul.mubr.f32.gmra.mrb[0].mxu0 %v1819
      %v2018 = vpop.f32.mrb[0].mxu0
      %v2019 = vadd.f32 0.0, %v2018
      %v2020 = vpop.f32.mrb[0].mxu0
      %2021 = vmatprep.mubr.f32.mxu0 0.0
      %2022 = vmatmul.mubr.f32.gmra.mrb[0].mxu0 %v1820
      %v2023 = vpop.f32.mrb[0].mxu0
      %v2024 = vadd.f32 0.0, %v2023
      %v2025 = vpop.f32.mrb[0].mxu0
      %2026 = vmatprep.mubr.f32.mxu0 0.0
      %2027 = vmatmul.mubr.f32.gmra.mrb[0].mxu0 %v1821
      %v2028 = vpop.f32.mrb[0].mxu0
      %v2029 = vadd.f32 0.0, %v2028
      %v2030 = vpop.f32.mrb[0].mxu0
      %2031 = vmatprep.mubr.f32.mxu0 0.0
      %2032 = vmatmul.mubr.f32.gmra.mrb[0].mxu0 %v1822
      %v2033 = vpop.f32.mrb[0].mxu0
      %v2034 = vadd.f32 0.0, %v2033
      %v2035 = vpop.f32.mrb[0].mxu0
      %2036 = vmatprep.mubr.f32.mxu0 0.0
      %2037 = vmatmul.mubr.f32.gmra.mrb[0].mxu0 %v1823
      %v2038 = vpop.f32.mrb[0].mxu0
      %v2039 = vadd.f32 0.0, %v2038
      %v2040 = vpop.f32.mrb[0].mxu0
      %2041 = vmatprep.mubr.f32.mxu0 0.0
      %2042 = vmatmul.mubr.f32.gmra.mrb[0].mxu0 %v1824
      %v2043 = vpop.f32.mrb[0].mxu0
      %v2044 = vadd.f32 0.0, %v2043
      %v2045 = vpop.f32.mrb[0].mxu0
      %2046 = vmatprep.mubr.f32.mxu0 0.0
      %2047 = vmatmul.mubr.f32.gmra.mrb[0].mxu0 %v1825
      %v2048 = vpop.f32.mrb[0].mxu0
      %v2049 = vadd.f32 0.0, %v2048
      %v2050 = vpop.f32.mrb[0].mxu0
      %2051 = vmatprep.mubr.f32.mxu0 0.0
      %2052 = vmatmul.mubr.f32.gmra.mrb[0].mxu0 %v1826
      %v2053 = vpop.f32.mrb[0].mxu0
      %v2054 = vadd.f32 0.0, %v2053
      %v2055 = vpop.f32.mrb[0].mxu0
      %2056 = vmatprep.mubr.f32.mxu0 0.0
      %2057 = vmatmul.mubr.f32.gmra.mrb[0].mxu0 %v1827
      %v2058 = vpop.f32.mrb[0].mxu0
      %v2059 = vadd.f32 0.0, %v2058
      %v2060 = vpop.f32.mrb[0].mxu0
      %2061 = vmatprep.mubr.f32.mxu0 0.0
      %2062 = vmatmul.mubr.f32.gmra.mrb[0].mxu0 %v1828
      %v2063 = vpop.f32.mrb[0].mxu0
      %v2064 = vadd.f32 0.0, %v2063
      %v2065 = vpop.f32.mrb[0].mxu0
      %2066 = vmatprep.mubr.f32.mxu0 0.0
      %2067 = vmatmul.mubr.f32.gmra.mrb[0].mxu0 %v1829
      %v2068 = vpop.f32.mrb[0].mxu0
      %v2069 = vadd.f32 0.0, %v2068
      %v2070 = vpop.f32.mrb[0].mxu0
      %2071 = vdwg.mxu0
      %v2072 = vadd.f32 %v1766, %v1914
      %v2073 = vadd.f32 %v1767, %v1919
      %v2074 = vadd.f32 %v1768, %v1924
      %v2075 = vadd.f32 %v1769, %v1929
      %v2076 = vadd.f32 %v1770, %v1934
      %v2077 = vadd.f32 %v1771, %v1939
      %v2078 = vadd.f32 %v1772, %v1944
      %v2079 = vadd.f32 %v1773, %v1949
      %v2080 = vadd.f32 %v1774, %v1954
      %v2081 = vadd.f32 %v1775, %v1959
      %v2082 = vadd.f32 %v1776, %v1964
      %v2083 = vadd.f32 %v1777, %v1969
      %v2084 = vadd.f32 %v1778, %v1974
      %v2085 = vadd.f32 %v1779, %v1979
      %v2086 = vadd.f32 %v1780, %v1984
      %v2087 = vadd.f32 %v1781, %v1989
      %v2088 = vadd.f32 %v1782, %v1994
      %v2089 = vadd.f32 %v1783, %v1999
      %v2090 = vadd.f32 %v1784, %v2004
      %v2091 = vadd.f32 %v1785, %v2009
      %v2092 = vadd.f32 %v1786, %v2014
      %v2093 = vadd.f32 %v1787, %v2019
      %v2094 = vadd.f32 %v1788, %v2024
      %v2095 = vadd.f32 %v1789, %v2029
      %v2096 = vadd.f32 %v1790, %v2034
      %v2097 = vadd.f32 %v1791, %v2039
      %v2098 = vadd.f32 %v1792, %v2044
      %v2099 = vadd.f32 %v1793, %v2049
      %v2100 = vadd.f32 %v1794, %v2054
      %v2101 = vadd.f32 %v1795, %v2059
      %v2102 = vadd.f32 %v1796, %v2064
      %v2103 = vadd.f32 %v1797, %v2069
      %v2104 = vld [vmem:[%s412 + $0x2] sm:$0xff]
      %v2105 = vld [vmem:[%s412 + $0xa] sm:$0xff]
      %v2106 = vld [vmem:[%s412 + $0x1a] sm:$0xff]
      %v2107 = vld [vmem:[%s412 + $0x22] sm:$0xff]
      %v2108 = vld [vmem:[%s412 + $0x32] sm:$0xff]
      %v2109 = vld [vmem:[%s412 + $0x3a] sm:$0xff]
      %v2110 = vld [vmem:[%s412 + $0x4a] sm:$0xff]
      %v2111 = vld [vmem:[%s412 + $0x52] sm:$0xff]
      %v2112 = vld [vmem:[%s412 + $0x62] sm:$0xff]
      %v2113 = vld [vmem:[%s412 + $0x6a] sm:$0xff]
      %v2114 = vld [vmem:[%s412 + $0x7a] sm:$0xff]
      %v2115 = vld [vmem:[%s412 + $0x82] sm:$0xff]
      %v2116 = vld [vmem:[%s412 + $0x92] sm:$0xff]
      %v2117 = vld [vmem:[%s412 + $0x9a] sm:$0xff]
      %v2118 = vld [vmem:[%s412 + $0xaa] sm:$0xff]
      %v2119 = vld [vmem:[%s412 + $0xb2] sm:$0xff]
      %v2120 = vld [vmem:[%s412 + $0xc2] sm:$0xff]
      %v2121 = vld [vmem:[%s412 + $0xca] sm:$0xff]
      %v2122 = vld [vmem:[%s412 + $0xda] sm:$0xff]
      %v2123 = vld [vmem:[%s412 + $0xe2] sm:$0xff]
      %v2124 = vld [vmem:[%s412 + $0xf2] sm:$0xff]
      %v2125 = vld [vmem:[%s412 + $0xfa] sm:$0xff]
      %v2126 = vld [vmem:[%s412 + $0x10a] sm:$0xff]
      %v2127 = vld [vmem:[%s412 + $0x112] sm:$0xff]
      %v2128 = vld [vmem:[%s412 + $0x122] sm:$0xff]
      %v2129 = vld [vmem:[%s412 + $0x12a] sm:$0xff]
      %v2130 = vld [vmem:[%s412 + $0x13a] sm:$0xff]
      %v2131 = vld [vmem:[%s412 + $0x142] sm:$0xff]
      %v2132 = vld [vmem:[%s412 + $0x152] sm:$0xff]
      %v2133 = vld [vmem:[%s412 + $0x15a] sm:$0xff]
      %v2134 = vld [vmem:[%s412 + $0x16a] sm:$0xff]
      %v2135 = vld [vmem:[%s412 + $0x172] sm:$0xff]
      %s2136 = scalar_lea.vmem %s2, 640
      %v2137 = vld [vmem:[%s2136] sm:$0xff]
      %v2138 = vld [vmem:[%s2136 + $0x8] sm:$0xff]
      %v2139 = vld [vmem:[%s2136 + $0x10] sm:$0xff]
      %v2140 = vld [vmem:[%s2136 + $0x18] sm:$0xff]
      %v2141 = vld [vmem:[%s2136 + $0x20] sm:$0xff]
      %v2142 = vld [vmem:[%s2136 + $0x28] sm:$0xff]
      %v2143 = vld [vmem:[%s2136 + $0x30] sm:$0xff]
      %v2144 = vld [vmem:[%s2136 + $0x38] sm:$0xff]
      %v2145 = vld [vmem:[%s2136 + $0x40] sm:$0xff]
      %v2146 = vld [vmem:[%s2136 + $0x48] sm:$0xff]
      %v2147 = vld [vmem:[%s2136 + $0x50] sm:$0xff]
      %v2148 = vld [vmem:[%s2136 + $0x58] sm:$0xff]
      %v2149 = vld [vmem:[%s2136 + $0x60] sm:$0xff]
      %v2150 = vld [vmem:[%s2136 + $0x68] sm:$0xff]
      %v2151 = vld [vmem:[%s2136 + $0x70] sm:$0xff]
      %v2152 = vld [vmem:[%s2136 + $0x78] sm:$0xff]
      %2153 = vmatprep.subr.mxu0 0.0
      %2154 = vmatpush1.msra.mxu0 %v2137
      %2155 = vmatprep.subr.mxu0 0.0
      %2156 = vmatpush1.msra.mxu0 %v2138
      %2157 = vmatprep.subr.mxu0 0.0
      %2158 = vmatpush1.msra.mxu0 %v2139
      %2159 = vmatprep.subr.mxu0 0.0
      %2160 = vmatpush1.msra.mxu0 %v2140
      %2161 = vmatprep.subr.mxu0 0.0
      %2162 = vmatpush1.msra.mxu0 %v2141
      %2163 = vmatprep.subr.mxu0 0.0
      %2164 = vmatpush1.msra.mxu0 %v2142
      %2165 = vmatprep.subr.mxu0 0.0
      %2166 = vmatpush1.msra.mxu0 %v2143
      %2167 = vmatprep.subr.mxu0 0.0
      %2168 = vmatpush1.msra.mxu0 %v2144
      %2169 = vmatprep.subr.mxu0 0.0
      %2170 = vmatpush1.msra.mxu0 %v2145
      %2171 = vmatprep.subr.mxu0 0.0
      %2172 = vmatpush1.msra.mxu0 %v2146
      %2173 = vmatprep.subr.mxu0 0.0
      %2174 = vmatpush1.msra.mxu0 %v2147
      %2175 = vmatprep.subr.mxu0 0.0
      %2176 = vmatpush1.msra.mxu0 %v2148
      %2177 = vmatprep.subr.mxu0 0.0
      %2178 = vmatpush1.msra.mxu0 %v2149
      %2179 = vmatprep.subr.mxu0 0.0
      %2180 = vmatpush1.msra.mxu0 %v2150
      %2181 = vmatprep.subr.mxu0 0.0
      %2182 = vmatpush1.msra.mxu0 %v2151
      %2183 = vmatprep.subr.mxu0 0.0
      %2184 = vmatpush1.msra.mxu0 %v2152
      %2185 = vmatprep.subr.mxu0 0.0
      %2186 = vmatpush1.msra.mxu0 0.0
      %2187 = vmatprep.subr.mxu0 0.0
      %2188 = vmatpush1.msra.mxu0 0.0
      %2189 = vmatprep.subr.mxu0 0.0
      %2190 = vmatpush1.msra.mxu0 0.0
      %2191 = vmatprep.subr.mxu0 0.0
      %2192 = vmatpush1.msra.mxu0 0.0
      %2193 = vmatprep.subr.mxu0 0.0
      %2194 = vmatpush1.msra.mxu0 0.0
      %2195 = vmatprep.subr.mxu0 0.0
      %2196 = vmatpush1.msra.mxu0 0.0
      %2197 = vmatprep.subr.mxu0 0.0
      %2198 = vmatpush1.msra.mxu0 0.0
      %2199 = vmatprep.subr.mxu0 0.0
      %2200 = vmatpush1.msra.mxu0 0.0
      %2201 = vmatprep.subr.mxu0 0.0
      %2202 = vmatpush1.msra.mxu0 0.0
      %2203 = vmatprep.subr.mxu0 0.0
      %2204 = vmatpush1.msra.mxu0 0.0
      %2205 = vmatprep.subr.mxu0 0.0
      %2206 = vmatpush1.msra.mxu0 0.0
      %2207 = vmatprep.subr.mxu0 0.0
      %2208 = vmatpush1.msra.mxu0 0.0
      %2209 = vmatprep.subr.mxu0 0.0
      %2210 = vmatpush1.msra.mxu0 0.0
      %2211 = vmatprep.subr.mxu0 0.0
      %2212 = vmatpush1.msra.mxu0 0.0
      %2213 = vmatprep.subr.mxu0 0.0
      %2214 = vmatpush1.msra.mxu0 0.0
      %2215 = vmatprep.subr.mxu0 0.0
      %2216 = vmatpush1.msra.mxu0 0.0
      %2217 = vmatprep.mubr.f32.mxu0 0.0
      %2218 = vmatmul.mubr.f32.gmra.mrb[0].mxu0 %v2104
      %v2219 = vpop.f32.mrb[0].mxu0
      %v2220 = vadd.f32 0.0, %v2219
      %v2221 = vpop.f32.mrb[0].mxu0
      %2222 = vmatprep.mubr.f32.mxu0 0.0
      %2223 = vmatmul.mubr.f32.gmra.mrb[0].mxu0 %v2105
      %v2224 = vpop.f32.mrb[0].mxu0
      %v2225 = vadd.f32 0.0, %v2224
      %v2226 = vpop.f32.mrb[0].mxu0
      %2227 = vmatprep.mubr.f32.mxu0 0.0
      %2228 = vmatmul.mubr.f32.gmra.mrb[0].mxu0 %v2106
      %v2229 = vpop.f32.mrb[0].mxu0
      %v2230 = vadd.f32 0.0, %v2229
      %v2231 = vpop.f32.mrb[0].mxu0
      %2232 = vmatprep.mubr.f32.mxu0 0.0
      %2233 = vmatmul.mubr.f32.gmra.mrb[0].mxu0 %v2107
      %v2234 = vpop.f32.mrb[0].mxu0
      %v2235 = vadd.f32 0.0, %v2234
      %v2236 = vpop.f32.mrb[0].mxu0
      %2237 = vmatprep.mubr.f32.mxu0 0.0
      %2238 = vmatmul.mubr.f32.gmra.mrb[0].mxu0 %v2108
      %v2239 = vpop.f32.mrb[0].mxu0
      %v2240 = vadd.f32 0.0, %v2239
      %v2241 = vpop.f32.mrb[0].mxu0
      %2242 = vmatprep.mubr.f32.mxu0 0.0
      %2243 = vmatmul.mubr.f32.gmra.mrb[0].mxu0 %v2109
      %v2244 = vpop.f32.mrb[0].mxu0
      %v2245 = vadd.f32 0.0, %v2244
      %v2246 = vpop.f32.mrb[0].mxu0
      %2247 = vmatprep.mubr.f32.mxu0 0.0
      %2248 = vmatmul.mubr.f32.gmra.mrb[0].mxu0 %v2110
      %v2249 = vpop.f32.mrb[0].mxu0
      %v2250 = vadd.f32 0.0, %v2249
      %v2251 = vpop.f32.mrb[0].mxu0
      %2252 = vmatprep.mubr.f32.mxu0 0.0
      %2253 = vmatmul.mubr.f32.gmra.mrb[0].mxu0 %v2111
      %v2254 = vpop.f32.mrb[0].mxu0
      %v2255 = vadd.f32 0.0, %v2254
      %v2256 = vpop.f32.mrb[0].mxu0
      %2257 = vmatprep.mubr.f32.mxu0 0.0
      %2258 = vmatmul.mubr.f32.gmra.mrb[0].mxu0 %v2112
      %v2259 = vpop.f32.mrb[0].mxu0
      %v2260 = vadd.f32 0.0, %v2259
      %v2261 = vpop.f32.mrb[0].mxu0
      %2262 = vmatprep.mubr.f32.mxu0 0.0
      %2263 = vmatmul.mubr.f32.gmra.mrb[0].mxu0 %v2113
      %v2264 = vpop.f32.mrb[0].mxu0
      %v2265 = vadd.f32 0.0, %v2264
      %v2266 = vpop.f32.mrb[0].mxu0
      %2267 = vmatprep.mubr.f32.mxu0 0.0
      %2268 = vmatmul.mubr.f32.gmra.mrb[0].mxu0 %v2114
      %v2269 = vpop.f32.mrb[0].mxu0
      %v2270 = vadd.f32 0.0, %v2269
      %v2271 = vpop.f32.mrb[0].mxu0
      %2272 = vmatprep.mubr.f32.mxu0 0.0
      %2273 = vmatmul.mubr.f32.gmra.mrb[0].mxu0 %v2115
      %v2274 = vpop.f32.mrb[0].mxu0
      %v2275 = vadd.f32 0.0, %v2274
      %v2276 = vpop.f32.mrb[0].mxu0
      %2277 = vmatprep.mubr.f32.mxu0 0.0
      %2278 = vmatmul.mubr.f32.gmra.mrb[0].mxu0 %v2116
      %v2279 = vpop.f32.mrb[0].mxu0
      %v2280 = vadd.f32 0.0, %v2279
      %v2281 = vpop.f32.mrb[0].mxu0
      %2282 = vmatprep.mubr.f32.mxu0 0.0
      %2283 = vmatmul.mubr.f32.gmra.mrb[0].mxu0 %v2117
      %v2284 = vpop.f32.mrb[0].mxu0
      %v2285 = vadd.f32 0.0, %v2284
      %v2286 = vpop.f32.mrb[0].mxu0
      %2287 = vmatprep.mubr.f32.mxu0 0.0
      %2288 = vmatmul.mubr.f32.gmra.mrb[0].mxu0 %v2118
      %v2289 = vpop.f32.mrb[0].mxu0
      %v2290 = vadd.f32 0.0, %v2289
      %v2291 = vpop.f32.mrb[0].mxu0
      %2292 = vmatprep.mubr.f32.mxu0 0.0
      %2293 = vmatmul.mubr.f32.gmra.mrb[0].mxu0 %v2119
      %v2294 = vpop.f32.mrb[0].mxu0
      %v2295 = vadd.f32 0.0, %v2294
      %v2296 = vpop.f32.mrb[0].mxu0
      %2297 = vmatprep.mubr.f32.mxu0 0.0
      %2298 = vmatmul.mubr.f32.gmra.mrb[0].mxu0 %v2120
      %v2299 = vpop.f32.mrb[0].mxu0
      %v2300 = vadd.f32 0.0, %v2299
      %v2301 = vpop.f32.mrb[0].mxu0
      %2302 = vmatprep.mubr.f32.mxu0 0.0
      %2303 = vmatmul.mubr.f32.gmra.mrb[0].mxu0 %v2121
      %v2304 = vpop.f32.mrb[0].mxu0
      %v2305 = vadd.f32 0.0, %v2304
      %v2306 = vpop.f32.mrb[0].mxu0
      %2307 = vmatprep.mubr.f32.mxu0 0.0
      %2308 = vmatmul.mubr.f32.gmra.mrb[0].mxu0 %v2122
      %v2309 = vpop.f32.mrb[0].mxu0
      %v2310 = vadd.f32 0.0, %v2309
      %v2311 = vpop.f32.mrb[0].mxu0
      %2312 = vmatprep.mubr.f32.mxu0 0.0
      %2313 = vmatmul.mubr.f32.gmra.mrb[0].mxu0 %v2123
      %v2314 = vpop.f32.mrb[0].mxu0
      %v2315 = vadd.f32 0.0, %v2314
      %v2316 = vpop.f32.mrb[0].mxu0
      %2317 = vmatprep.mubr.f32.mxu0 0.0
      %2318 = vmatmul.mubr.f32.gmra.mrb[0].mxu0 %v2124
      %v2319 = vpop.f32.mrb[0].mxu0
      %v2320 = vadd.f32 0.0, %v2319
      %v2321 = vpop.f32.mrb[0].mxu0
      %2322 = vmatprep.mubr.f32.mxu0 0.0
      %2323 = vmatmul.mubr.f32.gmra.mrb[0].mxu0 %v2125
      %v2324 = vpop.f32.mrb[0].mxu0
      %v2325 = vadd.f32 0.0, %v2324
      %v2326 = vpop.f32.mrb[0].mxu0
      %2327 = vmatprep.mubr.f32.mxu0 0.0
      %2328 = vmatmul.mubr.f32.gmra.mrb[0].mxu0 %v2126
      %v2329 = vpop.f32.mrb[0].mxu0
      %v2330 = vadd.f32 0.0, %v2329
      %v2331 = vpop.f32.mrb[0].mxu0
      %2332 = vmatprep.mubr.f32.mxu0 0.0
      %2333 = vmatmul.mubr.f32.gmra.mrb[0].mxu0 %v2127
      %v2334 = vpop.f32.mrb[0].mxu0
      %v2335 = vadd.f32 0.0, %v2334
      %v2336 = vpop.f32.mrb[0].mxu0
      %2337 = vmatprep.mubr.f32.mxu0 0.0
      %2338 = vmatmul.mubr.f32.gmra.mrb[0].mxu0 %v2128
      %v2339 = vpop.f32.mrb[0].mxu0
      %v2340 = vadd.f32 0.0, %v2339
      %v2341 = vpop.f32.mrb[0].mxu0
      %2342 = vmatprep.mubr.f32.mxu0 0.0
      %2343 = vmatmul.mubr.f32.gmra.mrb[0].mxu0 %v2129
      %v2344 = vpop.f32.mrb[0].mxu0
      %v2345 = vadd.f32 0.0, %v2344
      %v2346 = vpop.f32.mrb[0].mxu0
      %2347 = vmatprep.mubr.f32.mxu0 0.0
      %2348 = vmatmul.mubr.f32.gmra.mrb[0].mxu0 %v2130
      %v2349 = vpop.f32.mrb[0].mxu0
      %v2350 = vadd.f32 0.0, %v2349
      %v2351 = vpop.f32.mrb[0].mxu0
      %2352 = vmatprep.mubr.f32.mxu0 0.0
      %2353 = vmatmul.mubr.f32.gmra.mrb[0].mxu0 %v2131
      %v2354 = vpop.f32.mrb[0].mxu0
      %v2355 = vadd.f32 0.0, %v2354
      %v2356 = vpop.f32.mrb[0].mxu0
      %2357 = vmatprep.mubr.f32.mxu0 0.0
      %2358 = vmatmul.mubr.f32.gmra.mrb[0].mxu0 %v2132
      %v2359 = vpop.f32.mrb[0].mxu0
      %v2360 = vadd.f32 0.0, %v2359
      %v2361 = vpop.f32.mrb[0].mxu0
      %2362 = vmatprep.mubr.f32.mxu0 0.0
      %2363 = vmatmul.mubr.f32.gmra.mrb[0].mxu0 %v2133
      %v2364 = vpop.f32.mrb[0].mxu0
      %v2365 = vadd.f32 0.0, %v2364
      %v2366 = vpop.f32.mrb[0].mxu0
      %2367 = vmatprep.mubr.f32.mxu0 0.0
      %2368 = vmatmul.mubr.f32.gmra.mrb[0].mxu0 %v2134
      %v2369 = vpop.f32.mrb[0].mxu0
      %v2370 = vadd.f32 0.0, %v2369
      %v2371 = vpop.f32.mrb[0].mxu0
      %2372 = vmatprep.mubr.f32.mxu0 0.0
      %2373 = vmatmul.mubr.f32.gmra.mrb[0].mxu0 %v2135
      %v2374 = vpop.f32.mrb[0].mxu0
      %v2375 = vadd.f32 0.0, %v2374
      %v2376 = vpop.f32.mrb[0].mxu0
      %2377 = vdwg.mxu0
      %v2378 = vadd.f32 %v2072, %v2220
      %v2379 = vadd.f32 %v2073, %v2225
      %v2380 = vadd.f32 %v2074, %v2230
      %v2381 = vadd.f32 %v2075, %v2235
      %v2382 = vadd.f32 %v2076, %v2240
      %v2383 = vadd.f32 %v2077, %v2245
      %v2384 = vadd.f32 %v2078, %v2250
      %v2385 = vadd.f32 %v2079, %v2255
      %v2386 = vadd.f32 %v2080, %v2260
      %v2387 = vadd.f32 %v2081, %v2265
      %v2388 = vadd.f32 %v2082, %v2270
      %v2389 = vadd.f32 %v2083, %v2275
      %v2390 = vadd.f32 %v2084, %v2280
      %v2391 = vadd.f32 %v2085, %v2285
      %v2392 = vadd.f32 %v2086, %v2290
      %v2393 = vadd.f32 %v2087, %v2295
      %v2394 = vadd.f32 %v2088, %v2300
      %v2395 = vadd.f32 %v2089, %v2305
      %v2396 = vadd.f32 %v2090, %v2310
      %v2397 = vadd.f32 %v2091, %v2315
      %v2398 = vadd.f32 %v2092, %v2320
      %v2399 = vadd.f32 %v2093, %v2325
      %v2400 = vadd.f32 %v2094, %v2330
      %v2401 = vadd.f32 %v2095, %v2335
      %v2402 = vadd.f32 %v2096, %v2340
      %v2403 = vadd.f32 %v2097, %v2345
      %v2404 = vadd.f32 %v2098, %v2350
      %v2405 = vadd.f32 %v2099, %v2355
      %v2406 = vadd.f32 %v2100, %v2360
      %v2407 = vadd.f32 %v2101, %v2365
      %v2408 = vadd.f32 %v2102, %v2370
      %v2409 = vadd.f32 %v2103, %v2375
      %s2410 = scalar_lea.vmem [#allocation2], 48
      %v2411 = vld [vmem:[%s2410] sm:$0xff]
      %v2412 = vld [vmem:[%s2410 + $0x8] sm:$0xff]
      %v2413 = vld [vmem:[%s2410 + $0x18] sm:$0xff]
      %v2414 = vld [vmem:[%s2410 + $0x20] sm:$0xff]
      %v2415 = vld [vmem:[%s2410 + $0x30] sm:$0xff]
      %v2416 = vld [vmem:[%s2410 + $0x38] sm:$0xff]
      %v2417 = vld [vmem:[%s2410 + $0x48] sm:$0xff]
      %v2418 = vld [vmem:[%s2410 + $0x50] sm:$0xff]
      %v2419 = vld [vmem:[%s2410 + $0x60] sm:$0xff]
      %v2420 = vld [vmem:[%s2410 + $0x68] sm:$0xff]
      %v2421 = vld [vmem:[%s2410 + $0x78] sm:$0xff]
      %v2422 = vld [vmem:[%s2410 + $0x80] sm:$0xff]
      %v2423 = vld [vmem:[%s2410 + $0x90] sm:$0xff]
      %v2424 = vld [vmem:[%s2410 + $0x98] sm:$0xff]
      %v2425 = vld [vmem:[%s2410 + $0xa8] sm:$0xff]
      %v2426 = vld [vmem:[%s2410 + $0xb0] sm:$0xff]
      %v2427 = vld [vmem:[%s2410 + $0xc0] sm:$0xff]
      %v2428 = vld [vmem:[%s2410 + $0xc8] sm:$0xff]
      %v2429 = vld [vmem:[%s2410 + $0xd8] sm:$0xff]
      %v2430 = vld [vmem:[%s2410 + $0xe0] sm:$0xff]
      %v2431 = vld [vmem:[%s2410 + $0xf0] sm:$0xff]
      %v2432 = vld [vmem:[%s2410 + $0xf8] sm:$0xff]
      %v2433 = vld [vmem:[%s2410 + $0x108] sm:$0xff]
      %v2434 = vld [vmem:[%s2410 + $0x110] sm:$0xff]
      %v2435 = vld [vmem:[%s2410 + $0x120] sm:$0xff]
      %v2436 = vld [vmem:[%s2410 + $0x128] sm:$0xff]
      %v2437 = vld [vmem:[%s2410 + $0x138] sm:$0xff]
      %v2438 = vld [vmem:[%s2410 + $0x140] sm:$0xff]
      %v2439 = vld [vmem:[%s2410 + $0x150] sm:$0xff]
      %v2440 = vld [vmem:[%s2410 + $0x158] sm:$0xff]
      %v2441 = vld [vmem:[%s2410 + $0x168] sm:$0xff]
      %v2442 = vld [vmem:[%s2410 + $0x170] sm:$0xff]
      %s2443 = scalar_lea.vmem %s2, 768
      %v2444 = vld [vmem:[%s2443] sm:$0xff]
      %v2445 = vld [vmem:[%s2443 + $0x8] sm:$0xff]
      %v2446 = vld [vmem:[%s2443 + $0x10] sm:$0xff]
      %v2447 = vld [vmem:[%s2443 + $0x18] sm:$0xff]
      %v2448 = vld [vmem:[%s2443 + $0x20] sm:$0xff]
      %v2449 = vld [vmem:[%s2443 + $0x28] sm:$0xff]
      %v2450 = vld [vmem:[%s2443 + $0x30] sm:$0xff]
      %v2451 = vld [vmem:[%s2443 + $0x38] sm:$0xff]
      %v2452 = vld [vmem:[%s2443 + $0x40] sm:$0xff]
      %v2453 = vld [vmem:[%s2443 + $0x48] sm:$0xff]
      %v2454 = vld [vmem:[%s2443 + $0x50] sm:$0xff]
      %v2455 = vld [vmem:[%s2443 + $0x58] sm:$0xff]
      %v2456 = vld [vmem:[%s2443 + $0x60] sm:$0xff]
      %v2457 = vld [vmem:[%s2443 + $0x68] sm:$0xff]
      %v2458 = vld [vmem:[%s2443 + $0x70] sm:$0xff]
      %v2459 = vld [vmem:[%s2443 + $0x78] sm:$0xff]
      %2460 = vmatprep.subr.mxu0 0.0
      %2461 = vmatpush1.msra.mxu0 %v2444
      %2462 = vmatprep.subr.mxu0 0.0
      %2463 = vmatpush1.msra.mxu0 %v2445
      %2464 = vmatprep.subr.mxu0 0.0
      %2465 = vmatpush1.msra.mxu0 %v2446
      %2466 = vmatprep.subr.mxu0 0.0
      %2467 = vmatpush1.msra.mxu0 %v2447
      %2468 = vmatprep.subr.mxu0 0.0
      %2469 = vmatpush1.msra.mxu0 %v2448
      %2470 = vmatprep.subr.mxu0 0.0
      %2471 = vmatpush1.msra.mxu0 %v2449
      %2472 = vmatprep.subr.mxu0 0.0
      %2473 = vmatpush1.msra.mxu0 %v2450
      %2474 = vmatprep.subr.mxu0 0.0
      %2475 = vmatpush1.msra.mxu0 %v2451
      %2476 = vmatprep.subr.mxu0 0.0
      %2477 = vmatpush1.msra.mxu0 %v2452
      %2478 = vmatprep.subr.mxu0 0.0
      %2479 = vmatpush1.msra.mxu0 %v2453
      %2480 = vmatprep.subr.mxu0 0.0
      %2481 = vmatpush1.msra.mxu0 %v2454
      %2482 = vmatprep.subr.mxu0 0.0
      %2483 = vmatpush1.msra.mxu0 %v2455
      %2484 = vmatprep.subr.mxu0 0.0
      %2485 = vmatpush1.msra.mxu0 %v2456
      %2486 = vmatprep.subr.mxu0 0.0
      %2487 = vmatpush1.msra.mxu0 %v2457
      %2488 = vmatprep.subr.mxu0 0.0
      %2489 = vmatpush1.msra.mxu0 %v2458
      %2490 = vmatprep.subr.mxu0 0.0
      %2491 = vmatpush1.msra.mxu0 %v2459
      %2492 = vmatprep.subr.mxu0 0.0
      %2493 = vmatpush1.msra.mxu0 0.0
      %2494 = vmatprep.subr.mxu0 0.0
      %2495 = vmatpush1.msra.mxu0 0.0
      %2496 = vmatprep.subr.mxu0 0.0
      %2497 = vmatpush1.msra.mxu0 0.0
      %2498 = vmatprep.subr.mxu0 0.0
      %2499 = vmatpush1.msra.mxu0 0.0
      %2500 = vmatprep.subr.mxu0 0.0
      %2501 = vmatpush1.msra.mxu0 0.0
      %2502 = vmatprep.subr.mxu0 0.0
      %2503 = vmatpush1.msra.mxu0 0.0
      %2504 = vmatprep.subr.mxu0 0.0
      %2505 = vmatpush1.msra.mxu0 0.0
      %2506 = vmatprep.subr.mxu0 0.0
      %2507 = vmatpush1.msra.mxu0 0.0
      %2508 = vmatprep.subr.mxu0 0.0
      %2509 = vmatpush1.msra.mxu0 0.0
      %2510 = vmatprep.subr.mxu0 0.0
      %2511 = vmatpush1.msra.mxu0 0.0
      %2512 = vmatprep.subr.mxu0 0.0
      %2513 = vmatpush1.msra.mxu0 0.0
      %2514 = vmatprep.subr.mxu0 0.0
      %2515 = vmatpush1.msra.mxu0 0.0
      %2516 = vmatprep.subr.mxu0 0.0
      %2517 = vmatpush1.msra.mxu0 0.0
      %2518 = vmatprep.subr.mxu0 0.0
      %2519 = vmatpush1.msra.mxu0 0.0
      %2520 = vmatprep.subr.mxu0 0.0
      %2521 = vmatpush1.msra.mxu0 0.0
      %2522 = vmatprep.subr.mxu0 0.0
      %2523 = vmatpush1.msra.mxu0 0.0
      %2524 = vmatprep.mubr.f32.mxu0 0.0
      %2525 = vmatmul.mubr.f32.gmra.mrb[0].mxu0 %v2411
      %v2526 = vpop.f32.mrb[0].mxu0
      %v2527 = vadd.f32 0.0, %v2526
      %v2528 = vpop.f32.mrb[0].mxu0
      %2529 = vmatprep.mubr.f32.mxu0 0.0
      %2530 = vmatmul.mubr.f32.gmra.mrb[0].mxu0 %v2412
      %v2531 = vpop.f32.mrb[0].mxu0
      %v2532 = vadd.f32 0.0, %v2531
      %v2533 = vpop.f32.mrb[0].mxu0
      %2534 = vmatprep.mubr.f32.mxu0 0.0
      %2535 = vmatmul.mubr.f32.gmra.mrb[0].mxu0 %v2413
      %v2536 = vpop.f32.mrb[0].mxu0
      %v2537 = vadd.f32 0.0, %v2536
      %v2538 = vpop.f32.mrb[0].mxu0
      %2539 = vmatprep.mubr.f32.mxu0 0.0
      %2540 = vmatmul.mubr.f32.gmra.mrb[0].mxu0 %v2414
      %v2541 = vpop.f32.mrb[0].mxu0
      %v2542 = vadd.f32 0.0, %v2541
      %v2543 = vpop.f32.mrb[0].mxu0
      %2544 = vmatprep.mubr.f32.mxu0 0.0
      %2545 = vmatmul.mubr.f32.gmra.mrb[0].mxu0 %v2415
      %v2546 = vpop.f32.mrb[0].mxu0
      %v2547 = vadd.f32 0.0, %v2546
      %v2548 = vpop.f32.mrb[0].mxu0
      %2549 = vmatprep.mubr.f32.mxu0 0.0
      %2550 = vmatmul.mubr.f32.gmra.mrb[0].mxu0 %v2416
      %v2551 = vpop.f32.mrb[0].mxu0
      %v2552 = vadd.f32 0.0, %v2551
      %v2553 = vpop.f32.mrb[0].mxu0
      %2554 = vmatprep.mubr.f32.mxu0 0.0
      %2555 = vmatmul.mubr.f32.gmra.mrb[0].mxu0 %v2417
      %v2556 = vpop.f32.mrb[0].mxu0
      %v2557 = vadd.f32 0.0, %v2556
      %v2558 = vpop.f32.mrb[0].mxu0
      %2559 = vmatprep.mubr.f32.mxu0 0.0
      %2560 = vmatmul.mubr.f32.gmra.mrb[0].mxu0 %v2418
      %v2561 = vpop.f32.mrb[0].mxu0
      %v2562 = vadd.f32 0.0, %v2561
      %v2563 = vpop.f32.mrb[0].mxu0
      %2564 = vmatprep.mubr.f32.mxu0 0.0
      %2565 = vmatmul.mubr.f32.gmra.mrb[0].mxu0 %v2419
      %v2566 = vpop.f32.mrb[0].mxu0
      %v2567 = vadd.f32 0.0, %v2566
      %v2568 = vpop.f32.mrb[0].mxu0
      %2569 = vmatprep.mubr.f32.mxu0 0.0
      %2570 = vmatmul.mubr.f32.gmra.mrb[0].mxu0 %v2420
      %v2571 = vpop.f32.mrb[0].mxu0
      %v2572 = vadd.f32 0.0, %v2571
      %v2573 = vpop.f32.mrb[0].mxu0
      %2574 = vmatprep.mubr.f32.mxu0 0.0
      %2575 = vmatmul.mubr.f32.gmra.mrb[0].mxu0 %v2421
      %v2576 = vpop.f32.mrb[0].mxu0
      %v2577 = vadd.f32 0.0, %v2576
      %v2578 = vpop.f32.mrb[0].mxu0
      %2579 = vmatprep.mubr.f32.mxu0 0.0
      %2580 = vmatmul.mubr.f32.gmra.mrb[0].mxu0 %v2422
      %v2581 = vpop.f32.mrb[0].mxu0
      %v2582 = vadd.f32 0.0, %v2581
      %v2583 = vpop.f32.mrb[0].mxu0
      %2584 = vmatprep.mubr.f32.mxu0 0.0
      %2585 = vmatmul.mubr.f32.gmra.mrb[0].mxu0 %v2423
      %v2586 = vpop.f32.mrb[0].mxu0
      %v2587 = vadd.f32 0.0, %v2586
      %v2588 = vpop.f32.mrb[0].mxu0
      %2589 = vmatprep.mubr.f32.mxu0 0.0
      %2590 = vmatmul.mubr.f32.gmra.mrb[0].mxu0 %v2424
      %v2591 = vpop.f32.mrb[0].mxu0
      %v2592 = vadd.f32 0.0, %v2591
      %v2593 = vpop.f32.mrb[0].mxu0
      %2594 = vmatprep.mubr.f32.mxu0 0.0
      %2595 = vmatmul.mubr.f32.gmra.mrb[0].mxu0 %v2425
      %v2596 = vpop.f32.mrb[0].mxu0
      %v2597 = vadd.f32 0.0, %v2596
      %v2598 = vpop.f32.mrb[0].mxu0
      %2599 = vmatprep.mubr.f32.mxu0 0.0
      %2600 = vmatmul.mubr.f32.gmra.mrb[0].mxu0 %v2426
      %v2601 = vpop.f32.mrb[0].mxu0
      %v2602 = vadd.f32 0.0, %v2601
      %v2603 = vpop.f32.mrb[0].mxu0
      %2604 = vmatprep.mubr.f32.mxu0 0.0
      %2605 = vmatmul.mubr.f32.gmra.mrb[0].mxu0 %v2427
      %v2606 = vpop.f32.mrb[0].mxu0
      %v2607 = vadd.f32 0.0, %v2606
      %v2608 = vpop.f32.mrb[0].mxu0
      %2609 = vmatprep.mubr.f32.mxu0 0.0
      %2610 = vmatmul.mubr.f32.gmra.mrb[0].mxu0 %v2428
      %v2611 = vpop.f32.mrb[0].mxu0
      %v2612 = vadd.f32 0.0, %v2611
      %v2613 = vpop.f32.mrb[0].mxu0
      %2614 = vmatprep.mubr.f32.mxu0 0.0
      %2615 = vmatmul.mubr.f32.gmra.mrb[0].mxu0 %v2429
      %v2616 = vpop.f32.mrb[0].mxu0
      %v2617 = vadd.f32 0.0, %v2616
      %v2618 = vpop.f32.mrb[0].mxu0
      %2619 = vmatprep.mubr.f32.mxu0 0.0
      %2620 = vmatmul.mubr.f32.gmra.mrb[0].mxu0 %v2430
      %v2621 = vpop.f32.mrb[0].mxu0
      %v2622 = vadd.f32 0.0, %v2621
      %v2623 = vpop.f32.mrb[0].mxu0
      %2624 = vmatprep.mubr.f32.mxu0 0.0
      %2625 = vmatmul.mubr.f32.gmra.mrb[0].mxu0 %v2431
      %v2626 = vpop.f32.mrb[0].mxu0
      %v2627 = vadd.f32 0.0, %v2626
      %v2628 = vpop.f32.mrb[0].mxu0
      %2629 = vmatprep.mubr.f32.mxu0 0.0
      %2630 = vmatmul.mubr.f32.gmra.mrb[0].mxu0 %v2432
      %v2631 = vpop.f32.mrb[0].mxu0
      %v2632 = vadd.f32 0.0, %v2631
      %v2633 = vpop.f32.mrb[0].mxu0
      %2634 = vmatprep.mubr.f32.mxu0 0.0
      %2635 = vmatmul.mubr.f32.gmra.mrb[0].mxu0 %v2433
      %v2636 = vpop.f32.mrb[0].mxu0
      %v2637 = vadd.f32 0.0, %v2636
      %v2638 = vpop.f32.mrb[0].mxu0
      %2639 = vmatprep.mubr.f32.mxu0 0.0
      %2640 = vmatmul.mubr.f32.gmra.mrb[0].mxu0 %v2434
      %v2641 = vpop.f32.mrb[0].mxu0
      %v2642 = vadd.f32 0.0, %v2641
      %v2643 = vpop.f32.mrb[0].mxu0
      %2644 = vmatprep.mubr.f32.mxu0 0.0
      %2645 = vmatmul.mubr.f32.gmra.mrb[0].mxu0 %v2435
      %v2646 = vpop.f32.mrb[0].mxu0
      %v2647 = vadd.f32 0.0, %v2646
      %v2648 = vpop.f32.mrb[0].mxu0
      %2649 = vmatprep.mubr.f32.mxu0 0.0
      %2650 = vmatmul.mubr.f32.gmra.mrb[0].mxu0 %v2436
      %v2651 = vpop.f32.mrb[0].mxu0
      %v2652 = vadd.f32 0.0, %v2651
      %v2653 = vpop.f32.mrb[0].mxu0
      %2654 = vmatprep.mubr.f32.mxu0 0.0
      %2655 = vmatmul.mubr.f32.gmra.mrb[0].mxu0 %v2437
      %v2656 = vpop.f32.mrb[0].mxu0
      %v2657 = vadd.f32 0.0, %v2656
      %v2658 = vpop.f32.mrb[0].mxu0
      %2659 = vmatprep.mubr.f32.mxu0 0.0
      %2660 = vmatmul.mubr.f32.gmra.mrb[0].mxu0 %v2438
      %v2661 = vpop.f32.mrb[0].mxu0
      %v2662 = vadd.f32 0.0, %v2661
      %v2663 = vpop.f32.mrb[0].mxu0
      %2664 = vmatprep.mubr.f32.mxu0 0.0
      %2665 = vmatmul.mubr.f32.gmra.mrb[0].mxu0 %v2439
      %v2666 = vpop.f32.mrb[0].mxu0
      %v2667 = vadd.f32 0.0, %v2666
      %v2668 = vpop.f32.mrb[0].mxu0
      %2669 = vmatprep.mubr.f32.mxu0 0.0
      %2670 = vmatmul.mubr.f32.gmra.mrb[0].mxu0 %v2440
      %v2671 = vpop.f32.mrb[0].mxu0
      %v2672 = vadd.f32 0.0, %v2671
      %v2673 = vpop.f32.mrb[0].mxu0
      %2674 = vmatprep.mubr.f32.mxu0 0.0
      %2675 = vmatmul.mubr.f32.gmra.mrb[0].mxu0 %v2441
      %v2676 = vpop.f32.mrb[0].mxu0
      %v2677 = vadd.f32 0.0, %v2676
      %v2678 = vpop.f32.mrb[0].mxu0
      %2679 = vmatprep.mubr.f32.mxu0 0.0
      %2680 = vmatmul.mubr.f32.gmra.mrb[0].mxu0 %v2442
      %v2681 = vpop.f32.mrb[0].mxu0
      %v2682 = vadd.f32 0.0, %v2681
      %v2683 = vpop.f32.mrb[0].mxu0
      %2684 = vdwg.mxu0
      %v2685 = vadd.f32 %v2378, %v2527
      %v2686 = vadd.f32 %v2379, %v2532
      %v2687 = vadd.f32 %v2380, %v2537
      %v2688 = vadd.f32 %v2381, %v2542
      %v2689 = vadd.f32 %v2382, %v2547
      %v2690 = vadd.f32 %v2383, %v2552
      %v2691 = vadd.f32 %v2384, %v2557
      %v2692 = vadd.f32 %v2385, %v2562
      %v2693 = vadd.f32 %v2386, %v2567
      %v2694 = vadd.f32 %v2387, %v2572
      %v2695 = vadd.f32 %v2388, %v2577
      %v2696 = vadd.f32 %v2389, %v2582
      %v2697 = vadd.f32 %v2390, %v2587
      %v2698 = vadd.f32 %v2391, %v2592
      %v2699 = vadd.f32 %v2392, %v2597
      %v2700 = vadd.f32 %v2393, %v2602
      %v2701 = vadd.f32 %v2394, %v2607
      %v2702 = vadd.f32 %v2395, %v2612
      %v2703 = vadd.f32 %v2396, %v2617
      %v2704 = vadd.f32 %v2397, %v2622
      %v2705 = vadd.f32 %v2398, %v2627
      %v2706 = vadd.f32 %v2399, %v2632
      %v2707 = vadd.f32 %v2400, %v2637
      %v2708 = vadd.f32 %v2401, %v2642
      %v2709 = vadd.f32 %v2402, %v2647
      %v2710 = vadd.f32 %v2403, %v2652
      %v2711 = vadd.f32 %v2404, %v2657
      %v2712 = vadd.f32 %v2405, %v2662
      %v2713 = vadd.f32 %v2406, %v2667
      %v2714 = vadd.f32 %v2407, %v2672
      %v2715 = vadd.f32 %v2408, %v2677
      %v2716 = vadd.f32 %v2409, %v2682
      %v2717 = vld [vmem:[%s2410 + $0x1] sm:$0xff]
      %v2718 = vld [vmem:[%s2410 + $0x9] sm:$0xff]
      %v2719 = vld [vmem:[%s2410 + $0x19] sm:$0xff]
      %v2720 = vld [vmem:[%s2410 + $0x21] sm:$0xff]
      %v2721 = vld [vmem:[%s2410 + $0x31] sm:$0xff]
      %v2722 = vld [vmem:[%s2410 + $0x39] sm:$0xff]
      %v2723 = vld [vmem:[%s2410 + $0x49] sm:$0xff]
      %v2724 = vld [vmem:[%s2410 + $0x51] sm:$0xff]
      %v2725 = vld [vmem:[%s2410 + $0x61] sm:$0xff]
      %v2726 = vld [vmem:[%s2410 + $0x69] sm:$0xff]
      %v2727 = vld [vmem:[%s2410 + $0x79] sm:$0xff]
      %v2728 = vld [vmem:[%s2410 + $0x81] sm:$0xff]
      %v2729 = vld [vmem:[%s2410 + $0x91] sm:$0xff]
      %v2730 = vld [vmem:[%s2410 + $0x99] sm:$0xff]
      %v2731 = vld [vmem:[%s2410 + $0xa9] sm:$0xff]
      %v2732 = vld [vmem:[%s2410 + $0xb1] sm:$0xff]
      %v2733 = vld [vmem:[%s2410 + $0xc1] sm:$0xff]
      %v2734 = vld [vmem:[%s2410 + $0xc9] sm:$0xff]
      %v2735 = vld [vmem:[%s2410 + $0xd9] sm:$0xff]
      %v2736 = vld [vmem:[%s2410 + $0xe1] sm:$0xff]
      %v2737 = vld [vmem:[%s2410 + $0xf1] sm:$0xff]
      %v2738 = vld [vmem:[%s2410 + $0xf9] sm:$0xff]
      %v2739 = vld [vmem:[%s2410 + $0x109] sm:$0xff]
      %v2740 = vld [vmem:[%s2410 + $0x111] sm:$0xff]
      %v2741 = vld [vmem:[%s2410 + $0x121] sm:$0xff]
      %v2742 = vld [vmem:[%s2410 + $0x129] sm:$0xff]
      %v2743 = vld [vmem:[%s2410 + $0x139] sm:$0xff]
      %v2744 = vld [vmem:[%s2410 + $0x141] sm:$0xff]
      %v2745 = vld [vmem:[%s2410 + $0x151] sm:$0xff]
      %v2746 = vld [vmem:[%s2410 + $0x159] sm:$0xff]
      %v2747 = vld [vmem:[%s2410 + $0x169] sm:$0xff]
      %v2748 = vld [vmem:[%s2410 + $0x171] sm:$0xff]
      %s2749 = scalar_lea.vmem %s2, 896
      %v2750 = vld [vmem:[%s2749] sm:$0xff]
      %v2751 = vld [vmem:[%s2749 + $0x8] sm:$0xff]
      %v2752 = vld [vmem:[%s2749 + $0x10] sm:$0xff]
      %v2753 = vld [vmem:[%s2749 + $0x18] sm:$0xff]
      %v2754 = vld [vmem:[%s2749 + $0x20] sm:$0xff]
      %v2755 = vld [vmem:[%s2749 + $0x28] sm:$0xff]
      %v2756 = vld [vmem:[%s2749 + $0x30] sm:$0xff]
      %v2757 = vld [vmem:[%s2749 + $0x38] sm:$0xff]
      %v2758 = vld [vmem:[%s2749 + $0x40] sm:$0xff]
      %v2759 = vld [vmem:[%s2749 + $0x48] sm:$0xff]
      %v2760 = vld [vmem:[%s2749 + $0x50] sm:$0xff]
      %v2761 = vld [vmem:[%s2749 + $0x58] sm:$0xff]
      %v2762 = vld [vmem:[%s2749 + $0x60] sm:$0xff]
      %v2763 = vld [vmem:[%s2749 + $0x68] sm:$0xff]
      %v2764 = vld [vmem:[%s2749 + $0x70] sm:$0xff]
      %v2765 = vld [vmem:[%s2749 + $0x78] sm:$0xff]
      %2766 = vmatprep.subr.mxu0 0.0
      %2767 = vmatpush1.msra.mxu0 %v2750
      %2768 = vmatprep.subr.mxu0 0.0
      %2769 = vmatpush1.msra.mxu0 %v2751
      %2770 = vmatprep.subr.mxu0 0.0
      %2771 = vmatpush1.msra.mxu0 %v2752
      %2772 = vmatprep.subr.mxu0 0.0
      %2773 = vmatpush1.msra.mxu0 %v2753
      %2774 = vmatprep.subr.mxu0 0.0
      %2775 = vmatpush1.msra.mxu0 %v2754
      %2776 = vmatprep.subr.mxu0 0.0
      %2777 = vmatpush1.msra.mxu0 %v2755
      %2778 = vmatprep.subr.mxu0 0.0
      %2779 = vmatpush1.msra.mxu0 %v2756
      %2780 = vmatprep.subr.mxu0 0.0
      %2781 = vmatpush1.msra.mxu0 %v2757
      %2782 = vmatprep.subr.mxu0 0.0
      %2783 = vmatpush1.msra.mxu0 %v2758
      %2784 = vmatprep.subr.mxu0 0.0
      %2785 = vmatpush1.msra.mxu0 %v2759
      %2786 = vmatprep.subr.mxu0 0.0
      %2787 = vmatpush1.msra.mxu0 %v2760
      %2788 = vmatprep.subr.mxu0 0.0
      %2789 = vmatpush1.msra.mxu0 %v2761
      %2790 = vmatprep.subr.mxu0 0.0
      %2791 = vmatpush1.msra.mxu0 %v2762
      %2792 = vmatprep.subr.mxu0 0.0
      %2793 = vmatpush1.msra.mxu0 %v2763
      %2794 = vmatprep.subr.mxu0 0.0
      %2795 = vmatpush1.msra.mxu0 %v2764
      %2796 = vmatprep.subr.mxu0 0.0
      %2797 = vmatpush1.msra.mxu0 %v2765
      %2798 = vmatprep.subr.mxu0 0.0
      %2799 = vmatpush1.msra.mxu0 0.0
      %2800 = vmatprep.subr.mxu0 0.0
      %2801 = vmatpush1.msra.mxu0 0.0
      %2802 = vmatprep.subr.mxu0 0.0
      %2803 = vmatpush1.msra.mxu0 0.0
      %2804 = vmatprep.subr.mxu0 0.0
      %2805 = vmatpush1.msra.mxu0 0.0
      %2806 = vmatprep.subr.mxu0 0.0
      %2807 = vmatpush1.msra.mxu0 0.0
      %2808 = vmatprep.subr.mxu0 0.0
      %2809 = vmatpush1.msra.mxu0 0.0
      %2810 = vmatprep.subr.mxu0 0.0
      %2811 = vmatpush1.msra.mxu0 0.0
      %2812 = vmatprep.subr.mxu0 0.0
      %2813 = vmatpush1.msra.mxu0 0.0
      %2814 = vmatprep.subr.mxu0 0.0
      %2815 = vmatpush1.msra.mxu0 0.0
      %2816 = vmatprep.subr.mxu0 0.0
      %2817 = vmatpush1.msra.mxu0 0.0
      %2818 = vmatprep.subr.mxu0 0.0
      %2819 = vmatpush1.msra.mxu0 0.0
      %2820 = vmatprep.subr.mxu0 0.0
      %2821 = vmatpush1.msra.mxu0 0.0
      %2822 = vmatprep.subr.mxu0 0.0
      %2823 = vmatpush1.msra.mxu0 0.0
      %2824 = vmatprep.subr.mxu0 0.0
      %2825 = vmatpush1.msra.mxu0 0.0
      %2826 = vmatprep.subr.mxu0 0.0
      %2827 = vmatpush1.msra.mxu0 0.0
      %2828 = vmatprep.subr.mxu0 0.0
      %2829 = vmatpush1.msra.mxu0 0.0
      %2830 = vmatprep.mubr.f32.mxu0 0.0
      %2831 = vmatmul.mubr.f32.gmra.mrb[0].mxu0 %v2717
      %v2832 = vpop.f32.mrb[0].mxu0
      %v2833 = vadd.f32 0.0, %v2832
      %v2834 = vpop.f32.mrb[0].mxu0
      %2835 = vmatprep.mubr.f32.mxu0 0.0
      %2836 = vmatmul.mubr.f32.gmra.mrb[0].mxu0 %v2718
      %v2837 = vpop.f32.mrb[0].mxu0
      %v2838 = vadd.f32 0.0, %v2837
      %v2839 = vpop.f32.mrb[0].mxu0
      %2840 = vmatprep.mubr.f32.mxu0 0.0
      %2841 = vmatmul.mubr.f32.gmra.mrb[0].mxu0 %v2719
      %v2842 = vpop.f32.mrb[0].mxu0
      %v2843 = vadd.f32 0.0, %v2842
      %v2844 = vpop.f32.mrb[0].mxu0
      %2845 = vmatprep.mubr.f32.mxu0 0.0
      %2846 = vmatmul.mubr.f32.gmra.mrb[0].mxu0 %v2720
      %v2847 = vpop.f32.mrb[0].mxu0
      %v2848 = vadd.f32 0.0, %v2847
      %v2849 = vpop.f32.mrb[0].mxu0
      %2850 = vmatprep.mubr.f32.mxu0 0.0
      %2851 = vmatmul.mubr.f32.gmra.mrb[0].mxu0 %v2721
      %v2852 = vpop.f32.mrb[0].mxu0
      %v2853 = vadd.f32 0.0, %v2852
      %v2854 = vpop.f32.mrb[0].mxu0
      %2855 = vmatprep.mubr.f32.mxu0 0.0
      %2856 = vmatmul.mubr.f32.gmra.mrb[0].mxu0 %v2722
      %v2857 = vpop.f32.mrb[0].mxu0
      %v2858 = vadd.f32 0.0, %v2857
      %v2859 = vpop.f32.mrb[0].mxu0
      %2860 = vmatprep.mubr.f32.mxu0 0.0
      %2861 = vmatmul.mubr.f32.gmra.mrb[0].mxu0 %v2723
      %v2862 = vpop.f32.mrb[0].mxu0
      %v2863 = vadd.f32 0.0, %v2862
      %v2864 = vpop.f32.mrb[0].mxu0
      %2865 = vmatprep.mubr.f32.mxu0 0.0
      %2866 = vmatmul.mubr.f32.gmra.mrb[0].mxu0 %v2724
      %v2867 = vpop.f32.mrb[0].mxu0
      %v2868 = vadd.f32 0.0, %v2867
      %v2869 = vpop.f32.mrb[0].mxu0
      %2870 = vmatprep.mubr.f32.mxu0 0.0
      %2871 = vmatmul.mubr.f32.gmra.mrb[0].mxu0 %v2725
      %v2872 = vpop.f32.mrb[0].mxu0
      %v2873 = vadd.f32 0.0, %v2872
      %v2874 = vpop.f32.mrb[0].mxu0
      %2875 = vmatprep.mubr.f32.mxu0 0.0
      %2876 = vmatmul.mubr.f32.gmra.mrb[0].mxu0 %v2726
      %v2877 = vpop.f32.mrb[0].mxu0
      %v2878 = vadd.f32 0.0, %v2877
      %v2879 = vpop.f32.mrb[0].mxu0
      %2880 = vmatprep.mubr.f32.mxu0 0.0
      %2881 = vmatmul.mubr.f32.gmra.mrb[0].mxu0 %v2727
      %v2882 = vpop.f32.mrb[0].mxu0
      %v2883 = vadd.f32 0.0, %v2882
      %v2884 = vpop.f32.mrb[0].mxu0
      %2885 = vmatprep.mubr.f32.mxu0 0.0
      %2886 = vmatmul.mubr.f32.gmra.mrb[0].mxu0 %v2728
      %v2887 = vpop.f32.mrb[0].mxu0
      %v2888 = vadd.f32 0.0, %v2887
      %v2889 = vpop.f32.mrb[0].mxu0
      %2890 = vmatprep.mubr.f32.mxu0 0.0
      %2891 = vmatmul.mubr.f32.gmra.mrb[0].mxu0 %v2729
      %v2892 = vpop.f32.mrb[0].mxu0
      %v2893 = vadd.f32 0.0, %v2892
      %v2894 = vpop.f32.mrb[0].mxu0
      %2895 = vmatprep.mubr.f32.mxu0 0.0
      %2896 = vmatmul.mubr.f32.gmra.mrb[0].mxu0 %v2730
      %v2897 = vpop.f32.mrb[0].mxu0
      %v2898 = vadd.f32 0.0, %v2897
      %v2899 = vpop.f32.mrb[0].mxu0
      %2900 = vmatprep.mubr.f32.mxu0 0.0
      %2901 = vmatmul.mubr.f32.gmra.mrb[0].mxu0 %v2731
      %v2902 = vpop.f32.mrb[0].mxu0
      %v2903 = vadd.f32 0.0, %v2902
      %v2904 = vpop.f32.mrb[0].mxu0
      %2905 = vmatprep.mubr.f32.mxu0 0.0
      %2906 = vmatmul.mubr.f32.gmra.mrb[0].mxu0 %v2732
      %v2907 = vpop.f32.mrb[0].mxu0
      %v2908 = vadd.f32 0.0, %v2907
      %v2909 = vpop.f32.mrb[0].mxu0
      %2910 = vmatprep.mubr.f32.mxu0 0.0
      %2911 = vmatmul.mubr.f32.gmra.mrb[0].mxu0 %v2733
      %v2912 = vpop.f32.mrb[0].mxu0
      %v2913 = vadd.f32 0.0, %v2912
      %v2914 = vpop.f32.mrb[0].mxu0
      %2915 = vmatprep.mubr.f32.mxu0 0.0
      %2916 = vmatmul.mubr.f32.gmra.mrb[0].mxu0 %v2734
      %v2917 = vpop.f32.mrb[0].mxu0
      %v2918 = vadd.f32 0.0, %v2917
      %v2919 = vpop.f32.mrb[0].mxu0
      %2920 = vmatprep.mubr.f32.mxu0 0.0
      %2921 = vmatmul.mubr.f32.gmra.mrb[0].mxu0 %v2735
      %v2922 = vpop.f32.mrb[0].mxu0
      %v2923 = vadd.f32 0.0, %v2922
      %v2924 = vpop.f32.mrb[0].mxu0
      %2925 = vmatprep.mubr.f32.mxu0 0.0
      %2926 = vmatmul.mubr.f32.gmra.mrb[0].mxu0 %v2736
      %v2927 = vpop.f32.mrb[0].mxu0
      %v2928 = vadd.f32 0.0, %v2927
      %v2929 = vpop.f32.mrb[0].mxu0
      %2930 = vmatprep.mubr.f32.mxu0 0.0
      %2931 = vmatmul.mubr.f32.gmra.mrb[0].mxu0 %v2737
      %v2932 = vpop.f32.mrb[0].mxu0
      %v2933 = vadd.f32 0.0, %v2932
      %v2934 = vpop.f32.mrb[0].mxu0
      %2935 = vmatprep.mubr.f32.mxu0 0.0
      %2936 = vmatmul.mubr.f32.gmra.mrb[0].mxu0 %v2738
      %v2937 = vpop.f32.mrb[0].mxu0
      %v2938 = vadd.f32 0.0, %v2937
      %v2939 = vpop.f32.mrb[0].mxu0
      %2940 = vmatprep.mubr.f32.mxu0 0.0
      %2941 = vmatmul.mubr.f32.gmra.mrb[0].mxu0 %v2739
      %v2942 = vpop.f32.mrb[0].mxu0
      %v2943 = vadd.f32 0.0, %v2942
      %v2944 = vpop.f32.mrb[0].mxu0
      %2945 = vmatprep.mubr.f32.mxu0 0.0
      %2946 = vmatmul.mubr.f32.gmra.mrb[0].mxu0 %v2740
      %v2947 = vpop.f32.mrb[0].mxu0
      %v2948 = vadd.f32 0.0, %v2947
      %v2949 = vpop.f32.mrb[0].mxu0
      %2950 = vmatprep.mubr.f32.mxu0 0.0
      %2951 = vmatmul.mubr.f32.gmra.mrb[0].mxu0 %v2741
      %v2952 = vpop.f32.mrb[0].mxu0
      %v2953 = vadd.f32 0.0, %v2952
      %v2954 = vpop.f32.mrb[0].mxu0
      %2955 = vmatprep.mubr.f32.mxu0 0.0
      %2956 = vmatmul.mubr.f32.gmra.mrb[0].mxu0 %v2742
      %v2957 = vpop.f32.mrb[0].mxu0
      %v2958 = vadd.f32 0.0, %v2957
      %v2959 = vpop.f32.mrb[0].mxu0
      %2960 = vmatprep.mubr.f32.mxu0 0.0
      %2961 = vmatmul.mubr.f32.gmra.mrb[0].mxu0 %v2743
      %v2962 = vpop.f32.mrb[0].mxu0
      %v2963 = vadd.f32 0.0, %v2962
      %v2964 = vpop.f32.mrb[0].mxu0
      %2965 = vmatprep.mubr.f32.mxu0 0.0
      %2966 = vmatmul.mubr.f32.gmra.mrb[0].mxu0 %v2744
      %v2967 = vpop.f32.mrb[0].mxu0
      %v2968 = vadd.f32 0.0, %v2967
      %v2969 = vpop.f32.mrb[0].mxu0
      %2970 = vmatprep.mubr.f32.mxu0 0.0
      %2971 = vmatmul.mubr.f32.gmra.mrb[0].mxu0 %v2745
      %v2972 = vpop.f32.mrb[0].mxu0
      %v2973 = vadd.f32 0.0, %v2972
      %v2974 = vpop.f32.mrb[0].mxu0
      %2975 = vmatprep.mubr.f32.mxu0 0.0
      %2976 = vmatmul.mubr.f32.gmra.mrb[0].mxu0 %v2746
      %v2977 = vpop.f32.mrb[0].mxu0
      %v2978 = vadd.f32 0.0, %v2977
      %v2979 = vpop.f32.mrb[0].mxu0
      %2980 = vmatprep.mubr.f32.mxu0 0.0
      %2981 = vmatmul.mubr.f32.gmra.mrb[0].mxu0 %v2747
      %v2982 = vpop.f32.mrb[0].mxu0
      %v2983 = vadd.f32 0.0, %v2982
      %v2984 = vpop.f32.mrb[0].mxu0
      %2985 = vmatprep.mubr.f32.mxu0 0.0
      %2986 = vmatmul.mubr.f32.gmra.mrb[0].mxu0 %v2748
      %v2987 = vpop.f32.mrb[0].mxu0
      %v2988 = vadd.f32 0.0, %v2987
      %v2989 = vpop.f32.mrb[0].mxu0
      %2990 = vdwg.mxu0
      %v2991 = vadd.f32 %v2685, %v2833
      %v2992 = vadd.f32 %v2686, %v2838
      %v2993 = vadd.f32 %v2687, %v2843
      %v2994 = vadd.f32 %v2688, %v2848
      %v2995 = vadd.f32 %v2689, %v2853
      %v2996 = vadd.f32 %v2690, %v2858
      %v2997 = vadd.f32 %v2691, %v2863
      %v2998 = vadd.f32 %v2692, %v2868
      %v2999 = vadd.f32 %v2693, %v2873
      %v3000 = vadd.f32 %v2694, %v2878
      %v3001 = vadd.f32 %v2695, %v2883
      %v3002 = vadd.f32 %v2696, %v2888
      %v3003 = vadd.f32 %v2697, %v2893
      %v3004 = vadd.f32 %v2698, %v2898
      %v3005 = vadd.f32 %v2699, %v2903
      %v3006 = vadd.f32 %v2700, %v2908
      %v3007 = vadd.f32 %v2701, %v2913
      %v3008 = vadd.f32 %v2702, %v2918
      %v3009 = vadd.f32 %v2703, %v2923
      %v3010 = vadd.f32 %v2704, %v2928
      %v3011 = vadd.f32 %v2705, %v2933
      %v3012 = vadd.f32 %v2706, %v2938
      %v3013 = vadd.f32 %v2707, %v2943
      %v3014 = vadd.f32 %v2708, %v2948
      %v3015 = vadd.f32 %v2709, %v2953
      %v3016 = vadd.f32 %v2710, %v2958
      %v3017 = vadd.f32 %v2711, %v2963
      %v3018 = vadd.f32 %v2712, %v2968
      %v3019 = vadd.f32 %v2713, %v2973
      %v3020 = vadd.f32 %v2714, %v2978
      %v3021 = vadd.f32 %v2715, %v2983
      %v3022 = vadd.f32 %v2716, %v2988
      %v3023 = vld [vmem:[%s2410 + $0x2] sm:$0xff]
      %v3024 = vld [vmem:[%s2410 + $0xa] sm:$0xff]
      %v3025 = vld [vmem:[%s2410 + $0x1a] sm:$0xff]
      %v3026 = vld [vmem:[%s2410 + $0x22] sm:$0xff]
      %v3027 = vld [vmem:[%s2410 + $0x32] sm:$0xff]
      %v3028 = vld [vmem:[%s2410 + $0x3a] sm:$0xff]
      %v3029 = vld [vmem:[%s2410 + $0x4a] sm:$0xff]
      %v3030 = vld [vmem:[%s2410 + $0x52] sm:$0xff]
      %v3031 = vld [vmem:[%s2410 + $0x62] sm:$0xff]
      %v3032 = vld [vmem:[%s2410 + $0x6a] sm:$0xff]
      %v3033 = vld [vmem:[%s2410 + $0x7a] sm:$0xff]
      %v3034 = vld [vmem:[%s2410 + $0x82] sm:$0xff]
      %v3035 = vld [vmem:[%s2410 + $0x92] sm:$0xff]
      %v3036 = vld [vmem:[%s2410 + $0x9a] sm:$0xff]
      %v3037 = vld [vmem:[%s2410 + $0xaa] sm:$0xff]
      %v3038 = vld [vmem:[%s2410 + $0xb2] sm:$0xff]
      %v3039 = vld [vmem:[%s2410 + $0xc2] sm:$0xff]
      %v3040 = vld [vmem:[%s2410 + $0xca] sm:$0xff]
      %v3041 = vld [vmem:[%s2410 + $0xda] sm:$0xff]
      %v3042 = vld [vmem:[%s2410 + $0xe2] sm:$0xff]
      %v3043 = vld [vmem:[%s2410 + $0xf2] sm:$0xff]
      %v3044 = vld [vmem:[%s2410 + $0xfa] sm:$0xff]
      %v3045 = vld [vmem:[%s2410 + $0x10a] sm:$0xff]
      %v3046 = vld [vmem:[%s2410 + $0x112] sm:$0xff]
      %v3047 = vld [vmem:[%s2410 + $0x122] sm:$0xff]
      %v3048 = vld [vmem:[%s2410 + $0x12a] sm:$0xff]
      %v3049 = vld [vmem:[%s2410 + $0x13a] sm:$0xff]
      %v3050 = vld [vmem:[%s2410 + $0x142] sm:$0xff]
      %v3051 = vld [vmem:[%s2410 + $0x152] sm:$0xff]
      %v3052 = vld [vmem:[%s2410 + $0x15a] sm:$0xff]
      %v3053 = vld [vmem:[%s2410 + $0x16a] sm:$0xff]
      %v3054 = vld [vmem:[%s2410 + $0x172] sm:$0xff]
      %s3055 = scalar_lea.vmem %s2, 1024
      %v3056 = vld [vmem:[%s3055] sm:$0xff]
      %v3057 = vld [vmem:[%s3055 + $0x8] sm:$0xff]
      %v3058 = vld [vmem:[%s3055 + $0x10] sm:$0xff]
      %v3059 = vld [vmem:[%s3055 + $0x18] sm:$0xff]
      %v3060 = vld [vmem:[%s3055 + $0x20] sm:$0xff]
      %v3061 = vld [vmem:[%s3055 + $0x28] sm:$0xff]
      %v3062 = vld [vmem:[%s3055 + $0x30] sm:$0xff]
      %v3063 = vld [vmem:[%s3055 + $0x38] sm:$0xff]
      %v3064 = vld [vmem:[%s3055 + $0x40] sm:$0xff]
      %v3065 = vld [vmem:[%s3055 + $0x48] sm:$0xff]
      %v3066 = vld [vmem:[%s3055 + $0x50] sm:$0xff]
      %v3067 = vld [vmem:[%s3055 + $0x58] sm:$0xff]
      %v3068 = vld [vmem:[%s3055 + $0x60] sm:$0xff]
      %v3069 = vld [vmem:[%s3055 + $0x68] sm:$0xff]
      %v3070 = vld [vmem:[%s3055 + $0x70] sm:$0xff]
      %v3071 = vld [vmem:[%s3055 + $0x78] sm:$0xff]
      %3072 = vmatprep.subr.mxu0 0.0
      %3073 = vmatpush1.msra.mxu0 %v3056
      %3074 = vmatprep.subr.mxu0 0.0
      %3075 = vmatpush1.msra.mxu0 %v3057
      %3076 = vmatprep.subr.mxu0 0.0
      %3077 = vmatpush1.msra.mxu0 %v3058
      %3078 = vmatprep.subr.mxu0 0.0
      %3079 = vmatpush1.msra.mxu0 %v3059
      %3080 = vmatprep.subr.mxu0 0.0
      %3081 = vmatpush1.msra.mxu0 %v3060
      %3082 = vmatprep.subr.mxu0 0.0
      %3083 = vmatpush1.msra.mxu0 %v3061
      %3084 = vmatprep.subr.mxu0 0.0
      %3085 = vmatpush1.msra.mxu0 %v3062
      %3086 = vmatprep.subr.mxu0 0.0
      %3087 = vmatpush1.msra.mxu0 %v3063
      %3088 = vmatprep.subr.mxu0 0.0
      %3089 = vmatpush1.msra.mxu0 %v3064
      %3090 = vmatprep.subr.mxu0 0.0
      %3091 = vmatpush1.msra.mxu0 %v3065
      %3092 = vmatprep.subr.mxu0 0.0
      %3093 = vmatpush1.msra.mxu0 %v3066
      %3094 = vmatprep.subr.mxu0 0.0
      %3095 = vmatpush1.msra.mxu0 %v3067
      %3096 = vmatprep.subr.mxu0 0.0
      %3097 = vmatpush1.msra.mxu0 %v3068
      %3098 = vmatprep.subr.mxu0 0.0
      %3099 = vmatpush1.msra.mxu0 %v3069
      %3100 = vmatprep.subr.mxu0 0.0
      %3101 = vmatpush1.msra.mxu0 %v3070
      %3102 = vmatprep.subr.mxu0 0.0
      %3103 = vmatpush1.msra.mxu0 %v3071
      %3104 = vmatprep.subr.mxu0 0.0
      %3105 = vmatpush1.msra.mxu0 0.0
      %3106 = vmatprep.subr.mxu0 0.0
      %3107 = vmatpush1.msra.mxu0 0.0
      %3108 = vmatprep.subr.mxu0 0.0
      %3109 = vmatpush1.msra.mxu0 0.0
      %3110 = vmatprep.subr.mxu0 0.0
      %3111 = vmatpush1.msra.mxu0 0.0
      %3112 = vmatprep.subr.mxu0 0.0
      %3113 = vmatpush1.msra.mxu0 0.0
      %3114 = vmatprep.subr.mxu0 0.0
      %3115 = vmatpush1.msra.mxu0 0.0
      %3116 = vmatprep.subr.mxu0 0.0
      %3117 = vmatpush1.msra.mxu0 0.0
      %3118 = vmatprep.subr.mxu0 0.0
      %3119 = vmatpush1.msra.mxu0 0.0
      %3120 = vmatprep.subr.mxu0 0.0
      %3121 = vmatpush1.msra.mxu0 0.0
      %3122 = vmatprep.subr.mxu0 0.0
      %3123 = vmatpush1.msra.mxu0 0.0
      %3124 = vmatprep.subr.mxu0 0.0
      %3125 = vmatpush1.msra.mxu0 0.0
      %3126 = vmatprep.subr.mxu0 0.0
      %3127 = vmatpush1.msra.mxu0 0.0
      %3128 = vmatprep.subr.mxu0 0.0
      %3129 = vmatpush1.msra.mxu0 0.0
      %3130 = vmatprep.subr.mxu0 0.0
      %3131 = vmatpush1.msra.mxu0 0.0
      %3132 = vmatprep.subr.mxu0 0.0
      %3133 = vmatpush1.msra.mxu0 0.0
      %3134 = vmatprep.subr.mxu0 0.0
      %3135 = vmatpush1.msra.mxu0 0.0
      %3136 = vmatprep.mubr.f32.mxu0 0.0
      %3137 = vmatmul.mubr.f32.gmra.mrb[0].mxu0 %v3023
      %v3138 = vpop.f32.mrb[0].mxu0
      %v3139 = vadd.f32 0.0, %v3138
      %v3140 = vpop.f32.mrb[0].mxu0
      %3141 = vmatprep.mubr.f32.mxu0 0.0
      %3142 = vmatmul.mubr.f32.gmra.mrb[0].mxu0 %v3024
      %v3143 = vpop.f32.mrb[0].mxu0
      %v3144 = vadd.f32 0.0, %v3143
      %v3145 = vpop.f32.mrb[0].mxu0
      %3146 = vmatprep.mubr.f32.mxu0 0.0
      %3147 = vmatmul.mubr.f32.gmra.mrb[0].mxu0 %v3025
      %v3148 = vpop.f32.mrb[0].mxu0
      %v3149 = vadd.f32 0.0, %v3148
      %v3150 = vpop.f32.mrb[0].mxu0
      %3151 = vmatprep.mubr.f32.mxu0 0.0
      %3152 = vmatmul.mubr.f32.gmra.mrb[0].mxu0 %v3026
      %v3153 = vpop.f32.mrb[0].mxu0
      %v3154 = vadd.f32 0.0, %v3153
      %v3155 = vpop.f32.mrb[0].mxu0
      %3156 = vmatprep.mubr.f32.mxu0 0.0
      %3157 = vmatmul.mubr.f32.gmra.mrb[0].mxu0 %v3027
      %v3158 = vpop.f32.mrb[0].mxu0
      %v3159 = vadd.f32 0.0, %v3158
      %v3160 = vpop.f32.mrb[0].mxu0
      %3161 = vmatprep.mubr.f32.mxu0 0.0
      %3162 = vmatmul.mubr.f32.gmra.mrb[0].mxu0 %v3028
      %v3163 = vpop.f32.mrb[0].mxu0
      %v3164 = vadd.f32 0.0, %v3163
      %v3165 = vpop.f32.mrb[0].mxu0
      %3166 = vmatprep.mubr.f32.mxu0 0.0
      %3167 = vmatmul.mubr.f32.gmra.mrb[0].mxu0 %v3029
      %v3168 = vpop.f32.mrb[0].mxu0
      %v3169 = vadd.f32 0.0, %v3168
      %v3170 = vpop.f32.mrb[0].mxu0
      %3171 = vmatprep.mubr.f32.mxu0 0.0
      %3172 = vmatmul.mubr.f32.gmra.mrb[0].mxu0 %v3030
      %v3173 = vpop.f32.mrb[0].mxu0
      %v3174 = vadd.f32 0.0, %v3173
      %v3175 = vpop.f32.mrb[0].mxu0
      %3176 = vmatprep.mubr.f32.mxu0 0.0
      %3177 = vmatmul.mubr.f32.gmra.mrb[0].mxu0 %v3031
      %v3178 = vpop.f32.mrb[0].mxu0
      %v3179 = vadd.f32 0.0, %v3178
      %v3180 = vpop.f32.mrb[0].mxu0
      %3181 = vmatprep.mubr.f32.mxu0 0.0
      %3182 = vmatmul.mubr.f32.gmra.mrb[0].mxu0 %v3032
      %v3183 = vpop.f32.mrb[0].mxu0
      %v3184 = vadd.f32 0.0, %v3183
      %v3185 = vpop.f32.mrb[0].mxu0
      %3186 = vmatprep.mubr.f32.mxu0 0.0
      %3187 = vmatmul.mubr.f32.gmra.mrb[0].mxu0 %v3033
      %v3188 = vpop.f32.mrb[0].mxu0
      %v3189 = vadd.f32 0.0, %v3188
      %v3190 = vpop.f32.mrb[0].mxu0
      %3191 = vmatprep.mubr.f32.mxu0 0.0
      %3192 = vmatmul.mubr.f32.gmra.mrb[0].mxu0 %v3034
      %v3193 = vpop.f32.mrb[0].mxu0
      %v3194 = vadd.f32 0.0, %v3193
      %v3195 = vpop.f32.mrb[0].mxu0
      %3196 = vmatprep.mubr.f32.mxu0 0.0
      %3197 = vmatmul.mubr.f32.gmra.mrb[0].mxu0 %v3035
      %v3198 = vpop.f32.mrb[0].mxu0
      %v3199 = vadd.f32 0.0, %v3198
      %v3200 = vpop.f32.mrb[0].mxu0
      %3201 = vmatprep.mubr.f32.mxu0 0.0
      %3202 = vmatmul.mubr.f32.gmra.mrb[0].mxu0 %v3036
      %v3203 = vpop.f32.mrb[0].mxu0
      %v3204 = vadd.f32 0.0, %v3203
      %v3205 = vpop.f32.mrb[0].mxu0
      %3206 = vmatprep.mubr.f32.mxu0 0.0
      %3207 = vmatmul.mubr.f32.gmra.mrb[0].mxu0 %v3037
      %v3208 = vpop.f32.mrb[0].mxu0
      %v3209 = vadd.f32 0.0, %v3208
      %v3210 = vpop.f32.mrb[0].mxu0
      %3211 = vmatprep.mubr.f32.mxu0 0.0
      %3212 = vmatmul.mubr.f32.gmra.mrb[0].mxu0 %v3038
      %v3213 = vpop.f32.mrb[0].mxu0
      %v3214 = vadd.f32 0.0, %v3213
      %v3215 = vpop.f32.mrb[0].mxu0
      %3216 = vmatprep.mubr.f32.mxu0 0.0
      %3217 = vmatmul.mubr.f32.gmra.mrb[0].mxu0 %v3039
      %v3218 = vpop.f32.mrb[0].mxu0
      %v3219 = vadd.f32 0.0, %v3218
      %v3220 = vpop.f32.mrb[0].mxu0
      %3221 = vmatprep.mubr.f32.mxu0 0.0
      %3222 = vmatmul.mubr.f32.gmra.mrb[0].mxu0 %v3040
      %v3223 = vpop.f32.mrb[0].mxu0
      %v3224 = vadd.f32 0.0, %v3223
      %v3225 = vpop.f32.mrb[0].mxu0
      %3226 = vmatprep.mubr.f32.mxu0 0.0
      %3227 = vmatmul.mubr.f32.gmra.mrb[0].mxu0 %v3041
      %v3228 = vpop.f32.mrb[0].mxu0
      %v3229 = vadd.f32 0.0, %v3228
      %v3230 = vpop.f32.mrb[0].mxu0
      %3231 = vmatprep.mubr.f32.mxu0 0.0
      %3232 = vmatmul.mubr.f32.gmra.mrb[0].mxu0 %v3042
      %v3233 = vpop.f32.mrb[0].mxu0
      %v3234 = vadd.f32 0.0, %v3233
      %v3235 = vpop.f32.mrb[0].mxu0
      %3236 = vmatprep.mubr.f32.mxu0 0.0
      %3237 = vmatmul.mubr.f32.gmra.mrb[0].mxu0 %v3043
      %v3238 = vpop.f32.mrb[0].mxu0
      %v3239 = vadd.f32 0.0, %v3238
      %v3240 = vpop.f32.mrb[0].mxu0
      %3241 = vmatprep.mubr.f32.mxu0 0.0
      %3242 = vmatmul.mubr.f32.gmra.mrb[0].mxu0 %v3044
      %v3243 = vpop.f32.mrb[0].mxu0
      %v3244 = vadd.f32 0.0, %v3243
      %v3245 = vpop.f32.mrb[0].mxu0
      %3246 = vmatprep.mubr.f32.mxu0 0.0
      %3247 = vmatmul.mubr.f32.gmra.mrb[0].mxu0 %v3045
      %v3248 = vpop.f32.mrb[0].mxu0
      %v3249 = vadd.f32 0.0, %v3248
      %v3250 = vpop.f32.mrb[0].mxu0
      %3251 = vmatprep.mubr.f32.mxu0 0.0
      %3252 = vmatmul.mubr.f32.gmra.mrb[0].mxu0 %v3046
      %v3253 = vpop.f32.mrb[0].mxu0
      %v3254 = vadd.f32 0.0, %v3253
      %v3255 = vpop.f32.mrb[0].mxu0
      %3256 = vmatprep.mubr.f32.mxu0 0.0
      %3257 = vmatmul.mubr.f32.gmra.mrb[0].mxu0 %v3047
      %v3258 = vpop.f32.mrb[0].mxu0
      %v3259 = vadd.f32 0.0, %v3258
      %v3260 = vpop.f32.mrb[0].mxu0
      %3261 = vmatprep.mubr.f32.mxu0 0.0
      %3262 = vmatmul.mubr.f32.gmra.mrb[0].mxu0 %v3048
      %v3263 = vpop.f32.mrb[0].mxu0
      %v3264 = vadd.f32 0.0, %v3263
      %v3265 = vpop.f32.mrb[0].mxu0
      %3266 = vmatprep.mubr.f32.mxu0 0.0
      %3267 = vmatmul.mubr.f32.gmra.mrb[0].mxu0 %v3049
      %v3268 = vpop.f32.mrb[0].mxu0
      %v3269 = vadd.f32 0.0, %v3268
      %v3270 = vpop.f32.mrb[0].mxu0
      %3271 = vmatprep.mubr.f32.mxu0 0.0
      %3272 = vmatmul.mubr.f32.gmra.mrb[0].mxu0 %v3050
      %v3273 = vpop.f32.mrb[0].mxu0
      %v3274 = vadd.f32 0.0, %v3273
      %v3275 = vpop.f32.mrb[0].mxu0
      %3276 = vmatprep.mubr.f32.mxu0 0.0
      %3277 = vmatmul.mubr.f32.gmra.mrb[0].mxu0 %v3051
      %v3278 = vpop.f32.mrb[0].mxu0
      %v3279 = vadd.f32 0.0, %v3278
      %v3280 = vpop.f32.mrb[0].mxu0
      %3281 = vmatprep.mubr.f32.mxu0 0.0
      %3282 = vmatmul.mubr.f32.gmra.mrb[0].mxu0 %v3052
      %v3283 = vpop.f32.mrb[0].mxu0
      %v3284 = vadd.f32 0.0, %v3283
      %v3285 = vpop.f32.mrb[0].mxu0
      %3286 = vmatprep.mubr.f32.mxu0 0.0
      %3287 = vmatmul.mubr.f32.gmra.mrb[0].mxu0 %v3053
      %v3288 = vpop.f32.mrb[0].mxu0
      %v3289 = vadd.f32 0.0, %v3288
      %v3290 = vpop.f32.mrb[0].mxu0
      %3291 = vmatprep.mubr.f32.mxu0 0.0
      %3292 = vmatmul.mubr.f32.gmra.mrb[0].mxu0 %v3054
      %v3293 = vpop.f32.mrb[0].mxu0
      %v3294 = vadd.f32 0.0, %v3293
      %v3295 = vpop.f32.mrb[0].mxu0
      %3296 = vdwg.mxu0
      %v3297 = vadd.f32 %v2991, %v3139
      %v3298 = vadd.f32 %v2992, %v3144
      %v3299 = vadd.f32 %v2993, %v3149
      %v3300 = vadd.f32 %v2994, %v3154
      %v3301 = vadd.f32 %v2995, %v3159
      %v3302 = vadd.f32 %v2996, %v3164
      %v3303 = vadd.f32 %v2997, %v3169
      %v3304 = vadd.f32 %v2998, %v3174
      %v3305 = vadd.f32 %v2999, %v3179
      %v3306 = vadd.f32 %v3000, %v3184
      %v3307 = vadd.f32 %v3001, %v3189
      %v3308 = vadd.f32 %v3002, %v3194
      %v3309 = vadd.f32 %v3003, %v3199
      %v3310 = vadd.f32 %v3004, %v3204
      %v3311 = vadd.f32 %v3005, %v3209
      %v3312 = vadd.f32 %v3006, %v3214
      %v3313 = vadd.f32 %v3007, %v3219
      %v3314 = vadd.f32 %v3008, %v3224
      %v3315 = vadd.f32 %v3009, %v3229
      %v3316 = vadd.f32 %v3010, %v3234
      %v3317 = vadd.f32 %v3011, %v3239
      %v3318 = vadd.f32 %v3012, %v3244
      %v3319 = vadd.f32 %v3013, %v3249
      %v3320 = vadd.f32 %v3014, %v3254
      %v3321 = vadd.f32 %v3015, %v3259
      %v3322 = vadd.f32 %v3016, %v3264
      %v3323 = vadd.f32 %v3017, %v3269
      %v3324 = vadd.f32 %v3018, %v3274
      %v3325 = vadd.f32 %v3019, %v3279
      %v3326 = vadd.f32 %v3020, %v3284
      %v3327 = vadd.f32 %v3021, %v3289
      %v3328 = vadd.f32 %v3022, %v3294
      %v3329 = vld [vmem:[%s3] sm:$0x1]
      %v3331 = vlaneseq
      %v3332 = vshrl.u32 %v3331, 7
      %v3333 = vsub.s32 0, %v3332
      %v3334 = vrot.slane %v3329, %v3333
      %v3336 = vadd.f32 %v3297, %v3334
      %v3337 = vadd.f32 %v3298, %v3334
      %v3338 = vadd.f32 %v3299, %v3334
      %v3339 = vadd.f32 %v3300, %v3334
      %v3340 = vadd.f32 %v3301, %v3334
      %v3341 = vadd.f32 %v3302, %v3334
      %v3342 = vadd.f32 %v3303, %v3334
      %v3343 = vadd.f32 %v3304, %v3334
      %v3344 = vadd.f32 %v3305, %v3334
      %v3345 = vadd.f32 %v3306, %v3334
      %v3346 = vadd.f32 %v3307, %v3334
      %v3347 = vadd.f32 %v3308, %v3334
      %v3348 = vadd.f32 %v3309, %v3334
      %v3349 = vadd.f32 %v3310, %v3334
      %v3350 = vadd.f32 %v3311, %v3334
      %v3351 = vadd.f32 %v3312, %v3334
      %v3352 = vadd.f32 %v3313, %v3334
      %v3353 = vadd.f32 %v3314, %v3334
      %v3354 = vadd.f32 %v3315, %v3334
      %v3355 = vadd.f32 %v3316, %v3334
      %v3356 = vadd.f32 %v3317, %v3334
      %v3357 = vadd.f32 %v3318, %v3334
      %v3358 = vadd.f32 %v3319, %v3334
      %v3359 = vadd.f32 %v3320, %v3334
      %v3360 = vadd.f32 %v3321, %v3334
      %v3361 = vadd.f32 %v3322, %v3334
      %v3362 = vadd.f32 %v3323, %v3334
      %v3363 = vadd.f32 %v3324, %v3334
      %v3364 = vadd.f32 %v3325, %v3334
      %v3365 = vadd.f32 %v3326, %v3334
      %v3366 = vadd.f32 %v3327, %v3334
      %v3367 = vadd.f32 %v3328, %v3334
      %v3368 = vmax.f32 %v3336, 0.0
      %v3369 = vmax.f32 %v3337, 0.0
      %v3370 = vmax.f32 %v3338, 0.0
      %v3371 = vmax.f32 %v3339, 0.0
      %v3372 = vmax.f32 %v3340, 0.0
      %v3373 = vmax.f32 %v3341, 0.0
      %v3374 = vmax.f32 %v3342, 0.0
      %v3375 = vmax.f32 %v3343, 0.0
      %v3376 = vmax.f32 %v3344, 0.0
      %v3377 = vmax.f32 %v3345, 0.0
      %v3378 = vmax.f32 %v3346, 0.0
      %v3379 = vmax.f32 %v3347, 0.0
      %v3380 = vmax.f32 %v3348, 0.0
      %v3381 = vmax.f32 %v3349, 0.0
      %v3382 = vmax.f32 %v3350, 0.0
      %v3383 = vmax.f32 %v3351, 0.0
      %v3384 = vmax.f32 %v3352, 0.0
      %v3385 = vmax.f32 %v3353, 0.0
      %v3386 = vmax.f32 %v3354, 0.0
      %v3387 = vmax.f32 %v3355, 0.0
      %v3388 = vmax.f32 %v3356, 0.0
      %v3389 = vmax.f32 %v3357, 0.0
      %v3390 = vmax.f32 %v3358, 0.0
      %v3391 = vmax.f32 %v3359, 0.0
      %v3392 = vmax.f32 %v3360, 0.0
      %v3393 = vmax.f32 %v3361, 0.0
      %v3394 = vmax.f32 %v3362, 0.0
      %v3395 = vmax.f32 %v3363, 0.0
      %v3396 = vmax.f32 %v3364, 0.0
      %v3397 = vmax.f32 %v3365, 0.0
      %v3398 = vmax.f32 %v3366, 0.0
      %v3399 = vmax.f32 %v3367, 0.0
      %3400 = vst [vmem:[%s412 + $0x1] sm:$0xff] %v3368
      %3401 = vst [vmem:[%s412 + $0x9] sm:$0xff] %v3369
      %3402 = vst [vmem:[%s412 + $0x19] sm:$0xff] %v3370
      %3403 = vst [vmem:[%s412 + $0x21] sm:$0xff] %v3371
      %3404 = vst [vmem:[%s412 + $0x31] sm:$0xff] %v3372
      %3405 = vst [vmem:[%s412 + $0x39] sm:$0xff] %v3373
      %3406 = vst [vmem:[%s412 + $0x49] sm:$0xff] %v3374
      %3407 = vst [vmem:[%s412 + $0x51] sm:$0xff] %v3375
      %3408 = vst [vmem:[%s412 + $0x61] sm:$0xff] %v3376
      %3409 = vst [vmem:[%s412 + $0x69] sm:$0xff] %v3377
      %3410 = vst [vmem:[%s412 + $0x79] sm:$0xff] %v3378
      %3411 = vst [vmem:[%s412 + $0x81] sm:$0xff] %v3379
      %3412 = vst [vmem:[%s412 + $0x91] sm:$0xff] %v3380
      %3413 = vst [vmem:[%s412 + $0x99] sm:$0xff] %v3381
      %3414 = vst [vmem:[%s412 + $0xa9] sm:$0xff] %v3382
      %3415 = vst [vmem:[%s412 + $0xb1] sm:$0xff] %v3383
      %3416 = vst [vmem:[%s412 + $0xc1] sm:$0xff] %v3384
      %3417 = vst [vmem:[%s412 + $0xc9] sm:$0xff] %v3385
      %3418 = vst [vmem:[%s412 + $0xd9] sm:$0xff] %v3386
      %3419 = vst [vmem:[%s412 + $0xe1] sm:$0xff] %v3387
      %3420 = vst [vmem:[%s412 + $0xf1] sm:$0xff] %v3388
      %3421 = vst [vmem:[%s412 + $0xf9] sm:$0xff] %v3389
      %3422 = vst [vmem:[%s412 + $0x109] sm:$0xff] %v3390
      %3423 = vst [vmem:[%s412 + $0x111] sm:$0xff] %v3391
      %3424 = vst [vmem:[%s412 + $0x121] sm:$0xff] %v3392
      %3425 = vst [vmem:[%s412 + $0x129] sm:$0xff] %v3393
      %3426 = vst [vmem:[%s412 + $0x139] sm:$0xff] %v3394
      %3427 = vst [vmem:[%s412 + $0x141] sm:$0xff] %v3395
      %3428 = vst [vmem:[%s412 + $0x151] sm:$0xff] %v3396
      %3429 = vst [vmem:[%s412 + $0x159] sm:$0xff] %v3397
      %3430 = vst [vmem:[%s412 + $0x169] sm:$0xff] %v3398
      %3431 = vst [vmem:[%s412 + $0x171] sm:$0xff] %v3399
      %v3432 = vld [vmem:[#allocation2] sm:$0xff]
      %v3433 = vld [vmem:[#allocation2 + $0x8] sm:$0xff]
      %v3434 = vld [vmem:[#allocation2 + $0x18] sm:$0xff]
      %v3435 = vld [vmem:[#allocation2 + $0x20] sm:$0xff]
      %v3436 = vld [vmem:[#allocation2 + $0x30] sm:$0xff]
      %v3437 = vld [vmem:[#allocation2 + $0x38] sm:$0xff]
      %v3438 = vld [vmem:[#allocation2 + $0x48] sm:$0xff]
      %v3439 = vld [vmem:[#allocation2 + $0x50] sm:$0xff]
      %v3440 = vld [vmem:[#allocation2 + $0x60] sm:$0xff]
      %v3441 = vld [vmem:[#allocation2 + $0x68] sm:$0xff]
      %v3442 = vld [vmem:[#allocation2 + $0x78] sm:$0xff]
      %v3443 = vld [vmem:[#allocation2 + $0x80] sm:$0xff]
      %v3444 = vld [vmem:[#allocation2 + $0x90] sm:$0xff]
      %v3445 = vld [vmem:[#allocation2 + $0x98] sm:$0xff]
      %v3446 = vld [vmem:[#allocation2 + $0xa8] sm:$0xff]
      %v3447 = vld [vmem:[#allocation2 + $0xb0] sm:$0xff]
      %v3448 = vld [vmem:[#allocation2 + $0xc0] sm:$0xff]
      %v3449 = vld [vmem:[#allocation2 + $0xc8] sm:$0xff]
      %v3450 = vld [vmem:[#allocation2 + $0xd8] sm:$0xff]
      %v3451 = vld [vmem:[#allocation2 + $0xe0] sm:$0xff]
      %v3452 = vld [vmem:[#allocation2 + $0xf0] sm:$0xff]
      %v3453 = vld [vmem:[#allocation2 + $0xf8] sm:$0xff]
      %v3454 = vld [vmem:[#allocation2 + $0x108] sm:$0xff]
      %v3455 = vld [vmem:[#allocation2 + $0x110] sm:$0xff]
      %v3456 = vld [vmem:[#allocation2 + $0x120] sm:$0xff]
      %v3457 = vld [vmem:[#allocation2 + $0x128] sm:$0xff]
      %v3458 = vld [vmem:[#allocation2 + $0x138] sm:$0xff]
      %v3459 = vld [vmem:[#allocation2 + $0x140] sm:$0xff]
      %v3460 = vld [vmem:[#allocation2 + $0x150] sm:$0xff]
      %v3461 = vld [vmem:[#allocation2 + $0x158] sm:$0xff]
      %v3462 = vld [vmem:[#allocation2 + $0x168] sm:$0xff]
      %v3463 = vld [vmem:[#allocation2 + $0x170] sm:$0xff]
      %v3464 = vld [vmem:[%s4] sm:$0xff]
      %v3465 = vld [vmem:[%s4 + $0x8] sm:$0xff]
      %v3466 = vld [vmem:[%s4 + $0x10] sm:$0xff]
      %v3467 = vld [vmem:[%s4 + $0x18] sm:$0xff]
      %v3468 = vld [vmem:[%s4 + $0x20] sm:$0xff]
      %v3469 = vld [vmem:[%s4 + $0x28] sm:$0xff]
      %v3470 = vld [vmem:[%s4 + $0x30] sm:$0xff]
      %v3471 = vld [vmem:[%s4 + $0x38] sm:$0xff]
      %v3472 = vld [vmem:[%s4 + $0x40] sm:$0xff]
      %v3473 = vld [vmem:[%s4 + $0x48] sm:$0xff]
      %v3474 = vld [vmem:[%s4 + $0x50] sm:$0xff]
      %v3475 = vld [vmem:[%s4 + $0x58] sm:$0xff]
      %v3476 = vld [vmem:[%s4 + $0x60] sm:$0xff]
      %v3477 = vld [vmem:[%s4 + $0x68] sm:$0xff]
      %v3478 = vld [vmem:[%s4 + $0x70] sm:$0xff]
      %v3479 = vld [vmem:[%s4 + $0x78] sm:$0xff]
      %v3480 = vld [vmem:[#allocation2 + $0x1] sm:$0xff]
      %v3481 = vld [vmem:[#allocation2 + $0x9] sm:$0xff]
      %v3482 = vld [vmem:[#allocation2 + $0x19] sm:$0xff]
      %v3483 = vld [vmem:[#allocation2 + $0x21] sm:$0xff]
      %v3484 = vld [vmem:[#allocation2 + $0x31] sm:$0xff]
      %v3485 = vld [vmem:[#allocation2 + $0x39] sm:$0xff]
      %v3486 = vld [vmem:[#allocation2 + $0x49] sm:$0xff]
      %v3487 = vld [vmem:[#allocation2 + $0x51] sm:$0xff]
      %v3488 = vld [vmem:[#allocation2 + $0x61] sm:$0xff]
      %v3489 = vld [vmem:[#allocation2 + $0x69] sm:$0xff]
      %v3490 = vld [vmem:[#allocation2 + $0x79] sm:$0xff]
      %v3491 = vld [vmem:[#allocation2 + $0x81] sm:$0xff]
      %v3492 = vld [vmem:[#allocation2 + $0x91] sm:$0xff]
      %v3493 = vld [vmem:[#allocation2 + $0x99] sm:$0xff]
      %v3494 = vld [vmem:[#allocation2 + $0xa9] sm:$0xff]
      %v3495 = vld [vmem:[#allocation2 + $0xb1] sm:$0xff]
      %v3496 = vld [vmem:[#allocation2 + $0xc1] sm:$0xff]
      %v3497 = vld [vmem:[#allocation2 + $0xc9] sm:$0xff]
      %v3498 = vld [vmem:[#allocation2 + $0xd9] sm:$0xff]
      %v3499 = vld [vmem:[#allocation2 + $0xe1] sm:$0xff]
      %v3500 = vld [vmem:[#allocation2 + $0xf1] sm:$0xff]
      %v3501 = vld [vmem:[#allocation2 + $0xf9] sm:$0xff]
      %v3502 = vld [vmem:[#allocation2 + $0x109] sm:$0xff]
      %v3503 = vld [vmem:[#allocation2 + $0x111] sm:$0xff]
      %v3504 = vld [vmem:[#allocation2 + $0x121] sm:$0xff]
      %v3505 = vld [vmem:[#allocation2 + $0x129] sm:$0xff]
      %v3506 = vld [vmem:[#allocation2 + $0x139] sm:$0xff]
      %v3507 = vld [vmem:[#allocation2 + $0x141] sm:$0xff]
      %v3508 = vld [vmem:[#allocation2 + $0x151] sm:$0xff]
      %v3509 = vld [vmem:[#allocation2 + $0x159] sm:$0xff]
      %v3510 = vld [vmem:[#allocation2 + $0x169] sm:$0xff]
      %v3511 = vld [vmem:[#allocation2 + $0x171] sm:$0xff]
      %s3512 = scalar_lea.vmem %s4, 128
      %v3513 = vld [vmem:[%s3512] sm:$0xff]
      %v3514 = vld [vmem:[%s3512 + $0x8] sm:$0xff]
      %v3515 = vld [vmem:[%s3512 + $0x10] sm:$0xff]
      %v3516 = vld [vmem:[%s3512 + $0x18] sm:$0xff]
      %v3517 = vld [vmem:[%s3512 + $0x20] sm:$0xff]
      %v3518 = vld [vmem:[%s3512 + $0x28] sm:$0xff]
      %v3519 = vld [vmem:[%s3512 + $0x30] sm:$0xff]
      %v3520 = vld [vmem:[%s3512 + $0x38] sm:$0xff]
      %v3521 = vld [vmem:[%s3512 + $0x40] sm:$0xff]
      %v3522 = vld [vmem:[%s3512 + $0x48] sm:$0xff]
      %v3523 = vld [vmem:[%s3512 + $0x50] sm:$0xff]
      %v3524 = vld [vmem:[%s3512 + $0x58] sm:$0xff]
      %v3525 = vld [vmem:[%s3512 + $0x60] sm:$0xff]
      %v3526 = vld [vmem:[%s3512 + $0x68] sm:$0xff]
      %v3527 = vld [vmem:[%s3512 + $0x70] sm:$0xff]
      %v3528 = vld [vmem:[%s3512 + $0x78] sm:$0xff]
      %3529 = vmatprep.subr.mxu0 0.0
      %3530 = vmatpush1.msra.mxu0 %v3513
      %3531 = vmatprep.subr.mxu0 0.0
      %3532 = vmatpush1.msra.mxu0 %v3514
      %3533 = vmatprep.subr.mxu0 0.0
      %3534 = vmatpush1.msra.mxu0 %v3515
      %3535 = vmatprep.subr.mxu0 0.0
      %3536 = vmatpush1.msra.mxu0 %v3516
      %3537 = vmatprep.subr.mxu0 0.0
      %3538 = vmatpush1.msra.mxu0 %v3517
      %3539 = vmatprep.subr.mxu0 0.0
      %3540 = vmatpush1.msra.mxu0 %v3518
      %3541 = vmatprep.subr.mxu0 0.0
      %3542 = vmatpush1.msra.mxu0 %v3519
      %3543 = vmatprep.subr.mxu0 0.0
      %3544 = vmatpush1.msra.mxu0 %v3520
      %3545 = vmatprep.subr.mxu0 0.0
      %3546 = vmatpush1.msra.mxu0 %v3521
      %3547 = vmatprep.subr.mxu0 0.0
      %3548 = vmatpush1.msra.mxu0 %v3522
      %3549 = vmatprep.subr.mxu0 0.0
      %3550 = vmatpush1.msra.mxu0 %v3523
      %3551 = vmatprep.subr.mxu0 0.0
      %3552 = vmatpush1.msra.mxu0 %v3524
      %3553 = vmatprep.subr.mxu0 0.0
      %3554 = vmatpush1.msra.mxu0 %v3525
      %3555 = vmatprep.subr.mxu0 0.0
      %3556 = vmatpush1.msra.mxu0 %v3526
      %3557 = vmatprep.subr.mxu0 0.0
      %3558 = vmatpush1.msra.mxu0 %v3527
      %3559 = vmatprep.subr.mxu0 0.0
      %3560 = vmatpush1.msra.mxu0 %v3528
      %3561 = vmatprep.subr.mxu0 0.0
      %3562 = vmatpush1.msra.mxu0 0.0
      %3563 = vmatprep.subr.mxu0 0.0
      %3564 = vmatpush1.msra.mxu0 0.0
      %3565 = vmatprep.subr.mxu0 0.0
      %3566 = vmatpush1.msra.mxu0 0.0
      %3567 = vmatprep.subr.mxu0 0.0
      %3568 = vmatpush1.msra.mxu0 0.0
      %3569 = vmatprep.subr.mxu0 0.0
      %3570 = vmatpush1.msra.mxu0 0.0
      %3571 = vmatprep.subr.mxu0 0.0
      %3572 = vmatpush1.msra.mxu0 0.0
      %3573 = vmatprep.subr.mxu0 0.0
      %3574 = vmatpush1.msra.mxu0 0.0
      %3575 = vmatprep.subr.mxu0 0.0
      %3576 = vmatpush1.msra.mxu0 0.0
      %3577 = vmatprep.subr.mxu0 0.0
      %3578 = vmatpush1.msra.mxu0 0.0
      %3579 = vmatprep.subr.mxu0 0.0
      %3580 = vmatpush1.msra.mxu0 0.0
      %3581 = vmatprep.subr.mxu0 0.0
      %3582 = vmatpush1.msra.mxu0 0.0
      %3583 = vmatprep.subr.mxu0 0.0
      %3584 = vmatpush1.msra.mxu0 0.0
      %3585 = vmatprep.subr.mxu0 0.0
      %3586 = vmatpush1.msra.mxu0 0.0
      %3587 = vmatprep.subr.mxu0 0.0
      %3588 = vmatpush1.msra.mxu0 0.0
      %3589 = vmatprep.subr.mxu0 0.0
      %3590 = vmatpush1.msra.mxu0 0.0
      %3591 = vmatprep.subr.mxu0 0.0
      %3592 = vmatpush1.msra.mxu0 0.0
      %3593 = vmatprep.mubr.f32.mxu0 0.0
      %3594 = vmatmul.mubr.f32.gmra.mrb[0].mxu0 %v3480
      %v3595 = vpop.f32.mrb[0].mxu0
      %v3596 = vadd.f32 0.0, %v3595
      %v3597 = vpop.f32.mrb[0].mxu0
      %3598 = vmatprep.mubr.f32.mxu0 0.0
      %3599 = vmatmul.mubr.f32.gmra.mrb[0].mxu0 %v3481
      %v3600 = vpop.f32.mrb[0].mxu0
      %v3601 = vadd.f32 0.0, %v3600
      %v3602 = vpop.f32.mrb[0].mxu0
      %3603 = vmatprep.mubr.f32.mxu0 0.0
      %3604 = vmatmul.mubr.f32.gmra.mrb[0].mxu0 %v3482
      %v3605 = vpop.f32.mrb[0].mxu0
      %v3606 = vadd.f32 0.0, %v3605
      %v3607 = vpop.f32.mrb[0].mxu0
      %3608 = vmatprep.mubr.f32.mxu0 0.0
      %3609 = vmatmul.mubr.f32.gmra.mrb[0].mxu0 %v3483
      %v3610 = vpop.f32.mrb[0].mxu0
      %v3611 = vadd.f32 0.0, %v3610
      %v3612 = vpop.f32.mrb[0].mxu0
      %3613 = vmatprep.mubr.f32.mxu0 0.0
      %3614 = vmatmul.mubr.f32.gmra.mrb[0].mxu0 %v3484
      %v3615 = vpop.f32.mrb[0].mxu0
      %v3616 = vadd.f32 0.0, %v3615
      %v3617 = vpop.f32.mrb[0].mxu0
      %3618 = vmatprep.mubr.f32.mxu0 0.0
      %3619 = vmatmul.mubr.f32.gmra.mrb[0].mxu0 %v3485
      %v3620 = vpop.f32.mrb[0].mxu0
      %v3621 = vadd.f32 0.0, %v3620
      %v3622 = vpop.f32.mrb[0].mxu0
      %3623 = vmatprep.mubr.f32.mxu0 0.0
      %3624 = vmatmul.mubr.f32.gmra.mrb[0].mxu0 %v3486
      %v3625 = vpop.f32.mrb[0].mxu0
      %v3626 = vadd.f32 0.0, %v3625
      %v3627 = vpop.f32.mrb[0].mxu0
      %3628 = vmatprep.mubr.f32.mxu0 0.0
      %3629 = vmatmul.mubr.f32.gmra.mrb[0].mxu0 %v3487
      %v3630 = vpop.f32.mrb[0].mxu0
      %v3631 = vadd.f32 0.0, %v3630
      %v3632 = vpop.f32.mrb[0].mxu0
      %3633 = vmatprep.mubr.f32.mxu0 0.0
      %3634 = vmatmul.mubr.f32.gmra.mrb[0].mxu0 %v3488
      %v3635 = vpop.f32.mrb[0].mxu0
      %v3636 = vadd.f32 0.0, %v3635
      %v3637 = vpop.f32.mrb[0].mxu0
      %3638 = vmatprep.mubr.f32.mxu0 0.0
      %3639 = vmatmul.mubr.f32.gmra.mrb[0].mxu0 %v3489
      %v3640 = vpop.f32.mrb[0].mxu0
      %v3641 = vadd.f32 0.0, %v3640
      %v3642 = vpop.f32.mrb[0].mxu0
      %3643 = vmatprep.mubr.f32.mxu0 0.0
      %3644 = vmatmul.mubr.f32.gmra.mrb[0].mxu0 %v3490
      %v3645 = vpop.f32.mrb[0].mxu0
      %v3646 = vadd.f32 0.0, %v3645
      %v3647 = vpop.f32.mrb[0].mxu0
      %3648 = vmatprep.mubr.f32.mxu0 0.0
      %3649 = vmatmul.mubr.f32.gmra.mrb[0].mxu0 %v3491
      %v3650 = vpop.f32.mrb[0].mxu0
      %v3651 = vadd.f32 0.0, %v3650
      %v3652 = vpop.f32.mrb[0].mxu0
      %3653 = vmatprep.mubr.f32.mxu0 0.0
      %3654 = vmatmul.mubr.f32.gmra.mrb[0].mxu0 %v3492
      %v3655 = vpop.f32.mrb[0].mxu0
      %v3656 = vadd.f32 0.0, %v3655
      %v3657 = vpop.f32.mrb[0].mxu0
      %3658 = vmatprep.mubr.f32.mxu0 0.0
      %3659 = vmatmul.mubr.f32.gmra.mrb[0].mxu0 %v3493
      %v3660 = vpop.f32.mrb[0].mxu0
      %v3661 = vadd.f32 0.0, %v3660
      %v3662 = vpop.f32.mrb[0].mxu0
      %3663 = vmatprep.mubr.f32.mxu0 0.0
      %3664 = vmatmul.mubr.f32.gmra.mrb[0].mxu0 %v3494
      %v3665 = vpop.f32.mrb[0].mxu0
      %v3666 = vadd.f32 0.0, %v3665
      %v3667 = vpop.f32.mrb[0].mxu0
      %3668 = vmatprep.mubr.f32.mxu0 0.0
      %3669 = vmatmul.mubr.f32.gmra.mrb[0].mxu0 %v3495
      %v3670 = vpop.f32.mrb[0].mxu0
      %v3671 = vadd.f32 0.0, %v3670
      %v3672 = vpop.f32.mrb[0].mxu0
      %3673 = vmatprep.mubr.f32.mxu0 0.0
      %3674 = vmatmul.mubr.f32.gmra.mrb[0].mxu0 %v3496
      %v3675 = vpop.f32.mrb[0].mxu0
      %v3676 = vadd.f32 0.0, %v3675
      %v3677 = vpop.f32.mrb[0].mxu0
      %3678 = vmatprep.mubr.f32.mxu0 0.0
      %3679 = vmatmul.mubr.f32.gmra.mrb[0].mxu0 %v3497
      %v3680 = vpop.f32.mrb[0].mxu0
      %v3681 = vadd.f32 0.0, %v3680
      %v3682 = vpop.f32.mrb[0].mxu0
      %3683 = vmatprep.mubr.f32.mxu0 0.0
      %3684 = vmatmul.mubr.f32.gmra.mrb[0].mxu0 %v3498
      %v3685 = vpop.f32.mrb[0].mxu0
      %v3686 = vadd.f32 0.0, %v3685
      %v3687 = vpop.f32.mrb[0].mxu0
      %3688 = vmatprep.mubr.f32.mxu0 0.0
      %3689 = vmatmul.mubr.f32.gmra.mrb[0].mxu0 %v3499
      %v3690 = vpop.f32.mrb[0].mxu0
      %v3691 = vadd.f32 0.0, %v3690
      %v3692 = vpop.f32.mrb[0].mxu0
      %3693 = vmatprep.mubr.f32.mxu0 0.0
      %3694 = vmatmul.mubr.f32.gmra.mrb[0].mxu0 %v3500
      %v3695 = vpop.f32.mrb[0].mxu0
      %v3696 = vadd.f32 0.0, %v3695
      %v3697 = vpop.f32.mrb[0].mxu0
      %3698 = vmatprep.mubr.f32.mxu0 0.0
      %3699 = vmatmul.mubr.f32.gmra.mrb[0].mxu0 %v3501
      %v3700 = vpop.f32.mrb[0].mxu0
      %v3701 = vadd.f32 0.0, %v3700
      %v3702 = vpop.f32.mrb[0].mxu0
      %3703 = vmatprep.mubr.f32.mxu0 0.0
      %3704 = vmatmul.mubr.f32.gmra.mrb[0].mxu0 %v3502
      %v3705 = vpop.f32.mrb[0].mxu0
      %v3706 = vadd.f32 0.0, %v3705
      %v3707 = vpop.f32.mrb[0].mxu0
      %3708 = vmatprep.mubr.f32.mxu0 0.0
      %3709 = vmatmul.mubr.f32.gmra.mrb[0].mxu0 %v3503
      %v3710 = vpop.f32.mrb[0].mxu0
      %v3711 = vadd.f32 0.0, %v3710
      %v3712 = vpop.f32.mrb[0].mxu0
      %3713 = vmatprep.mubr.f32.mxu0 0.0
      %3714 = vmatmul.mubr.f32.gmra.mrb[0].mxu0 %v3504
      %v3715 = vpop.f32.mrb[0].mxu0
      %v3716 = vadd.f32 0.0, %v3715
      %v3717 = vpop.f32.mrb[0].mxu0
      %3718 = vmatprep.mubr.f32.mxu0 0.0
      %3719 = vmatmul.mubr.f32.gmra.mrb[0].mxu0 %v3505
      %v3720 = vpop.f32.mrb[0].mxu0
      %v3721 = vadd.f32 0.0, %v3720
      %v3722 = vpop.f32.mrb[0].mxu0
      %3723 = vmatprep.mubr.f32.mxu0 0.0
      %3724 = vmatmul.mubr.f32.gmra.mrb[0].mxu0 %v3506
      %v3725 = vpop.f32.mrb[0].mxu0
      %v3726 = vadd.f32 0.0, %v3725
      %v3727 = vpop.f32.mrb[0].mxu0
      %3728 = vmatprep.mubr.f32.mxu0 0.0
      %3729 = vmatmul.mubr.f32.gmra.mrb[0].mxu0 %v3507
      %v3730 = vpop.f32.mrb[0].mxu0
      %v3731 = vadd.f32 0.0, %v3730
      %v3732 = vpop.f32.mrb[0].mxu0
      %3733 = vmatprep.mubr.f32.mxu0 0.0
      %3734 = vmatmul.mubr.f32.gmra.mrb[0].mxu0 %v3508
      %v3735 = vpop.f32.mrb[0].mxu0
      %v3736 = vadd.f32 0.0, %v3735
      %v3737 = vpop.f32.mrb[0].mxu0
      %3738 = vmatprep.mubr.f32.mxu0 0.0
      %3739 = vmatmul.mubr.f32.gmra.mrb[0].mxu0 %v3509
      %v3740 = vpop.f32.mrb[0].mxu0
      %v3741 = vadd.f32 0.0, %v3740
      %v3742 = vpop.f32.mrb[0].mxu0
      %3743 = vmatprep.mubr.f32.mxu0 0.0
      %3744 = vmatmul.mubr.f32.gmra.mrb[0].mxu0 %v3510
      %v3745 = vpop.f32.mrb[0].mxu0
      %v3746 = vadd.f32 0.0, %v3745
      %v3747 = vpop.f32.mrb[0].mxu0
      %3748 = vmatprep.mubr.f32.mxu0 0.0
      %3749 = vmatmul.mubr.f32.gmra.mrb[0].mxu0 %v3511
      %v3750 = vpop.f32.mrb[0].mxu0
      %v3751 = vadd.f32 0.0, %v3750
      %v3752 = vpop.f32.mrb[0].mxu0
      %3753 = vdwg.mxu0
      %3754 = vmatprep.subr.mxu0 0.0
      %3755 = vmatpush1.msra.mxu0 %v3464
      %3756 = vmatprep.subr.mxu0 0.0
      %3757 = vmatpush1.msra.mxu0 %v3465
      %3758 = vmatprep.subr.mxu0 0.0
      %3759 = vmatpush1.msra.mxu0 %v3466
      %3760 = vmatprep.subr.mxu0 0.0
      %3761 = vmatpush1.msra.mxu0 %v3467
      %3762 = vmatprep.subr.mxu0 0.0
      %3763 = vmatpush1.msra.mxu0 %v3468
      %3764 = vmatprep.subr.mxu0 0.0
      %3765 = vmatpush1.msra.mxu0 %v3469
      %3766 = vmatprep.subr.mxu0 0.0
      %3767 = vmatpush1.msra.mxu0 %v3470
      %3768 = vmatprep.subr.mxu0 0.0
      %3769 = vmatpush1.msra.mxu0 %v3471
      %3770 = vmatprep.subr.mxu0 0.0
      %3771 = vmatpush1.msra.mxu0 %v3472
      %3772 = vmatprep.subr.mxu0 0.0
      %3773 = vmatpush1.msra.mxu0 %v3473
      %3774 = vmatprep.subr.mxu0 0.0
      %3775 = vmatpush1.msra.mxu0 %v3474
      %3776 = vmatprep.subr.mxu0 0.0
      %3777 = vmatpush1.msra.mxu0 %v3475
      %3778 = vmatprep.subr.mxu0 0.0
      %3779 = vmatpush1.msra.mxu0 %v3476
      %3780 = vmatprep.subr.mxu0 0.0
      %3781 = vmatpush1.msra.mxu0 %v3477
      %3782 = vmatprep.subr.mxu0 0.0
      %3783 = vmatpush1.msra.mxu0 %v3478
      %3784 = vmatprep.subr.mxu0 0.0
      %3785 = vmatpush1.msra.mxu0 %v3479
      %3786 = vmatprep.subr.mxu0 0.0
      %3787 = vmatpush1.msra.mxu0 0.0
      %3788 = vmatprep.subr.mxu0 0.0
      %3789 = vmatpush1.msra.mxu0 0.0
      %3790 = vmatprep.subr.mxu0 0.0
      %3791 = vmatpush1.msra.mxu0 0.0
      %3792 = vmatprep.subr.mxu0 0.0
      %3793 = vmatpush1.msra.mxu0 0.0
      %3794 = vmatprep.subr.mxu0 0.0
      %3795 = vmatpush1.msra.mxu0 0.0
      %3796 = vmatprep.subr.mxu0 0.0
      %3797 = vmatpush1.msra.mxu0 0.0
      %3798 = vmatprep.subr.mxu0 0.0
      %3799 = vmatpush1.msra.mxu0 0.0
      %3800 = vmatprep.subr.mxu0 0.0
      %3801 = vmatpush1.msra.mxu0 0.0
      %3802 = vmatprep.subr.mxu0 0.0
      %3803 = vmatpush1.msra.mxu0 0.0
      %3804 = vmatprep.subr.mxu0 0.0
      %3805 = vmatpush1.msra.mxu0 0.0
      %3806 = vmatprep.subr.mxu0 0.0
      %3807 = vmatpush1.msra.mxu0 0.0
      %3808 = vmatprep.subr.mxu0 0.0
      %3809 = vmatpush1.msra.mxu0 0.0
      %3810 = vmatprep.subr.mxu0 0.0
      %3811 = vmatpush1.msra.mxu0 0.0
      %3812 = vmatprep.subr.mxu0 0.0
      %3813 = vmatpush1.msra.mxu0 0.0
      %3814 = vmatprep.subr.mxu0 0.0
      %3815 = vmatpush1.msra.mxu0 0.0
      %3816 = vmatprep.subr.mxu0 0.0
      %3817 = vmatpush1.msra.mxu0 0.0
      %3818 = vmatprep.mubr.f32.mxu0 0.0
      %3819 = vmatmul.mubr.f32.gmra.mrb[0].mxu0 %v3432
      %v3820 = vpop.f32.mrb[0].mxu0
      %v3821 = vadd.f32 %v3596, %v3820
      %v3822 = vpop.f32.mrb[0].mxu0
      %3823 = vmatprep.mubr.f32.mxu0 0.0
      %3824 = vmatmul.mubr.f32.gmra.mrb[0].mxu0 %v3433
      %v3825 = vpop.f32.mrb[0].mxu0
      %v3826 = vadd.f32 %v3601, %v3825
      %v3827 = vpop.f32.mrb[0].mxu0
      %3828 = vmatprep.mubr.f32.mxu0 0.0
      %3829 = vmatmul.mubr.f32.gmra.mrb[0].mxu0 %v3434
      %v3830 = vpop.f32.mrb[0].mxu0
      %v3831 = vadd.f32 %v3606, %v3830
      %v3832 = vpop.f32.mrb[0].mxu0
      %3833 = vmatprep.mubr.f32.mxu0 0.0
      %3834 = vmatmul.mubr.f32.gmra.mrb[0].mxu0 %v3435
      %v3835 = vpop.f32.mrb[0].mxu0
      %v3836 = vadd.f32 %v3611, %v3835
      %v3837 = vpop.f32.mrb[0].mxu0
      %3838 = vmatprep.mubr.f32.mxu0 0.0
      %3839 = vmatmul.mubr.f32.gmra.mrb[0].mxu0 %v3436
      %v3840 = vpop.f32.mrb[0].mxu0
      %v3841 = vadd.f32 %v3616, %v3840
      %v3842 = vpop.f32.mrb[0].mxu0
      %3843 = vmatprep.mubr.f32.mxu0 0.0
      %3844 = vmatmul.mubr.f32.gmra.mrb[0].mxu0 %v3437
      %v3845 = vpop.f32.mrb[0].mxu0
      %v3846 = vadd.f32 %v3621, %v3845
      %v3847 = vpop.f32.mrb[0].mxu0
      %3848 = vmatprep.mubr.f32.mxu0 0.0
      %3849 = vmatmul.mubr.f32.gmra.mrb[0].mxu0 %v3438
      %v3850 = vpop.f32.mrb[0].mxu0
      %v3851 = vadd.f32 %v3626, %v3850
      %v3852 = vpop.f32.mrb[0].mxu0
      %3853 = vmatprep.mubr.f32.mxu0 0.0
      %3854 = vmatmul.mubr.f32.gmra.mrb[0].mxu0 %v3439
      %v3855 = vpop.f32.mrb[0].mxu0
      %v3856 = vadd.f32 %v3631, %v3855
      %v3857 = vpop.f32.mrb[0].mxu0
      %3858 = vmatprep.mubr.f32.mxu0 0.0
      %3859 = vmatmul.mubr.f32.gmra.mrb[0].mxu0 %v3440
      %v3860 = vpop.f32.mrb[0].mxu0
      %v3861 = vadd.f32 %v3636, %v3860
      %v3862 = vpop.f32.mrb[0].mxu0
      %3863 = vmatprep.mubr.f32.mxu0 0.0
      %3864 = vmatmul.mubr.f32.gmra.mrb[0].mxu0 %v3441
      %v3865 = vpop.f32.mrb[0].mxu0
      %v3866 = vadd.f32 %v3641, %v3865
      %v3867 = vpop.f32.mrb[0].mxu0
      %3868 = vmatprep.mubr.f32.mxu0 0.0
      %3869 = vmatmul.mubr.f32.gmra.mrb[0].mxu0 %v3442
      %v3870 = vpop.f32.mrb[0].mxu0
      %v3871 = vadd.f32 %v3646, %v3870
      %v3872 = vpop.f32.mrb[0].mxu0
      %3873 = vmatprep.mubr.f32.mxu0 0.0
      %3874 = vmatmul.mubr.f32.gmra.mrb[0].mxu0 %v3443
      %v3875 = vpop.f32.mrb[0].mxu0
      %v3876 = vadd.f32 %v3651, %v3875
      %v3877 = vpop.f32.mrb[0].mxu0
      %3878 = vmatprep.mubr.f32.mxu0 0.0
      %3879 = vmatmul.mubr.f32.gmra.mrb[0].mxu0 %v3444
      %v3880 = vpop.f32.mrb[0].mxu0
      %v3881 = vadd.f32 %v3656, %v3880
      %v3882 = vpop.f32.mrb[0].mxu0
      %3883 = vmatprep.mubr.f32.mxu0 0.0
      %3884 = vmatmul.mubr.f32.gmra.mrb[0].mxu0 %v3445
      %v3885 = vpop.f32.mrb[0].mxu0
      %v3886 = vadd.f32 %v3661, %v3885
      %v3887 = vpop.f32.mrb[0].mxu0
      %3888 = vmatprep.mubr.f32.mxu0 0.0
      %3889 = vmatmul.mubr.f32.gmra.mrb[0].mxu0 %v3446
      %v3890 = vpop.f32.mrb[0].mxu0
      %v3891 = vadd.f32 %v3666, %v3890
      %v3892 = vpop.f32.mrb[0].mxu0
      %3893 = vmatprep.mubr.f32.mxu0 0.0
      %3894 = vmatmul.mubr.f32.gmra.mrb[0].mxu0 %v3447
      %v3895 = vpop.f32.mrb[0].mxu0
      %v3896 = vadd.f32 %v3671, %v3895
      %v3897 = vpop.f32.mrb[0].mxu0
      %3898 = vmatprep.mubr.f32.mxu0 0.0
      %3899 = vmatmul.mubr.f32.gmra.mrb[0].mxu0 %v3448
      %v3900 = vpop.f32.mrb[0].mxu0
      %v3901 = vadd.f32 %v3676, %v3900
      %v3902 = vpop.f32.mrb[0].mxu0
      %3903 = vmatprep.mubr.f32.mxu0 0.0
      %3904 = vmatmul.mubr.f32.gmra.mrb[0].mxu0 %v3449
      %v3905 = vpop.f32.mrb[0].mxu0
      %v3906 = vadd.f32 %v3681, %v3905
      %v3907 = vpop.f32.mrb[0].mxu0
      %3908 = vmatprep.mubr.f32.mxu0 0.0
      %3909 = vmatmul.mubr.f32.gmra.mrb[0].mxu0 %v3450
      %v3910 = vpop.f32.mrb[0].mxu0
      %v3911 = vadd.f32 %v3686, %v3910
      %v3912 = vpop.f32.mrb[0].mxu0
      %3913 = vmatprep.mubr.f32.mxu0 0.0
      %3914 = vmatmul.mubr.f32.gmra.mrb[0].mxu0 %v3451
      %v3915 = vpop.f32.mrb[0].mxu0
      %v3916 = vadd.f32 %v3691, %v3915
      %v3917 = vpop.f32.mrb[0].mxu0
      %3918 = vmatprep.mubr.f32.mxu0 0.0
      %3919 = vmatmul.mubr.f32.gmra.mrb[0].mxu0 %v3452
      %v3920 = vpop.f32.mrb[0].mxu0
      %v3921 = vadd.f32 %v3696, %v3920
      %v3922 = vpop.f32.mrb[0].mxu0
      %3923 = vmatprep.mubr.f32.mxu0 0.0
      %3924 = vmatmul.mubr.f32.gmra.mrb[0].mxu0 %v3453
      %v3925 = vpop.f32.mrb[0].mxu0
      %v3926 = vadd.f32 %v3701, %v3925
      %v3927 = vpop.f32.mrb[0].mxu0
      %3928 = vmatprep.mubr.f32.mxu0 0.0
      %3929 = vmatmul.mubr.f32.gmra.mrb[0].mxu0 %v3454
      %v3930 = vpop.f32.mrb[0].mxu0
      %v3931 = vadd.f32 %v3706, %v3930
      %v3932 = vpop.f32.mrb[0].mxu0
      %3933 = vmatprep.mubr.f32.mxu0 0.0
      %3934 = vmatmul.mubr.f32.gmra.mrb[0].mxu0 %v3455
      %v3935 = vpop.f32.mrb[0].mxu0
      %v3936 = vadd.f32 %v3711, %v3935
      %v3937 = vpop.f32.mrb[0].mxu0
      %3938 = vmatprep.mubr.f32.mxu0 0.0
      %3939 = vmatmul.mubr.f32.gmra.mrb[0].mxu0 %v3456
      %v3940 = vpop.f32.mrb[0].mxu0
      %v3941 = vadd.f32 %v3716, %v3940
      %v3942 = vpop.f32.mrb[0].mxu0
      %3943 = vmatprep.mubr.f32.mxu0 0.0
      %3944 = vmatmul.mubr.f32.gmra.mrb[0].mxu0 %v3457
      %v3945 = vpop.f32.mrb[0].mxu0
      %v3946 = vadd.f32 %v3721, %v3945
      %v3947 = vpop.f32.mrb[0].mxu0
      %3948 = vmatprep.mubr.f32.mxu0 0.0
      %3949 = vmatmul.mubr.f32.gmra.mrb[0].mxu0 %v3458
      %v3950 = vpop.f32.mrb[0].mxu0
      %v3951 = vadd.f32 %v3726, %v3950
      %v3952 = vpop.f32.mrb[0].mxu0
      %3953 = vmatprep.mubr.f32.mxu0 0.0
      %3954 = vmatmul.mubr.f32.gmra.mrb[0].mxu0 %v3459
      %v3955 = vpop.f32.mrb[0].mxu0
      %v3956 = vadd.f32 %v3731, %v3955
      %v3957 = vpop.f32.mrb[0].mxu0
      %3958 = vmatprep.mubr.f32.mxu0 0.0
      %3959 = vmatmul.mubr.f32.gmra.mrb[0].mxu0 %v3460
      %v3960 = vpop.f32.mrb[0].mxu0
      %v3961 = vadd.f32 %v3736, %v3960
      %v3962 = vpop.f32.mrb[0].mxu0
      %3963 = vmatprep.mubr.f32.mxu0 0.0
      %3964 = vmatmul.mubr.f32.gmra.mrb[0].mxu0 %v3461
      %v3965 = vpop.f32.mrb[0].mxu0
      %v3966 = vadd.f32 %v3741, %v3965
      %v3967 = vpop.f32.mrb[0].mxu0
      %3968 = vmatprep.mubr.f32.mxu0 0.0
      %3969 = vmatmul.mubr.f32.gmra.mrb[0].mxu0 %v3462
      %v3970 = vpop.f32.mrb[0].mxu0
      %v3971 = vadd.f32 %v3746, %v3970
      %v3972 = vpop.f32.mrb[0].mxu0
      %3973 = vmatprep.mubr.f32.mxu0 0.0
      %3974 = vmatmul.mubr.f32.gmra.mrb[0].mxu0 %v3463
      %v3975 = vpop.f32.mrb[0].mxu0
      %v3976 = vadd.f32 %v3751, %v3975
      %v3977 = vpop.f32.mrb[0].mxu0
      %3978 = vdwg.mxu0
      %v3979 = vld [vmem:[#allocation2 + $0x2] sm:$0xff]
      %v3980 = vld [vmem:[#allocation2 + $0xa] sm:$0xff]
      %v3981 = vld [vmem:[#allocation2 + $0x1a] sm:$0xff]
      %v3982 = vld [vmem:[#allocation2 + $0x22] sm:$0xff]
      %v3983 = vld [vmem:[#allocation2 + $0x32] sm:$0xff]
      %v3984 = vld [vmem:[#allocation2 + $0x3a] sm:$0xff]
      %v3985 = vld [vmem:[#allocation2 + $0x4a] sm:$0xff]
      %v3986 = vld [vmem:[#allocation2 + $0x52] sm:$0xff]
      %v3987 = vld [vmem:[#allocation2 + $0x62] sm:$0xff]
      %v3988 = vld [vmem:[#allocation2 + $0x6a] sm:$0xff]
      %v3989 = vld [vmem:[#allocation2 + $0x7a] sm:$0xff]
      %v3990 = vld [vmem:[#allocation2 + $0x82] sm:$0xff]
      %v3991 = vld [vmem:[#allocation2 + $0x92] sm:$0xff]
      %v3992 = vld [vmem:[#allocation2 + $0x9a] sm:$0xff]
      %v3993 = vld [vmem:[#allocation2 + $0xaa] sm:$0xff]
      %v3994 = vld [vmem:[#allocation2 + $0xb2] sm:$0xff]
      %v3995 = vld [vmem:[#allocation2 + $0xc2] sm:$0xff]
      %v3996 = vld [vmem:[#allocation2 + $0xca] sm:$0xff]
      %v3997 = vld [vmem:[#allocation2 + $0xda] sm:$0xff]
      %v3998 = vld [vmem:[#allocation2 + $0xe2] sm:$0xff]
      %v3999 = vld [vmem:[#allocation2 + $0xf2] sm:$0xff]
      %v4000 = vld [vmem:[#allocation2 + $0xfa] sm:$0xff]
      %v4001 = vld [vmem:[#allocation2 + $0x10a] sm:$0xff]
      %v4002 = vld [vmem:[#allocation2 + $0x112] sm:$0xff]
      %v4003 = vld [vmem:[#allocation2 + $0x122] sm:$0xff]
      %v4004 = vld [vmem:[#allocation2 + $0x12a] sm:$0xff]
      %v4005 = vld [vmem:[#allocation2 + $0x13a] sm:$0xff]
      %v4006 = vld [vmem:[#allocation2 + $0x142] sm:$0xff]
      %v4007 = vld [vmem:[#allocation2 + $0x152] sm:$0xff]
      %v4008 = vld [vmem:[#allocation2 + $0x15a] sm:$0xff]
      %v4009 = vld [vmem:[#allocation2 + $0x16a] sm:$0xff]
      %v4010 = vld [vmem:[#allocation2 + $0x172] sm:$0xff]
      %s4011 = scalar_lea.vmem %s4, 256
      %v4012 = vld [vmem:[%s4011] sm:$0xff]
      %v4013 = vld [vmem:[%s4011 + $0x8] sm:$0xff]
      %v4014 = vld [vmem:[%s4011 + $0x10] sm:$0xff]
      %v4015 = vld [vmem:[%s4011 + $0x18] sm:$0xff]
      %v4016 = vld [vmem:[%s4011 + $0x20] sm:$0xff]
      %v4017 = vld [vmem:[%s4011 + $0x28] sm:$0xff]
      %v4018 = vld [vmem:[%s4011 + $0x30] sm:$0xff]
      %v4019 = vld [vmem:[%s4011 + $0x38] sm:$0xff]
      %v4020 = vld [vmem:[%s4011 + $0x40] sm:$0xff]
      %v4021 = vld [vmem:[%s4011 + $0x48] sm:$0xff]
      %v4022 = vld [vmem:[%s4011 + $0x50] sm:$0xff]
      %v4023 = vld [vmem:[%s4011 + $0x58] sm:$0xff]
      %v4024 = vld [vmem:[%s4011 + $0x60] sm:$0xff]
      %v4025 = vld [vmem:[%s4011 + $0x68] sm:$0xff]
      %v4026 = vld [vmem:[%s4011 + $0x70] sm:$0xff]
      %v4027 = vld [vmem:[%s4011 + $0x78] sm:$0xff]
      %4028 = vmatprep.subr.mxu0 0.0
      %4029 = vmatpush1.msra.mxu0 %v4012
      %4030 = vmatprep.subr.mxu0 0.0
      %4031 = vmatpush1.msra.mxu0 %v4013
      %4032 = vmatprep.subr.mxu0 0.0
      %4033 = vmatpush1.msra.mxu0 %v4014
      %4034 = vmatprep.subr.mxu0 0.0
      %4035 = vmatpush1.msra.mxu0 %v4015
      %4036 = vmatprep.subr.mxu0 0.0
      %4037 = vmatpush1.msra.mxu0 %v4016
      %4038 = vmatprep.subr.mxu0 0.0
      %4039 = vmatpush1.msra.mxu0 %v4017
      %4040 = vmatprep.subr.mxu0 0.0
      %4041 = vmatpush1.msra.mxu0 %v4018
      %4042 = vmatprep.subr.mxu0 0.0
      %4043 = vmatpush1.msra.mxu0 %v4019
      %4044 = vmatprep.subr.mxu0 0.0
      %4045 = vmatpush1.msra.mxu0 %v4020
      %4046 = vmatprep.subr.mxu0 0.0
      %4047 = vmatpush1.msra.mxu0 %v4021
      %4048 = vmatprep.subr.mxu0 0.0
      %4049 = vmatpush1.msra.mxu0 %v4022
      %4050 = vmatprep.subr.mxu0 0.0
      %4051 = vmatpush1.msra.mxu0 %v4023
      %4052 = vmatprep.subr.mxu0 0.0
      %4053 = vmatpush1.msra.mxu0 %v4024
      %4054 = vmatprep.subr.mxu0 0.0
      %4055 = vmatpush1.msra.mxu0 %v4025
      %4056 = vmatprep.subr.mxu0 0.0
      %4057 = vmatpush1.msra.mxu0 %v4026
      %4058 = vmatprep.subr.mxu0 0.0
      %4059 = vmatpush1.msra.mxu0 %v4027
      %4060 = vmatprep.subr.mxu0 0.0
      %4061 = vmatpush1.msra.mxu0 0.0
      %4062 = vmatprep.subr.mxu0 0.0
      %4063 = vmatpush1.msra.mxu0 0.0
      %4064 = vmatprep.subr.mxu0 0.0
      %4065 = vmatpush1.msra.mxu0 0.0
      %4066 = vmatprep.subr.mxu0 0.0
      %4067 = vmatpush1.msra.mxu0 0.0
      %4068 = vmatprep.subr.mxu0 0.0
      %4069 = vmatpush1.msra.mxu0 0.0
      %4070 = vmatprep.subr.mxu0 0.0
      %4071 = vmatpush1.msra.mxu0 0.0
      %4072 = vmatprep.subr.mxu0 0.0
      %4073 = vmatpush1.msra.mxu0 0.0
      %4074 = vmatprep.subr.mxu0 0.0
      %4075 = vmatpush1.msra.mxu0 0.0
      %4076 = vmatprep.subr.mxu0 0.0
      %4077 = vmatpush1.msra.mxu0 0.0
      %4078 = vmatprep.subr.mxu0 0.0
      %4079 = vmatpush1.msra.mxu0 0.0
      %4080 = vmatprep.subr.mxu0 0.0
      %4081 = vmatpush1.msra.mxu0 0.0
      %4082 = vmatprep.subr.mxu0 0.0
      %4083 = vmatpush1.msra.mxu0 0.0
      %4084 = vmatprep.subr.mxu0 0.0
      %4085 = vmatpush1.msra.mxu0 0.0
      %4086 = vmatprep.subr.mxu0 0.0
      %4087 = vmatpush1.msra.mxu0 0.0
      %4088 = vmatprep.subr.mxu0 0.0
      %4089 = vmatpush1.msra.mxu0 0.0
      %4090 = vmatprep.subr.mxu0 0.0
      %4091 = vmatpush1.msra.mxu0 0.0
      %4092 = vmatprep.mubr.f32.mxu0 0.0
      %4093 = vmatmul.mubr.f32.gmra.mrb[0].mxu0 %v3979
      %v4094 = vpop.f32.mrb[0].mxu0
      %v4095 = vadd.f32 0.0, %v4094
      %v4096 = vpop.f32.mrb[0].mxu0
      %4097 = vmatprep.mubr.f32.mxu0 0.0
      %4098 = vmatmul.mubr.f32.gmra.mrb[0].mxu0 %v3980
      %v4099 = vpop.f32.mrb[0].mxu0
      %v4100 = vadd.f32 0.0, %v4099
      %v4101 = vpop.f32.mrb[0].mxu0
      %4102 = vmatprep.mubr.f32.mxu0 0.0
      %4103 = vmatmul.mubr.f32.gmra.mrb[0].mxu0 %v3981
      %v4104 = vpop.f32.mrb[0].mxu0
      %v4105 = vadd.f32 0.0, %v4104
      %v4106 = vpop.f32.mrb[0].mxu0
      %4107 = vmatprep.mubr.f32.mxu0 0.0
      %4108 = vmatmul.mubr.f32.gmra.mrb[0].mxu0 %v3982
      %v4109 = vpop.f32.mrb[0].mxu0
      %v4110 = vadd.f32 0.0, %v4109
      %v4111 = vpop.f32.mrb[0].mxu0
      %4112 = vmatprep.mubr.f32.mxu0 0.0
      %4113 = vmatmul.mubr.f32.gmra.mrb[0].mxu0 %v3983
      %v4114 = vpop.f32.mrb[0].mxu0
      %v4115 = vadd.f32 0.0, %v4114
      %v4116 = vpop.f32.mrb[0].mxu0
      %4117 = vmatprep.mubr.f32.mxu0 0.0
      %4118 = vmatmul.mubr.f32.gmra.mrb[0].mxu0 %v3984
      %v4119 = vpop.f32.mrb[0].mxu0
      %v4120 = vadd.f32 0.0, %v4119
      %v4121 = vpop.f32.mrb[0].mxu0
      %4122 = vmatprep.mubr.f32.mxu0 0.0
      %4123 = vmatmul.mubr.f32.gmra.mrb[0].mxu0 %v3985
      %v4124 = vpop.f32.mrb[0].mxu0
      %v4125 = vadd.f32 0.0, %v4124
      %v4126 = vpop.f32.mrb[0].mxu0
      %4127 = vmatprep.mubr.f32.mxu0 0.0
      %4128 = vmatmul.mubr.f32.gmra.mrb[0].mxu0 %v3986
      %v4129 = vpop.f32.mrb[0].mxu0
      %v4130 = vadd.f32 0.0, %v4129
      %v4131 = vpop.f32.mrb[0].mxu0
      %4132 = vmatprep.mubr.f32.mxu0 0.0
      %4133 = vmatmul.mubr.f32.gmra.mrb[0].mxu0 %v3987
      %v4134 = vpop.f32.mrb[0].mxu0
      %v4135 = vadd.f32 0.0, %v4134
      %v4136 = vpop.f32.mrb[0].mxu0
      %4137 = vmatprep.mubr.f32.mxu0 0.0
      %4138 = vmatmul.mubr.f32.gmra.mrb[0].mxu0 %v3988
      %v4139 = vpop.f32.mrb[0].mxu0
      %v4140 = vadd.f32 0.0, %v4139
      %v4141 = vpop.f32.mrb[0].mxu0
      %4142 = vmatprep.mubr.f32.mxu0 0.0
      %4143 = vmatmul.mubr.f32.gmra.mrb[0].mxu0 %v3989
      %v4144 = vpop.f32.mrb[0].mxu0
      %v4145 = vadd.f32 0.0, %v4144
      %v4146 = vpop.f32.mrb[0].mxu0
      %4147 = vmatprep.mubr.f32.mxu0 0.0
      %4148 = vmatmul.mubr.f32.gmra.mrb[0].mxu0 %v3990
      %v4149 = vpop.f32.mrb[0].mxu0
      %v4150 = vadd.f32 0.0, %v4149
      %v4151 = vpop.f32.mrb[0].mxu0
      %4152 = vmatprep.mubr.f32.mxu0 0.0
      %4153 = vmatmul.mubr.f32.gmra.mrb[0].mxu0 %v3991
      %v4154 = vpop.f32.mrb[0].mxu0
      %v4155 = vadd.f32 0.0, %v4154
      %v4156 = vpop.f32.mrb[0].mxu0
      %4157 = vmatprep.mubr.f32.mxu0 0.0
      %4158 = vmatmul.mubr.f32.gmra.mrb[0].mxu0 %v3992
      %v4159 = vpop.f32.mrb[0].mxu0
      %v4160 = vadd.f32 0.0, %v4159
      %v4161 = vpop.f32.mrb[0].mxu0
      %4162 = vmatprep.mubr.f32.mxu0 0.0
      %4163 = vmatmul.mubr.f32.gmra.mrb[0].mxu0 %v3993
      %v4164 = vpop.f32.mrb[0].mxu0
      %v4165 = vadd.f32 0.0, %v4164
      %v4166 = vpop.f32.mrb[0].mxu0
      %4167 = vmatprep.mubr.f32.mxu0 0.0
      %4168 = vmatmul.mubr.f32.gmra.mrb[0].mxu0 %v3994
      %v4169 = vpop.f32.mrb[0].mxu0
      %v4170 = vadd.f32 0.0, %v4169
      %v4171 = vpop.f32.mrb[0].mxu0
      %4172 = vmatprep.mubr.f32.mxu0 0.0
      %4173 = vmatmul.mubr.f32.gmra.mrb[0].mxu0 %v3995
      %v4174 = vpop.f32.mrb[0].mxu0
      %v4175 = vadd.f32 0.0, %v4174
      %v4176 = vpop.f32.mrb[0].mxu0
      %4177 = vmatprep.mubr.f32.mxu0 0.0
      %4178 = vmatmul.mubr.f32.gmra.mrb[0].mxu0 %v3996
      %v4179 = vpop.f32.mrb[0].mxu0
      %v4180 = vadd.f32 0.0, %v4179
      %v4181 = vpop.f32.mrb[0].mxu0
      %4182 = vmatprep.mubr.f32.mxu0 0.0
      %4183 = vmatmul.mubr.f32.gmra.mrb[0].mxu0 %v3997
      %v4184 = vpop.f32.mrb[0].mxu0
      %v4185 = vadd.f32 0.0, %v4184
      %v4186 = vpop.f32.mrb[0].mxu0
      %4187 = vmatprep.mubr.f32.mxu0 0.0
      %4188 = vmatmul.mubr.f32.gmra.mrb[0].mxu0 %v3998
      %v4189 = vpop.f32.mrb[0].mxu0
      %v4190 = vadd.f32 0.0, %v4189
      %v4191 = vpop.f32.mrb[0].mxu0
      %4192 = vmatprep.mubr.f32.mxu0 0.0
      %4193 = vmatmul.mubr.f32.gmra.mrb[0].mxu0 %v3999
      %v4194 = vpop.f32.mrb[0].mxu0
      %v4195 = vadd.f32 0.0, %v4194
      %v4196 = vpop.f32.mrb[0].mxu0
      %4197 = vmatprep.mubr.f32.mxu0 0.0
      %4198 = vmatmul.mubr.f32.gmra.mrb[0].mxu0 %v4000
      %v4199 = vpop.f32.mrb[0].mxu0
      %v4200 = vadd.f32 0.0, %v4199
      %v4201 = vpop.f32.mrb[0].mxu0
      %4202 = vmatprep.mubr.f32.mxu0 0.0
      %4203 = vmatmul.mubr.f32.gmra.mrb[0].mxu0 %v4001
      %v4204 = vpop.f32.mrb[0].mxu0
      %v4205 = vadd.f32 0.0, %v4204
      %v4206 = vpop.f32.mrb[0].mxu0
      %4207 = vmatprep.mubr.f32.mxu0 0.0
      %4208 = vmatmul.mubr.f32.gmra.mrb[0].mxu0 %v4002
      %v4209 = vpop.f32.mrb[0].mxu0
      %v4210 = vadd.f32 0.0, %v4209
      %v4211 = vpop.f32.mrb[0].mxu0
      %4212 = vmatprep.mubr.f32.mxu0 0.0
      %4213 = vmatmul.mubr.f32.gmra.mrb[0].mxu0 %v4003
      %v4214 = vpop.f32.mrb[0].mxu0
      %v4215 = vadd.f32 0.0, %v4214
      %v4216 = vpop.f32.mrb[0].mxu0
      %4217 = vmatprep.mubr.f32.mxu0 0.0
      %4218 = vmatmul.mubr.f32.gmra.mrb[0].mxu0 %v4004
      %v4219 = vpop.f32.mrb[0].mxu0
      %v4220 = vadd.f32 0.0, %v4219
      %v4221 = vpop.f32.mrb[0].mxu0
      %4222 = vmatprep.mubr.f32.mxu0 0.0
      %4223 = vmatmul.mubr.f32.gmra.mrb[0].mxu0 %v4005
      %v4224 = vpop.f32.mrb[0].mxu0
      %v4225 = vadd.f32 0.0, %v4224
      %v4226 = vpop.f32.mrb[0].mxu0
      %4227 = vmatprep.mubr.f32.mxu0 0.0
      %4228 = vmatmul.mubr.f32.gmra.mrb[0].mxu0 %v4006
      %v4229 = vpop.f32.mrb[0].mxu0
      %v4230 = vadd.f32 0.0, %v4229
      %v4231 = vpop.f32.mrb[0].mxu0
      %4232 = vmatprep.mubr.f32.mxu0 0.0
      %4233 = vmatmul.mubr.f32.gmra.mrb[0].mxu0 %v4007
      %v4234 = vpop.f32.mrb[0].mxu0
      %v4235 = vadd.f32 0.0, %v4234
      %v4236 = vpop.f32.mrb[0].mxu0
      %4237 = vmatprep.mubr.f32.mxu0 0.0
      %4238 = vmatmul.mubr.f32.gmra.mrb[0].mxu0 %v4008
      %v4239 = vpop.f32.mrb[0].mxu0
      %v4240 = vadd.f32 0.0, %v4239
      %v4241 = vpop.f32.mrb[0].mxu0
      %4242 = vmatprep.mubr.f32.mxu0 0.0
      %4243 = vmatmul.mubr.f32.gmra.mrb[0].mxu0 %v4009
      %v4244 = vpop.f32.mrb[0].mxu0
      %v4245 = vadd.f32 0.0, %v4244
      %v4246 = vpop.f32.mrb[0].mxu0
      %4247 = vmatprep.mubr.f32.mxu0 0.0
      %4248 = vmatmul.mubr.f32.gmra.mrb[0].mxu0 %v4010
      %v4249 = vpop.f32.mrb[0].mxu0
      %v4250 = vadd.f32 0.0, %v4249
      %v4251 = vpop.f32.mrb[0].mxu0
      %4252 = vdwg.mxu0
      %v4253 = vadd.f32 %v3821, %v4095
      %v4254 = vadd.f32 %v3826, %v4100
      %v4255 = vadd.f32 %v3831, %v4105
      %v4256 = vadd.f32 %v3836, %v4110
      %v4257 = vadd.f32 %v3841, %v4115
      %v4258 = vadd.f32 %v3846, %v4120
      %v4259 = vadd.f32 %v3851, %v4125
      %v4260 = vadd.f32 %v3856, %v4130
      %v4261 = vadd.f32 %v3861, %v4135
      %v4262 = vadd.f32 %v3866, %v4140
      %v4263 = vadd.f32 %v3871, %v4145
      %v4264 = vadd.f32 %v3876, %v4150
      %v4265 = vadd.f32 %v3881, %v4155
      %v4266 = vadd.f32 %v3886, %v4160
      %v4267 = vadd.f32 %v3891, %v4165
      %v4268 = vadd.f32 %v3896, %v4170
      %v4269 = vadd.f32 %v3901, %v4175
      %v4270 = vadd.f32 %v3906, %v4180
      %v4271 = vadd.f32 %v3911, %v4185
      %v4272 = vadd.f32 %v3916, %v4190
      %v4273 = vadd.f32 %v3921, %v4195
      %v4274 = vadd.f32 %v3926, %v4200
      %v4275 = vadd.f32 %v3931, %v4205
      %v4276 = vadd.f32 %v3936, %v4210
      %v4277 = vadd.f32 %v3941, %v4215
      %v4278 = vadd.f32 %v3946, %v4220
      %v4279 = vadd.f32 %v3951, %v4225
      %v4280 = vadd.f32 %v3956, %v4230
      %v4281 = vadd.f32 %v3961, %v4235
      %v4282 = vadd.f32 %v3966, %v4240
      %v4283 = vadd.f32 %v3971, %v4245
      %v4284 = vadd.f32 %v3976, %v4250
      %v4285 = vld [vmem:[%s412] sm:$0xff]
      %v4286 = vld [vmem:[%s412 + $0x8] sm:$0xff]
      %v4287 = vld [vmem:[%s412 + $0x18] sm:$0xff]
      %v4288 = vld [vmem:[%s412 + $0x20] sm:$0xff]
      %v4289 = vld [vmem:[%s412 + $0x30] sm:$0xff]
      %v4290 = vld [vmem:[%s412 + $0x38] sm:$0xff]
      %v4291 = vld [vmem:[%s412 + $0x48] sm:$0xff]
      %v4292 = vld [vmem:[%s412 + $0x50] sm:$0xff]
      %v4293 = vld [vmem:[%s412 + $0x60] sm:$0xff]
      %v4294 = vld [vmem:[%s412 + $0x68] sm:$0xff]
      %v4295 = vld [vmem:[%s412 + $0x78] sm:$0xff]
      %v4296 = vld [vmem:[%s412 + $0x80] sm:$0xff]
      %v4297 = vld [vmem:[%s412 + $0x90] sm:$0xff]
      %v4298 = vld [vmem:[%s412 + $0x98] sm:$0xff]
      %v4299 = vld [vmem:[%s412 + $0xa8] sm:$0xff]
      %v4300 = vld [vmem:[%s412 + $0xb0] sm:$0xff]
      %v4301 = vld [vmem:[%s412 + $0xc0] sm:$0xff]
      %v4302 = vld [vmem:[%s412 + $0xc8] sm:$0xff]
      %v4303 = vld [vmem:[%s412 + $0xd8] sm:$0xff]
      %v4304 = vld [vmem:[%s412 + $0xe0] sm:$0xff]
      %v4305 = vld [vmem:[%s412 + $0xf0] sm:$0xff]
      %v4306 = vld [vmem:[%s412 + $0xf8] sm:$0xff]
      %v4307 = vld [vmem:[%s412 + $0x108] sm:$0xff]
      %v4308 = vld [vmem:[%s412 + $0x110] sm:$0xff]
      %v4309 = vld [vmem:[%s412 + $0x120] sm:$0xff]
      %v4310 = vld [vmem:[%s412 + $0x128] sm:$0xff]
      %v4311 = vld [vmem:[%s412 + $0x138] sm:$0xff]
      %v4312 = vld [vmem:[%s412 + $0x140] sm:$0xff]
      %v4313 = vld [vmem:[%s412 + $0x150] sm:$0xff]
      %v4314 = vld [vmem:[%s412 + $0x158] sm:$0xff]
      %v4315 = vld [vmem:[%s412 + $0x168] sm:$0xff]
      %v4316 = vld [vmem:[%s412 + $0x170] sm:$0xff]
      %s4317 = scalar_lea.vmem %s4, 384
      %v4318 = vld [vmem:[%s4317] sm:$0xff]
      %v4319 = vld [vmem:[%s4317 + $0x8] sm:$0xff]
      %v4320 = vld [vmem:[%s4317 + $0x10] sm:$0xff]
      %v4321 = vld [vmem:[%s4317 + $0x18] sm:$0xff]
      %v4322 = vld [vmem:[%s4317 + $0x20] sm:$0xff]
      %v4323 = vld [vmem:[%s4317 + $0x28] sm:$0xff]
      %v4324 = vld [vmem:[%s4317 + $0x30] sm:$0xff]
      %v4325 = vld [vmem:[%s4317 + $0x38] sm:$0xff]
      %v4326 = vld [vmem:[%s4317 + $0x40] sm:$0xff]
      %v4327 = vld [vmem:[%s4317 + $0x48] sm:$0xff]
      %v4328 = vld [vmem:[%s4317 + $0x50] sm:$0xff]
      %v4329 = vld [vmem:[%s4317 + $0x58] sm:$0xff]
      %v4330 = vld [vmem:[%s4317 + $0x60] sm:$0xff]
      %v4331 = vld [vmem:[%s4317 + $0x68] sm:$0xff]
      %v4332 = vld [vmem:[%s4317 + $0x70] sm:$0xff]
      %v4333 = vld [vmem:[%s4317 + $0x78] sm:$0xff]
      %4334 = vmatprep.subr.mxu0 0.0
      %4335 = vmatpush1.msra.mxu0 %v4318
      %4336 = vmatprep.subr.mxu0 0.0
      %4337 = vmatpush1.msra.mxu0 %v4319
      %4338 = vmatprep.subr.mxu0 0.0
      %4339 = vmatpush1.msra.mxu0 %v4320
      %4340 = vmatprep.subr.mxu0 0.0
      %4341 = vmatpush1.msra.mxu0 %v4321
      %4342 = vmatprep.subr.mxu0 0.0
      %4343 = vmatpush1.msra.mxu0 %v4322
      %4344 = vmatprep.subr.mxu0 0.0
      %4345 = vmatpush1.msra.mxu0 %v4323
      %4346 = vmatprep.subr.mxu0 0.0
      %4347 = vmatpush1.msra.mxu0 %v4324
      %4348 = vmatprep.subr.mxu0 0.0
      %4349 = vmatpush1.msra.mxu0 %v4325
      %4350 = vmatprep.subr.mxu0 0.0
      %4351 = vmatpush1.msra.mxu0 %v4326
      %4352 = vmatprep.subr.mxu0 0.0
      %4353 = vmatpush1.msra.mxu0 %v4327
      %4354 = vmatprep.subr.mxu0 0.0
      %4355 = vmatpush1.msra.mxu0 %v4328
      %4356 = vmatprep.subr.mxu0 0.0
      %4357 = vmatpush1.msra.mxu0 %v4329
      %4358 = vmatprep.subr.mxu0 0.0
      %4359 = vmatpush1.msra.mxu0 %v4330
      %4360 = vmatprep.subr.mxu0 0.0
      %4361 = vmatpush1.msra.mxu0 %v4331
      %4362 = vmatprep.subr.mxu0 0.0
      %4363 = vmatpush1.msra.mxu0 %v4332
      %4364 = vmatprep.subr.mxu0 0.0
      %4365 = vmatpush1.msra.mxu0 %v4333
      %4366 = vmatprep.subr.mxu0 0.0
      %4367 = vmatpush1.msra.mxu0 0.0
      %4368 = vmatprep.subr.mxu0 0.0
      %4369 = vmatpush1.msra.mxu0 0.0
      %4370 = vmatprep.subr.mxu0 0.0
      %4371 = vmatpush1.msra.mxu0 0.0
      %4372 = vmatprep.subr.mxu0 0.0
      %4373 = vmatpush1.msra.mxu0 0.0
      %4374 = vmatprep.subr.mxu0 0.0
      %4375 = vmatpush1.msra.mxu0 0.0
      %4376 = vmatprep.subr.mxu0 0.0
      %4377 = vmatpush1.msra.mxu0 0.0
      %4378 = vmatprep.subr.mxu0 0.0
      %4379 = vmatpush1.msra.mxu0 0.0
      %4380 = vmatprep.subr.mxu0 0.0
      %4381 = vmatpush1.msra.mxu0 0.0
      %4382 = vmatprep.subr.mxu0 0.0
      %4383 = vmatpush1.msra.mxu0 0.0
      %4384 = vmatprep.subr.mxu0 0.0
      %4385 = vmatpush1.msra.mxu0 0.0
      %4386 = vmatprep.subr.mxu0 0.0
      %4387 = vmatpush1.msra.mxu0 0.0
      %4388 = vmatprep.subr.mxu0 0.0
      %4389 = vmatpush1.msra.mxu0 0.0
      %4390 = vmatprep.subr.mxu0 0.0
      %4391 = vmatpush1.msra.mxu0 0.0
      %4392 = vmatprep.subr.mxu0 0.0
      %4393 = vmatpush1.msra.mxu0 0.0
      %4394 = vmatprep.subr.mxu0 0.0
      %4395 = vmatpush1.msra.mxu0 0.0
      %4396 = vmatprep.subr.mxu0 0.0
      %4397 = vmatpush1.msra.mxu0 0.0
      %4398 = vmatprep.mubr.f32.mxu0 0.0
      %4399 = vmatmul.mubr.f32.gmra.mrb[0].mxu0 %v4285
      %v4400 = vpop.f32.mrb[0].mxu0
      %v4401 = vadd.f32 0.0, %v4400
      %v4402 = vpop.f32.mrb[0].mxu0
      %4403 = vmatprep.mubr.f32.mxu0 0.0
      %4404 = vmatmul.mubr.f32.gmra.mrb[0].mxu0 %v4286
      %v4405 = vpop.f32.mrb[0].mxu0
      %v4406 = vadd.f32 0.0, %v4405
      %v4407 = vpop.f32.mrb[0].mxu0
      %4408 = vmatprep.mubr.f32.mxu0 0.0
      %4409 = vmatmul.mubr.f32.gmra.mrb[0].mxu0 %v4287
      %v4410 = vpop.f32.mrb[0].mxu0
      %v4411 = vadd.f32 0.0, %v4410
      %v4412 = vpop.f32.mrb[0].mxu0
      %4413 = vmatprep.mubr.f32.mxu0 0.0
      %4414 = vmatmul.mubr.f32.gmra.mrb[0].mxu0 %v4288
      %v4415 = vpop.f32.mrb[0].mxu0
      %v4416 = vadd.f32 0.0, %v4415
      %v4417 = vpop.f32.mrb[0].mxu0
      %4418 = vmatprep.mubr.f32.mxu0 0.0
      %4419 = vmatmul.mubr.f32.gmra.mrb[0].mxu0 %v4289
      %v4420 = vpop.f32.mrb[0].mxu0
      %v4421 = vadd.f32 0.0, %v4420
      %v4422 = vpop.f32.mrb[0].mxu0
      %4423 = vmatprep.mubr.f32.mxu0 0.0
      %4424 = vmatmul.mubr.f32.gmra.mrb[0].mxu0 %v4290
      %v4425 = vpop.f32.mrb[0].mxu0
      %v4426 = vadd.f32 0.0, %v4425
      %v4427 = vpop.f32.mrb[0].mxu0
      %4428 = vmatprep.mubr.f32.mxu0 0.0
      %4429 = vmatmul.mubr.f32.gmra.mrb[0].mxu0 %v4291
      %v4430 = vpop.f32.mrb[0].mxu0
      %v4431 = vadd.f32 0.0, %v4430
      %v4432 = vpop.f32.mrb[0].mxu0
      %4433 = vmatprep.mubr.f32.mxu0 0.0
      %4434 = vmatmul.mubr.f32.gmra.mrb[0].mxu0 %v4292
      %v4435 = vpop.f32.mrb[0].mxu0
      %v4436 = vadd.f32 0.0, %v4435
      %v4437 = vpop.f32.mrb[0].mxu0
      %4438 = vmatprep.mubr.f32.mxu0 0.0
      %4439 = vmatmul.mubr.f32.gmra.mrb[0].mxu0 %v4293
      %v4440 = vpop.f32.mrb[0].mxu0
      %v4441 = vadd.f32 0.0, %v4440
      %v4442 = vpop.f32.mrb[0].mxu0
      %4443 = vmatprep.mubr.f32.mxu0 0.0
      %4444 = vmatmul.mubr.f32.gmra.mrb[0].mxu0 %v4294
      %v4445 = vpop.f32.mrb[0].mxu0
      %v4446 = vadd.f32 0.0, %v4445
      %v4447 = vpop.f32.mrb[0].mxu0
      %4448 = vmatprep.mubr.f32.mxu0 0.0
      %4449 = vmatmul.mubr.f32.gmra.mrb[0].mxu0 %v4295
      %v4450 = vpop.f32.mrb[0].mxu0
      %v4451 = vadd.f32 0.0, %v4450
      %v4452 = vpop.f32.mrb[0].mxu0
      %4453 = vmatprep.mubr.f32.mxu0 0.0
      %4454 = vmatmul.mubr.f32.gmra.mrb[0].mxu0 %v4296
      %v4455 = vpop.f32.mrb[0].mxu0
      %v4456 = vadd.f32 0.0, %v4455
      %v4457 = vpop.f32.mrb[0].mxu0
      %4458 = vmatprep.mubr.f32.mxu0 0.0
      %4459 = vmatmul.mubr.f32.gmra.mrb[0].mxu0 %v4297
      %v4460 = vpop.f32.mrb[0].mxu0
      %v4461 = vadd.f32 0.0, %v4460
      %v4462 = vpop.f32.mrb[0].mxu0
      %4463 = vmatprep.mubr.f32.mxu0 0.0
      %4464 = vmatmul.mubr.f32.gmra.mrb[0].mxu0 %v4298
      %v4465 = vpop.f32.mrb[0].mxu0
      %v4466 = vadd.f32 0.0, %v4465
      %v4467 = vpop.f32.mrb[0].mxu0
      %4468 = vmatprep.mubr.f32.mxu0 0.0
      %4469 = vmatmul.mubr.f32.gmra.mrb[0].mxu0 %v4299
      %v4470 = vpop.f32.mrb[0].mxu0
      %v4471 = vadd.f32 0.0, %v4470
      %v4472 = vpop.f32.mrb[0].mxu0
      %4473 = vmatprep.mubr.f32.mxu0 0.0
      %4474 = vmatmul.mubr.f32.gmra.mrb[0].mxu0 %v4300
      %v4475 = vpop.f32.mrb[0].mxu0
      %v4476 = vadd.f32 0.0, %v4475
      %v4477 = vpop.f32.mrb[0].mxu0
      %4478 = vmatprep.mubr.f32.mxu0 0.0
      %4479 = vmatmul.mubr.f32.gmra.mrb[0].mxu0 %v4301
      %v4480 = vpop.f32.mrb[0].mxu0
      %v4481 = vadd.f32 0.0, %v4480
      %v4482 = vpop.f32.mrb[0].mxu0
      %4483 = vmatprep.mubr.f32.mxu0 0.0
      %4484 = vmatmul.mubr.f32.gmra.mrb[0].mxu0 %v4302
      %v4485 = vpop.f32.mrb[0].mxu0
      %v4486 = vadd.f32 0.0, %v4485
      %v4487 = vpop.f32.mrb[0].mxu0
      %4488 = vmatprep.mubr.f32.mxu0 0.0
      %4489 = vmatmul.mubr.f32.gmra.mrb[0].mxu0 %v4303
      %v4490 = vpop.f32.mrb[0].mxu0
      %v4491 = vadd.f32 0.0, %v4490
      %v4492 = vpop.f32.mrb[0].mxu0
      %4493 = vmatprep.mubr.f32.mxu0 0.0
      %4494 = vmatmul.mubr.f32.gmra.mrb[0].mxu0 %v4304
      %v4495 = vpop.f32.mrb[0].mxu0
      %v4496 = vadd.f32 0.0, %v4495
      %v4497 = vpop.f32.mrb[0].mxu0
      %4498 = vmatprep.mubr.f32.mxu0 0.0
      %4499 = vmatmul.mubr.f32.gmra.mrb[0].mxu0 %v4305
      %v4500 = vpop.f32.mrb[0].mxu0
      %v4501 = vadd.f32 0.0, %v4500
      %v4502 = vpop.f32.mrb[0].mxu0
      %4503 = vmatprep.mubr.f32.mxu0 0.0
      %4504 = vmatmul.mubr.f32.gmra.mrb[0].mxu0 %v4306
      %v4505 = vpop.f32.mrb[0].mxu0
      %v4506 = vadd.f32 0.0, %v4505
      %v4507 = vpop.f32.mrb[0].mxu0
      %4508 = vmatprep.mubr.f32.mxu0 0.0
      %4509 = vmatmul.mubr.f32.gmra.mrb[0].mxu0 %v4307
      %v4510 = vpop.f32.mrb[0].mxu0
      %v4511 = vadd.f32 0.0, %v4510
      %v4512 = vpop.f32.mrb[0].mxu0
      %4513 = vmatprep.mubr.f32.mxu0 0.0
      %4514 = vmatmul.mubr.f32.gmra.mrb[0].mxu0 %v4308
      %v4515 = vpop.f32.mrb[0].mxu0
      %v4516 = vadd.f32 0.0, %v4515
      %v4517 = vpop.f32.mrb[0].mxu0
      %4518 = vmatprep.mubr.f32.mxu0 0.0
      %4519 = vmatmul.mubr.f32.gmra.mrb[0].mxu0 %v4309
      %v4520 = vpop.f32.mrb[0].mxu0
      %v4521 = vadd.f32 0.0, %v4520
      %v4522 = vpop.f32.mrb[0].mxu0
      %4523 = vmatprep.mubr.f32.mxu0 0.0
      %4524 = vmatmul.mubr.f32.gmra.mrb[0].mxu0 %v4310
      %v4525 = vpop.f32.mrb[0].mxu0
      %v4526 = vadd.f32 0.0, %v4525
      %v4527 = vpop.f32.mrb[0].mxu0
      %4528 = vmatprep.mubr.f32.mxu0 0.0
      %4529 = vmatmul.mubr.f32.gmra.mrb[0].mxu0 %v4311
      %v4530 = vpop.f32.mrb[0].mxu0
      %v4531 = vadd.f32 0.0, %v4530
      %v4532 = vpop.f32.mrb[0].mxu0
      %4533 = vmatprep.mubr.f32.mxu0 0.0
      %4534 = vmatmul.mubr.f32.gmra.mrb[0].mxu0 %v4312
      %v4535 = vpop.f32.mrb[0].mxu0
      %v4536 = vadd.f32 0.0, %v4535
      %v4537 = vpop.f32.mrb[0].mxu0
      %4538 = vmatprep.mubr.f32.mxu0 0.0
      %4539 = vmatmul.mubr.f32.gmra.mrb[0].mxu0 %v4313
      %v4540 = vpop.f32.mrb[0].mxu0
      %v4541 = vadd.f32 0.0, %v4540
      %v4542 = vpop.f32.mrb[0].mxu0
      %4543 = vmatprep.mubr.f32.mxu0 0.0
      %4544 = vmatmul.mubr.f32.gmra.mrb[0].mxu0 %v4314
      %v4545 = vpop.f32.mrb[0].mxu0
      %v4546 = vadd.f32 0.0, %v4545
      %v4547 = vpop.f32.mrb[0].mxu0
      %4548 = vmatprep.mubr.f32.mxu0 0.0
      %4549 = vmatmul.mubr.f32.gmra.mrb[0].mxu0 %v4315
      %v4550 = vpop.f32.mrb[0].mxu0
      %v4551 = vadd.f32 0.0, %v4550
      %v4552 = vpop.f32.mrb[0].mxu0
      %4553 = vmatprep.mubr.f32.mxu0 0.0
      %4554 = vmatmul.mubr.f32.gmra.mrb[0].mxu0 %v4316
      %v4555 = vpop.f32.mrb[0].mxu0
      %v4556 = vadd.f32 0.0, %v4555
      %v4557 = vpop.f32.mrb[0].mxu0
      %4558 = vdwg.mxu0
      %v4559 = vadd.f32 %v4253, %v4401
      %v4560 = vadd.f32 %v4254, %v4406
      %v4561 = vadd.f32 %v4255, %v4411
      %v4562 = vadd.f32 %v4256, %v4416
      %v4563 = vadd.f32 %v4257, %v4421
      %v4564 = vadd.f32 %v4258, %v4426
      %v4565 = vadd.f32 %v4259, %v4431
      %v4566 = vadd.f32 %v4260, %v4436
      %v4567 = vadd.f32 %v4261, %v4441
      %v4568 = vadd.f32 %v4262, %v4446
      %v4569 = vadd.f32 %v4263, %v4451
      %v4570 = vadd.f32 %v4264, %v4456
      %v4571 = vadd.f32 %v4265, %v4461
      %v4572 = vadd.f32 %v4266, %v4466
      %v4573 = vadd.f32 %v4267, %v4471
      %v4574 = vadd.f32 %v4268, %v4476
      %v4575 = vadd.f32 %v4269, %v4481
      %v4576 = vadd.f32 %v4270, %v4486
      %v4577 = vadd.f32 %v4271, %v4491
      %v4578 = vadd.f32 %v4272, %v4496
      %v4579 = vadd.f32 %v4273, %v4501
      %v4580 = vadd.f32 %v4274, %v4506
      %v4581 = vadd.f32 %v4275, %v4511
      %v4582 = vadd.f32 %v4276, %v4516
      %v4583 = vadd.f32 %v4277, %v4521
      %v4584 = vadd.f32 %v4278, %v4526
      %v4585 = vadd.f32 %v4279, %v4531
      %v4586 = vadd.f32 %v4280, %v4536
      %v4587 = vadd.f32 %v4281, %v4541
      %v4588 = vadd.f32 %v4282, %v4546
      %v4589 = vadd.f32 %v4283, %v4551
      %v4590 = vadd.f32 %v4284, %v4556
      %v4591 = vld [vmem:[%s412 + $0x1] sm:$0xff]
      %v4592 = vld [vmem:[%s412 + $0x9] sm:$0xff]
      %v4593 = vld [vmem:[%s412 + $0x19] sm:$0xff]
      %v4594 = vld [vmem:[%s412 + $0x21] sm:$0xff]
      %v4595 = vld [vmem:[%s412 + $0x31] sm:$0xff]
      %v4596 = vld [vmem:[%s412 + $0x39] sm:$0xff]
      %v4597 = vld [vmem:[%s412 + $0x49] sm:$0xff]
      %v4598 = vld [vmem:[%s412 + $0x51] sm:$0xff]
      %v4599 = vld [vmem:[%s412 + $0x61] sm:$0xff]
      %v4600 = vld [vmem:[%s412 + $0x69] sm:$0xff]
      %v4601 = vld [vmem:[%s412 + $0x79] sm:$0xff]
      %v4602 = vld [vmem:[%s412 + $0x81] sm:$0xff]
      %v4603 = vld [vmem:[%s412 + $0x91] sm:$0xff]
      %v4604 = vld [vmem:[%s412 + $0x99] sm:$0xff]
      %v4605 = vld [vmem:[%s412 + $0xa9] sm:$0xff]
      %v4606 = vld [vmem:[%s412 + $0xb1] sm:$0xff]
      %v4607 = vld [vmem:[%s412 + $0xc1] sm:$0xff]
      %v4608 = vld [vmem:[%s412 + $0xc9] sm:$0xff]
      %v4609 = vld [vmem:[%s412 + $0xd9] sm:$0xff]
      %v4610 = vld [vmem:[%s412 + $0xe1] sm:$0xff]
      %v4611 = vld [vmem:[%s412 + $0xf1] sm:$0xff]
      %v4612 = vld [vmem:[%s412 + $0xf9] sm:$0xff]
      %v4613 = vld [vmem:[%s412 + $0x109] sm:$0xff]
      %v4614 = vld [vmem:[%s412 + $0x111] sm:$0xff]
      %v4615 = vld [vmem:[%s412 + $0x121] sm:$0xff]
      %v4616 = vld [vmem:[%s412 + $0x129] sm:$0xff]
      %v4617 = vld [vmem:[%s412 + $0x139] sm:$0xff]
      %v4618 = vld [vmem:[%s412 + $0x141] sm:$0xff]
      %v4619 = vld [vmem:[%s412 + $0x151] sm:$0xff]
      %v4620 = vld [vmem:[%s412 + $0x159] sm:$0xff]
      %v4621 = vld [vmem:[%s412 + $0x169] sm:$0xff]
      %v4622 = vld [vmem:[%s412 + $0x171] sm:$0xff]
      %s4623 = scalar_lea.vmem %s4, 512
      %v4624 = vld [vmem:[%s4623] sm:$0xff]
      %v4625 = vld [vmem:[%s4623 + $0x8] sm:$0xff]
      %v4626 = vld [vmem:[%s4623 + $0x10] sm:$0xff]
      %v4627 = vld [vmem:[%s4623 + $0x18] sm:$0xff]
      %v4628 = vld [vmem:[%s4623 + $0x20] sm:$0xff]
      %v4629 = vld [vmem:[%s4623 + $0x28] sm:$0xff]
      %v4630 = vld [vmem:[%s4623 + $0x30] sm:$0xff]
      %v4631 = vld [vmem:[%s4623 + $0x38] sm:$0xff]
      %v4632 = vld [vmem:[%s4623 + $0x40] sm:$0xff]
      %v4633 = vld [vmem:[%s4623 + $0x48] sm:$0xff]
      %v4634 = vld [vmem:[%s4623 + $0x50] sm:$0xff]
      %v4635 = vld [vmem:[%s4623 + $0x58] sm:$0xff]
      %v4636 = vld [vmem:[%s4623 + $0x60] sm:$0xff]
      %v4637 = vld [vmem:[%s4623 + $0x68] sm:$0xff]
      %v4638 = vld [vmem:[%s4623 + $0x70] sm:$0xff]
      %v4639 = vld [vmem:[%s4623 + $0x78] sm:$0xff]
      %4640 = vmatprep.subr.mxu0 0.0
      %4641 = vmatpush1.msra.mxu0 %v4624
      %4642 = vmatprep.subr.mxu0 0.0
      %4643 = vmatpush1.msra.mxu0 %v4625
      %4644 = vmatprep.subr.mxu0 0.0
      %4645 = vmatpush1.msra.mxu0 %v4626
      %4646 = vmatprep.subr.mxu0 0.0
      %4647 = vmatpush1.msra.mxu0 %v4627
      %4648 = vmatprep.subr.mxu0 0.0
      %4649 = vmatpush1.msra.mxu0 %v4628
      %4650 = vmatprep.subr.mxu0 0.0
      %4651 = vmatpush1.msra.mxu0 %v4629
      %4652 = vmatprep.subr.mxu0 0.0
      %4653 = vmatpush1.msra.mxu0 %v4630
      %4654 = vmatprep.subr.mxu0 0.0
      %4655 = vmatpush1.msra.mxu0 %v4631
      %4656 = vmatprep.subr.mxu0 0.0
      %4657 = vmatpush1.msra.mxu0 %v4632
      %4658 = vmatprep.subr.mxu0 0.0
      %4659 = vmatpush1.msra.mxu0 %v4633
      %4660 = vmatprep.subr.mxu0 0.0
      %4661 = vmatpush1.msra.mxu0 %v4634
      %4662 = vmatprep.subr.mxu0 0.0
      %4663 = vmatpush1.msra.mxu0 %v4635
      %4664 = vmatprep.subr.mxu0 0.0
      %4665 = vmatpush1.msra.mxu0 %v4636
      %4666 = vmatprep.subr.mxu0 0.0
      %4667 = vmatpush1.msra.mxu0 %v4637
      %4668 = vmatprep.subr.mxu0 0.0
      %4669 = vmatpush1.msra.mxu0 %v4638
      %4670 = vmatprep.subr.mxu0 0.0
      %4671 = vmatpush1.msra.mxu0 %v4639
      %4672 = vmatprep.subr.mxu0 0.0
      %4673 = vmatpush1.msra.mxu0 0.0
      %4674 = vmatprep.subr.mxu0 0.0
      %4675 = vmatpush1.msra.mxu0 0.0
      %4676 = vmatprep.subr.mxu0 0.0
      %4677 = vmatpush1.msra.mxu0 0.0
      %4678 = vmatprep.subr.mxu0 0.0
      %4679 = vmatpush1.msra.mxu0 0.0
      %4680 = vmatprep.subr.mxu0 0.0
      %4681 = vmatpush1.msra.mxu0 0.0
      %4682 = vmatprep.subr.mxu0 0.0
      %4683 = vmatpush1.msra.mxu0 0.0
      %4684 = vmatprep.subr.mxu0 0.0
      %4685 = vmatpush1.msra.mxu0 0.0
      %4686 = vmatprep.subr.mxu0 0.0
      %4687 = vmatpush1.msra.mxu0 0.0
      %4688 = vmatprep.subr.mxu0 0.0
      %4689 = vmatpush1.msra.mxu0 0.0
      %4690 = vmatprep.subr.mxu0 0.0
      %4691 = vmatpush1.msra.mxu0 0.0
      %4692 = vmatprep.subr.mxu0 0.0
      %4693 = vmatpush1.msra.mxu0 0.0
      %4694 = vmatprep.subr.mxu0 0.0
      %4695 = vmatpush1.msra.mxu0 0.0
      %4696 = vmatprep.subr.mxu0 0.0
      %4697 = vmatpush1.msra.mxu0 0.0
      %4698 = vmatprep.subr.mxu0 0.0
      %4699 = vmatpush1.msra.mxu0 0.0
      %4700 = vmatprep.subr.mxu0 0.0
      %4701 = vmatpush1.msra.mxu0 0.0
      %4702 = vmatprep.subr.mxu0 0.0
      %4703 = vmatpush1.msra.mxu0 0.0
      %4704 = vmatprep.mubr.f32.mxu0 0.0
      %4705 = vmatmul.mubr.f32.gmra.mrb[0].mxu0 %v4591
      %v4706 = vpop.f32.mrb[0].mxu0
      %v4707 = vadd.f32 0.0, %v4706
      %v4708 = vpop.f32.mrb[0].mxu0
      %4709 = vmatprep.mubr.f32.mxu0 0.0
      %4710 = vmatmul.mubr.f32.gmra.mrb[0].mxu0 %v4592
      %v4711 = vpop.f32.mrb[0].mxu0
      %v4712 = vadd.f32 0.0, %v4711
      %v4713 = vpop.f32.mrb[0].mxu0
      %4714 = vmatprep.mubr.f32.mxu0 0.0
      %4715 = vmatmul.mubr.f32.gmra.mrb[0].mxu0 %v4593
      %v4716 = vpop.f32.mrb[0].mxu0
      %v4717 = vadd.f32 0.0, %v4716
      %v4718 = vpop.f32.mrb[0].mxu0
      %4719 = vmatprep.mubr.f32.mxu0 0.0
      %4720 = vmatmul.mubr.f32.gmra.mrb[0].mxu0 %v4594
      %v4721 = vpop.f32.mrb[0].mxu0
      %v4722 = vadd.f32 0.0, %v4721
      %v4723 = vpop.f32.mrb[0].mxu0
      %4724 = vmatprep.mubr.f32.mxu0 0.0
      %4725 = vmatmul.mubr.f32.gmra.mrb[0].mxu0 %v4595
      %v4726 = vpop.f32.mrb[0].mxu0
      %v4727 = vadd.f32 0.0, %v4726
      %v4728 = vpop.f32.mrb[0].mxu0
      %4729 = vmatprep.mubr.f32.mxu0 0.0
      %4730 = vmatmul.mubr.f32.gmra.mrb[0].mxu0 %v4596
      %v4731 = vpop.f32.mrb[0].mxu0
      %v4732 = vadd.f32 0.0, %v4731
      %v4733 = vpop.f32.mrb[0].mxu0
      %4734 = vmatprep.mubr.f32.mxu0 0.0
      %4735 = vmatmul.mubr.f32.gmra.mrb[0].mxu0 %v4597
      %v4736 = vpop.f32.mrb[0].mxu0
      %v4737 = vadd.f32 0.0, %v4736
      %v4738 = vpop.f32.mrb[0].mxu0
      %4739 = vmatprep.mubr.f32.mxu0 0.0
      %4740 = vmatmul.mubr.f32.gmra.mrb[0].mxu0 %v4598
      %v4741 = vpop.f32.mrb[0].mxu0
      %v4742 = vadd.f32 0.0, %v4741
      %v4743 = vpop.f32.mrb[0].mxu0
      %4744 = vmatprep.mubr.f32.mxu0 0.0
      %4745 = vmatmul.mubr.f32.gmra.mrb[0].mxu0 %v4599
      %v4746 = vpop.f32.mrb[0].mxu0
      %v4747 = vadd.f32 0.0, %v4746
      %v4748 = vpop.f32.mrb[0].mxu0
      %4749 = vmatprep.mubr.f32.mxu0 0.0
      %4750 = vmatmul.mubr.f32.gmra.mrb[0].mxu0 %v4600
      %v4751 = vpop.f32.mrb[0].mxu0
      %v4752 = vadd.f32 0.0, %v4751
      %v4753 = vpop.f32.mrb[0].mxu0
      %4754 = vmatprep.mubr.f32.mxu0 0.0
      %4755 = vmatmul.mubr.f32.gmra.mrb[0].mxu0 %v4601
      %v4756 = vpop.f32.mrb[0].mxu0
      %v4757 = vadd.f32 0.0, %v4756
      %v4758 = vpop.f32.mrb[0].mxu0
      %4759 = vmatprep.mubr.f32.mxu0 0.0
      %4760 = vmatmul.mubr.f32.gmra.mrb[0].mxu0 %v4602
      %v4761 = vpop.f32.mrb[0].mxu0
      %v4762 = vadd.f32 0.0, %v4761
      %v4763 = vpop.f32.mrb[0].mxu0
      %4764 = vmatprep.mubr.f32.mxu0 0.0
      %4765 = vmatmul.mubr.f32.gmra.mrb[0].mxu0 %v4603
      %v4766 = vpop.f32.mrb[0].mxu0
      %v4767 = vadd.f32 0.0, %v4766
      %v4768 = vpop.f32.mrb[0].mxu0
      %4769 = vmatprep.mubr.f32.mxu0 0.0
      %4770 = vmatmul.mubr.f32.gmra.mrb[0].mxu0 %v4604
      %v4771 = vpop.f32.mrb[0].mxu0
      %v4772 = vadd.f32 0.0, %v4771
      %v4773 = vpop.f32.mrb[0].mxu0
      %4774 = vmatprep.mubr.f32.mxu0 0.0
      %4775 = vmatmul.mubr.f32.gmra.mrb[0].mxu0 %v4605
      %v4776 = vpop.f32.mrb[0].mxu0
      %v4777 = vadd.f32 0.0, %v4776
      %v4778 = vpop.f32.mrb[0].mxu0
      %4779 = vmatprep.mubr.f32.mxu0 0.0
      %4780 = vmatmul.mubr.f32.gmra.mrb[0].mxu0 %v4606
      %v4781 = vpop.f32.mrb[0].mxu0
      %v4782 = vadd.f32 0.0, %v4781
      %v4783 = vpop.f32.mrb[0].mxu0
      %4784 = vmatprep.mubr.f32.mxu0 0.0
      %4785 = vmatmul.mubr.f32.gmra.mrb[0].mxu0 %v4607
      %v4786 = vpop.f32.mrb[0].mxu0
      %v4787 = vadd.f32 0.0, %v4786
      %v4788 = vpop.f32.mrb[0].mxu0
      %4789 = vmatprep.mubr.f32.mxu0 0.0
      %4790 = vmatmul.mubr.f32.gmra.mrb[0].mxu0 %v4608
      %v4791 = vpop.f32.mrb[0].mxu0
      %v4792 = vadd.f32 0.0, %v4791
      %v4793 = vpop.f32.mrb[0].mxu0
      %4794 = vmatprep.mubr.f32.mxu0 0.0
      %4795 = vmatmul.mubr.f32.gmra.mrb[0].mxu0 %v4609
      %v4796 = vpop.f32.mrb[0].mxu0
      %v4797 = vadd.f32 0.0, %v4796
      %v4798 = vpop.f32.mrb[0].mxu0
      %4799 = vmatprep.mubr.f32.mxu0 0.0
      %4800 = vmatmul.mubr.f32.gmra.mrb[0].mxu0 %v4610
      %v4801 = vpop.f32.mrb[0].mxu0
      %v4802 = vadd.f32 0.0, %v4801
      %v4803 = vpop.f32.mrb[0].mxu0
      %4804 = vmatprep.mubr.f32.mxu0 0.0
      %4805 = vmatmul.mubr.f32.gmra.mrb[0].mxu0 %v4611
      %v4806 = vpop.f32.mrb[0].mxu0
      %v4807 = vadd.f32 0.0, %v4806
      %v4808 = vpop.f32.mrb[0].mxu0
      %4809 = vmatprep.mubr.f32.mxu0 0.0
      %4810 = vmatmul.mubr.f32.gmra.mrb[0].mxu0 %v4612
      %v4811 = vpop.f32.mrb[0].mxu0
      %v4812 = vadd.f32 0.0, %v4811
      %v4813 = vpop.f32.mrb[0].mxu0
      %4814 = vmatprep.mubr.f32.mxu0 0.0
      %4815 = vmatmul.mubr.f32.gmra.mrb[0].mxu0 %v4613
      %v4816 = vpop.f32.mrb[0].mxu0
      %v4817 = vadd.f32 0.0, %v4816
      %v4818 = vpop.f32.mrb[0].mxu0
      %4819 = vmatprep.mubr.f32.mxu0 0.0
      %4820 = vmatmul.mubr.f32.gmra.mrb[0].mxu0 %v4614
      %v4821 = vpop.f32.mrb[0].mxu0
      %v4822 = vadd.f32 0.0, %v4821
      %v4823 = vpop.f32.mrb[0].mxu0
      %4824 = vmatprep.mubr.f32.mxu0 0.0
      %4825 = vmatmul.mubr.f32.gmra.mrb[0].mxu0 %v4615
      %v4826 = vpop.f32.mrb[0].mxu0
      %v4827 = vadd.f32 0.0, %v4826
      %v4828 = vpop.f32.mrb[0].mxu0
      %4829 = vmatprep.mubr.f32.mxu0 0.0
      %4830 = vmatmul.mubr.f32.gmra.mrb[0].mxu0 %v4616
      %v4831 = vpop.f32.mrb[0].mxu0
      %v4832 = vadd.f32 0.0, %v4831
      %v4833 = vpop.f32.mrb[0].mxu0
      %4834 = vmatprep.mubr.f32.mxu0 0.0
      %4835 = vmatmul.mubr.f32.gmra.mrb[0].mxu0 %v4617
      %v4836 = vpop.f32.mrb[0].mxu0
      %v4837 = vadd.f32 0.0, %v4836
      %v4838 = vpop.f32.mrb[0].mxu0
      %4839 = vmatprep.mubr.f32.mxu0 0.0
      %4840 = vmatmul.mubr.f32.gmra.mrb[0].mxu0 %v4618
      %v4841 = vpop.f32.mrb[0].mxu0
      %v4842 = vadd.f32 0.0, %v4841
      %v4843 = vpop.f32.mrb[0].mxu0
      %4844 = vmatprep.mubr.f32.mxu0 0.0
      %4845 = vmatmul.mubr.f32.gmra.mrb[0].mxu0 %v4619
      %v4846 = vpop.f32.mrb[0].mxu0
      %v4847 = vadd.f32 0.0, %v4846
      %v4848 = vpop.f32.mrb[0].mxu0
      %4849 = vmatprep.mubr.f32.mxu0 0.0
      %4850 = vmatmul.mubr.f32.gmra.mrb[0].mxu0 %v4620
      %v4851 = vpop.f32.mrb[0].mxu0
      %v4852 = vadd.f32 0.0, %v4851
      %v4853 = vpop.f32.mrb[0].mxu0
      %4854 = vmatprep.mubr.f32.mxu0 0.0
      %4855 = vmatmul.mubr.f32.gmra.mrb[0].mxu0 %v4621
      %v4856 = vpop.f32.mrb[0].mxu0
      %v4857 = vadd.f32 0.0, %v4856
      %v4858 = vpop.f32.mrb[0].mxu0
      %4859 = vmatprep.mubr.f32.mxu0 0.0
      %4860 = vmatmul.mubr.f32.gmra.mrb[0].mxu0 %v4622
      %v4861 = vpop.f32.mrb[0].mxu0
      %v4862 = vadd.f32 0.0, %v4861
      %v4863 = vpop.f32.mrb[0].mxu0
      %4864 = vdwg.mxu0
      %v4865 = vadd.f32 %v4559, %v4707
      %v4866 = vadd.f32 %v4560, %v4712
      %v4867 = vadd.f32 %v4561, %v4717
      %v4868 = vadd.f32 %v4562, %v4722
      %v4869 = vadd.f32 %v4563, %v4727
      %v4870 = vadd.f32 %v4564, %v4732
      %v4871 = vadd.f32 %v4565, %v4737
      %v4872 = vadd.f32 %v4566, %v4742
      %v4873 = vadd.f32 %v4567, %v4747
      %v4874 = vadd.f32 %v4568, %v4752
      %v4875 = vadd.f32 %v4569, %v4757
      %v4876 = vadd.f32 %v4570, %v4762
      %v4877 = vadd.f32 %v4571, %v4767
      %v4878 = vadd.f32 %v4572, %v4772
      %v4879 = vadd.f32 %v4573, %v4777
      %v4880 = vadd.f32 %v4574, %v4782
      %v4881 = vadd.f32 %v4575, %v4787
      %v4882 = vadd.f32 %v4576, %v4792
      %v4883 = vadd.f32 %v4577, %v4797
      %v4884 = vadd.f32 %v4578, %v4802
      %v4885 = vadd.f32 %v4579, %v4807
      %v4886 = vadd.f32 %v4580, %v4812
      %v4887 = vadd.f32 %v4581, %v4817
      %v4888 = vadd.f32 %v4582, %v4822
      %v4889 = vadd.f32 %v4583, %v4827
      %v4890 = vadd.f32 %v4584, %v4832
      %v4891 = vadd.f32 %v4585, %v4837
      %v4892 = vadd.f32 %v4586, %v4842
      %v4893 = vadd.f32 %v4587, %v4847
      %v4894 = vadd.f32 %v4588, %v4852
      %v4895 = vadd.f32 %v4589, %v4857
      %v4896 = vadd.f32 %v4590, %v4862
      %v4897 = vld [vmem:[%s412 + $0x2] sm:$0xff]
      %v4898 = vld [vmem:[%s412 + $0xa] sm:$0xff]
      %v4899 = vld [vmem:[%s412 + $0x1a] sm:$0xff]
      %v4900 = vld [vmem:[%s412 + $0x22] sm:$0xff]
      %v4901 = vld [vmem:[%s412 + $0x32] sm:$0xff]
      %v4902 = vld [vmem:[%s412 + $0x3a] sm:$0xff]
      %v4903 = vld [vmem:[%s412 + $0x4a] sm:$0xff]
      %v4904 = vld [vmem:[%s412 + $0x52] sm:$0xff]
      %v4905 = vld [vmem:[%s412 + $0x62] sm:$0xff]
      %v4906 = vld [vmem:[%s412 + $0x6a] sm:$0xff]
      %v4907 = vld [vmem:[%s412 + $0x7a] sm:$0xff]
      %v4908 = vld [vmem:[%s412 + $0x82] sm:$0xff]
      %v4909 = vld [vmem:[%s412 + $0x92] sm:$0xff]
      %v4910 = vld [vmem:[%s412 + $0x9a] sm:$0xff]
      %v4911 = vld [vmem:[%s412 + $0xaa] sm:$0xff]
      %v4912 = vld [vmem:[%s412 + $0xb2] sm:$0xff]
      %v4913 = vld [vmem:[%s412 + $0xc2] sm:$0xff]
      %v4914 = vld [vmem:[%s412 + $0xca] sm:$0xff]
      %v4915 = vld [vmem:[%s412 + $0xda] sm:$0xff]
      %v4916 = vld [vmem:[%s412 + $0xe2] sm:$0xff]
      %v4917 = vld [vmem:[%s412 + $0xf2] sm:$0xff]
      %v4918 = vld [vmem:[%s412 + $0xfa] sm:$0xff]
      %v4919 = vld [vmem:[%s412 + $0x10a] sm:$0xff]
      %v4920 = vld [vmem:[%s412 + $0x112] sm:$0xff]
      %v4921 = vld [vmem:[%s412 + $0x122] sm:$0xff]
      %v4922 = vld [vmem:[%s412 + $0x12a] sm:$0xff]
      %v4923 = vld [vmem:[%s412 + $0x13a] sm:$0xff]
      %v4924 = vld [vmem:[%s412 + $0x142] sm:$0xff]
      %v4925 = vld [vmem:[%s412 + $0x152] sm:$0xff]
      %v4926 = vld [vmem:[%s412 + $0x15a] sm:$0xff]
      %v4927 = vld [vmem:[%s412 + $0x16a] sm:$0xff]
      %v4928 = vld [vmem:[%s412 + $0x172] sm:$0xff]
      %s4929 = scalar_lea.vmem %s4, 640
      %v4930 = vld [vmem:[%s4929] sm:$0xff]
      %v4931 = vld [vmem:[%s4929 + $0x8] sm:$0xff]
      %v4932 = vld [vmem:[%s4929 + $0x10] sm:$0xff]
      %v4933 = vld [vmem:[%s4929 + $0x18] sm:$0xff]
      %v4934 = vld [vmem:[%s4929 + $0x20] sm:$0xff]
      %v4935 = vld [vmem:[%s4929 + $0x28] sm:$0xff]
      %v4936 = vld [vmem:[%s4929 + $0x30] sm:$0xff]
      %v4937 = vld [vmem:[%s4929 + $0x38] sm:$0xff]
      %v4938 = vld [vmem:[%s4929 + $0x40] sm:$0xff]
      %v4939 = vld [vmem:[%s4929 + $0x48] sm:$0xff]
      %v4940 = vld [vmem:[%s4929 + $0x50] sm:$0xff]
      %v4941 = vld [vmem:[%s4929 + $0x58] sm:$0xff]
      %v4942 = vld [vmem:[%s4929 + $0x60] sm:$0xff]
      %v4943 = vld [vmem:[%s4929 + $0x68] sm:$0xff]
      %v4944 = vld [vmem:[%s4929 + $0x70] sm:$0xff]
      %v4945 = vld [vmem:[%s4929 + $0x78] sm:$0xff]
      %4946 = vmatprep.subr.mxu0 0.0
      %4947 = vmatpush1.msra.mxu0 %v4930
      %4948 = vmatprep.subr.mxu0 0.0
      %4949 = vmatpush1.msra.mxu0 %v4931
      %4950 = vmatprep.subr.mxu0 0.0
      %4951 = vmatpush1.msra.mxu0 %v4932
      %4952 = vmatprep.subr.mxu0 0.0
      %4953 = vmatpush1.msra.mxu0 %v4933
      %4954 = vmatprep.subr.mxu0 0.0
      %4955 = vmatpush1.msra.mxu0 %v4934
      %4956 = vmatprep.subr.mxu0 0.0
      %4957 = vmatpush1.msra.mxu0 %v4935
      %4958 = vmatprep.subr.mxu0 0.0
      %4959 = vmatpush1.msra.mxu0 %v4936
      %4960 = vmatprep.subr.mxu0 0.0
      %4961 = vmatpush1.msra.mxu0 %v4937
      %4962 = vmatprep.subr.mxu0 0.0
      %4963 = vmatpush1.msra.mxu0 %v4938
      %4964 = vmatprep.subr.mxu0 0.0
      %4965 = vmatpush1.msra.mxu0 %v4939
      %4966 = vmatprep.subr.mxu0 0.0
      %4967 = vmatpush1.msra.mxu0 %v4940
      %4968 = vmatprep.subr.mxu0 0.0
      %4969 = vmatpush1.msra.mxu0 %v4941
      %4970 = vmatprep.subr.mxu0 0.0
      %4971 = vmatpush1.msra.mxu0 %v4942
      %4972 = vmatprep.subr.mxu0 0.0
      %4973 = vmatpush1.msra.mxu0 %v4943
      %4974 = vmatprep.subr.mxu0 0.0
      %4975 = vmatpush1.msra.mxu0 %v4944
      %4976 = vmatprep.subr.mxu0 0.0
      %4977 = vmatpush1.msra.mxu0 %v4945
      %4978 = vmatprep.subr.mxu0 0.0
      %4979 = vmatpush1.msra.mxu0 0.0
      %4980 = vmatprep.subr.mxu0 0.0
      %4981 = vmatpush1.msra.mxu0 0.0
      %4982 = vmatprep.subr.mxu0 0.0
      %4983 = vmatpush1.msra.mxu0 0.0
      %4984 = vmatprep.subr.mxu0 0.0
      %4985 = vmatpush1.msra.mxu0 0.0
      %4986 = vmatprep.subr.mxu0 0.0
      %4987 = vmatpush1.msra.mxu0 0.0
      %4988 = vmatprep.subr.mxu0 0.0
      %4989 = vmatpush1.msra.mxu0 0.0
      %4990 = vmatprep.subr.mxu0 0.0
      %4991 = vmatpush1.msra.mxu0 0.0
      %4992 = vmatprep.subr.mxu0 0.0
      %4993 = vmatpush1.msra.mxu0 0.0
      %4994 = vmatprep.subr.mxu0 0.0
      %4995 = vmatpush1.msra.mxu0 0.0
      %4996 = vmatprep.subr.mxu0 0.0
      %4997 = vmatpush1.msra.mxu0 0.0
      %4998 = vmatprep.subr.mxu0 0.0
      %4999 = vmatpush1.msra.mxu0 0.0
      %5000 = vmatprep.subr.mxu0 0.0
      %5001 = vmatpush1.msra.mxu0 0.0
      %5002 = vmatprep.subr.mxu0 0.0
      %5003 = vmatpush1.msra.mxu0 0.0
      %5004 = vmatprep.subr.mxu0 0.0
      %5005 = vmatpush1.msra.mxu0 0.0
      %5006 = vmatprep.subr.mxu0 0.0
      %5007 = vmatpush1.msra.mxu0 0.0
      %5008 = vmatprep.subr.mxu0 0.0
      %5009 = vmatpush1.msra.mxu0 0.0
      %5010 = vmatprep.mubr.f32.mxu0 0.0
      %5011 = vmatmul.mubr.f32.gmra.mrb[0].mxu0 %v4897
      %v5012 = vpop.f32.mrb[0].mxu0
      %v5013 = vadd.f32 0.0, %v5012
      %v5014 = vpop.f32.mrb[0].mxu0
      %5015 = vmatprep.mubr.f32.mxu0 0.0
      %5016 = vmatmul.mubr.f32.gmra.mrb[0].mxu0 %v4898
      %v5017 = vpop.f32.mrb[0].mxu0
      %v5018 = vadd.f32 0.0, %v5017
      %v5019 = vpop.f32.mrb[0].mxu0
      %5020 = vmatprep.mubr.f32.mxu0 0.0
      %5021 = vmatmul.mubr.f32.gmra.mrb[0].mxu0 %v4899
      %v5022 = vpop.f32.mrb[0].mxu0
      %v5023 = vadd.f32 0.0, %v5022
      %v5024 = vpop.f32.mrb[0].mxu0
      %5025 = vmatprep.mubr.f32.mxu0 0.0
      %5026 = vmatmul.mubr.f32.gmra.mrb[0].mxu0 %v4900
      %v5027 = vpop.f32.mrb[0].mxu0
      %v5028 = vadd.f32 0.0, %v5027
      %v5029 = vpop.f32.mrb[0].mxu0
      %5030 = vmatprep.mubr.f32.mxu0 0.0
      %5031 = vmatmul.mubr.f32.gmra.mrb[0].mxu0 %v4901
      %v5032 = vpop.f32.mrb[0].mxu0
      %v5033 = vadd.f32 0.0, %v5032
      %v5034 = vpop.f32.mrb[0].mxu0
      %5035 = vmatprep.mubr.f32.mxu0 0.0
      %5036 = vmatmul.mubr.f32.gmra.mrb[0].mxu0 %v4902
      %v5037 = vpop.f32.mrb[0].mxu0
      %v5038 = vadd.f32 0.0, %v5037
      %v5039 = vpop.f32.mrb[0].mxu0
      %5040 = vmatprep.mubr.f32.mxu0 0.0
      %5041 = vmatmul.mubr.f32.gmra.mrb[0].mxu0 %v4903
      %v5042 = vpop.f32.mrb[0].mxu0
      %v5043 = vadd.f32 0.0, %v5042
      %v5044 = vpop.f32.mrb[0].mxu0
      %5045 = vmatprep.mubr.f32.mxu0 0.0
      %5046 = vmatmul.mubr.f32.gmra.mrb[0].mxu0 %v4904
      %v5047 = vpop.f32.mrb[0].mxu0
      %v5048 = vadd.f32 0.0, %v5047
      %v5049 = vpop.f32.mrb[0].mxu0
      %5050 = vmatprep.mubr.f32.mxu0 0.0
      %5051 = vmatmul.mubr.f32.gmra.mrb[0].mxu0 %v4905
      %v5052 = vpop.f32.mrb[0].mxu0
      %v5053 = vadd.f32 0.0, %v5052
      %v5054 = vpop.f32.mrb[0].mxu0
      %5055 = vmatprep.mubr.f32.mxu0 0.0
      %5056 = vmatmul.mubr.f32.gmra.mrb[0].mxu0 %v4906
      %v5057 = vpop.f32.mrb[0].mxu0
      %v5058 = vadd.f32 0.0, %v5057
      %v5059 = vpop.f32.mrb[0].mxu0
      %5060 = vmatprep.mubr.f32.mxu0 0.0
      %5061 = vmatmul.mubr.f32.gmra.mrb[0].mxu0 %v4907
      %v5062 = vpop.f32.mrb[0].mxu0
      %v5063 = vadd.f32 0.0, %v5062
      %v5064 = vpop.f32.mrb[0].mxu0
      %5065 = vmatprep.mubr.f32.mxu0 0.0
      %5066 = vmatmul.mubr.f32.gmra.mrb[0].mxu0 %v4908
      %v5067 = vpop.f32.mrb[0].mxu0
      %v5068 = vadd.f32 0.0, %v5067
      %v5069 = vpop.f32.mrb[0].mxu0
      %5070 = vmatprep.mubr.f32.mxu0 0.0
      %5071 = vmatmul.mubr.f32.gmra.mrb[0].mxu0 %v4909
      %v5072 = vpop.f32.mrb[0].mxu0
      %v5073 = vadd.f32 0.0, %v5072
      %v5074 = vpop.f32.mrb[0].mxu0
      %5075 = vmatprep.mubr.f32.mxu0 0.0
      %5076 = vmatmul.mubr.f32.gmra.mrb[0].mxu0 %v4910
      %v5077 = vpop.f32.mrb[0].mxu0
      %v5078 = vadd.f32 0.0, %v5077
      %v5079 = vpop.f32.mrb[0].mxu0
      %5080 = vmatprep.mubr.f32.mxu0 0.0
      %5081 = vmatmul.mubr.f32.gmra.mrb[0].mxu0 %v4911
      %v5082 = vpop.f32.mrb[0].mxu0
      %v5083 = vadd.f32 0.0, %v5082
      %v5084 = vpop.f32.mrb[0].mxu0
      %5085 = vmatprep.mubr.f32.mxu0 0.0
      %5086 = vmatmul.mubr.f32.gmra.mrb[0].mxu0 %v4912
      %v5087 = vpop.f32.mrb[0].mxu0
      %v5088 = vadd.f32 0.0, %v5087
      %v5089 = vpop.f32.mrb[0].mxu0
      %5090 = vmatprep.mubr.f32.mxu0 0.0
      %5091 = vmatmul.mubr.f32.gmra.mrb[0].mxu0 %v4913
      %v5092 = vpop.f32.mrb[0].mxu0
      %v5093 = vadd.f32 0.0, %v5092
      %v5094 = vpop.f32.mrb[0].mxu0
      %5095 = vmatprep.mubr.f32.mxu0 0.0
      %5096 = vmatmul.mubr.f32.gmra.mrb[0].mxu0 %v4914
      %v5097 = vpop.f32.mrb[0].mxu0
      %v5098 = vadd.f32 0.0, %v5097
      %v5099 = vpop.f32.mrb[0].mxu0
      %5100 = vmatprep.mubr.f32.mxu0 0.0
      %5101 = vmatmul.mubr.f32.gmra.mrb[0].mxu0 %v4915
      %v5102 = vpop.f32.mrb[0].mxu0
      %v5103 = vadd.f32 0.0, %v5102
      %v5104 = vpop.f32.mrb[0].mxu0
      %5105 = vmatprep.mubr.f32.mxu0 0.0
      %5106 = vmatmul.mubr.f32.gmra.mrb[0].mxu0 %v4916
      %v5107 = vpop.f32.mrb[0].mxu0
      %v5108 = vadd.f32 0.0, %v5107
      %v5109 = vpop.f32.mrb[0].mxu0
      %5110 = vmatprep.mubr.f32.mxu0 0.0
      %5111 = vmatmul.mubr.f32.gmra.mrb[0].mxu0 %v4917
      %v5112 = vpop.f32.mrb[0].mxu0
      %v5113 = vadd.f32 0.0, %v5112
      %v5114 = vpop.f32.mrb[0].mxu0
      %5115 = vmatprep.mubr.f32.mxu0 0.0
      %5116 = vmatmul.mubr.f32.gmra.mrb[0].mxu0 %v4918
      %v5117 = vpop.f32.mrb[0].mxu0
      %v5118 = vadd.f32 0.0, %v5117
      %v5119 = vpop.f32.mrb[0].mxu0
      %5120 = vmatprep.mubr.f32.mxu0 0.0
      %5121 = vmatmul.mubr.f32.gmra.mrb[0].mxu0 %v4919
      %v5122 = vpop.f32.mrb[0].mxu0
      %v5123 = vadd.f32 0.0, %v5122
      %v5124 = vpop.f32.mrb[0].mxu0
      %5125 = vmatprep.mubr.f32.mxu0 0.0
      %5126 = vmatmul.mubr.f32.gmra.mrb[0].mxu0 %v4920
      %v5127 = vpop.f32.mrb[0].mxu0
      %v5128 = vadd.f32 0.0, %v5127
      %v5129 = vpop.f32.mrb[0].mxu0
      %5130 = vmatprep.mubr.f32.mxu0 0.0
      %5131 = vmatmul.mubr.f32.gmra.mrb[0].mxu0 %v4921
      %v5132 = vpop.f32.mrb[0].mxu0
      %v5133 = vadd.f32 0.0, %v5132
      %v5134 = vpop.f32.mrb[0].mxu0
      %5135 = vmatprep.mubr.f32.mxu0 0.0
      %5136 = vmatmul.mubr.f32.gmra.mrb[0].mxu0 %v4922
      %v5137 = vpop.f32.mrb[0].mxu0
      %v5138 = vadd.f32 0.0, %v5137
      %v5139 = vpop.f32.mrb[0].mxu0
      %5140 = vmatprep.mubr.f32.mxu0 0.0
      %5141 = vmatmul.mubr.f32.gmra.mrb[0].mxu0 %v4923
      %v5142 = vpop.f32.mrb[0].mxu0
      %v5143 = vadd.f32 0.0, %v5142
      %v5144 = vpop.f32.mrb[0].mxu0
      %5145 = vmatprep.mubr.f32.mxu0 0.0
      %5146 = vmatmul.mubr.f32.gmra.mrb[0].mxu0 %v4924
      %v5147 = vpop.f32.mrb[0].mxu0
      %v5148 = vadd.f32 0.0, %v5147
      %v5149 = vpop.f32.mrb[0].mxu0
      %5150 = vmatprep.mubr.f32.mxu0 0.0
      %5151 = vmatmul.mubr.f32.gmra.mrb[0].mxu0 %v4925
      %v5152 = vpop.f32.mrb[0].mxu0
      %v5153 = vadd.f32 0.0, %v5152
      %v5154 = vpop.f32.mrb[0].mxu0
      %5155 = vmatprep.mubr.f32.mxu0 0.0
      %5156 = vmatmul.mubr.f32.gmra.mrb[0].mxu0 %v4926
      %v5157 = vpop.f32.mrb[0].mxu0
      %v5158 = vadd.f32 0.0, %v5157
      %v5159 = vpop.f32.mrb[0].mxu0
      %5160 = vmatprep.mubr.f32.mxu0 0.0
      %5161 = vmatmul.mubr.f32.gmra.mrb[0].mxu0 %v4927
      %v5162 = vpop.f32.mrb[0].mxu0
      %v5163 = vadd.f32 0.0, %v5162
      %v5164 = vpop.f32.mrb[0].mxu0
      %5165 = vmatprep.mubr.f32.mxu0 0.0
      %5166 = vmatmul.mubr.f32.gmra.mrb[0].mxu0 %v4928
      %v5167 = vpop.f32.mrb[0].mxu0
      %v5168 = vadd.f32 0.0, %v5167
      %v5169 = vpop.f32.mrb[0].mxu0
      %5170 = vdwg.mxu0
      %v5171 = vadd.f32 %v4865, %v5013
      %v5172 = vadd.f32 %v4866, %v5018
      %v5173 = vadd.f32 %v4867, %v5023
      %v5174 = vadd.f32 %v4868, %v5028
      %v5175 = vadd.f32 %v4869, %v5033
      %v5176 = vadd.f32 %v4870, %v5038
      %v5177 = vadd.f32 %v4871, %v5043
      %v5178 = vadd.f32 %v4872, %v5048
      %v5179 = vadd.f32 %v4873, %v5053
      %v5180 = vadd.f32 %v4874, %v5058
      %v5181 = vadd.f32 %v4875, %v5063
      %v5182 = vadd.f32 %v4876, %v5068
      %v5183 = vadd.f32 %v4877, %v5073
      %v5184 = vadd.f32 %v4878, %v5078
      %v5185 = vadd.f32 %v4879, %v5083
      %v5186 = vadd.f32 %v4880, %v5088
      %v5187 = vadd.f32 %v4881, %v5093
      %v5188 = vadd.f32 %v4882, %v5098
      %v5189 = vadd.f32 %v4883, %v5103
      %v5190 = vadd.f32 %v4884, %v5108
      %v5191 = vadd.f32 %v4885, %v5113
      %v5192 = vadd.f32 %v4886, %v5118
      %v5193 = vadd.f32 %v4887, %v5123
      %v5194 = vadd.f32 %v4888, %v5128
      %v5195 = vadd.f32 %v4889, %v5133
      %v5196 = vadd.f32 %v4890, %v5138
      %v5197 = vadd.f32 %v4891, %v5143
      %v5198 = vadd.f32 %v4892, %v5148
      %v5199 = vadd.f32 %v4893, %v5153
      %v5200 = vadd.f32 %v4894, %v5158
      %v5201 = vadd.f32 %v4895, %v5163
      %v5202 = vadd.f32 %v4896, %v5168
      %v5203 = vld [vmem:[%s2410] sm:$0xff]
      %v5204 = vld [vmem:[%s2410 + $0x8] sm:$0xff]
      %v5205 = vld [vmem:[%s2410 + $0x18] sm:$0xff]
      %v5206 = vld [vmem:[%s2410 + $0x20] sm:$0xff]
      %v5207 = vld [vmem:[%s2410 + $0x30] sm:$0xff]
      %v5208 = vld [vmem:[%s2410 + $0x38] sm:$0xff]
      %v5209 = vld [vmem:[%s2410 + $0x48] sm:$0xff]
      %v5210 = vld [vmem:[%s2410 + $0x50] sm:$0xff]
      %v5211 = vld [vmem:[%s2410 + $0x60] sm:$0xff]
      %v5212 = vld [vmem:[%s2410 + $0x68] sm:$0xff]
      %v5213 = vld [vmem:[%s2410 + $0x78] sm:$0xff]
      %v5214 = vld [vmem:[%s2410 + $0x80] sm:$0xff]
      %v5215 = vld [vmem:[%s2410 + $0x90] sm:$0xff]
      %v5216 = vld [vmem:[%s2410 + $0x98] sm:$0xff]
      %v5217 = vld [vmem:[%s2410 + $0xa8] sm:$0xff]
      %v5218 = vld [vmem:[%s2410 + $0xb0] sm:$0xff]
      %v5219 = vld [vmem:[%s2410 + $0xc0] sm:$0xff]
      %v5220 = vld [vmem:[%s2410 + $0xc8] sm:$0xff]
      %v5221 = vld [vmem:[%s2410 + $0xd8] sm:$0xff]
      %v5222 = vld [vmem:[%s2410 + $0xe0] sm:$0xff]
      %v5223 = vld [vmem:[%s2410 + $0xf0] sm:$0xff]
      %v5224 = vld [vmem:[%s2410 + $0xf8] sm:$0xff]
      %v5225 = vld [vmem:[%s2410 + $0x108] sm:$0xff]
      %v5226 = vld [vmem:[%s2410 + $0x110] sm:$0xff]
      %v5227 = vld [vmem:[%s2410 + $0x120] sm:$0xff]
      %v5228 = vld [vmem:[%s2410 + $0x128] sm:$0xff]
      %v5229 = vld [vmem:[%s2410 + $0x138] sm:$0xff]
      %v5230 = vld [vmem:[%s2410 + $0x140] sm:$0xff]
      %v5231 = vld [vmem:[%s2410 + $0x150] sm:$0xff]
      %v5232 = vld [vmem:[%s2410 + $0x158] sm:$0xff]
      %v5233 = vld [vmem:[%s2410 + $0x168] sm:$0xff]
      %v5234 = vld [vmem:[%s2410 + $0x170] sm:$0xff]
      %s5235 = scalar_lea.vmem %s4, 768
      %v5236 = vld [vmem:[%s5235] sm:$0xff]
      %v5237 = vld [vmem:[%s5235 + $0x8] sm:$0xff]
      %v5238 = vld [vmem:[%s5235 + $0x10] sm:$0xff]
      %v5239 = vld [vmem:[%s5235 + $0x18] sm:$0xff]
      %v5240 = vld [vmem:[%s5235 + $0x20] sm:$0xff]
      %v5241 = vld [vmem:[%s5235 + $0x28] sm:$0xff]
      %v5242 = vld [vmem:[%s5235 + $0x30] sm:$0xff]
      %v5243 = vld [vmem:[%s5235 + $0x38] sm:$0xff]
      %v5244 = vld [vmem:[%s5235 + $0x40] sm:$0xff]
      %v5245 = vld [vmem:[%s5235 + $0x48] sm:$0xff]
      %v5246 = vld [vmem:[%s5235 + $0x50] sm:$0xff]
      %v5247 = vld [vmem:[%s5235 + $0x58] sm:$0xff]
      %v5248 = vld [vmem:[%s5235 + $0x60] sm:$0xff]
      %v5249 = vld [vmem:[%s5235 + $0x68] sm:$0xff]
      %v5250 = vld [vmem:[%s5235 + $0x70] sm:$0xff]
      %v5251 = vld [vmem:[%s5235 + $0x78] sm:$0xff]
      %5252 = vmatprep.subr.mxu0 0.0
      %5253 = vmatpush1.msra.mxu0 %v5236
      %5254 = vmatprep.subr.mxu0 0.0
      %5255 = vmatpush1.msra.mxu0 %v5237
      %5256 = vmatprep.subr.mxu0 0.0
      %5257 = vmatpush1.msra.mxu0 %v5238
      %5258 = vmatprep.subr.mxu0 0.0
      %5259 = vmatpush1.msra.mxu0 %v5239
      %5260 = vmatprep.subr.mxu0 0.0
      %5261 = vmatpush1.msra.mxu0 %v5240
      %5262 = vmatprep.subr.mxu0 0.0
      %5263 = vmatpush1.msra.mxu0 %v5241
      %5264 = vmatprep.subr.mxu0 0.0
      %5265 = vmatpush1.msra.mxu0 %v5242
      %5266 = vmatprep.subr.mxu0 0.0
      %5267 = vmatpush1.msra.mxu0 %v5243
      %5268 = vmatprep.subr.mxu0 0.0
      %5269 = vmatpush1.msra.mxu0 %v5244
      %5270 = vmatprep.subr.mxu0 0.0
      %5271 = vmatpush1.msra.mxu0 %v5245
      %5272 = vmatprep.subr.mxu0 0.0
      %5273 = vmatpush1.msra.mxu0 %v5246
      %5274 = vmatprep.subr.mxu0 0.0
      %5275 = vmatpush1.msra.mxu0 %v5247
      %5276 = vmatprep.subr.mxu0 0.0
      %5277 = vmatpush1.msra.mxu0 %v5248
      %5278 = vmatprep.subr.mxu0 0.0
      %5279 = vmatpush1.msra.mxu0 %v5249
      %5280 = vmatprep.subr.mxu0 0.0
      %5281 = vmatpush1.msra.mxu0 %v5250
      %5282 = vmatprep.subr.mxu0 0.0
      %5283 = vmatpush1.msra.mxu0 %v5251
      %5284 = vmatprep.subr.mxu0 0.0
      %5285 = vmatpush1.msra.mxu0 0.0
      %5286 = vmatprep.subr.mxu0 0.0
      %5287 = vmatpush1.msra.mxu0 0.0
      %5288 = vmatprep.subr.mxu0 0.0
      %5289 = vmatpush1.msra.mxu0 0.0
      %5290 = vmatprep.subr.mxu0 0.0
      %5291 = vmatpush1.msra.mxu0 0.0
      %5292 = vmatprep.subr.mxu0 0.0
      %5293 = vmatpush1.msra.mxu0 0.0
      %5294 = vmatprep.subr.mxu0 0.0
      %5295 = vmatpush1.msra.mxu0 0.0
      %5296 = vmatprep.subr.mxu0 0.0
      %5297 = vmatpush1.msra.mxu0 0.0
      %5298 = vmatprep.subr.mxu0 0.0
      %5299 = vmatpush1.msra.mxu0 0.0
      %5300 = vmatprep.subr.mxu0 0.0
      %5301 = vmatpush1.msra.mxu0 0.0
      %5302 = vmatprep.subr.mxu0 0.0
      %5303 = vmatpush1.msra.mxu0 0.0
      %5304 = vmatprep.subr.mxu0 0.0
      %5305 = vmatpush1.msra.mxu0 0.0
      %5306 = vmatprep.subr.mxu0 0.0
      %5307 = vmatpush1.msra.mxu0 0.0
      %5308 = vmatprep.subr.mxu0 0.0
      %5309 = vmatpush1.msra.mxu0 0.0
      %5310 = vmatprep.subr.mxu0 0.0
      %5311 = vmatpush1.msra.mxu0 0.0
      %5312 = vmatprep.subr.mxu0 0.0
      %5313 = vmatpush1.msra.mxu0 0.0
      %5314 = vmatprep.subr.mxu0 0.0
      %5315 = vmatpush1.msra.mxu0 0.0
      %5316 = vmatprep.mubr.f32.mxu0 0.0
      %5317 = vmatmul.mubr.f32.gmra.mrb[0].mxu0 %v5203
      %v5318 = vpop.f32.mrb[0].mxu0
      %v5319 = vadd.f32 0.0, %v5318
      %v5320 = vpop.f32.mrb[0].mxu0
      %5321 = vmatprep.mubr.f32.mxu0 0.0
      %5322 = vmatmul.mubr.f32.gmra.mrb[0].mxu0 %v5204
      %v5323 = vpop.f32.mrb[0].mxu0
      %v5324 = vadd.f32 0.0, %v5323
      %v5325 = vpop.f32.mrb[0].mxu0
      %5326 = vmatprep.mubr.f32.mxu0 0.0
      %5327 = vmatmul.mubr.f32.gmra.mrb[0].mxu0 %v5205
      %v5328 = vpop.f32.mrb[0].mxu0
      %v5329 = vadd.f32 0.0, %v5328
      %v5330 = vpop.f32.mrb[0].mxu0
      %5331 = vmatprep.mubr.f32.mxu0 0.0
      %5332 = vmatmul.mubr.f32.gmra.mrb[0].mxu0 %v5206
      %v5333 = vpop.f32.mrb[0].mxu0
      %v5334 = vadd.f32 0.0, %v5333
      %v5335 = vpop.f32.mrb[0].mxu0
      %5336 = vmatprep.mubr.f32.mxu0 0.0
      %5337 = vmatmul.mubr.f32.gmra.mrb[0].mxu0 %v5207
      %v5338 = vpop.f32.mrb[0].mxu0
      %v5339 = vadd.f32 0.0, %v5338
      %v5340 = vpop.f32.mrb[0].mxu0
      %5341 = vmatprep.mubr.f32.mxu0 0.0
      %5342 = vmatmul.mubr.f32.gmra.mrb[0].mxu0 %v5208
      %v5343 = vpop.f32.mrb[0].mxu0
      %v5344 = vadd.f32 0.0, %v5343
      %v5345 = vpop.f32.mrb[0].mxu0
      %5346 = vmatprep.mubr.f32.mxu0 0.0
      %5347 = vmatmul.mubr.f32.gmra.mrb[0].mxu0 %v5209
      %v5348 = vpop.f32.mrb[0].mxu0
      %v5349 = vadd.f32 0.0, %v5348
      %v5350 = vpop.f32.mrb[0].mxu0
      %5351 = vmatprep.mubr.f32.mxu0 0.0
      %5352 = vmatmul.mubr.f32.gmra.mrb[0].mxu0 %v5210
      %v5353 = vpop.f32.mrb[0].mxu0
      %v5354 = vadd.f32 0.0, %v5353
      %v5355 = vpop.f32.mrb[0].mxu0
      %5356 = vmatprep.mubr.f32.mxu0 0.0
      %5357 = vmatmul.mubr.f32.gmra.mrb[0].mxu0 %v5211
      %v5358 = vpop.f32.mrb[0].mxu0
      %v5359 = vadd.f32 0.0, %v5358
      %v5360 = vpop.f32.mrb[0].mxu0
      %5361 = vmatprep.mubr.f32.mxu0 0.0
      %5362 = vmatmul.mubr.f32.gmra.mrb[0].mxu0 %v5212
      %v5363 = vpop.f32.mrb[0].mxu0
      %v5364 = vadd.f32 0.0, %v5363
      %v5365 = vpop.f32.mrb[0].mxu0
      %5366 = vmatprep.mubr.f32.mxu0 0.0
      %5367 = vmatmul.mubr.f32.gmra.mrb[0].mxu0 %v5213
      %v5368 = vpop.f32.mrb[0].mxu0
      %v5369 = vadd.f32 0.0, %v5368
      %v5370 = vpop.f32.mrb[0].mxu0
      %5371 = vmatprep.mubr.f32.mxu0 0.0
      %5372 = vmatmul.mubr.f32.gmra.mrb[0].mxu0 %v5214
      %v5373 = vpop.f32.mrb[0].mxu0
      %v5374 = vadd.f32 0.0, %v5373
      %v5375 = vpop.f32.mrb[0].mxu0
      %5376 = vmatprep.mubr.f32.mxu0 0.0
      %5377 = vmatmul.mubr.f32.gmra.mrb[0].mxu0 %v5215
      %v5378 = vpop.f32.mrb[0].mxu0
      %v5379 = vadd.f32 0.0, %v5378
      %v5380 = vpop.f32.mrb[0].mxu0
      %5381 = vmatprep.mubr.f32.mxu0 0.0
      %5382 = vmatmul.mubr.f32.gmra.mrb[0].mxu0 %v5216
      %v5383 = vpop.f32.mrb[0].mxu0
      %v5384 = vadd.f32 0.0, %v5383
      %v5385 = vpop.f32.mrb[0].mxu0
      %5386 = vmatprep.mubr.f32.mxu0 0.0
      %5387 = vmatmul.mubr.f32.gmra.mrb[0].mxu0 %v5217
      %v5388 = vpop.f32.mrb[0].mxu0
      %v5389 = vadd.f32 0.0, %v5388
      %v5390 = vpop.f32.mrb[0].mxu0
      %5391 = vmatprep.mubr.f32.mxu0 0.0
      %5392 = vmatmul.mubr.f32.gmra.mrb[0].mxu0 %v5218
      %v5393 = vpop.f32.mrb[0].mxu0
      %v5394 = vadd.f32 0.0, %v5393
      %v5395 = vpop.f32.mrb[0].mxu0
      %5396 = vmatprep.mubr.f32.mxu0 0.0
      %5397 = vmatmul.mubr.f32.gmra.mrb[0].mxu0 %v5219
      %v5398 = vpop.f32.mrb[0].mxu0
      %v5399 = vadd.f32 0.0, %v5398
      %v5400 = vpop.f32.mrb[0].mxu0
      %5401 = vmatprep.mubr.f32.mxu0 0.0
      %5402 = vmatmul.mubr.f32.gmra.mrb[0].mxu0 %v5220
      %v5403 = vpop.f32.mrb[0].mxu0
      %v5404 = vadd.f32 0.0, %v5403
      %v5405 = vpop.f32.mrb[0].mxu0
      %5406 = vmatprep.mubr.f32.mxu0 0.0
      %5407 = vmatmul.mubr.f32.gmra.mrb[0].mxu0 %v5221
      %v5408 = vpop.f32.mrb[0].mxu0
      %v5409 = vadd.f32 0.0, %v5408
      %v5410 = vpop.f32.mrb[0].mxu0
      %5411 = vmatprep.mubr.f32.mxu0 0.0
      %5412 = vmatmul.mubr.f32.gmra.mrb[0].mxu0 %v5222
      %v5413 = vpop.f32.mrb[0].mxu0
      %v5414 = vadd.f32 0.0, %v5413
      %v5415 = vpop.f32.mrb[0].mxu0
      %5416 = vmatprep.mubr.f32.mxu0 0.0
      %5417 = vmatmul.mubr.f32.gmra.mrb[0].mxu0 %v5223
      %v5418 = vpop.f32.mrb[0].mxu0
      %v5419 = vadd.f32 0.0, %v5418
      %v5420 = vpop.f32.mrb[0].mxu0
      %5421 = vmatprep.mubr.f32.mxu0 0.0
      %5422 = vmatmul.mubr.f32.gmra.mrb[0].mxu0 %v5224
      %v5423 = vpop.f32.mrb[0].mxu0
      %v5424 = vadd.f32 0.0, %v5423
      %v5425 = vpop.f32.mrb[0].mxu0
      %5426 = vmatprep.mubr.f32.mxu0 0.0
      %5427 = vmatmul.mubr.f32.gmra.mrb[0].mxu0 %v5225
      %v5428 = vpop.f32.mrb[0].mxu0
      %v5429 = vadd.f32 0.0, %v5428
      %v5430 = vpop.f32.mrb[0].mxu0
      %5431 = vmatprep.mubr.f32.mxu0 0.0
      %5432 = vmatmul.mubr.f32.gmra.mrb[0].mxu0 %v5226
      %v5433 = vpop.f32.mrb[0].mxu0
      %v5434 = vadd.f32 0.0, %v5433
      %v5435 = vpop.f32.mrb[0].mxu0
      %5436 = vmatprep.mubr.f32.mxu0 0.0
      %5437 = vmatmul.mubr.f32.gmra.mrb[0].mxu0 %v5227
      %v5438 = vpop.f32.mrb[0].mxu0
      %v5439 = vadd.f32 0.0, %v5438
      %v5440 = vpop.f32.mrb[0].mxu0
      %5441 = vmatprep.mubr.f32.mxu0 0.0
      %5442 = vmatmul.mubr.f32.gmra.mrb[0].mxu0 %v5228
      %v5443 = vpop.f32.mrb[0].mxu0
      %v5444 = vadd.f32 0.0, %v5443
      %v5445 = vpop.f32.mrb[0].mxu0
      %5446 = vmatprep.mubr.f32.mxu0 0.0
      %5447 = vmatmul.mubr.f32.gmra.mrb[0].mxu0 %v5229
      %v5448 = vpop.f32.mrb[0].mxu0
      %v5449 = vadd.f32 0.0, %v5448
      %v5450 = vpop.f32.mrb[0].mxu0
      %5451 = vmatprep.mubr.f32.mxu0 0.0
      %5452 = vmatmul.mubr.f32.gmra.mrb[0].mxu0 %v5230
      %v5453 = vpop.f32.mrb[0].mxu0
      %v5454 = vadd.f32 0.0, %v5453
      %v5455 = vpop.f32.mrb[0].mxu0
      %5456 = vmatprep.mubr.f32.mxu0 0.0
      %5457 = vmatmul.mubr.f32.gmra.mrb[0].mxu0 %v5231
      %v5458 = vpop.f32.mrb[0].mxu0
      %v5459 = vadd.f32 0.0, %v5458
      %v5460 = vpop.f32.mrb[0].mxu0
      %5461 = vmatprep.mubr.f32.mxu0 0.0
      %5462 = vmatmul.mubr.f32.gmra.mrb[0].mxu0 %v5232
      %v5463 = vpop.f32.mrb[0].mxu0
      %v5464 = vadd.f32 0.0, %v5463
      %v5465 = vpop.f32.mrb[0].mxu0
      %5466 = vmatprep.mubr.f32.mxu0 0.0
      %5467 = vmatmul.mubr.f32.gmra.mrb[0].mxu0 %v5233
      %v5468 = vpop.f32.mrb[0].mxu0
      %v5469 = vadd.f32 0.0, %v5468
      %v5470 = vpop.f32.mrb[0].mxu0
      %5471 = vmatprep.mubr.f32.mxu0 0.0
      %5472 = vmatmul.mubr.f32.gmra.mrb[0].mxu0 %v5234
      %v5473 = vpop.f32.mrb[0].mxu0
      %v5474 = vadd.f32 0.0, %v5473
      %v5475 = vpop.f32.mrb[0].mxu0
      %5476 = vdwg.mxu0
      %v5477 = vadd.f32 %v5171, %v5319
      %v5478 = vadd.f32 %v5172, %v5324
      %v5479 = vadd.f32 %v5173, %v5329
      %v5480 = vadd.f32 %v5174, %v5334
      %v5481 = vadd.f32 %v5175, %v5339
      %v5482 = vadd.f32 %v5176, %v5344
      %v5483 = vadd.f32 %v5177, %v5349
      %v5484 = vadd.f32 %v5178, %v5354
      %v5485 = vadd.f32 %v5179, %v5359
      %v5486 = vadd.f32 %v5180, %v5364
      %v5487 = vadd.f32 %v5181, %v5369
      %v5488 = vadd.f32 %v5182, %v5374
      %v5489 = vadd.f32 %v5183, %v5379
      %v5490 = vadd.f32 %v5184, %v5384
      %v5491 = vadd.f32 %v5185, %v5389
      %v5492 = vadd.f32 %v5186, %v5394
      %v5493 = vadd.f32 %v5187, %v5399
      %v5494 = vadd.f32 %v5188, %v5404
      %v5495 = vadd.f32 %v5189, %v5409
      %v5496 = vadd.f32 %v5190, %v5414
      %v5497 = vadd.f32 %v5191, %v5419
      %v5498 = vadd.f32 %v5192, %v5424
      %v5499 = vadd.f32 %v5193, %v5429
      %v5500 = vadd.f32 %v5194, %v5434
      %v5501 = vadd.f32 %v5195, %v5439
      %v5502 = vadd.f32 %v5196, %v5444
      %v5503 = vadd.f32 %v5197, %v5449
      %v5504 = vadd.f32 %v5198, %v5454
      %v5505 = vadd.f32 %v5199, %v5459
      %v5506 = vadd.f32 %v5200, %v5464
      %v5507 = vadd.f32 %v5201, %v5469
      %v5508 = vadd.f32 %v5202, %v5474
      %v5509 = vld [vmem:[%s2410 + $0x1] sm:$0xff]
      %v5510 = vld [vmem:[%s2410 + $0x9] sm:$0xff]
      %v5511 = vld [vmem:[%s2410 + $0x19] sm:$0xff]
      %v5512 = vld [vmem:[%s2410 + $0x21] sm:$0xff]
      %v5513 = vld [vmem:[%s2410 + $0x31] sm:$0xff]
      %v5514 = vld [vmem:[%s2410 + $0x39] sm:$0xff]
      %v5515 = vld [vmem:[%s2410 + $0x49] sm:$0xff]
      %v5516 = vld [vmem:[%s2410 + $0x51] sm:$0xff]
      %v5517 = vld [vmem:[%s2410 + $0x61] sm:$0xff]
      %v5518 = vld [vmem:[%s2410 + $0x69] sm:$0xff]
      %v5519 = vld [vmem:[%s2410 + $0x79] sm:$0xff]
      %v5520 = vld [vmem:[%s2410 + $0x81] sm:$0xff]
      %v5521 = vld [vmem:[%s2410 + $0x91] sm:$0xff]
      %v5522 = vld [vmem:[%s2410 + $0x99] sm:$0xff]
      %v5523 = vld [vmem:[%s2410 + $0xa9] sm:$0xff]
      %v5524 = vld [vmem:[%s2410 + $0xb1] sm:$0xff]
      %v5525 = vld [vmem:[%s2410 + $0xc1] sm:$0xff]
      %v5526 = vld [vmem:[%s2410 + $0xc9] sm:$0xff]
      %v5527 = vld [vmem:[%s2410 + $0xd9] sm:$0xff]
      %v5528 = vld [vmem:[%s2410 + $0xe1] sm:$0xff]
      %v5529 = vld [vmem:[%s2410 + $0xf1] sm:$0xff]
      %v5530 = vld [vmem:[%s2410 + $0xf9] sm:$0xff]
      %v5531 = vld [vmem:[%s2410 + $0x109] sm:$0xff]
      %v5532 = vld [vmem:[%s2410 + $0x111] sm:$0xff]
      %v5533 = vld [vmem:[%s2410 + $0x121] sm:$0xff]
      %v5534 = vld [vmem:[%s2410 + $0x129] sm:$0xff]
      %v5535 = vld [vmem:[%s2410 + $0x139] sm:$0xff]
      %v5536 = vld [vmem:[%s2410 + $0x141] sm:$0xff]
      %v5537 = vld [vmem:[%s2410 + $0x151] sm:$0xff]
      %v5538 = vld [vmem:[%s2410 + $0x159] sm:$0xff]
      %v5539 = vld [vmem:[%s2410 + $0x169] sm:$0xff]
      %v5540 = vld [vmem:[%s2410 + $0x171] sm:$0xff]
      %s5541 = scalar_lea.vmem %s4, 896
      %v5542 = vld [vmem:[%s5541] sm:$0xff]
      %v5543 = vld [vmem:[%s5541 + $0x8] sm:$0xff]
      %v5544 = vld [vmem:[%s5541 + $0x10] sm:$0xff]
      %v5545 = vld [vmem:[%s5541 + $0x18] sm:$0xff]
      %v5546 = vld [vmem:[%s5541 + $0x20] sm:$0xff]
      %v5547 = vld [vmem:[%s5541 + $0x28] sm:$0xff]
      %v5548 = vld [vmem:[%s5541 + $0x30] sm:$0xff]
      %v5549 = vld [vmem:[%s5541 + $0x38] sm:$0xff]
      %v5550 = vld [vmem:[%s5541 + $0x40] sm:$0xff]
      %v5551 = vld [vmem:[%s5541 + $0x48] sm:$0xff]
      %v5552 = vld [vmem:[%s5541 + $0x50] sm:$0xff]
      %v5553 = vld [vmem:[%s5541 + $0x58] sm:$0xff]
      %v5554 = vld [vmem:[%s5541 + $0x60] sm:$0xff]
      %v5555 = vld [vmem:[%s5541 + $0x68] sm:$0xff]
      %v5556 = vld [vmem:[%s5541 + $0x70] sm:$0xff]
      %v5557 = vld [vmem:[%s5541 + $0x78] sm:$0xff]
      %5558 = vmatprep.subr.mxu0 0.0
      %5559 = vmatpush1.msra.mxu0 %v5542
      %5560 = vmatprep.subr.mxu0 0.0
      %5561 = vmatpush1.msra.mxu0 %v5543
      %5562 = vmatprep.subr.mxu0 0.0
      %5563 = vmatpush1.msra.mxu0 %v5544
      %5564 = vmatprep.subr.mxu0 0.0
      %5565 = vmatpush1.msra.mxu0 %v5545
      %5566 = vmatprep.subr.mxu0 0.0
      %5567 = vmatpush1.msra.mxu0 %v5546
      %5568 = vmatprep.subr.mxu0 0.0
      %5569 = vmatpush1.msra.mxu0 %v5547
      %5570 = vmatprep.subr.mxu0 0.0
      %5571 = vmatpush1.msra.mxu0 %v5548
      %5572 = vmatprep.subr.mxu0 0.0
      %5573 = vmatpush1.msra.mxu0 %v5549
      %5574 = vmatprep.subr.mxu0 0.0
      %5575 = vmatpush1.msra.mxu0 %v5550
      %5576 = vmatprep.subr.mxu0 0.0
      %5577 = vmatpush1.msra.mxu0 %v5551
      %5578 = vmatprep.subr.mxu0 0.0
      %5579 = vmatpush1.msra.mxu0 %v5552
      %5580 = vmatprep.subr.mxu0 0.0
      %5581 = vmatpush1.msra.mxu0 %v5553
      %5582 = vmatprep.subr.mxu0 0.0
      %5583 = vmatpush1.msra.mxu0 %v5554
      %5584 = vmatprep.subr.mxu0 0.0
      %5585 = vmatpush1.msra.mxu0 %v5555
      %5586 = vmatprep.subr.mxu0 0.0
      %5587 = vmatpush1.msra.mxu0 %v5556
      %5588 = vmatprep.subr.mxu0 0.0
      %5589 = vmatpush1.msra.mxu0 %v5557
      %5590 = vmatprep.subr.mxu0 0.0
      %5591 = vmatpush1.msra.mxu0 0.0
      %5592 = vmatprep.subr.mxu0 0.0
      %5593 = vmatpush1.msra.mxu0 0.0
      %5594 = vmatprep.subr.mxu0 0.0
      %5595 = vmatpush1.msra.mxu0 0.0
      %5596 = vmatprep.subr.mxu0 0.0
      %5597 = vmatpush1.msra.mxu0 0.0
      %5598 = vmatprep.subr.mxu0 0.0
      %5599 = vmatpush1.msra.mxu0 0.0
      %5600 = vmatprep.subr.mxu0 0.0
      %5601 = vmatpush1.msra.mxu0 0.0
      %5602 = vmatprep.subr.mxu0 0.0
      %5603 = vmatpush1.msra.mxu0 0.0
      %5604 = vmatprep.subr.mxu0 0.0
      %5605 = vmatpush1.msra.mxu0 0.0
      %5606 = vmatprep.subr.mxu0 0.0
      %5607 = vmatpush1.msra.mxu0 0.0
      %5608 = vmatprep.subr.mxu0 0.0
      %5609 = vmatpush1.msra.mxu0 0.0
      %5610 = vmatprep.subr.mxu0 0.0
      %5611 = vmatpush1.msra.mxu0 0.0
      %5612 = vmatprep.subr.mxu0 0.0
      %5613 = vmatpush1.msra.mxu0 0.0
      %5614 = vmatprep.subr.mxu0 0.0
      %5615 = vmatpush1.msra.mxu0 0.0
      %5616 = vmatprep.subr.mxu0 0.0
      %5617 = vmatpush1.msra.mxu0 0.0
      %5618 = vmatprep.subr.mxu0 0.0
      %5619 = vmatpush1.msra.mxu0 0.0
      %5620 = vmatprep.subr.mxu0 0.0
      %5621 = vmatpush1.msra.mxu0 0.0
      %5622 = vmatprep.mubr.f32.mxu0 0.0
      %5623 = vmatmul.mubr.f32.gmra.mrb[0].mxu0 %v5509
      %v5624 = vpop.f32.mrb[0].mxu0
      %v5625 = vadd.f32 0.0, %v5624
      %v5626 = vpop.f32.mrb[0].mxu0
      %5627 = vmatprep.mubr.f32.mxu0 0.0
      %5628 = vmatmul.mubr.f32.gmra.mrb[0].mxu0 %v5510
      %v5629 = vpop.f32.mrb[0].mxu0
      %v5630 = vadd.f32 0.0, %v5629
      %v5631 = vpop.f32.mrb[0].mxu0
      %5632 = vmatprep.mubr.f32.mxu0 0.0
      %5633 = vmatmul.mubr.f32.gmra.mrb[0].mxu0 %v5511
      %v5634 = vpop.f32.mrb[0].mxu0
      %v5635 = vadd.f32 0.0, %v5634
      %v5636 = vpop.f32.mrb[0].mxu0
      %5637 = vmatprep.mubr.f32.mxu0 0.0
      %5638 = vmatmul.mubr.f32.gmra.mrb[0].mxu0 %v5512
      %v5639 = vpop.f32.mrb[0].mxu0
      %v5640 = vadd.f32 0.0, %v5639
      %v5641 = vpop.f32.mrb[0].mxu0
      %5642 = vmatprep.mubr.f32.mxu0 0.0
      %5643 = vmatmul.mubr.f32.gmra.mrb[0].mxu0 %v5513
      %v5644 = vpop.f32.mrb[0].mxu0
      %v5645 = vadd.f32 0.0, %v5644
      %v5646 = vpop.f32.mrb[0].mxu0
      %5647 = vmatprep.mubr.f32.mxu0 0.0
      %5648 = vmatmul.mubr.f32.gmra.mrb[0].mxu0 %v5514
      %v5649 = vpop.f32.mrb[0].mxu0
      %v5650 = vadd.f32 0.0, %v5649
      %v5651 = vpop.f32.mrb[0].mxu0
      %5652 = vmatprep.mubr.f32.mxu0 0.0
      %5653 = vmatmul.mubr.f32.gmra.mrb[0].mxu0 %v5515
      %v5654 = vpop.f32.mrb[0].mxu0
      %v5655 = vadd.f32 0.0, %v5654
      %v5656 = vpop.f32.mrb[0].mxu0
      %5657 = vmatprep.mubr.f32.mxu0 0.0
      %5658 = vmatmul.mubr.f32.gmra.mrb[0].mxu0 %v5516
      %v5659 = vpop.f32.mrb[0].mxu0
      %v5660 = vadd.f32 0.0, %v5659
      %v5661 = vpop.f32.mrb[0].mxu0
      %5662 = vmatprep.mubr.f32.mxu0 0.0
      %5663 = vmatmul.mubr.f32.gmra.mrb[0].mxu0 %v5517
      %v5664 = vpop.f32.mrb[0].mxu0
      %v5665 = vadd.f32 0.0, %v5664
      %v5666 = vpop.f32.mrb[0].mxu0
      %5667 = vmatprep.mubr.f32.mxu0 0.0
      %5668 = vmatmul.mubr.f32.gmra.mrb[0].mxu0 %v5518
      %v5669 = vpop.f32.mrb[0].mxu0
      %v5670 = vadd.f32 0.0, %v5669
      %v5671 = vpop.f32.mrb[0].mxu0
      %5672 = vmatprep.mubr.f32.mxu0 0.0
      %5673 = vmatmul.mubr.f32.gmra.mrb[0].mxu0 %v5519
      %v5674 = vpop.f32.mrb[0].mxu0
      %v5675 = vadd.f32 0.0, %v5674
      %v5676 = vpop.f32.mrb[0].mxu0
      %5677 = vmatprep.mubr.f32.mxu0 0.0
      %5678 = vmatmul.mubr.f32.gmra.mrb[0].mxu0 %v5520
      %v5679 = vpop.f32.mrb[0].mxu0
      %v5680 = vadd.f32 0.0, %v5679
      %v5681 = vpop.f32.mrb[0].mxu0
      %5682 = vmatprep.mubr.f32.mxu0 0.0
      %5683 = vmatmul.mubr.f32.gmra.mrb[0].mxu0 %v5521
      %v5684 = vpop.f32.mrb[0].mxu0
      %v5685 = vadd.f32 0.0, %v5684
      %v5686 = vpop.f32.mrb[0].mxu0
      %5687 = vmatprep.mubr.f32.mxu0 0.0
      %5688 = vmatmul.mubr.f32.gmra.mrb[0].mxu0 %v5522
      %v5689 = vpop.f32.mrb[0].mxu0
      %v5690 = vadd.f32 0.0, %v5689
      %v5691 = vpop.f32.mrb[0].mxu0
      %5692 = vmatprep.mubr.f32.mxu0 0.0
      %5693 = vmatmul.mubr.f32.gmra.mrb[0].mxu0 %v5523
      %v5694 = vpop.f32.mrb[0].mxu0
      %v5695 = vadd.f32 0.0, %v5694
      %v5696 = vpop.f32.mrb[0].mxu0
      %5697 = vmatprep.mubr.f32.mxu0 0.0
      %5698 = vmatmul.mubr.f32.gmra.mrb[0].mxu0 %v5524
      %v5699 = vpop.f32.mrb[0].mxu0
      %v5700 = vadd.f32 0.0, %v5699
      %v5701 = vpop.f32.mrb[0].mxu0
      %5702 = vmatprep.mubr.f32.mxu0 0.0
      %5703 = vmatmul.mubr.f32.gmra.mrb[0].mxu0 %v5525
      %v5704 = vpop.f32.mrb[0].mxu0
      %v5705 = vadd.f32 0.0, %v5704
      %v5706 = vpop.f32.mrb[0].mxu0
      %5707 = vmatprep.mubr.f32.mxu0 0.0
      %5708 = vmatmul.mubr.f32.gmra.mrb[0].mxu0 %v5526
      %v5709 = vpop.f32.mrb[0].mxu0
      %v5710 = vadd.f32 0.0, %v5709
      %v5711 = vpop.f32.mrb[0].mxu0
      %5712 = vmatprep.mubr.f32.mxu0 0.0
      %5713 = vmatmul.mubr.f32.gmra.mrb[0].mxu0 %v5527
      %v5714 = vpop.f32.mrb[0].mxu0
      %v5715 = vadd.f32 0.0, %v5714
      %v5716 = vpop.f32.mrb[0].mxu0
      %5717 = vmatprep.mubr.f32.mxu0 0.0
      %5718 = vmatmul.mubr.f32.gmra.mrb[0].mxu0 %v5528
      %v5719 = vpop.f32.mrb[0].mxu0
      %v5720 = vadd.f32 0.0, %v5719
      %v5721 = vpop.f32.mrb[0].mxu0
      %5722 = vmatprep.mubr.f32.mxu0 0.0
      %5723 = vmatmul.mubr.f32.gmra.mrb[0].mxu0 %v5529
      %v5724 = vpop.f32.mrb[0].mxu0
      %v5725 = vadd.f32 0.0, %v5724
      %v5726 = vpop.f32.mrb[0].mxu0
      %5727 = vmatprep.mubr.f32.mxu0 0.0
      %5728 = vmatmul.mubr.f32.gmra.mrb[0].mxu0 %v5530
      %v5729 = vpop.f32.mrb[0].mxu0
      %v5730 = vadd.f32 0.0, %v5729
      %v5731 = vpop.f32.mrb[0].mxu0
      %5732 = vmatprep.mubr.f32.mxu0 0.0
      %5733 = vmatmul.mubr.f32.gmra.mrb[0].mxu0 %v5531
      %v5734 = vpop.f32.mrb[0].mxu0
      %v5735 = vadd.f32 0.0, %v5734
      %v5736 = vpop.f32.mrb[0].mxu0
      %5737 = vmatprep.mubr.f32.mxu0 0.0
      %5738 = vmatmul.mubr.f32.gmra.mrb[0].mxu0 %v5532
      %v5739 = vpop.f32.mrb[0].mxu0
      %v5740 = vadd.f32 0.0, %v5739
      %v5741 = vpop.f32.mrb[0].mxu0
      %5742 = vmatprep.mubr.f32.mxu0 0.0
      %5743 = vmatmul.mubr.f32.gmra.mrb[0].mxu0 %v5533
      %v5744 = vpop.f32.mrb[0].mxu0
      %v5745 = vadd.f32 0.0, %v5744
      %v5746 = vpop.f32.mrb[0].mxu0
      %5747 = vmatprep.mubr.f32.mxu0 0.0
      %5748 = vmatmul.mubr.f32.gmra.mrb[0].mxu0 %v5534
      %v5749 = vpop.f32.mrb[0].mxu0
      %v5750 = vadd.f32 0.0, %v5749
      %v5751 = vpop.f32.mrb[0].mxu0
      %5752 = vmatprep.mubr.f32.mxu0 0.0
      %5753 = vmatmul.mubr.f32.gmra.mrb[0].mxu0 %v5535
      %v5754 = vpop.f32.mrb[0].mxu0
      %v5755 = vadd.f32 0.0, %v5754
      %v5756 = vpop.f32.mrb[0].mxu0
      %5757 = vmatprep.mubr.f32.mxu0 0.0
      %5758 = vmatmul.mubr.f32.gmra.mrb[0].mxu0 %v5536
      %v5759 = vpop.f32.mrb[0].mxu0
      %v5760 = vadd.f32 0.0, %v5759
      %v5761 = vpop.f32.mrb[0].mxu0
      %5762 = vmatprep.mubr.f32.mxu0 0.0
      %5763 = vmatmul.mubr.f32.gmra.mrb[0].mxu0 %v5537
      %v5764 = vpop.f32.mrb[0].mxu0
      %v5765 = vadd.f32 0.0, %v5764
      %v5766 = vpop.f32.mrb[0].mxu0
      %5767 = vmatprep.mubr.f32.mxu0 0.0
      %5768 = vmatmul.mubr.f32.gmra.mrb[0].mxu0 %v5538
      %v5769 = vpop.f32.mrb[0].mxu0
      %v5770 = vadd.f32 0.0, %v5769
      %v5771 = vpop.f32.mrb[0].mxu0
      %5772 = vmatprep.mubr.f32.mxu0 0.0
      %5773 = vmatmul.mubr.f32.gmra.mrb[0].mxu0 %v5539
      %v5774 = vpop.f32.mrb[0].mxu0
      %v5775 = vadd.f32 0.0, %v5774
      %v5776 = vpop.f32.mrb[0].mxu0
      %5777 = vmatprep.mubr.f32.mxu0 0.0
      %5778 = vmatmul.mubr.f32.gmra.mrb[0].mxu0 %v5540
      %v5779 = vpop.f32.mrb[0].mxu0
      %v5780 = vadd.f32 0.0, %v5779
      %v5781 = vpop.f32.mrb[0].mxu0
      %5782 = vdwg.mxu0
      %v5783 = vadd.f32 %v5477, %v5625
      %v5784 = vadd.f32 %v5478, %v5630
      %v5785 = vadd.f32 %v5479, %v5635
      %v5786 = vadd.f32 %v5480, %v5640
      %v5787 = vadd.f32 %v5481, %v5645
      %v5788 = vadd.f32 %v5482, %v5650
      %v5789 = vadd.f32 %v5483, %v5655
      %v5790 = vadd.f32 %v5484, %v5660
      %v5791 = vadd.f32 %v5485, %v5665
      %v5792 = vadd.f32 %v5486, %v5670
      %v5793 = vadd.f32 %v5487, %v5675
      %v5794 = vadd.f32 %v5488, %v5680
      %v5795 = vadd.f32 %v5489, %v5685
      %v5796 = vadd.f32 %v5490, %v5690
      %v5797 = vadd.f32 %v5491, %v5695
      %v5798 = vadd.f32 %v5492, %v5700
      %v5799 = vadd.f32 %v5493, %v5705
      %v5800 = vadd.f32 %v5494, %v5710
      %v5801 = vadd.f32 %v5495, %v5715
      %v5802 = vadd.f32 %v5496, %v5720
      %v5803 = vadd.f32 %v5497, %v5725
      %v5804 = vadd.f32 %v5498, %v5730
      %v5805 = vadd.f32 %v5499, %v5735
      %v5806 = vadd.f32 %v5500, %v5740
      %v5807 = vadd.f32 %v5501, %v5745
      %v5808 = vadd.f32 %v5502, %v5750
      %v5809 = vadd.f32 %v5503, %v5755
      %v5810 = vadd.f32 %v5504, %v5760
      %v5811 = vadd.f32 %v5505, %v5765
      %v5812 = vadd.f32 %v5506, %v5770
      %v5813 = vadd.f32 %v5507, %v5775
      %v5814 = vadd.f32 %v5508, %v5780
      %v5815 = vld [vmem:[%s2410 + $0x2] sm:$0xff]
      %v5816 = vld [vmem:[%s2410 + $0xa] sm:$0xff]
      %v5817 = vld [vmem:[%s2410 + $0x1a] sm:$0xff]
      %v5818 = vld [vmem:[%s2410 + $0x22] sm:$0xff]
      %v5819 = vld [vmem:[%s2410 + $0x32] sm:$0xff]
      %v5820 = vld [vmem:[%s2410 + $0x3a] sm:$0xff]
      %v5821 = vld [vmem:[%s2410 + $0x4a] sm:$0xff]
      %v5822 = vld [vmem:[%s2410 + $0x52] sm:$0xff]
      %v5823 = vld [vmem:[%s2410 + $0x62] sm:$0xff]
      %v5824 = vld [vmem:[%s2410 + $0x6a] sm:$0xff]
      %v5825 = vld [vmem:[%s2410 + $0x7a] sm:$0xff]
      %v5826 = vld [vmem:[%s2410 + $0x82] sm:$0xff]
      %v5827 = vld [vmem:[%s2410 + $0x92] sm:$0xff]
      %v5828 = vld [vmem:[%s2410 + $0x9a] sm:$0xff]
      %v5829 = vld [vmem:[%s2410 + $0xaa] sm:$0xff]
      %v5830 = vld [vmem:[%s2410 + $0xb2] sm:$0xff]
      %v5831 = vld [vmem:[%s2410 + $0xc2] sm:$0xff]
      %v5832 = vld [vmem:[%s2410 + $0xca] sm:$0xff]
      %v5833 = vld [vmem:[%s2410 + $0xda] sm:$0xff]
      %v5834 = vld [vmem:[%s2410 + $0xe2] sm:$0xff]
      %v5835 = vld [vmem:[%s2410 + $0xf2] sm:$0xff]
      %v5836 = vld [vmem:[%s2410 + $0xfa] sm:$0xff]
      %v5837 = vld [vmem:[%s2410 + $0x10a] sm:$0xff]
      %v5838 = vld [vmem:[%s2410 + $0x112] sm:$0xff]
      %v5839 = vld [vmem:[%s2410 + $0x122] sm:$0xff]
      %v5840 = vld [vmem:[%s2410 + $0x12a] sm:$0xff]
      %v5841 = vld [vmem:[%s2410 + $0x13a] sm:$0xff]
      %v5842 = vld [vmem:[%s2410 + $0x142] sm:$0xff]
      %v5843 = vld [vmem:[%s2410 + $0x152] sm:$0xff]
      %v5844 = vld [vmem:[%s2410 + $0x15a] sm:$0xff]
      %v5845 = vld [vmem:[%s2410 + $0x16a] sm:$0xff]
      %v5846 = vld [vmem:[%s2410 + $0x172] sm:$0xff]
      %s5847 = scalar_lea.vmem %s4, 1024
      %v5848 = vld [vmem:[%s5847] sm:$0xff]
      %v5849 = vld [vmem:[%s5847 + $0x8] sm:$0xff]
      %v5850 = vld [vmem:[%s5847 + $0x10] sm:$0xff]
      %v5851 = vld [vmem:[%s5847 + $0x18] sm:$0xff]
      %v5852 = vld [vmem:[%s5847 + $0x20] sm:$0xff]
      %v5853 = vld [vmem:[%s5847 + $0x28] sm:$0xff]
      %v5854 = vld [vmem:[%s5847 + $0x30] sm:$0xff]
      %v5855 = vld [vmem:[%s5847 + $0x38] sm:$0xff]
      %v5856 = vld [vmem:[%s5847 + $0x40] sm:$0xff]
      %v5857 = vld [vmem:[%s5847 + $0x48] sm:$0xff]
      %v5858 = vld [vmem:[%s5847 + $0x50] sm:$0xff]
      %v5859 = vld [vmem:[%s5847 + $0x58] sm:$0xff]
      %v5860 = vld [vmem:[%s5847 + $0x60] sm:$0xff]
      %v5861 = vld [vmem:[%s5847 + $0x68] sm:$0xff]
      %v5862 = vld [vmem:[%s5847 + $0x70] sm:$0xff]
      %v5863 = vld [vmem:[%s5847 + $0x78] sm:$0xff]
      %5864 = vmatprep.subr.mxu0 0.0
      %5865 = vmatpush1.msra.mxu0 %v5848
      %5866 = vmatprep.subr.mxu0 0.0
      %5867 = vmatpush1.msra.mxu0 %v5849
      %5868 = vmatprep.subr.mxu0 0.0
      %5869 = vmatpush1.msra.mxu0 %v5850
      %5870 = vmatprep.subr.mxu0 0.0
      %5871 = vmatpush1.msra.mxu0 %v5851
      %5872 = vmatprep.subr.mxu0 0.0
      %5873 = vmatpush1.msra.mxu0 %v5852
      %5874 = vmatprep.subr.mxu0 0.0
      %5875 = vmatpush1.msra.mxu0 %v5853
      %5876 = vmatprep.subr.mxu0 0.0
      %5877 = vmatpush1.msra.mxu0 %v5854
      %5878 = vmatprep.subr.mxu0 0.0
      %5879 = vmatpush1.msra.mxu0 %v5855
      %5880 = vmatprep.subr.mxu0 0.0
      %5881 = vmatpush1.msra.mxu0 %v5856
      %5882 = vmatprep.subr.mxu0 0.0
      %5883 = vmatpush1.msra.mxu0 %v5857
      %5884 = vmatprep.subr.mxu0 0.0
      %5885 = vmatpush1.msra.mxu0 %v5858
      %5886 = vmatprep.subr.mxu0 0.0
      %5887 = vmatpush1.msra.mxu0 %v5859
      %5888 = vmatprep.subr.mxu0 0.0
      %5889 = vmatpush1.msra.mxu0 %v5860
      %5890 = vmatprep.subr.mxu0 0.0
      %5891 = vmatpush1.msra.mxu0 %v5861
      %5892 = vmatprep.subr.mxu0 0.0
      %5893 = vmatpush1.msra.mxu0 %v5862
      %5894 = vmatprep.subr.mxu0 0.0
      %5895 = vmatpush1.msra.mxu0 %v5863
      %5896 = vmatprep.subr.mxu0 0.0
      %5897 = vmatpush1.msra.mxu0 0.0
      %5898 = vmatprep.subr.mxu0 0.0
      %5899 = vmatpush1.msra.mxu0 0.0
      %5900 = vmatprep.subr.mxu0 0.0
      %5901 = vmatpush1.msra.mxu0 0.0
      %5902 = vmatprep.subr.mxu0 0.0
      %5903 = vmatpush1.msra.mxu0 0.0
      %5904 = vmatprep.subr.mxu0 0.0
      %5905 = vmatpush1.msra.mxu0 0.0
      %5906 = vmatprep.subr.mxu0 0.0
      %5907 = vmatpush1.msra.mxu0 0.0
      %5908 = vmatprep.subr.mxu0 0.0
      %5909 = vmatpush1.msra.mxu0 0.0
      %5910 = vmatprep.subr.mxu0 0.0
      %5911 = vmatpush1.msra.mxu0 0.0
      %5912 = vmatprep.subr.mxu0 0.0
      %5913 = vmatpush1.msra.mxu0 0.0
      %5914 = vmatprep.subr.mxu0 0.0
      %5915 = vmatpush1.msra.mxu0 0.0
      %5916 = vmatprep.subr.mxu0 0.0
      %5917 = vmatpush1.msra.mxu0 0.0
      %5918 = vmatprep.subr.mxu0 0.0
      %5919 = vmatpush1.msra.mxu0 0.0
      %5920 = vmatprep.subr.mxu0 0.0
      %5921 = vmatpush1.msra.mxu0 0.0
      %5922 = vmatprep.subr.mxu0 0.0
      %5923 = vmatpush1.msra.mxu0 0.0
      %5924 = vmatprep.subr.mxu0 0.0
      %5925 = vmatpush1.msra.mxu0 0.0
      %5926 = vmatprep.subr.mxu0 0.0
      %5927 = vmatpush1.msra.mxu0 0.0
      %5928 = vmatprep.mubr.f32.mxu0 0.0
      %5929 = vmatmul.mubr.f32.gmra.mrb[0].mxu0 %v5815
      %v5930 = vpop.f32.mrb[0].mxu0
      %v5931 = vadd.f32 0.0, %v5930
      %v5932 = vpop.f32.mrb[0].mxu0
      %5933 = vmatprep.mubr.f32.mxu0 0.0
      %5934 = vmatmul.mubr.f32.gmra.mrb[0].mxu0 %v5816
      %v5935 = vpop.f32.mrb[0].mxu0
      %v5936 = vadd.f32 0.0, %v5935
      %v5937 = vpop.f32.mrb[0].mxu0
      %5938 = vmatprep.mubr.f32.mxu0 0.0
      %5939 = vmatmul.mubr.f32.gmra.mrb[0].mxu0 %v5817
      %v5940 = vpop.f32.mrb[0].mxu0
      %v5941 = vadd.f32 0.0, %v5940
      %v5942 = vpop.f32.mrb[0].mxu0
      %5943 = vmatprep.mubr.f32.mxu0 0.0
      %5944 = vmatmul.mubr.f32.gmra.mrb[0].mxu0 %v5818
      %v5945 = vpop.f32.mrb[0].mxu0
      %v5946 = vadd.f32 0.0, %v5945
      %v5947 = vpop.f32.mrb[0].mxu0
      %5948 = vmatprep.mubr.f32.mxu0 0.0
      %5949 = vmatmul.mubr.f32.gmra.mrb[0].mxu0 %v5819
      %v5950 = vpop.f32.mrb[0].mxu0
      %v5951 = vadd.f32 0.0, %v5950
      %v5952 = vpop.f32.mrb[0].mxu0
      %5953 = vmatprep.mubr.f32.mxu0 0.0
      %5954 = vmatmul.mubr.f32.gmra.mrb[0].mxu0 %v5820
      %v5955 = vpop.f32.mrb[0].mxu0
      %v5956 = vadd.f32 0.0, %v5955
      %v5957 = vpop.f32.mrb[0].mxu0
      %5958 = vmatprep.mubr.f32.mxu0 0.0
      %5959 = vmatmul.mubr.f32.gmra.mrb[0].mxu0 %v5821
      %v5960 = vpop.f32.mrb[0].mxu0
      %v5961 = vadd.f32 0.0, %v5960
      %v5962 = vpop.f32.mrb[0].mxu0
      %5963 = vmatprep.mubr.f32.mxu0 0.0
      %5964 = vmatmul.mubr.f32.gmra.mrb[0].mxu0 %v5822
      %v5965 = vpop.f32.mrb[0].mxu0
      %v5966 = vadd.f32 0.0, %v5965
      %v5967 = vpop.f32.mrb[0].mxu0
      %5968 = vmatprep.mubr.f32.mxu0 0.0
      %5969 = vmatmul.mubr.f32.gmra.mrb[0].mxu0 %v5823
      %v5970 = vpop.f32.mrb[0].mxu0
      %v5971 = vadd.f32 0.0, %v5970
      %v5972 = vpop.f32.mrb[0].mxu0
      %5973 = vmatprep.mubr.f32.mxu0 0.0
      %5974 = vmatmul.mubr.f32.gmra.mrb[0].mxu0 %v5824
      %v5975 = vpop.f32.mrb[0].mxu0
      %v5976 = vadd.f32 0.0, %v5975
      %v5977 = vpop.f32.mrb[0].mxu0
      %5978 = vmatprep.mubr.f32.mxu0 0.0
      %5979 = vmatmul.mubr.f32.gmra.mrb[0].mxu0 %v5825
      %v5980 = vpop.f32.mrb[0].mxu0
      %v5981 = vadd.f32 0.0, %v5980
      %v5982 = vpop.f32.mrb[0].mxu0
      %5983 = vmatprep.mubr.f32.mxu0 0.0
      %5984 = vmatmul.mubr.f32.gmra.mrb[0].mxu0 %v5826
      %v5985 = vpop.f32.mrb[0].mxu0
      %v5986 = vadd.f32 0.0, %v5985
      %v5987 = vpop.f32.mrb[0].mxu0
      %5988 = vmatprep.mubr.f32.mxu0 0.0
      %5989 = vmatmul.mubr.f32.gmra.mrb[0].mxu0 %v5827
      %v5990 = vpop.f32.mrb[0].mxu0
      %v5991 = vadd.f32 0.0, %v5990
      %v5992 = vpop.f32.mrb[0].mxu0
      %5993 = vmatprep.mubr.f32.mxu0 0.0
      %5994 = vmatmul.mubr.f32.gmra.mrb[0].mxu0 %v5828
      %v5995 = vpop.f32.mrb[0].mxu0
      %v5996 = vadd.f32 0.0, %v5995
      %v5997 = vpop.f32.mrb[0].mxu0
      %5998 = vmatprep.mubr.f32.mxu0 0.0
      %5999 = vmatmul.mubr.f32.gmra.mrb[0].mxu0 %v5829
      %v6000 = vpop.f32.mrb[0].mxu0
      %v6001 = vadd.f32 0.0, %v6000
      %v6002 = vpop.f32.mrb[0].mxu0
      %6003 = vmatprep.mubr.f32.mxu0 0.0
      %6004 = vmatmul.mubr.f32.gmra.mrb[0].mxu0 %v5830
      %v6005 = vpop.f32.mrb[0].mxu0
      %v6006 = vadd.f32 0.0, %v6005
      %v6007 = vpop.f32.mrb[0].mxu0
      %6008 = vmatprep.mubr.f32.mxu0 0.0
      %6009 = vmatmul.mubr.f32.gmra.mrb[0].mxu0 %v5831
      %v6010 = vpop.f32.mrb[0].mxu0
      %v6011 = vadd.f32 0.0, %v6010
      %v6012 = vpop.f32.mrb[0].mxu0
      %6013 = vmatprep.mubr.f32.mxu0 0.0
      %6014 = vmatmul.mubr.f32.gmra.mrb[0].mxu0 %v5832
      %v6015 = vpop.f32.mrb[0].mxu0
      %v6016 = vadd.f32 0.0, %v6015
      %v6017 = vpop.f32.mrb[0].mxu0
      %6018 = vmatprep.mubr.f32.mxu0 0.0
      %6019 = vmatmul.mubr.f32.gmra.mrb[0].mxu0 %v5833
      %v6020 = vpop.f32.mrb[0].mxu0
      %v6021 = vadd.f32 0.0, %v6020
      %v6022 = vpop.f32.mrb[0].mxu0
      %6023 = vmatprep.mubr.f32.mxu0 0.0
      %6024 = vmatmul.mubr.f32.gmra.mrb[0].mxu0 %v5834
      %v6025 = vpop.f32.mrb[0].mxu0
      %v6026 = vadd.f32 0.0, %v6025
      %v6027 = vpop.f32.mrb[0].mxu0
      %6028 = vmatprep.mubr.f32.mxu0 0.0
      %6029 = vmatmul.mubr.f32.gmra.mrb[0].mxu0 %v5835
      %v6030 = vpop.f32.mrb[0].mxu0
      %v6031 = vadd.f32 0.0, %v6030
      %v6032 = vpop.f32.mrb[0].mxu0
      %6033 = vmatprep.mubr.f32.mxu0 0.0
      %6034 = vmatmul.mubr.f32.gmra.mrb[0].mxu0 %v5836
      %v6035 = vpop.f32.mrb[0].mxu0
      %v6036 = vadd.f32 0.0, %v6035
      %v6037 = vpop.f32.mrb[0].mxu0
      %6038 = vmatprep.mubr.f32.mxu0 0.0
      %6039 = vmatmul.mubr.f32.gmra.mrb[0].mxu0 %v5837
      %v6040 = vpop.f32.mrb[0].mxu0
      %v6041 = vadd.f32 0.0, %v6040
      %v6042 = vpop.f32.mrb[0].mxu0
      %6043 = vmatprep.mubr.f32.mxu0 0.0
      %6044 = vmatmul.mubr.f32.gmra.mrb[0].mxu0 %v5838
      %v6045 = vpop.f32.mrb[0].mxu0
      %v6046 = vadd.f32 0.0, %v6045
      %v6047 = vpop.f32.mrb[0].mxu0
      %6048 = vmatprep.mubr.f32.mxu0 0.0
      %6049 = vmatmul.mubr.f32.gmra.mrb[0].mxu0 %v5839
      %v6050 = vpop.f32.mrb[0].mxu0
      %v6051 = vadd.f32 0.0, %v6050
      %v6052 = vpop.f32.mrb[0].mxu0
      %6053 = vmatprep.mubr.f32.mxu0 0.0
      %6054 = vmatmul.mubr.f32.gmra.mrb[0].mxu0 %v5840
      %v6055 = vpop.f32.mrb[0].mxu0
      %v6056 = vadd.f32 0.0, %v6055
      %v6057 = vpop.f32.mrb[0].mxu0
      %6058 = vmatprep.mubr.f32.mxu0 0.0
      %6059 = vmatmul.mubr.f32.gmra.mrb[0].mxu0 %v5841
      %v6060 = vpop.f32.mrb[0].mxu0
      %v6061 = vadd.f32 0.0, %v6060
      %v6062 = vpop.f32.mrb[0].mxu0
      %6063 = vmatprep.mubr.f32.mxu0 0.0
      %6064 = vmatmul.mubr.f32.gmra.mrb[0].mxu0 %v5842
      %v6065 = vpop.f32.mrb[0].mxu0
      %v6066 = vadd.f32 0.0, %v6065
      %v6067 = vpop.f32.mrb[0].mxu0
      %6068 = vmatprep.mubr.f32.mxu0 0.0
      %6069 = vmatmul.mubr.f32.gmra.mrb[0].mxu0 %v5843
      %v6070 = vpop.f32.mrb[0].mxu0
      %v6071 = vadd.f32 0.0, %v6070
      %v6072 = vpop.f32.mrb[0].mxu0
      %6073 = vmatprep.mubr.f32.mxu0 0.0
      %6074 = vmatmul.mubr.f32.gmra.mrb[0].mxu0 %v5844
      %v6075 = vpop.f32.mrb[0].mxu0
      %v6076 = vadd.f32 0.0, %v6075
      %v6077 = vpop.f32.mrb[0].mxu0
      %6078 = vmatprep.mubr.f32.mxu0 0.0
      %6079 = vmatmul.mubr.f32.gmra.mrb[0].mxu0 %v5845
      %v6080 = vpop.f32.mrb[0].mxu0
      %v6081 = vadd.f32 0.0, %v6080
      %v6082 = vpop.f32.mrb[0].mxu0
      %6083 = vmatprep.mubr.f32.mxu0 0.0
      %6084 = vmatmul.mubr.f32.gmra.mrb[0].mxu0 %v5846
      %v6085 = vpop.f32.mrb[0].mxu0
      %v6086 = vadd.f32 0.0, %v6085
      %v6087 = vpop.f32.mrb[0].mxu0
      %6088 = vdwg.mxu0
      %v6089 = vadd.f32 %v5783, %v5931
      %v6090 = vadd.f32 %v5784, %v5936
      %v6091 = vadd.f32 %v5785, %v5941
      %v6092 = vadd.f32 %v5786, %v5946
      %v6093 = vadd.f32 %v5787, %v5951
      %v6094 = vadd.f32 %v5788, %v5956
      %v6095 = vadd.f32 %v5789, %v5961
      %v6096 = vadd.f32 %v5790, %v5966
      %v6097 = vadd.f32 %v5791, %v5971
      %v6098 = vadd.f32 %v5792, %v5976
      %v6099 = vadd.f32 %v5793, %v5981
      %v6100 = vadd.f32 %v5794, %v5986
      %v6101 = vadd.f32 %v5795, %v5991
      %v6102 = vadd.f32 %v5796, %v5996
      %v6103 = vadd.f32 %v5797, %v6001
      %v6104 = vadd.f32 %v5798, %v6006
      %v6105 = vadd.f32 %v5799, %v6011
      %v6106 = vadd.f32 %v5800, %v6016
      %v6107 = vadd.f32 %v5801, %v6021
      %v6108 = vadd.f32 %v5802, %v6026
      %v6109 = vadd.f32 %v5803, %v6031
      %v6110 = vadd.f32 %v5804, %v6036
      %v6111 = vadd.f32 %v5805, %v6041
      %v6112 = vadd.f32 %v5806, %v6046
      %v6113 = vadd.f32 %v5807, %v6051
      %v6114 = vadd.f32 %v5808, %v6056
      %v6115 = vadd.f32 %v5809, %v6061
      %v6116 = vadd.f32 %v5810, %v6066
      %v6117 = vadd.f32 %v5811, %v6071
      %v6118 = vadd.f32 %v5812, %v6076
      %v6119 = vadd.f32 %v5813, %v6081
      %v6120 = vadd.f32 %v5814, %v6086
      %v6121 = vld [vmem:[%s5] sm:$0x1]
      %v6123 = vlaneseq
      %v6124 = vshrl.u32 %v6123, 7
      %v6125 = vsub.s32 0, %v6124
      %v6126 = vrot.slane %v6121, %v6125
      %v6128 = vadd.f32 %v6089, %v6126
      %v6129 = vadd.f32 %v6090, %v6126
      %v6130 = vadd.f32 %v6091, %v6126
      %v6131 = vadd.f32 %v6092, %v6126
      %v6132 = vadd.f32 %v6093, %v6126
      %v6133 = vadd.f32 %v6094, %v6126
      %v6134 = vadd.f32 %v6095, %v6126
      %v6135 = vadd.f32 %v6096, %v6126
      %v6136 = vadd.f32 %v6097, %v6126
      %v6137 = vadd.f32 %v6098, %v6126
      %v6138 = vadd.f32 %v6099, %v6126
      %v6139 = vadd.f32 %v6100, %v6126
      %v6140 = vadd.f32 %v6101, %v6126
      %v6141 = vadd.f32 %v6102, %v6126
      %v6142 = vadd.f32 %v6103, %v6126
      %v6143 = vadd.f32 %v6104, %v6126
      %v6144 = vadd.f32 %v6105, %v6126
      %v6145 = vadd.f32 %v6106, %v6126
      %v6146 = vadd.f32 %v6107, %v6126
      %v6147 = vadd.f32 %v6108, %v6126
      %v6148 = vadd.f32 %v6109, %v6126
      %v6149 = vadd.f32 %v6110, %v6126
      %v6150 = vadd.f32 %v6111, %v6126
      %v6151 = vadd.f32 %v6112, %v6126
      %v6152 = vadd.f32 %v6113, %v6126
      %v6153 = vadd.f32 %v6114, %v6126
      %v6154 = vadd.f32 %v6115, %v6126
      %v6155 = vadd.f32 %v6116, %v6126
      %v6156 = vadd.f32 %v6117, %v6126
      %v6157 = vadd.f32 %v6118, %v6126
      %v6158 = vadd.f32 %v6119, %v6126
      %v6159 = vadd.f32 %v6120, %v6126
      %v6160 = vmax.f32 %v6128, 0.0
      %v6161 = vmax.f32 %v6129, 0.0
      %v6162 = vmax.f32 %v6130, 0.0
      %v6163 = vmax.f32 %v6131, 0.0
      %v6164 = vmax.f32 %v6132, 0.0
      %v6165 = vmax.f32 %v6133, 0.0
      %v6166 = vmax.f32 %v6134, 0.0
      %v6167 = vmax.f32 %v6135, 0.0
      %v6168 = vmax.f32 %v6136, 0.0
      %v6169 = vmax.f32 %v6137, 0.0
      %v6170 = vmax.f32 %v6138, 0.0
      %v6171 = vmax.f32 %v6139, 0.0
      %v6172 = vmax.f32 %v6140, 0.0
      %v6173 = vmax.f32 %v6141, 0.0
      %v6174 = vmax.f32 %v6142, 0.0
      %v6175 = vmax.f32 %v6143, 0.0
      %v6176 = vmax.f32 %v6144, 0.0
      %v6177 = vmax.f32 %v6145, 0.0
      %v6178 = vmax.f32 %v6146, 0.0
      %v6179 = vmax.f32 %v6147, 0.0
      %v6180 = vmax.f32 %v6148, 0.0
      %v6181 = vmax.f32 %v6149, 0.0
      %v6182 = vmax.f32 %v6150, 0.0
      %v6183 = vmax.f32 %v6151, 0.0
      %v6184 = vmax.f32 %v6152, 0.0
      %v6185 = vmax.f32 %v6153, 0.0
      %v6186 = vmax.f32 %v6154, 0.0
      %v6187 = vmax.f32 %v6155, 0.0
      %v6188 = vmax.f32 %v6156, 0.0
      %v6189 = vmax.f32 %v6157, 0.0
      %v6190 = vmax.f32 %v6158, 0.0
      %v6191 = vmax.f32 %v6159, 0.0
      %6192 = vst [vmem:[%s412 + $0x1] sm:$0xff] %v6160
      %6193 = vst [vmem:[%s412 + $0x9] sm:$0xff] %v6161
      %6194 = vst [vmem:[%s412 + $0x19] sm:$0xff] %v6162
      %6195 = vst [vmem:[%s412 + $0x21] sm:$0xff] %v6163
      %6196 = vst [vmem:[%s412 + $0x31] sm:$0xff] %v6164
      %6197 = vst [vmem:[%s412 + $0x39] sm:$0xff] %v6165
      %6198 = vst [vmem:[%s412 + $0x49] sm:$0xff] %v6166
      %6199 = vst [vmem:[%s412 + $0x51] sm:$0xff] %v6167
      %6200 = vst [vmem:[%s412 + $0x61] sm:$0xff] %v6168
      %6201 = vst [vmem:[%s412 + $0x69] sm:$0xff] %v6169
      %6202 = vst [vmem:[%s412 + $0x79] sm:$0xff] %v6170
      %6203 = vst [vmem:[%s412 + $0x81] sm:$0xff] %v6171
      %6204 = vst [vmem:[%s412 + $0x91] sm:$0xff] %v6172
      %6205 = vst [vmem:[%s412 + $0x99] sm:$0xff] %v6173
      %6206 = vst [vmem:[%s412 + $0xa9] sm:$0xff] %v6174
      %6207 = vst [vmem:[%s412 + $0xb1] sm:$0xff] %v6175
      %6208 = vst [vmem:[%s412 + $0xc1] sm:$0xff] %v6176
      %6209 = vst [vmem:[%s412 + $0xc9] sm:$0xff] %v6177
      %6210 = vst [vmem:[%s412 + $0xd9] sm:$0xff] %v6178
      %6211 = vst [vmem:[%s412 + $0xe1] sm:$0xff] %v6179
      %6212 = vst [vmem:[%s412 + $0xf1] sm:$0xff] %v6180
      %6213 = vst [vmem:[%s412 + $0xf9] sm:$0xff] %v6181
      %6214 = vst [vmem:[%s412 + $0x109] sm:$0xff] %v6182
      %6215 = vst [vmem:[%s412 + $0x111] sm:$0xff] %v6183
      %6216 = vst [vmem:[%s412 + $0x121] sm:$0xff] %v6184
      %6217 = vst [vmem:[%s412 + $0x129] sm:$0xff] %v6185
      %6218 = vst [vmem:[%s412 + $0x139] sm:$0xff] %v6186
      %6219 = vst [vmem:[%s412 + $0x141] sm:$0xff] %v6187
      %6220 = vst [vmem:[%s412 + $0x151] sm:$0xff] %v6188
      %6221 = vst [vmem:[%s412 + $0x159] sm:$0xff] %v6189
      %6222 = vst [vmem:[%s412 + $0x169] sm:$0xff] %v6190
      %6223 = vst [vmem:[%s412 + $0x171] sm:$0xff] %v6191
      %v6224 = vld [vmem:[#allocation2] sm:$0xff]
      %v6225 = vld [vmem:[#allocation2 + $0x8] sm:$0xff]
      %v6226 = vld [vmem:[#allocation2 + $0x18] sm:$0xff]
      %v6227 = vld [vmem:[#allocation2 + $0x20] sm:$0xff]
      %v6228 = vld [vmem:[#allocation2 + $0x30] sm:$0xff]
      %v6229 = vld [vmem:[#allocation2 + $0x38] sm:$0xff]
      %v6230 = vld [vmem:[#allocation2 + $0x48] sm:$0xff]
      %v6231 = vld [vmem:[#allocation2 + $0x50] sm:$0xff]
      %v6232 = vld [vmem:[#allocation2 + $0x60] sm:$0xff]
      %v6233 = vld [vmem:[#allocation2 + $0x68] sm:$0xff]
      %v6234 = vld [vmem:[#allocation2 + $0x78] sm:$0xff]
      %v6235 = vld [vmem:[#allocation2 + $0x80] sm:$0xff]
      %v6236 = vld [vmem:[#allocation2 + $0x90] sm:$0xff]
      %v6237 = vld [vmem:[#allocation2 + $0x98] sm:$0xff]
      %v6238 = vld [vmem:[#allocation2 + $0xa8] sm:$0xff]
      %v6239 = vld [vmem:[#allocation2 + $0xb0] sm:$0xff]
      %v6240 = vld [vmem:[#allocation2 + $0xc0] sm:$0xff]
      %v6241 = vld [vmem:[#allocation2 + $0xc8] sm:$0xff]
      %v6242 = vld [vmem:[#allocation2 + $0xd8] sm:$0xff]
      %v6243 = vld [vmem:[#allocation2 + $0xe0] sm:$0xff]
      %v6244 = vld [vmem:[#allocation2 + $0xf0] sm:$0xff]
      %v6245 = vld [vmem:[#allocation2 + $0xf8] sm:$0xff]
      %v6246 = vld [vmem:[#allocation2 + $0x108] sm:$0xff]
      %v6247 = vld [vmem:[#allocation2 + $0x110] sm:$0xff]
      %v6248 = vld [vmem:[#allocation2 + $0x120] sm:$0xff]
      %v6249 = vld [vmem:[#allocation2 + $0x128] sm:$0xff]
      %v6250 = vld [vmem:[#allocation2 + $0x138] sm:$0xff]
      %v6251 = vld [vmem:[#allocation2 + $0x140] sm:$0xff]
      %v6252 = vld [vmem:[#allocation2 + $0x150] sm:$0xff]
      %v6253 = vld [vmem:[#allocation2 + $0x158] sm:$0xff]
      %v6254 = vld [vmem:[#allocation2 + $0x168] sm:$0xff]
      %v6255 = vld [vmem:[#allocation2 + $0x170] sm:$0xff]
      %v6256 = vld [vmem:[%s6] sm:$0xff]
      %v6257 = vld [vmem:[%s6 + $0x8] sm:$0xff]
      %v6258 = vld [vmem:[%s6 + $0x10] sm:$0xff]
      %v6259 = vld [vmem:[%s6 + $0x18] sm:$0xff]
      %v6260 = vld [vmem:[%s6 + $0x20] sm:$0xff]
      %v6261 = vld [vmem:[%s6 + $0x28] sm:$0xff]
      %v6262 = vld [vmem:[%s6 + $0x30] sm:$0xff]
      %v6263 = vld [vmem:[%s6 + $0x38] sm:$0xff]
      %v6264 = vld [vmem:[%s6 + $0x40] sm:$0xff]
      %v6265 = vld [vmem:[%s6 + $0x48] sm:$0xff]
      %v6266 = vld [vmem:[%s6 + $0x50] sm:$0xff]
      %v6267 = vld [vmem:[%s6 + $0x58] sm:$0xff]
      %v6268 = vld [vmem:[%s6 + $0x60] sm:$0xff]
      %v6269 = vld [vmem:[%s6 + $0x68] sm:$0xff]
      %v6270 = vld [vmem:[%s6 + $0x70] sm:$0xff]
      %v6271 = vld [vmem:[%s6 + $0x78] sm:$0xff]
      %v6272 = vld [vmem:[#allocation2 + $0x1] sm:$0xff]
      %v6273 = vld [vmem:[#allocation2 + $0x9] sm:$0xff]
      %v6274 = vld [vmem:[#allocation2 + $0x19] sm:$0xff]
      %v6275 = vld [vmem:[#allocation2 + $0x21] sm:$0xff]
      %v6276 = vld [vmem:[#allocation2 + $0x31] sm:$0xff]
      %v6277 = vld [vmem:[#allocation2 + $0x39] sm:$0xff]
      %v6278 = vld [vmem:[#allocation2 + $0x49] sm:$0xff]
      %v6279 = vld [vmem:[#allocation2 + $0x51] sm:$0xff]
      %v6280 = vld [vmem:[#allocation2 + $0x61] sm:$0xff]
      %v6281 = vld [vmem:[#allocation2 + $0x69] sm:$0xff]
      %v6282 = vld [vmem:[#allocation2 + $0x79] sm:$0xff]
      %v6283 = vld [vmem:[#allocation2 + $0x81] sm:$0xff]
      %v6284 = vld [vmem:[#allocation2 + $0x91] sm:$0xff]
      %v6285 = vld [vmem:[#allocation2 + $0x99] sm:$0xff]
      %v6286 = vld [vmem:[#allocation2 + $0xa9] sm:$0xff]
      %v6287 = vld [vmem:[#allocation2 + $0xb1] sm:$0xff]
      %v6288 = vld [vmem:[#allocation2 + $0xc1] sm:$0xff]
      %v6289 = vld [vmem:[#allocation2 + $0xc9] sm:$0xff]
      %v6290 = vld [vmem:[#allocation2 + $0xd9] sm:$0xff]
      %v6291 = vld [vmem:[#allocation2 + $0xe1] sm:$0xff]
      %v6292 = vld [vmem:[#allocation2 + $0xf1] sm:$0xff]
      %v6293 = vld [vmem:[#allocation2 + $0xf9] sm:$0xff]
      %v6294 = vld [vmem:[#allocation2 + $0x109] sm:$0xff]
      %v6295 = vld [vmem:[#allocation2 + $0x111] sm:$0xff]
      %v6296 = vld [vmem:[#allocation2 + $0x121] sm:$0xff]
      %v6297 = vld [vmem:[#allocation2 + $0x129] sm:$0xff]
      %v6298 = vld [vmem:[#allocation2 + $0x139] sm:$0xff]
      %v6299 = vld [vmem:[#allocation2 + $0x141] sm:$0xff]
      %v6300 = vld [vmem:[#allocation2 + $0x151] sm:$0xff]
      %v6301 = vld [vmem:[#allocation2 + $0x159] sm:$0xff]
      %v6302 = vld [vmem:[#allocation2 + $0x169] sm:$0xff]
      %v6303 = vld [vmem:[#allocation2 + $0x171] sm:$0xff]
      %s6304 = scalar_lea.vmem %s6, 128
      %v6305 = vld [vmem:[%s6304] sm:$0xff]
      %v6306 = vld [vmem:[%s6304 + $0x8] sm:$0xff]
      %v6307 = vld [vmem:[%s6304 + $0x10] sm:$0xff]
      %v6308 = vld [vmem:[%s6304 + $0x18] sm:$0xff]
      %v6309 = vld [vmem:[%s6304 + $0x20] sm:$0xff]
      %v6310 = vld [vmem:[%s6304 + $0x28] sm:$0xff]
      %v6311 = vld [vmem:[%s6304 + $0x30] sm:$0xff]
      %v6312 = vld [vmem:[%s6304 + $0x38] sm:$0xff]
      %v6313 = vld [vmem:[%s6304 + $0x40] sm:$0xff]
      %v6314 = vld [vmem:[%s6304 + $0x48] sm:$0xff]
      %v6315 = vld [vmem:[%s6304 + $0x50] sm:$0xff]
      %v6316 = vld [vmem:[%s6304 + $0x58] sm:$0xff]
      %v6317 = vld [vmem:[%s6304 + $0x60] sm:$0xff]
      %v6318 = vld [vmem:[%s6304 + $0x68] sm:$0xff]
      %v6319 = vld [vmem:[%s6304 + $0x70] sm:$0xff]
      %v6320 = vld [vmem:[%s6304 + $0x78] sm:$0xff]
      %6321 = vmatprep.subr.mxu0 0.0
      %6322 = vmatpush1.msra.mxu0 %v6305
      %6323 = vmatprep.subr.mxu0 0.0
      %6324 = vmatpush1.msra.mxu0 %v6306
      %6325 = vmatprep.subr.mxu0 0.0
      %6326 = vmatpush1.msra.mxu0 %v6307
      %6327 = vmatprep.subr.mxu0 0.0
      %6328 = vmatpush1.msra.mxu0 %v6308
      %6329 = vmatprep.subr.mxu0 0.0
      %6330 = vmatpush1.msra.mxu0 %v6309
      %6331 = vmatprep.subr.mxu0 0.0
      %6332 = vmatpush1.msra.mxu0 %v6310
      %6333 = vmatprep.subr.mxu0 0.0
      %6334 = vmatpush1.msra.mxu0 %v6311
      %6335 = vmatprep.subr.mxu0 0.0
      %6336 = vmatpush1.msra.mxu0 %v6312
      %6337 = vmatprep.subr.mxu0 0.0
      %6338 = vmatpush1.msra.mxu0 %v6313
      %6339 = vmatprep.subr.mxu0 0.0
      %6340 = vmatpush1.msra.mxu0 %v6314
      %6341 = vmatprep.subr.mxu0 0.0
      %6342 = vmatpush1.msra.mxu0 %v6315
      %6343 = vmatprep.subr.mxu0 0.0
      %6344 = vmatpush1.msra.mxu0 %v6316
      %6345 = vmatprep.subr.mxu0 0.0
      %6346 = vmatpush1.msra.mxu0 %v6317
      %6347 = vmatprep.subr.mxu0 0.0
      %6348 = vmatpush1.msra.mxu0 %v6318
      %6349 = vmatprep.subr.mxu0 0.0
      %6350 = vmatpush1.msra.mxu0 %v6319
      %6351 = vmatprep.subr.mxu0 0.0
      %6352 = vmatpush1.msra.mxu0 %v6320
      %6353 = vmatprep.subr.mxu0 0.0
      %6354 = vmatpush1.msra.mxu0 0.0
      %6355 = vmatprep.subr.mxu0 0.0
      %6356 = vmatpush1.msra.mxu0 0.0
      %6357 = vmatprep.subr.mxu0 0.0
      %6358 = vmatpush1.msra.mxu0 0.0
      %6359 = vmatprep.subr.mxu0 0.0
      %6360 = vmatpush1.msra.mxu0 0.0
      %6361 = vmatprep.subr.mxu0 0.0
      %6362 = vmatpush1.msra.mxu0 0.0
      %6363 = vmatprep.subr.mxu0 0.0
      %6364 = vmatpush1.msra.mxu0 0.0
      %6365 = vmatprep.subr.mxu0 0.0
      %6366 = vmatpush1.msra.mxu0 0.0
      %6367 = vmatprep.subr.mxu0 0.0
      %6368 = vmatpush1.msra.mxu0 0.0
      %6369 = vmatprep.subr.mxu0 0.0
      %6370 = vmatpush1.msra.mxu0 0.0
      %6371 = vmatprep.subr.mxu0 0.0
      %6372 = vmatpush1.msra.mxu0 0.0
      %6373 = vmatprep.subr.mxu0 0.0
      %6374 = vmatpush1.msra.mxu0 0.0
      %6375 = vmatprep.subr.mxu0 0.0
      %6376 = vmatpush1.msra.mxu0 0.0
      %6377 = vmatprep.subr.mxu0 0.0
      %6378 = vmatpush1.msra.mxu0 0.0
      %6379 = vmatprep.subr.mxu0 0.0
      %6380 = vmatpush1.msra.mxu0 0.0
      %6381 = vmatprep.subr.mxu0 0.0
      %6382 = vmatpush1.msra.mxu0 0.0
      %6383 = vmatprep.subr.mxu0 0.0
      %6384 = vmatpush1.msra.mxu0 0.0
      %6385 = vmatprep.mubr.f32.mxu0 0.0
      %6386 = vmatmul.mubr.f32.gmra.mrb[0].mxu0 %v6272
      %v6387 = vpop.f32.mrb[0].mxu0
      %v6388 = vadd.f32 0.0, %v6387
      %v6389 = vpop.f32.mrb[0].mxu0
      %6390 = vmatprep.mubr.f32.mxu0 0.0
      %6391 = vmatmul.mubr.f32.gmra.mrb[0].mxu0 %v6273
      %v6392 = vpop.f32.mrb[0].mxu0
      %v6393 = vadd.f32 0.0, %v6392
      %v6394 = vpop.f32.mrb[0].mxu0
      %6395 = vmatprep.mubr.f32.mxu0 0.0
      %6396 = vmatmul.mubr.f32.gmra.mrb[0].mxu0 %v6274
      %v6397 = vpop.f32.mrb[0].mxu0
      %v6398 = vadd.f32 0.0, %v6397
      %v6399 = vpop.f32.mrb[0].mxu0
      %6400 = vmatprep.mubr.f32.mxu0 0.0
      %6401 = vmatmul.mubr.f32.gmra.mrb[0].mxu0 %v6275
      %v6402 = vpop.f32.mrb[0].mxu0
      %v6403 = vadd.f32 0.0, %v6402
      %v6404 = vpop.f32.mrb[0].mxu0
      %6405 = vmatprep.mubr.f32.mxu0 0.0
      %6406 = vmatmul.mubr.f32.gmra.mrb[0].mxu0 %v6276
      %v6407 = vpop.f32.mrb[0].mxu0
      %v6408 = vadd.f32 0.0, %v6407
      %v6409 = vpop.f32.mrb[0].mxu0
      %6410 = vmatprep.mubr.f32.mxu0 0.0
      %6411 = vmatmul.mubr.f32.gmra.mrb[0].mxu0 %v6277
      %v6412 = vpop.f32.mrb[0].mxu0
      %v6413 = vadd.f32 0.0, %v6412
      %v6414 = vpop.f32.mrb[0].mxu0
      %6415 = vmatprep.mubr.f32.mxu0 0.0
      %6416 = vmatmul.mubr.f32.gmra.mrb[0].mxu0 %v6278
      %v6417 = vpop.f32.mrb[0].mxu0
      %v6418 = vadd.f32 0.0, %v6417
      %v6419 = vpop.f32.mrb[0].mxu0
      %6420 = vmatprep.mubr.f32.mxu0 0.0
      %6421 = vmatmul.mubr.f32.gmra.mrb[0].mxu0 %v6279
      %v6422 = vpop.f32.mrb[0].mxu0
      %v6423 = vadd.f32 0.0, %v6422
      %v6424 = vpop.f32.mrb[0].mxu0
      %6425 = vmatprep.mubr.f32.mxu0 0.0
      %6426 = vmatmul.mubr.f32.gmra.mrb[0].mxu0 %v6280
      %v6427 = vpop.f32.mrb[0].mxu0
      %v6428 = vadd.f32 0.0, %v6427
      %v6429 = vpop.f32.mrb[0].mxu0
      %6430 = vmatprep.mubr.f32.mxu0 0.0
      %6431 = vmatmul.mubr.f32.gmra.mrb[0].mxu0 %v6281
      %v6432 = vpop.f32.mrb[0].mxu0
      %v6433 = vadd.f32 0.0, %v6432
      %v6434 = vpop.f32.mrb[0].mxu0
      %6435 = vmatprep.mubr.f32.mxu0 0.0
      %6436 = vmatmul.mubr.f32.gmra.mrb[0].mxu0 %v6282
      %v6437 = vpop.f32.mrb[0].mxu0
      %v6438 = vadd.f32 0.0, %v6437
      %v6439 = vpop.f32.mrb[0].mxu0
      %6440 = vmatprep.mubr.f32.mxu0 0.0
      %6441 = vmatmul.mubr.f32.gmra.mrb[0].mxu0 %v6283
      %v6442 = vpop.f32.mrb[0].mxu0
      %v6443 = vadd.f32 0.0, %v6442
      %v6444 = vpop.f32.mrb[0].mxu0
      %6445 = vmatprep.mubr.f32.mxu0 0.0
      %6446 = vmatmul.mubr.f32.gmra.mrb[0].mxu0 %v6284
      %v6447 = vpop.f32.mrb[0].mxu0
      %v6448 = vadd.f32 0.0, %v6447
      %v6449 = vpop.f32.mrb[0].mxu0
      %6450 = vmatprep.mubr.f32.mxu0 0.0
      %6451 = vmatmul.mubr.f32.gmra.mrb[0].mxu0 %v6285
      %v6452 = vpop.f32.mrb[0].mxu0
      %v6453 = vadd.f32 0.0, %v6452
      %v6454 = vpop.f32.mrb[0].mxu0
      %6455 = vmatprep.mubr.f32.mxu0 0.0
      %6456 = vmatmul.mubr.f32.gmra.mrb[0].mxu0 %v6286
      %v6457 = vpop.f32.mrb[0].mxu0
      %v6458 = vadd.f32 0.0, %v6457
      %v6459 = vpop.f32.mrb[0].mxu0
      %6460 = vmatprep.mubr.f32.mxu0 0.0
      %6461 = vmatmul.mubr.f32.gmra.mrb[0].mxu0 %v6287
      %v6462 = vpop.f32.mrb[0].mxu0
      %v6463 = vadd.f32 0.0, %v6462
      %v6464 = vpop.f32.mrb[0].mxu0
      %6465 = vmatprep.mubr.f32.mxu0 0.0
      %6466 = vmatmul.mubr.f32.gmra.mrb[0].mxu0 %v6288
      %v6467 = vpop.f32.mrb[0].mxu0
      %v6468 = vadd.f32 0.0, %v6467
      %v6469 = vpop.f32.mrb[0].mxu0
      %6470 = vmatprep.mubr.f32.mxu0 0.0
      %6471 = vmatmul.mubr.f32.gmra.mrb[0].mxu0 %v6289
      %v6472 = vpop.f32.mrb[0].mxu0
      %v6473 = vadd.f32 0.0, %v6472
      %v6474 = vpop.f32.mrb[0].mxu0
      %6475 = vmatprep.mubr.f32.mxu0 0.0
      %6476 = vmatmul.mubr.f32.gmra.mrb[0].mxu0 %v6290
      %v6477 = vpop.f32.mrb[0].mxu0
      %v6478 = vadd.f32 0.0, %v6477
      %v6479 = vpop.f32.mrb[0].mxu0
      %6480 = vmatprep.mubr.f32.mxu0 0.0
      %6481 = vmatmul.mubr.f32.gmra.mrb[0].mxu0 %v6291
      %v6482 = vpop.f32.mrb[0].mxu0
      %v6483 = vadd.f32 0.0, %v6482
      %v6484 = vpop.f32.mrb[0].mxu0
      %6485 = vmatprep.mubr.f32.mxu0 0.0
      %6486 = vmatmul.mubr.f32.gmra.mrb[0].mxu0 %v6292
      %v6487 = vpop.f32.mrb[0].mxu0
      %v6488 = vadd.f32 0.0, %v6487
      %v6489 = vpop.f32.mrb[0].mxu0
      %6490 = vmatprep.mubr.f32.mxu0 0.0
      %6491 = vmatmul.mubr.f32.gmra.mrb[0].mxu0 %v6293
      %v6492 = vpop.f32.mrb[0].mxu0
      %v6493 = vadd.f32 0.0, %v6492
      %v6494 = vpop.f32.mrb[0].mxu0
      %6495 = vmatprep.mubr.f32.mxu0 0.0
      %6496 = vmatmul.mubr.f32.gmra.mrb[0].mxu0 %v6294
      %v6497 = vpop.f32.mrb[0].mxu0
      %v6498 = vadd.f32 0.0, %v6497
      %v6499 = vpop.f32.mrb[0].mxu0
      %6500 = vmatprep.mubr.f32.mxu0 0.0
      %6501 = vmatmul.mubr.f32.gmra.mrb[0].mxu0 %v6295
      %v6502 = vpop.f32.mrb[0].mxu0
      %v6503 = vadd.f32 0.0, %v6502
      %v6504 = vpop.f32.mrb[0].mxu0
      %6505 = vmatprep.mubr.f32.mxu0 0.0
      %6506 = vmatmul.mubr.f32.gmra.mrb[0].mxu0 %v6296
      %v6507 = vpop.f32.mrb[0].mxu0
      %v6508 = vadd.f32 0.0, %v6507
      %v6509 = vpop.f32.mrb[0].mxu0
      %6510 = vmatprep.mubr.f32.mxu0 0.0
      %6511 = vmatmul.mubr.f32.gmra.mrb[0].mxu0 %v6297
      %v6512 = vpop.f32.mrb[0].mxu0
      %v6513 = vadd.f32 0.0, %v6512
      %v6514 = vpop.f32.mrb[0].mxu0
      %6515 = vmatprep.mubr.f32.mxu0 0.0
      %6516 = vmatmul.mubr.f32.gmra.mrb[0].mxu0 %v6298
      %v6517 = vpop.f32.mrb[0].mxu0
      %v6518 = vadd.f32 0.0, %v6517
      %v6519 = vpop.f32.mrb[0].mxu0
      %6520 = vmatprep.mubr.f32.mxu0 0.0
      %6521 = vmatmul.mubr.f32.gmra.mrb[0].mxu0 %v6299
      %v6522 = vpop.f32.mrb[0].mxu0
      %v6523 = vadd.f32 0.0, %v6522
      %v6524 = vpop.f32.mrb[0].mxu0
      %6525 = vmatprep.mubr.f32.mxu0 0.0
      %6526 = vmatmul.mubr.f32.gmra.mrb[0].mxu0 %v6300
      %v6527 = vpop.f32.mrb[0].mxu0
      %v6528 = vadd.f32 0.0, %v6527
      %v6529 = vpop.f32.mrb[0].mxu0
      %6530 = vmatprep.mubr.f32.mxu0 0.0
      %6531 = vmatmul.mubr.f32.gmra.mrb[0].mxu0 %v6301
      %v6532 = vpop.f32.mrb[0].mxu0
      %v6533 = vadd.f32 0.0, %v6532
      %v6534 = vpop.f32.mrb[0].mxu0
      %6535 = vmatprep.mubr.f32.mxu0 0.0
      %6536 = vmatmul.mubr.f32.gmra.mrb[0].mxu0 %v6302
      %v6537 = vpop.f32.mrb[0].mxu0
      %v6538 = vadd.f32 0.0, %v6537
      %v6539 = vpop.f32.mrb[0].mxu0
      %6540 = vmatprep.mubr.f32.mxu0 0.0
      %6541 = vmatmul.mubr.f32.gmra.mrb[0].mxu0 %v6303
      %v6542 = vpop.f32.mrb[0].mxu0
      %v6543 = vadd.f32 0.0, %v6542
      %v6544 = vpop.f32.mrb[0].mxu0
      %6545 = vdwg.mxu0
      %6546 = vmatprep.subr.mxu0 0.0
      %6547 = vmatpush1.msra.mxu0 %v6256
      %6548 = vmatprep.subr.mxu0 0.0
      %6549 = vmatpush1.msra.mxu0 %v6257
      %6550 = vmatprep.subr.mxu0 0.0
      %6551 = vmatpush1.msra.mxu0 %v6258
      %6552 = vmatprep.subr.mxu0 0.0
      %6553 = vmatpush1.msra.mxu0 %v6259
      %6554 = vmatprep.subr.mxu0 0.0
      %6555 = vmatpush1.msra.mxu0 %v6260
      %6556 = vmatprep.subr.mxu0 0.0
      %6557 = vmatpush1.msra.mxu0 %v6261
      %6558 = vmatprep.subr.mxu0 0.0
      %6559 = vmatpush1.msra.mxu0 %v6262
      %6560 = vmatprep.subr.mxu0 0.0
      %6561 = vmatpush1.msra.mxu0 %v6263
      %6562 = vmatprep.subr.mxu0 0.0
      %6563 = vmatpush1.msra.mxu0 %v6264
      %6564 = vmatprep.subr.mxu0 0.0
      %6565 = vmatpush1.msra.mxu0 %v6265
      %6566 = vmatprep.subr.mxu0 0.0
      %6567 = vmatpush1.msra.mxu0 %v6266
      %6568 = vmatprep.subr.mxu0 0.0
      %6569 = vmatpush1.msra.mxu0 %v6267
      %6570 = vmatprep.subr.mxu0 0.0
      %6571 = vmatpush1.msra.mxu0 %v6268
      %6572 = vmatprep.subr.mxu0 0.0
      %6573 = vmatpush1.msra.mxu0 %v6269
      %6574 = vmatprep.subr.mxu0 0.0
      %6575 = vmatpush1.msra.mxu0 %v6270
      %6576 = vmatprep.subr.mxu0 0.0
      %6577 = vmatpush1.msra.mxu0 %v6271
      %6578 = vmatprep.subr.mxu0 0.0
      %6579 = vmatpush1.msra.mxu0 0.0
      %6580 = vmatprep.subr.mxu0 0.0
      %6581 = vmatpush1.msra.mxu0 0.0
      %6582 = vmatprep.subr.mxu0 0.0
      %6583 = vmatpush1.msra.mxu0 0.0
      %6584 = vmatprep.subr.mxu0 0.0
      %6585 = vmatpush1.msra.mxu0 0.0
      %6586 = vmatprep.subr.mxu0 0.0
      %6587 = vmatpush1.msra.mxu0 0.0
      %6588 = vmatprep.subr.mxu0 0.0
      %6589 = vmatpush1.msra.mxu0 0.0
      %6590 = vmatprep.subr.mxu0 0.0
      %6591 = vmatpush1.msra.mxu0 0.0
      %6592 = vmatprep.subr.mxu0 0.0
      %6593 = vmatpush1.msra.mxu0 0.0
      %6594 = vmatprep.subr.mxu0 0.0
      %6595 = vmatpush1.msra.mxu0 0.0
      %6596 = vmatprep.subr.mxu0 0.0
      %6597 = vmatpush1.msra.mxu0 0.0
      %6598 = vmatprep.subr.mxu0 0.0
      %6599 = vmatpush1.msra.mxu0 0.0
      %6600 = vmatprep.subr.mxu0 0.0
      %6601 = vmatpush1.msra.mxu0 0.0
      %6602 = vmatprep.subr.mxu0 0.0
      %6603 = vmatpush1.msra.mxu0 0.0
      %6604 = vmatprep.subr.mxu0 0.0
      %6605 = vmatpush1.msra.mxu0 0.0
      %6606 = vmatprep.subr.mxu0 0.0
      %6607 = vmatpush1.msra.mxu0 0.0
      %6608 = vmatprep.subr.mxu0 0.0
      %6609 = vmatpush1.msra.mxu0 0.0
      %6610 = vmatprep.mubr.f32.mxu0 0.0
      %6611 = vmatmul.mubr.f32.gmra.mrb[0].mxu0 %v6224
      %v6612 = vpop.f32.mrb[0].mxu0
      %v6613 = vadd.f32 %v6388, %v6612
      %v6614 = vpop.f32.mrb[0].mxu0
      %6615 = vmatprep.mubr.f32.mxu0 0.0
      %6616 = vmatmul.mubr.f32.gmra.mrb[0].mxu0 %v6225
      %v6617 = vpop.f32.mrb[0].mxu0
      %v6618 = vadd.f32 %v6393, %v6617
      %v6619 = vpop.f32.mrb[0].mxu0
      %6620 = vmatprep.mubr.f32.mxu0 0.0
      %6621 = vmatmul.mubr.f32.gmra.mrb[0].mxu0 %v6226
      %v6622 = vpop.f32.mrb[0].mxu0
      %v6623 = vadd.f32 %v6398, %v6622
      %v6624 = vpop.f32.mrb[0].mxu0
      %6625 = vmatprep.mubr.f32.mxu0 0.0
      %6626 = vmatmul.mubr.f32.gmra.mrb[0].mxu0 %v6227
      %v6627 = vpop.f32.mrb[0].mxu0
      %v6628 = vadd.f32 %v6403, %v6627
      %v6629 = vpop.f32.mrb[0].mxu0
      %6630 = vmatprep.mubr.f32.mxu0 0.0
      %6631 = vmatmul.mubr.f32.gmra.mrb[0].mxu0 %v6228
      %v6632 = vpop.f32.mrb[0].mxu0
      %v6633 = vadd.f32 %v6408, %v6632
      %v6634 = vpop.f32.mrb[0].mxu0
      %6635 = vmatprep.mubr.f32.mxu0 0.0
      %6636 = vmatmul.mubr.f32.gmra.mrb[0].mxu0 %v6229
      %v6637 = vpop.f32.mrb[0].mxu0
      %v6638 = vadd.f32 %v6413, %v6637
      %v6639 = vpop.f32.mrb[0].mxu0
      %6640 = vmatprep.mubr.f32.mxu0 0.0
      %6641 = vmatmul.mubr.f32.gmra.mrb[0].mxu0 %v6230
      %v6642 = vpop.f32.mrb[0].mxu0
      %v6643 = vadd.f32 %v6418, %v6642
      %v6644 = vpop.f32.mrb[0].mxu0
      %6645 = vmatprep.mubr.f32.mxu0 0.0
      %6646 = vmatmul.mubr.f32.gmra.mrb[0].mxu0 %v6231
      %v6647 = vpop.f32.mrb[0].mxu0
      %v6648 = vadd.f32 %v6423, %v6647
      %v6649 = vpop.f32.mrb[0].mxu0
      %6650 = vmatprep.mubr.f32.mxu0 0.0
      %6651 = vmatmul.mubr.f32.gmra.mrb[0].mxu0 %v6232
      %v6652 = vpop.f32.mrb[0].mxu0
      %v6653 = vadd.f32 %v6428, %v6652
      %v6654 = vpop.f32.mrb[0].mxu0
      %6655 = vmatprep.mubr.f32.mxu0 0.0
      %6656 = vmatmul.mubr.f32.gmra.mrb[0].mxu0 %v6233
      %v6657 = vpop.f32.mrb[0].mxu0
      %v6658 = vadd.f32 %v6433, %v6657
      %v6659 = vpop.f32.mrb[0].mxu0
      %6660 = vmatprep.mubr.f32.mxu0 0.0
      %6661 = vmatmul.mubr.f32.gmra.mrb[0].mxu0 %v6234
      %v6662 = vpop.f32.mrb[0].mxu0
      %v6663 = vadd.f32 %v6438, %v6662
      %v6664 = vpop.f32.mrb[0].mxu0
      %6665 = vmatprep.mubr.f32.mxu0 0.0
      %6666 = vmatmul.mubr.f32.gmra.mrb[0].mxu0 %v6235
      %v6667 = vpop.f32.mrb[0].mxu0
      %v6668 = vadd.f32 %v6443, %v6667
      %v6669 = vpop.f32.mrb[0].mxu0
      %6670 = vmatprep.mubr.f32.mxu0 0.0
      %6671 = vmatmul.mubr.f32.gmra.mrb[0].mxu0 %v6236
      %v6672 = vpop.f32.mrb[0].mxu0
      %v6673 = vadd.f32 %v6448, %v6672
      %v6674 = vpop.f32.mrb[0].mxu0
      %6675 = vmatprep.mubr.f32.mxu0 0.0
      %6676 = vmatmul.mubr.f32.gmra.mrb[0].mxu0 %v6237
      %v6677 = vpop.f32.mrb[0].mxu0
      %v6678 = vadd.f32 %v6453, %v6677
      %v6679 = vpop.f32.mrb[0].mxu0
      %6680 = vmatprep.mubr.f32.mxu0 0.0
      %6681 = vmatmul.mubr.f32.gmra.mrb[0].mxu0 %v6238
      %v6682 = vpop.f32.mrb[0].mxu0
      %v6683 = vadd.f32 %v6458, %v6682
      %v6684 = vpop.f32.mrb[0].mxu0
      %6685 = vmatprep.mubr.f32.mxu0 0.0
      %6686 = vmatmul.mubr.f32.gmra.mrb[0].mxu0 %v6239
      %v6687 = vpop.f32.mrb[0].mxu0
      %v6688 = vadd.f32 %v6463, %v6687
      %v6689 = vpop.f32.mrb[0].mxu0
      %6690 = vmatprep.mubr.f32.mxu0 0.0
      %6691 = vmatmul.mubr.f32.gmra.mrb[0].mxu0 %v6240
      %v6692 = vpop.f32.mrb[0].mxu0
      %v6693 = vadd.f32 %v6468, %v6692
      %v6694 = vpop.f32.mrb[0].mxu0
      %6695 = vmatprep.mubr.f32.mxu0 0.0
      %6696 = vmatmul.mubr.f32.gmra.mrb[0].mxu0 %v6241
      %v6697 = vpop.f32.mrb[0].mxu0
      %v6698 = vadd.f32 %v6473, %v6697
      %v6699 = vpop.f32.mrb[0].mxu0
      %6700 = vmatprep.mubr.f32.mxu0 0.0
      %6701 = vmatmul.mubr.f32.gmra.mrb[0].mxu0 %v6242
      %v6702 = vpop.f32.mrb[0].mxu0
      %v6703 = vadd.f32 %v6478, %v6702
      %v6704 = vpop.f32.mrb[0].mxu0
      %6705 = vmatprep.mubr.f32.mxu0 0.0
      %6706 = vmatmul.mubr.f32.gmra.mrb[0].mxu0 %v6243
      %v6707 = vpop.f32.mrb[0].mxu0
      %v6708 = vadd.f32 %v6483, %v6707
      %v6709 = vpop.f32.mrb[0].mxu0
      %6710 = vmatprep.mubr.f32.mxu0 0.0
      %6711 = vmatmul.mubr.f32.gmra.mrb[0].mxu0 %v6244
      %v6712 = vpop.f32.mrb[0].mxu0
      %v6713 = vadd.f32 %v6488, %v6712
      %v6714 = vpop.f32.mrb[0].mxu0
      %6715 = vmatprep.mubr.f32.mxu0 0.0
      %6716 = vmatmul.mubr.f32.gmra.mrb[0].mxu0 %v6245
      %v6717 = vpop.f32.mrb[0].mxu0
      %v6718 = vadd.f32 %v6493, %v6717
      %v6719 = vpop.f32.mrb[0].mxu0
      %6720 = vmatprep.mubr.f32.mxu0 0.0
      %6721 = vmatmul.mubr.f32.gmra.mrb[0].mxu0 %v6246
      %v6722 = vpop.f32.mrb[0].mxu0
      %v6723 = vadd.f32 %v6498, %v6722
      %v6724 = vpop.f32.mrb[0].mxu0
      %6725 = vmatprep.mubr.f32.mxu0 0.0
      %6726 = vmatmul.mubr.f32.gmra.mrb[0].mxu0 %v6247
      %v6727 = vpop.f32.mrb[0].mxu0
      %v6728 = vadd.f32 %v6503, %v6727
      %v6729 = vpop.f32.mrb[0].mxu0
      %6730 = vmatprep.mubr.f32.mxu0 0.0
      %6731 = vmatmul.mubr.f32.gmra.mrb[0].mxu0 %v6248
      %v6732 = vpop.f32.mrb[0].mxu0
      %v6733 = vadd.f32 %v6508, %v6732
      %v6734 = vpop.f32.mrb[0].mxu0
      %6735 = vmatprep.mubr.f32.mxu0 0.0
      %6736 = vmatmul.mubr.f32.gmra.mrb[0].mxu0 %v6249
      %v6737 = vpop.f32.mrb[0].mxu0
      %v6738 = vadd.f32 %v6513, %v6737
      %v6739 = vpop.f32.mrb[0].mxu0
      %6740 = vmatprep.mubr.f32.mxu0 0.0
      %6741 = vmatmul.mubr.f32.gmra.mrb[0].mxu0 %v6250
      %v6742 = vpop.f32.mrb[0].mxu0
      %v6743 = vadd.f32 %v6518, %v6742
      %v6744 = vpop.f32.mrb[0].mxu0
      %6745 = vmatprep.mubr.f32.mxu0 0.0
      %6746 = vmatmul.mubr.f32.gmra.mrb[0].mxu0 %v6251
      %v6747 = vpop.f32.mrb[0].mxu0
      %v6748 = vadd.f32 %v6523, %v6747
      %v6749 = vpop.f32.mrb[0].mxu0
      %6750 = vmatprep.mubr.f32.mxu0 0.0
      %6751 = vmatmul.mubr.f32.gmra.mrb[0].mxu0 %v6252
      %v6752 = vpop.f32.mrb[0].mxu0
      %v6753 = vadd.f32 %v6528, %v6752
      %v6754 = vpop.f32.mrb[0].mxu0
      %6755 = vmatprep.mubr.f32.mxu0 0.0
      %6756 = vmatmul.mubr.f32.gmra.mrb[0].mxu0 %v6253
      %v6757 = vpop.f32.mrb[0].mxu0
      %v6758 = vadd.f32 %v6533, %v6757
      %v6759 = vpop.f32.mrb[0].mxu0
      %6760 = vmatprep.mubr.f32.mxu0 0.0
      %6761 = vmatmul.mubr.f32.gmra.mrb[0].mxu0 %v6254
      %v6762 = vpop.f32.mrb[0].mxu0
      %v6763 = vadd.f32 %v6538, %v6762
      %v6764 = vpop.f32.mrb[0].mxu0
      %6765 = vmatprep.mubr.f32.mxu0 0.0
      %6766 = vmatmul.mubr.f32.gmra.mrb[0].mxu0 %v6255
      %v6767 = vpop.f32.mrb[0].mxu0
      %v6768 = vadd.f32 %v6543, %v6767
      %v6769 = vpop.f32.mrb[0].mxu0
      %6770 = vdwg.mxu0
      %v6771 = vld [vmem:[#allocation2 + $0x2] sm:$0xff]
      %v6772 = vld [vmem:[#allocation2 + $0xa] sm:$0xff]
      %v6773 = vld [vmem:[#allocation2 + $0x1a] sm:$0xff]
      %v6774 = vld [vmem:[#allocation2 + $0x22] sm:$0xff]
      %v6775 = vld [vmem:[#allocation2 + $0x32] sm:$0xff]
      %v6776 = vld [vmem:[#allocation2 + $0x3a] sm:$0xff]
      %v6777 = vld [vmem:[#allocation2 + $0x4a] sm:$0xff]
      %v6778 = vld [vmem:[#allocation2 + $0x52] sm:$0xff]
      %v6779 = vld [vmem:[#allocation2 + $0x62] sm:$0xff]
      %v6780 = vld [vmem:[#allocation2 + $0x6a] sm:$0xff]
      %v6781 = vld [vmem:[#allocation2 + $0x7a] sm:$0xff]
      %v6782 = vld [vmem:[#allocation2 + $0x82] sm:$0xff]
      %v6783 = vld [vmem:[#allocation2 + $0x92] sm:$0xff]
      %v6784 = vld [vmem:[#allocation2 + $0x9a] sm:$0xff]
      %v6785 = vld [vmem:[#allocation2 + $0xaa] sm:$0xff]
      %v6786 = vld [vmem:[#allocation2 + $0xb2] sm:$0xff]
      %v6787 = vld [vmem:[#allocation2 + $0xc2] sm:$0xff]
      %v6788 = vld [vmem:[#allocation2 + $0xca] sm:$0xff]
      %v6789 = vld [vmem:[#allocation2 + $0xda] sm:$0xff]
      %v6790 = vld [vmem:[#allocation2 + $0xe2] sm:$0xff]
      %v6791 = vld [vmem:[#allocation2 + $0xf2] sm:$0xff]
      %v6792 = vld [vmem:[#allocation2 + $0xfa] sm:$0xff]
      %v6793 = vld [vmem:[#allocation2 + $0x10a] sm:$0xff]
      %v6794 = vld [vmem:[#allocation2 + $0x112] sm:$0xff]
      %v6795 = vld [vmem:[#allocation2 + $0x122] sm:$0xff]
      %v6796 = vld [vmem:[#allocation2 + $0x12a] sm:$0xff]
      %v6797 = vld [vmem:[#allocation2 + $0x13a] sm:$0xff]
      %v6798 = vld [vmem:[#allocation2 + $0x142] sm:$0xff]
      %v6799 = vld [vmem:[#allocation2 + $0x152] sm:$0xff]
      %v6800 = vld [vmem:[#allocation2 + $0x15a] sm:$0xff]
      %v6801 = vld [vmem:[#allocation2 + $0x16a] sm:$0xff]
      %v6802 = vld [vmem:[#allocation2 + $0x172] sm:$0xff]
      %s6803 = scalar_lea.vmem %s6, 256
      %v6804 = vld [vmem:[%s6803] sm:$0xff]
      %v6805 = vld [vmem:[%s6803 + $0x8] sm:$0xff]
      %v6806 = vld [vmem:[%s6803 + $0x10] sm:$0xff]
      %v6807 = vld [vmem:[%s6803 + $0x18] sm:$0xff]
      %v6808 = vld [vmem:[%s6803 + $0x20] sm:$0xff]
      %v6809 = vld [vmem:[%s6803 + $0x28] sm:$0xff]
      %v6810 = vld [vmem:[%s6803 + $0x30] sm:$0xff]
      %v6811 = vld [vmem:[%s6803 + $0x38] sm:$0xff]
      %v6812 = vld [vmem:[%s6803 + $0x40] sm:$0xff]
      %v6813 = vld [vmem:[%s6803 + $0x48] sm:$0xff]
      %v6814 = vld [vmem:[%s6803 + $0x50] sm:$0xff]
      %v6815 = vld [vmem:[%s6803 + $0x58] sm:$0xff]
      %v6816 = vld [vmem:[%s6803 + $0x60] sm:$0xff]
      %v6817 = vld [vmem:[%s6803 + $0x68] sm:$0xff]
      %v6818 = vld [vmem:[%s6803 + $0x70] sm:$0xff]
      %v6819 = vld [vmem:[%s6803 + $0x78] sm:$0xff]
      %6820 = vmatprep.subr.mxu0 0.0
      %6821 = vmatpush1.msra.mxu0 %v6804
      %6822 = vmatprep.subr.mxu0 0.0
      %6823 = vmatpush1.msra.mxu0 %v6805
      %6824 = vmatprep.subr.mxu0 0.0
      %6825 = vmatpush1.msra.mxu0 %v6806
      %6826 = vmatprep.subr.mxu0 0.0
      %6827 = vmatpush1.msra.mxu0 %v6807
      %6828 = vmatprep.subr.mxu0 0.0
      %6829 = vmatpush1.msra.mxu0 %v6808
      %6830 = vmatprep.subr.mxu0 0.0
      %6831 = vmatpush1.msra.mxu0 %v6809
      %6832 = vmatprep.subr.mxu0 0.0
      %6833 = vmatpush1.msra.mxu0 %v6810
      %6834 = vmatprep.subr.mxu0 0.0
      %6835 = vmatpush1.msra.mxu0 %v6811
      %6836 = vmatprep.subr.mxu0 0.0
      %6837 = vmatpush1.msra.mxu0 %v6812
      %6838 = vmatprep.subr.mxu0 0.0
      %6839 = vmatpush1.msra.mxu0 %v6813
      %6840 = vmatprep.subr.mxu0 0.0
      %6841 = vmatpush1.msra.mxu0 %v6814
      %6842 = vmatprep.subr.mxu0 0.0
      %6843 = vmatpush1.msra.mxu0 %v6815
      %6844 = vmatprep.subr.mxu0 0.0
      %6845 = vmatpush1.msra.mxu0 %v6816
      %6846 = vmatprep.subr.mxu0 0.0
      %6847 = vmatpush1.msra.mxu0 %v6817
      %6848 = vmatprep.subr.mxu0 0.0
      %6849 = vmatpush1.msra.mxu0 %v6818
      %6850 = vmatprep.subr.mxu0 0.0
      %6851 = vmatpush1.msra.mxu0 %v6819
      %6852 = vmatprep.subr.mxu0 0.0
      %6853 = vmatpush1.msra.mxu0 0.0
      %6854 = vmatprep.subr.mxu0 0.0
      %6855 = vmatpush1.msra.mxu0 0.0
      %6856 = vmatprep.subr.mxu0 0.0
      %6857 = vmatpush1.msra.mxu0 0.0
      %6858 = vmatprep.subr.mxu0 0.0
      %6859 = vmatpush1.msra.mxu0 0.0
      %6860 = vmatprep.subr.mxu0 0.0
      %6861 = vmatpush1.msra.mxu0 0.0
      %6862 = vmatprep.subr.mxu0 0.0
      %6863 = vmatpush1.msra.mxu0 0.0
      %6864 = vmatprep.subr.mxu0 0.0
      %6865 = vmatpush1.msra.mxu0 0.0
      %6866 = vmatprep.subr.mxu0 0.0
      %6867 = vmatpush1.msra.mxu0 0.0
      %6868 = vmatprep.subr.mxu0 0.0
      %6869 = vmatpush1.msra.mxu0 0.0
      %6870 = vmatprep.subr.mxu0 0.0
      %6871 = vmatpush1.msra.mxu0 0.0
      %6872 = vmatprep.subr.mxu0 0.0
      %6873 = vmatpush1.msra.mxu0 0.0
      %6874 = vmatprep.subr.mxu0 0.0
      %6875 = vmatpush1.msra.mxu0 0.0
      %6876 = vmatprep.subr.mxu0 0.0
      %6877 = vmatpush1.msra.mxu0 0.0
      %6878 = vmatprep.subr.mxu0 0.0
      %6879 = vmatpush1.msra.mxu0 0.0
      %6880 = vmatprep.subr.mxu0 0.0
      %6881 = vmatpush1.msra.mxu0 0.0
      %6882 = vmatprep.subr.mxu0 0.0
      %6883 = vmatpush1.msra.mxu0 0.0
      %6884 = vmatprep.mubr.f32.mxu0 0.0
      %6885 = vmatmul.mubr.f32.gmra.mrb[0].mxu0 %v6771
      %v6886 = vpop.f32.mrb[0].mxu0
      %v6887 = vadd.f32 0.0, %v6886
      %v6888 = vpop.f32.mrb[0].mxu0
      %6889 = vmatprep.mubr.f32.mxu0 0.0
      %6890 = vmatmul.mubr.f32.gmra.mrb[0].mxu0 %v6772
      %v6891 = vpop.f32.mrb[0].mxu0
      %v6892 = vadd.f32 0.0, %v6891
      %v6893 = vpop.f32.mrb[0].mxu0
      %6894 = vmatprep.mubr.f32.mxu0 0.0
      %6895 = vmatmul.mubr.f32.gmra.mrb[0].mxu0 %v6773
      %v6896 = vpop.f32.mrb[0].mxu0
      %v6897 = vadd.f32 0.0, %v6896
      %v6898 = vpop.f32.mrb[0].mxu0
      %6899 = vmatprep.mubr.f32.mxu0 0.0
      %6900 = vmatmul.mubr.f32.gmra.mrb[0].mxu0 %v6774
      %v6901 = vpop.f32.mrb[0].mxu0
      %v6902 = vadd.f32 0.0, %v6901
      %v6903 = vpop.f32.mrb[0].mxu0
      %6904 = vmatprep.mubr.f32.mxu0 0.0
      %6905 = vmatmul.mubr.f32.gmra.mrb[0].mxu0 %v6775
      %v6906 = vpop.f32.mrb[0].mxu0
      %v6907 = vadd.f32 0.0, %v6906
      %v6908 = vpop.f32.mrb[0].mxu0
      %6909 = vmatprep.mubr.f32.mxu0 0.0
      %6910 = vmatmul.mubr.f32.gmra.mrb[0].mxu0 %v6776
      %v6911 = vpop.f32.mrb[0].mxu0
      %v6912 = vadd.f32 0.0, %v6911
      %v6913 = vpop.f32.mrb[0].mxu0
      %6914 = vmatprep.mubr.f32.mxu0 0.0
      %6915 = vmatmul.mubr.f32.gmra.mrb[0].mxu0 %v6777
      %v6916 = vpop.f32.mrb[0].mxu0
      %v6917 = vadd.f32 0.0, %v6916
      %v6918 = vpop.f32.mrb[0].mxu0
      %6919 = vmatprep.mubr.f32.mxu0 0.0
      %6920 = vmatmul.mubr.f32.gmra.mrb[0].mxu0 %v6778
      %v6921 = vpop.f32.mrb[0].mxu0
      %v6922 = vadd.f32 0.0, %v6921
      %v6923 = vpop.f32.mrb[0].mxu0
      %6924 = vmatprep.mubr.f32.mxu0 0.0
      %6925 = vmatmul.mubr.f32.gmra.mrb[0].mxu0 %v6779
      %v6926 = vpop.f32.mrb[0].mxu0
      %v6927 = vadd.f32 0.0, %v6926
      %v6928 = vpop.f32.mrb[0].mxu0
      %6929 = vmatprep.mubr.f32.mxu0 0.0
      %6930 = vmatmul.mubr.f32.gmra.mrb[0].mxu0 %v6780
      %v6931 = vpop.f32.mrb[0].mxu0
      %v6932 = vadd.f32 0.0, %v6931
      %v6933 = vpop.f32.mrb[0].mxu0
      %6934 = vmatprep.mubr.f32.mxu0 0.0
      %6935 = vmatmul.mubr.f32.gmra.mrb[0].mxu0 %v6781
      %v6936 = vpop.f32.mrb[0].mxu0
      %v6937 = vadd.f32 0.0, %v6936
      %v6938 = vpop.f32.mrb[0].mxu0
      %6939 = vmatprep.mubr.f32.mxu0 0.0
      %6940 = vmatmul.mubr.f32.gmra.mrb[0].mxu0 %v6782
      %v6941 = vpop.f32.mrb[0].mxu0
      %v6942 = vadd.f32 0.0, %v6941
      %v6943 = vpop.f32.mrb[0].mxu0
      %6944 = vmatprep.mubr.f32.mxu0 0.0
      %6945 = vmatmul.mubr.f32.gmra.mrb[0].mxu0 %v6783
      %v6946 = vpop.f32.mrb[0].mxu0
      %v6947 = vadd.f32 0.0, %v6946
      %v6948 = vpop.f32.mrb[0].mxu0
      %6949 = vmatprep.mubr.f32.mxu0 0.0
      %6950 = vmatmul.mubr.f32.gmra.mrb[0].mxu0 %v6784
      %v6951 = vpop.f32.mrb[0].mxu0
      %v6952 = vadd.f32 0.0, %v6951
      %v6953 = vpop.f32.mrb[0].mxu0
      %6954 = vmatprep.mubr.f32.mxu0 0.0
      %6955 = vmatmul.mubr.f32.gmra.mrb[0].mxu0 %v6785
      %v6956 = vpop.f32.mrb[0].mxu0
      %v6957 = vadd.f32 0.0, %v6956
      %v6958 = vpop.f32.mrb[0].mxu0
      %6959 = vmatprep.mubr.f32.mxu0 0.0
      %6960 = vmatmul.mubr.f32.gmra.mrb[0].mxu0 %v6786
      %v6961 = vpop.f32.mrb[0].mxu0
      %v6962 = vadd.f32 0.0, %v6961
      %v6963 = vpop.f32.mrb[0].mxu0
      %6964 = vmatprep.mubr.f32.mxu0 0.0
      %6965 = vmatmul.mubr.f32.gmra.mrb[0].mxu0 %v6787
      %v6966 = vpop.f32.mrb[0].mxu0
      %v6967 = vadd.f32 0.0, %v6966
      %v6968 = vpop.f32.mrb[0].mxu0
      %6969 = vmatprep.mubr.f32.mxu0 0.0
      %6970 = vmatmul.mubr.f32.gmra.mrb[0].mxu0 %v6788
      %v6971 = vpop.f32.mrb[0].mxu0
      %v6972 = vadd.f32 0.0, %v6971
      %v6973 = vpop.f32.mrb[0].mxu0
      %6974 = vmatprep.mubr.f32.mxu0 0.0
      %6975 = vmatmul.mubr.f32.gmra.mrb[0].mxu0 %v6789
      %v6976 = vpop.f32.mrb[0].mxu0
      %v6977 = vadd.f32 0.0, %v6976
      %v6978 = vpop.f32.mrb[0].mxu0
      %6979 = vmatprep.mubr.f32.mxu0 0.0
      %6980 = vmatmul.mubr.f32.gmra.mrb[0].mxu0 %v6790
      %v6981 = vpop.f32.mrb[0].mxu0
      %v6982 = vadd.f32 0.0, %v6981
      %v6983 = vpop.f32.mrb[0].mxu0
      %6984 = vmatprep.mubr.f32.mxu0 0.0
      %6985 = vmatmul.mubr.f32.gmra.mrb[0].mxu0 %v6791
      %v6986 = vpop.f32.mrb[0].mxu0
      %v6987 = vadd.f32 0.0, %v6986
      %v6988 = vpop.f32.mrb[0].mxu0
      %6989 = vmatprep.mubr.f32.mxu0 0.0
      %6990 = vmatmul.mubr.f32.gmra.mrb[0].mxu0 %v6792
      %v6991 = vpop.f32.mrb[0].mxu0
      %v6992 = vadd.f32 0.0, %v6991
      %v6993 = vpop.f32.mrb[0].mxu0
      %6994 = vmatprep.mubr.f32.mxu0 0.0
      %6995 = vmatmul.mubr.f32.gmra.mrb[0].mxu0 %v6793
      %v6996 = vpop.f32.mrb[0].mxu0
      %v6997 = vadd.f32 0.0, %v6996
      %v6998 = vpop.f32.mrb[0].mxu0
      %6999 = vmatprep.mubr.f32.mxu0 0.0
      %7000 = vmatmul.mubr.f32.gmra.mrb[0].mxu0 %v6794
      %v7001 = vpop.f32.mrb[0].mxu0
      %v7002 = vadd.f32 0.0, %v7001
      %v7003 = vpop.f32.mrb[0].mxu0
      %7004 = vmatprep.mubr.f32.mxu0 0.0
      %7005 = vmatmul.mubr.f32.gmra.mrb[0].mxu0 %v6795
      %v7006 = vpop.f32.mrb[0].mxu0
      %v7007 = vadd.f32 0.0, %v7006
      %v7008 = vpop.f32.mrb[0].mxu0
      %7009 = vmatprep.mubr.f32.mxu0 0.0
      %7010 = vmatmul.mubr.f32.gmra.mrb[0].mxu0 %v6796
      %v7011 = vpop.f32.mrb[0].mxu0
      %v7012 = vadd.f32 0.0, %v7011
      %v7013 = vpop.f32.mrb[0].mxu0
      %7014 = vmatprep.mubr.f32.mxu0 0.0
      %7015 = vmatmul.mubr.f32.gmra.mrb[0].mxu0 %v6797
      %v7016 = vpop.f32.mrb[0].mxu0
      %v7017 = vadd.f32 0.0, %v7016
      %v7018 = vpop.f32.mrb[0].mxu0
      %7019 = vmatprep.mubr.f32.mxu0 0.0
      %7020 = vmatmul.mubr.f32.gmra.mrb[0].mxu0 %v6798
      %v7021 = vpop.f32.mrb[0].mxu0
      %v7022 = vadd.f32 0.0, %v7021
      %v7023 = vpop.f32.mrb[0].mxu0
      %7024 = vmatprep.mubr.f32.mxu0 0.0
      %7025 = vmatmul.mubr.f32.gmra.mrb[0].mxu0 %v6799
      %v7026 = vpop.f32.mrb[0].mxu0
      %v7027 = vadd.f32 0.0, %v7026
      %v7028 = vpop.f32.mrb[0].mxu0
      %7029 = vmatprep.mubr.f32.mxu0 0.0
      %7030 = vmatmul.mubr.f32.gmra.mrb[0].mxu0 %v6800
      %v7031 = vpop.f32.mrb[0].mxu0
      %v7032 = vadd.f32 0.0, %v7031
      %v7033 = vpop.f32.mrb[0].mxu0
      %7034 = vmatprep.mubr.f32.mxu0 0.0
      %7035 = vmatmul.mubr.f32.gmra.mrb[0].mxu0 %v6801
      %v7036 = vpop.f32.mrb[0].mxu0
      %v7037 = vadd.f32 0.0, %v7036
      %v7038 = vpop.f32.mrb[0].mxu0
      %7039 = vmatprep.mubr.f32.mxu0 0.0
      %7040 = vmatmul.mubr.f32.gmra.mrb[0].mxu0 %v6802
      %v7041 = vpop.f32.mrb[0].mxu0
      %v7042 = vadd.f32 0.0, %v7041
      %v7043 = vpop.f32.mrb[0].mxu0
      %7044 = vdwg.mxu0
      %v7045 = vadd.f32 %v6613, %v6887
      %v7046 = vadd.f32 %v6618, %v6892
      %v7047 = vadd.f32 %v6623, %v6897
      %v7048 = vadd.f32 %v6628, %v6902
      %v7049 = vadd.f32 %v6633, %v6907
      %v7050 = vadd.f32 %v6638, %v6912
      %v7051 = vadd.f32 %v6643, %v6917
      %v7052 = vadd.f32 %v6648, %v6922
      %v7053 = vadd.f32 %v6653, %v6927
      %v7054 = vadd.f32 %v6658, %v6932
      %v7055 = vadd.f32 %v6663, %v6937
      %v7056 = vadd.f32 %v6668, %v6942
      %v7057 = vadd.f32 %v6673, %v6947
      %v7058 = vadd.f32 %v6678, %v6952
      %v7059 = vadd.f32 %v6683, %v6957
      %v7060 = vadd.f32 %v6688, %v6962
      %v7061 = vadd.f32 %v6693, %v6967
      %v7062 = vadd.f32 %v6698, %v6972
      %v7063 = vadd.f32 %v6703, %v6977
      %v7064 = vadd.f32 %v6708, %v6982
      %v7065 = vadd.f32 %v6713, %v6987
      %v7066 = vadd.f32 %v6718, %v6992
      %v7067 = vadd.f32 %v6723, %v6997
      %v7068 = vadd.f32 %v6728, %v7002
      %v7069 = vadd.f32 %v6733, %v7007
      %v7070 = vadd.f32 %v6738, %v7012
      %v7071 = vadd.f32 %v6743, %v7017
      %v7072 = vadd.f32 %v6748, %v7022
      %v7073 = vadd.f32 %v6753, %v7027
      %v7074 = vadd.f32 %v6758, %v7032
      %v7075 = vadd.f32 %v6763, %v7037
      %v7076 = vadd.f32 %v6768, %v7042
      %v7077 = vld [vmem:[%s412] sm:$0xff]
      %v7078 = vld [vmem:[%s412 + $0x8] sm:$0xff]
      %v7079 = vld [vmem:[%s412 + $0x18] sm:$0xff]
      %v7080 = vld [vmem:[%s412 + $0x20] sm:$0xff]
      %v7081 = vld [vmem:[%s412 + $0x30] sm:$0xff]
      %v7082 = vld [vmem:[%s412 + $0x38] sm:$0xff]
      %v7083 = vld [vmem:[%s412 + $0x48] sm:$0xff]
      %v7084 = vld [vmem:[%s412 + $0x50] sm:$0xff]
      %v7085 = vld [vmem:[%s412 + $0x60] sm:$0xff]
      %v7086 = vld [vmem:[%s412 + $0x68] sm:$0xff]
      %v7087 = vld [vmem:[%s412 + $0x78] sm:$0xff]
      %v7088 = vld [vmem:[%s412 + $0x80] sm:$0xff]
      %v7089 = vld [vmem:[%s412 + $0x90] sm:$0xff]
      %v7090 = vld [vmem:[%s412 + $0x98] sm:$0xff]
      %v7091 = vld [vmem:[%s412 + $0xa8] sm:$0xff]
      %v7092 = vld [vmem:[%s412 + $0xb0] sm:$0xff]
      %v7093 = vld [vmem:[%s412 + $0xc0] sm:$0xff]
      %v7094 = vld [vmem:[%s412 + $0xc8] sm:$0xff]
      %v7095 = vld [vmem:[%s412 + $0xd8] sm:$0xff]
      %v7096 = vld [vmem:[%s412 + $0xe0] sm:$0xff]
      %v7097 = vld [vmem:[%s412 + $0xf0] sm:$0xff]
      %v7098 = vld [vmem:[%s412 + $0xf8] sm:$0xff]
      %v7099 = vld [vmem:[%s412 + $0x108] sm:$0xff]
      %v7100 = vld [vmem:[%s412 + $0x110] sm:$0xff]
      %v7101 = vld [vmem:[%s412 + $0x120] sm:$0xff]
      %v7102 = vld [vmem:[%s412 + $0x128] sm:$0xff]
      %v7103 = vld [vmem:[%s412 + $0x138] sm:$0xff]
      %v7104 = vld [vmem:[%s412 + $0x140] sm:$0xff]
      %v7105 = vld [vmem:[%s412 + $0x150] sm:$0xff]
      %v7106 = vld [vmem:[%s412 + $0x158] sm:$0xff]
      %v7107 = vld [vmem:[%s412 + $0x168] sm:$0xff]
      %v7108 = vld [vmem:[%s412 + $0x170] sm:$0xff]
      %s7109 = scalar_lea.vmem %s6, 384
      %v7110 = vld [vmem:[%s7109] sm:$0xff]
      %v7111 = vld [vmem:[%s7109 + $0x8] sm:$0xff]
      %v7112 = vld [vmem:[%s7109 + $0x10] sm:$0xff]
      %v7113 = vld [vmem:[%s7109 + $0x18] sm:$0xff]
      %v7114 = vld [vmem:[%s7109 + $0x20] sm:$0xff]
      %v7115 = vld [vmem:[%s7109 + $0x28] sm:$0xff]
      %v7116 = vld [vmem:[%s7109 + $0x30] sm:$0xff]
      %v7117 = vld [vmem:[%s7109 + $0x38] sm:$0xff]
      %v7118 = vld [vmem:[%s7109 + $0x40] sm:$0xff]
      %v7119 = vld [vmem:[%s7109 + $0x48] sm:$0xff]
      %v7120 = vld [vmem:[%s7109 + $0x50] sm:$0xff]
      %v7121 = vld [vmem:[%s7109 + $0x58] sm:$0xff]
      %v7122 = vld [vmem:[%s7109 + $0x60] sm:$0xff]
      %v7123 = vld [vmem:[%s7109 + $0x68] sm:$0xff]
      %v7124 = vld [vmem:[%s7109 + $0x70] sm:$0xff]
      %v7125 = vld [vmem:[%s7109 + $0x78] sm:$0xff]
      %7126 = vmatprep.subr.mxu0 0.0
      %7127 = vmatpush1.msra.mxu0 %v7110
      %7128 = vmatprep.subr.mxu0 0.0
      %7129 = vmatpush1.msra.mxu0 %v7111
      %7130 = vmatprep.subr.mxu0 0.0
      %7131 = vmatpush1.msra.mxu0 %v7112
      %7132 = vmatprep.subr.mxu0 0.0
      %7133 = vmatpush1.msra.mxu0 %v7113
      %7134 = vmatprep.subr.mxu0 0.0
      %7135 = vmatpush1.msra.mxu0 %v7114
      %7136 = vmatprep.subr.mxu0 0.0
      %7137 = vmatpush1.msra.mxu0 %v7115
      %7138 = vmatprep.subr.mxu0 0.0
      %7139 = vmatpush1.msra.mxu0 %v7116
      %7140 = vmatprep.subr.mxu0 0.0
      %7141 = vmatpush1.msra.mxu0 %v7117
      %7142 = vmatprep.subr.mxu0 0.0
      %7143 = vmatpush1.msra.mxu0 %v7118
      %7144 = vmatprep.subr.mxu0 0.0
      %7145 = vmatpush1.msra.mxu0 %v7119
      %7146 = vmatprep.subr.mxu0 0.0
      %7147 = vmatpush1.msra.mxu0 %v7120
      %7148 = vmatprep.subr.mxu0 0.0
      %7149 = vmatpush1.msra.mxu0 %v7121
      %7150 = vmatprep.subr.mxu0 0.0
      %7151 = vmatpush1.msra.mxu0 %v7122
      %7152 = vmatprep.subr.mxu0 0.0
      %7153 = vmatpush1.msra.mxu0 %v7123
      %7154 = vmatprep.subr.mxu0 0.0
      %7155 = vmatpush1.msra.mxu0 %v7124
      %7156 = vmatprep.subr.mxu0 0.0
      %7157 = vmatpush1.msra.mxu0 %v7125
      %7158 = vmatprep.subr.mxu0 0.0
      %7159 = vmatpush1.msra.mxu0 0.0
      %7160 = vmatprep.subr.mxu0 0.0
      %7161 = vmatpush1.msra.mxu0 0.0
      %7162 = vmatprep.subr.mxu0 0.0
      %7163 = vmatpush1.msra.mxu0 0.0
      %7164 = vmatprep.subr.mxu0 0.0
      %7165 = vmatpush1.msra.mxu0 0.0
      %7166 = vmatprep.subr.mxu0 0.0
      %7167 = vmatpush1.msra.mxu0 0.0
      %7168 = vmatprep.subr.mxu0 0.0
      %7169 = vmatpush1.msra.mxu0 0.0
      %7170 = vmatprep.subr.mxu0 0.0
      %7171 = vmatpush1.msra.mxu0 0.0
      %7172 = vmatprep.subr.mxu0 0.0
      %7173 = vmatpush1.msra.mxu0 0.0
      %7174 = vmatprep.subr.mxu0 0.0
      %7175 = vmatpush1.msra.mxu0 0.0
      %7176 = vmatprep.subr.mxu0 0.0
      %7177 = vmatpush1.msra.mxu0 0.0
      %7178 = vmatprep.subr.mxu0 0.0
      %7179 = vmatpush1.msra.mxu0 0.0
      %7180 = vmatprep.subr.mxu0 0.0
      %7181 = vmatpush1.msra.mxu0 0.0
      %7182 = vmatprep.subr.mxu0 0.0
      %7183 = vmatpush1.msra.mxu0 0.0
      %7184 = vmatprep.subr.mxu0 0.0
      %7185 = vmatpush1.msra.mxu0 0.0
      %7186 = vmatprep.subr.mxu0 0.0
      %7187 = vmatpush1.msra.mxu0 0.0
      %7188 = vmatprep.subr.mxu0 0.0
      %7189 = vmatpush1.msra.mxu0 0.0
      %7190 = vmatprep.mubr.f32.mxu0 0.0
      %7191 = vmatmul.mubr.f32.gmra.mrb[0].mxu0 %v7077
      %v7192 = vpop.f32.mrb[0].mxu0
      %v7193 = vadd.f32 0.0, %v7192
      %v7194 = vpop.f32.mrb[0].mxu0
      %7195 = vmatprep.mubr.f32.mxu0 0.0
      %7196 = vmatmul.mubr.f32.gmra.mrb[0].mxu0 %v7078
      %v7197 = vpop.f32.mrb[0].mxu0
      %v7198 = vadd.f32 0.0, %v7197
      %v7199 = vpop.f32.mrb[0].mxu0
      %7200 = vmatprep.mubr.f32.mxu0 0.0
      %7201 = vmatmul.mubr.f32.gmra.mrb[0].mxu0 %v7079
      %v7202 = vpop.f32.mrb[0].mxu0
      %v7203 = vadd.f32 0.0, %v7202
      %v7204 = vpop.f32.mrb[0].mxu0
      %7205 = vmatprep.mubr.f32.mxu0 0.0
      %7206 = vmatmul.mubr.f32.gmra.mrb[0].mxu0 %v7080
      %v7207 = vpop.f32.mrb[0].mxu0
      %v7208 = vadd.f32 0.0, %v7207
      %v7209 = vpop.f32.mrb[0].mxu0
      %7210 = vmatprep.mubr.f32.mxu0 0.0
      %7211 = vmatmul.mubr.f32.gmra.mrb[0].mxu0 %v7081
      %v7212 = vpop.f32.mrb[0].mxu0
      %v7213 = vadd.f32 0.0, %v7212
      %v7214 = vpop.f32.mrb[0].mxu0
      %7215 = vmatprep.mubr.f32.mxu0 0.0
      %7216 = vmatmul.mubr.f32.gmra.mrb[0].mxu0 %v7082
      %v7217 = vpop.f32.mrb[0].mxu0
      %v7218 = vadd.f32 0.0, %v7217
      %v7219 = vpop.f32.mrb[0].mxu0
      %7220 = vmatprep.mubr.f32.mxu0 0.0
      %7221 = vmatmul.mubr.f32.gmra.mrb[0].mxu0 %v7083
      %v7222 = vpop.f32.mrb[0].mxu0
      %v7223 = vadd.f32 0.0, %v7222
      %v7224 = vpop.f32.mrb[0].mxu0
      %7225 = vmatprep.mubr.f32.mxu0 0.0
      %7226 = vmatmul.mubr.f32.gmra.mrb[0].mxu0 %v7084
      %v7227 = vpop.f32.mrb[0].mxu0
      %v7228 = vadd.f32 0.0, %v7227
      %v7229 = vpop.f32.mrb[0].mxu0
      %7230 = vmatprep.mubr.f32.mxu0 0.0
      %7231 = vmatmul.mubr.f32.gmra.mrb[0].mxu0 %v7085
      %v7232 = vpop.f32.mrb[0].mxu0
      %v7233 = vadd.f32 0.0, %v7232
      %v7234 = vpop.f32.mrb[0].mxu0
      %7235 = vmatprep.mubr.f32.mxu0 0.0
      %7236 = vmatmul.mubr.f32.gmra.mrb[0].mxu0 %v7086
      %v7237 = vpop.f32.mrb[0].mxu0
      %v7238 = vadd.f32 0.0, %v7237
      %v7239 = vpop.f32.mrb[0].mxu0
      %7240 = vmatprep.mubr.f32.mxu0 0.0
      %7241 = vmatmul.mubr.f32.gmra.mrb[0].mxu0 %v7087
      %v7242 = vpop.f32.mrb[0].mxu0
      %v7243 = vadd.f32 0.0, %v7242
      %v7244 = vpop.f32.mrb[0].mxu0
      %7245 = vmatprep.mubr.f32.mxu0 0.0
      %7246 = vmatmul.mubr.f32.gmra.mrb[0].mxu0 %v7088
      %v7247 = vpop.f32.mrb[0].mxu0
      %v7248 = vadd.f32 0.0, %v7247
      %v7249 = vpop.f32.mrb[0].mxu0
      %7250 = vmatprep.mubr.f32.mxu0 0.0
      %7251 = vmatmul.mubr.f32.gmra.mrb[0].mxu0 %v7089
      %v7252 = vpop.f32.mrb[0].mxu0
      %v7253 = vadd.f32 0.0, %v7252
      %v7254 = vpop.f32.mrb[0].mxu0
      %7255 = vmatprep.mubr.f32.mxu0 0.0
      %7256 = vmatmul.mubr.f32.gmra.mrb[0].mxu0 %v7090
      %v7257 = vpop.f32.mrb[0].mxu0
      %v7258 = vadd.f32 0.0, %v7257
      %v7259 = vpop.f32.mrb[0].mxu0
      %7260 = vmatprep.mubr.f32.mxu0 0.0
      %7261 = vmatmul.mubr.f32.gmra.mrb[0].mxu0 %v7091
      %v7262 = vpop.f32.mrb[0].mxu0
      %v7263 = vadd.f32 0.0, %v7262
      %v7264 = vpop.f32.mrb[0].mxu0
      %7265 = vmatprep.mubr.f32.mxu0 0.0
      %7266 = vmatmul.mubr.f32.gmra.mrb[0].mxu0 %v7092
      %v7267 = vpop.f32.mrb[0].mxu0
      %v7268 = vadd.f32 0.0, %v7267
      %v7269 = vpop.f32.mrb[0].mxu0
      %7270 = vmatprep.mubr.f32.mxu0 0.0
      %7271 = vmatmul.mubr.f32.gmra.mrb[0].mxu0 %v7093
      %v7272 = vpop.f32.mrb[0].mxu0
      %v7273 = vadd.f32 0.0, %v7272
      %v7274 = vpop.f32.mrb[0].mxu0
      %7275 = vmatprep.mubr.f32.mxu0 0.0
      %7276 = vmatmul.mubr.f32.gmra.mrb[0].mxu0 %v7094
      %v7277 = vpop.f32.mrb[0].mxu0
      %v7278 = vadd.f32 0.0, %v7277
      %v7279 = vpop.f32.mrb[0].mxu0
      %7280 = vmatprep.mubr.f32.mxu0 0.0
      %7281 = vmatmul.mubr.f32.gmra.mrb[0].mxu0 %v7095
      %v7282 = vpop.f32.mrb[0].mxu0
      %v7283 = vadd.f32 0.0, %v7282
      %v7284 = vpop.f32.mrb[0].mxu0
      %7285 = vmatprep.mubr.f32.mxu0 0.0
      %7286 = vmatmul.mubr.f32.gmra.mrb[0].mxu0 %v7096
      %v7287 = vpop.f32.mrb[0].mxu0
      %v7288 = vadd.f32 0.0, %v7287
      %v7289 = vpop.f32.mrb[0].mxu0
      %7290 = vmatprep.mubr.f32.mxu0 0.0
      %7291 = vmatmul.mubr.f32.gmra.mrb[0].mxu0 %v7097
      %v7292 = vpop.f32.mrb[0].mxu0
      %v7293 = vadd.f32 0.0, %v7292
      %v7294 = vpop.f32.mrb[0].mxu0
      %7295 = vmatprep.mubr.f32.mxu0 0.0
      %7296 = vmatmul.mubr.f32.gmra.mrb[0].mxu0 %v7098
      %v7297 = vpop.f32.mrb[0].mxu0
      %v7298 = vadd.f32 0.0, %v7297
      %v7299 = vpop.f32.mrb[0].mxu0
      %7300 = vmatprep.mubr.f32.mxu0 0.0
      %7301 = vmatmul.mubr.f32.gmra.mrb[0].mxu0 %v7099
      %v7302 = vpop.f32.mrb[0].mxu0
      %v7303 = vadd.f32 0.0, %v7302
      %v7304 = vpop.f32.mrb[0].mxu0
      %7305 = vmatprep.mubr.f32.mxu0 0.0
      %7306 = vmatmul.mubr.f32.gmra.mrb[0].mxu0 %v7100
      %v7307 = vpop.f32.mrb[0].mxu0
      %v7308 = vadd.f32 0.0, %v7307
      %v7309 = vpop.f32.mrb[0].mxu0
      %7310 = vmatprep.mubr.f32.mxu0 0.0
      %7311 = vmatmul.mubr.f32.gmra.mrb[0].mxu0 %v7101
      %v7312 = vpop.f32.mrb[0].mxu0
      %v7313 = vadd.f32 0.0, %v7312
      %v7314 = vpop.f32.mrb[0].mxu0
      %7315 = vmatprep.mubr.f32.mxu0 0.0
      %7316 = vmatmul.mubr.f32.gmra.mrb[0].mxu0 %v7102
      %v7317 = vpop.f32.mrb[0].mxu0
      %v7318 = vadd.f32 0.0, %v7317
      %v7319 = vpop.f32.mrb[0].mxu0
      %7320 = vmatprep.mubr.f32.mxu0 0.0
      %7321 = vmatmul.mubr.f32.gmra.mrb[0].mxu0 %v7103
      %v7322 = vpop.f32.mrb[0].mxu0
      %v7323 = vadd.f32 0.0, %v7322
      %v7324 = vpop.f32.mrb[0].mxu0
      %7325 = vmatprep.mubr.f32.mxu0 0.0
      %7326 = vmatmul.mubr.f32.gmra.mrb[0].mxu0 %v7104
      %v7327 = vpop.f32.mrb[0].mxu0
      %v7328 = vadd.f32 0.0, %v7327
      %v7329 = vpop.f32.mrb[0].mxu0
      %7330 = vmatprep.mubr.f32.mxu0 0.0
      %7331 = vmatmul.mubr.f32.gmra.mrb[0].mxu0 %v7105
      %v7332 = vpop.f32.mrb[0].mxu0
      %v7333 = vadd.f32 0.0, %v7332
      %v7334 = vpop.f32.mrb[0].mxu0
      %7335 = vmatprep.mubr.f32.mxu0 0.0
      %7336 = vmatmul.mubr.f32.gmra.mrb[0].mxu0 %v7106
      %v7337 = vpop.f32.mrb[0].mxu0
      %v7338 = vadd.f32 0.0, %v7337
      %v7339 = vpop.f32.mrb[0].mxu0
      %7340 = vmatprep.mubr.f32.mxu0 0.0
      %7341 = vmatmul.mubr.f32.gmra.mrb[0].mxu0 %v7107
      %v7342 = vpop.f32.mrb[0].mxu0
      %v7343 = vadd.f32 0.0, %v7342
      %v7344 = vpop.f32.mrb[0].mxu0
      %7345 = vmatprep.mubr.f32.mxu0 0.0
      %7346 = vmatmul.mubr.f32.gmra.mrb[0].mxu0 %v7108
      %v7347 = vpop.f32.mrb[0].mxu0
      %v7348 = vadd.f32 0.0, %v7347
      %v7349 = vpop.f32.mrb[0].mxu0
      %7350 = vdwg.mxu0
      %v7351 = vadd.f32 %v7045, %v7193
      %v7352 = vadd.f32 %v7046, %v7198
      %v7353 = vadd.f32 %v7047, %v7203
      %v7354 = vadd.f32 %v7048, %v7208
      %v7355 = vadd.f32 %v7049, %v7213
      %v7356 = vadd.f32 %v7050, %v7218
      %v7357 = vadd.f32 %v7051, %v7223
      %v7358 = vadd.f32 %v7052, %v7228
      %v7359 = vadd.f32 %v7053, %v7233
      %v7360 = vadd.f32 %v7054, %v7238
      %v7361 = vadd.f32 %v7055, %v7243
      %v7362 = vadd.f32 %v7056, %v7248
      %v7363 = vadd.f32 %v7057, %v7253
      %v7364 = vadd.f32 %v7058, %v7258
      %v7365 = vadd.f32 %v7059, %v7263
      %v7366 = vadd.f32 %v7060, %v7268
      %v7367 = vadd.f32 %v7061, %v7273
      %v7368 = vadd.f32 %v7062, %v7278
      %v7369 = vadd.f32 %v7063, %v7283
      %v7370 = vadd.f32 %v7064, %v7288
      %v7371 = vadd.f32 %v7065, %v7293
      %v7372 = vadd.f32 %v7066, %v7298
      %v7373 = vadd.f32 %v7067, %v7303
      %v7374 = vadd.f32 %v7068, %v7308
      %v7375 = vadd.f32 %v7069, %v7313
      %v7376 = vadd.f32 %v7070, %v7318
      %v7377 = vadd.f32 %v7071, %v7323
      %v7378 = vadd.f32 %v7072, %v7328
      %v7379 = vadd.f32 %v7073, %v7333
      %v7380 = vadd.f32 %v7074, %v7338
      %v7381 = vadd.f32 %v7075, %v7343
      %v7382 = vadd.f32 %v7076, %v7348
      %v7383 = vld [vmem:[%s412 + $0x1] sm:$0xff]
      %v7384 = vld [vmem:[%s412 + $0x9] sm:$0xff]
      %v7385 = vld [vmem:[%s412 + $0x19] sm:$0xff]
      %v7386 = vld [vmem:[%s412 + $0x21] sm:$0xff]
      %v7387 = vld [vmem:[%s412 + $0x31] sm:$0xff]
      %v7388 = vld [vmem:[%s412 + $0x39] sm:$0xff]
      %v7389 = vld [vmem:[%s412 + $0x49] sm:$0xff]
      %v7390 = vld [vmem:[%s412 + $0x51] sm:$0xff]
      %v7391 = vld [vmem:[%s412 + $0x61] sm:$0xff]
      %v7392 = vld [vmem:[%s412 + $0x69] sm:$0xff]
      %v7393 = vld [vmem:[%s412 + $0x79] sm:$0xff]
      %v7394 = vld [vmem:[%s412 + $0x81] sm:$0xff]
      %v7395 = vld [vmem:[%s412 + $0x91] sm:$0xff]
      %v7396 = vld [vmem:[%s412 + $0x99] sm:$0xff]
      %v7397 = vld [vmem:[%s412 + $0xa9] sm:$0xff]
      %v7398 = vld [vmem:[%s412 + $0xb1] sm:$0xff]
      %v7399 = vld [vmem:[%s412 + $0xc1] sm:$0xff]
      %v7400 = vld [vmem:[%s412 + $0xc9] sm:$0xff]
      %v7401 = vld [vmem:[%s412 + $0xd9] sm:$0xff]
      %v7402 = vld [vmem:[%s412 + $0xe1] sm:$0xff]
      %v7403 = vld [vmem:[%s412 + $0xf1] sm:$0xff]
      %v7404 = vld [vmem:[%s412 + $0xf9] sm:$0xff]
      %v7405 = vld [vmem:[%s412 + $0x109] sm:$0xff]
      %v7406 = vld [vmem:[%s412 + $0x111] sm:$0xff]
      %v7407 = vld [vmem:[%s412 + $0x121] sm:$0xff]
      %v7408 = vld [vmem:[%s412 + $0x129] sm:$0xff]
      %v7409 = vld [vmem:[%s412 + $0x139] sm:$0xff]
      %v7410 = vld [vmem:[%s412 + $0x141] sm:$0xff]
      %v7411 = vld [vmem:[%s412 + $0x151] sm:$0xff]
      %v7412 = vld [vmem:[%s412 + $0x159] sm:$0xff]
      %v7413 = vld [vmem:[%s412 + $0x169] sm:$0xff]
      %v7414 = vld [vmem:[%s412 + $0x171] sm:$0xff]
      %s7415 = scalar_lea.vmem %s6, 512
      %v7416 = vld [vmem:[%s7415] sm:$0xff]
      %v7417 = vld [vmem:[%s7415 + $0x8] sm:$0xff]
      %v7418 = vld [vmem:[%s7415 + $0x10] sm:$0xff]
      %v7419 = vld [vmem:[%s7415 + $0x18] sm:$0xff]
      %v7420 = vld [vmem:[%s7415 + $0x20] sm:$0xff]
      %v7421 = vld [vmem:[%s7415 + $0x28] sm:$0xff]
      %v7422 = vld [vmem:[%s7415 + $0x30] sm:$0xff]
      %v7423 = vld [vmem:[%s7415 + $0x38] sm:$0xff]
      %v7424 = vld [vmem:[%s7415 + $0x40] sm:$0xff]
      %v7425 = vld [vmem:[%s7415 + $0x48] sm:$0xff]
      %v7426 = vld [vmem:[%s7415 + $0x50] sm:$0xff]
      %v7427 = vld [vmem:[%s7415 + $0x58] sm:$0xff]
      %v7428 = vld [vmem:[%s7415 + $0x60] sm:$0xff]
      %v7429 = vld [vmem:[%s7415 + $0x68] sm:$0xff]
      %v7430 = vld [vmem:[%s7415 + $0x70] sm:$0xff]
      %v7431 = vld [vmem:[%s7415 + $0x78] sm:$0xff]
      %7432 = vmatprep.subr.mxu0 0.0
      %7433 = vmatpush1.msra.mxu0 %v7416
      %7434 = vmatprep.subr.mxu0 0.0
      %7435 = vmatpush1.msra.mxu0 %v7417
      %7436 = vmatprep.subr.mxu0 0.0
      %7437 = vmatpush1.msra.mxu0 %v7418
      %7438 = vmatprep.subr.mxu0 0.0
      %7439 = vmatpush1.msra.mxu0 %v7419
      %7440 = vmatprep.subr.mxu0 0.0
      %7441 = vmatpush1.msra.mxu0 %v7420
      %7442 = vmatprep.subr.mxu0 0.0
      %7443 = vmatpush1.msra.mxu0 %v7421
      %7444 = vmatprep.subr.mxu0 0.0
      %7445 = vmatpush1.msra.mxu0 %v7422
      %7446 = vmatprep.subr.mxu0 0.0
      %7447 = vmatpush1.msra.mxu0 %v7423
      %7448 = vmatprep.subr.mxu0 0.0
      %7449 = vmatpush1.msra.mxu0 %v7424
      %7450 = vmatprep.subr.mxu0 0.0
      %7451 = vmatpush1.msra.mxu0 %v7425
      %7452 = vmatprep.subr.mxu0 0.0
      %7453 = vmatpush1.msra.mxu0 %v7426
      %7454 = vmatprep.subr.mxu0 0.0
      %7455 = vmatpush1.msra.mxu0 %v7427
      %7456 = vmatprep.subr.mxu0 0.0
      %7457 = vmatpush1.msra.mxu0 %v7428
      %7458 = vmatprep.subr.mxu0 0.0
      %7459 = vmatpush1.msra.mxu0 %v7429
      %7460 = vmatprep.subr.mxu0 0.0
      %7461 = vmatpush1.msra.mxu0 %v7430
      %7462 = vmatprep.subr.mxu0 0.0
      %7463 = vmatpush1.msra.mxu0 %v7431
      %7464 = vmatprep.subr.mxu0 0.0
      %7465 = vmatpush1.msra.mxu0 0.0
      %7466 = vmatprep.subr.mxu0 0.0
      %7467 = vmatpush1.msra.mxu0 0.0
      %7468 = vmatprep.subr.mxu0 0.0
      %7469 = vmatpush1.msra.mxu0 0.0
      %7470 = vmatprep.subr.mxu0 0.0
      %7471 = vmatpush1.msra.mxu0 0.0
      %7472 = vmatprep.subr.mxu0 0.0
      %7473 = vmatpush1.msra.mxu0 0.0
      %7474 = vmatprep.subr.mxu0 0.0
      %7475 = vmatpush1.msra.mxu0 0.0
      %7476 = vmatprep.subr.mxu0 0.0
      %7477 = vmatpush1.msra.mxu0 0.0
      %7478 = vmatprep.subr.mxu0 0.0
      %7479 = vmatpush1.msra.mxu0 0.0
      %7480 = vmatprep.subr.mxu0 0.0
      %7481 = vmatpush1.msra.mxu0 0.0
      %7482 = vmatprep.subr.mxu0 0.0
      %7483 = vmatpush1.msra.mxu0 0.0
      %7484 = vmatprep.subr.mxu0 0.0
      %7485 = vmatpush1.msra.mxu0 0.0
      %7486 = vmatprep.subr.mxu0 0.0
      %7487 = vmatpush1.msra.mxu0 0.0
      %7488 = vmatprep.subr.mxu0 0.0
      %7489 = vmatpush1.msra.mxu0 0.0
      %7490 = vmatprep.subr.mxu0 0.0
      %7491 = vmatpush1.msra.mxu0 0.0
      %7492 = vmatprep.subr.mxu0 0.0
      %7493 = vmatpush1.msra.mxu0 0.0
      %7494 = vmatprep.subr.mxu0 0.0
      %7495 = vmatpush1.msra.mxu0 0.0
      %7496 = vmatprep.mubr.f32.mxu0 0.0
      %7497 = vmatmul.mubr.f32.gmra.mrb[0].mxu0 %v7383
      %v7498 = vpop.f32.mrb[0].mxu0
      %v7499 = vadd.f32 0.0, %v7498
      %v7500 = vpop.f32.mrb[0].mxu0
      %7501 = vmatprep.mubr.f32.mxu0 0.0
      %7502 = vmatmul.mubr.f32.gmra.mrb[0].mxu0 %v7384
      %v7503 = vpop.f32.mrb[0].mxu0
      %v7504 = vadd.f32 0.0, %v7503
      %v7505 = vpop.f32.mrb[0].mxu0
      %7506 = vmatprep.mubr.f32.mxu0 0.0
      %7507 = vmatmul.mubr.f32.gmra.mrb[0].mxu0 %v7385
      %v7508 = vpop.f32.mrb[0].mxu0
      %v7509 = vadd.f32 0.0, %v7508
      %v7510 = vpop.f32.mrb[0].mxu0
      %7511 = vmatprep.mubr.f32.mxu0 0.0
      %7512 = vmatmul.mubr.f32.gmra.mrb[0].mxu0 %v7386
      %v7513 = vpop.f32.mrb[0].mxu0
      %v7514 = vadd.f32 0.0, %v7513
      %v7515 = vpop.f32.mrb[0].mxu0
      %7516 = vmatprep.mubr.f32.mxu0 0.0
      %7517 = vmatmul.mubr.f32.gmra.mrb[0].mxu0 %v7387
      %v7518 = vpop.f32.mrb[0].mxu0
      %v7519 = vadd.f32 0.0, %v7518
      %v7520 = vpop.f32.mrb[0].mxu0
      %7521 = vmatprep.mubr.f32.mxu0 0.0
      %7522 = vmatmul.mubr.f32.gmra.mrb[0].mxu0 %v7388
      %v7523 = vpop.f32.mrb[0].mxu0
      %v7524 = vadd.f32 0.0, %v7523
      %v7525 = vpop.f32.mrb[0].mxu0
      %7526 = vmatprep.mubr.f32.mxu0 0.0
      %7527 = vmatmul.mubr.f32.gmra.mrb[0].mxu0 %v7389
      %v7528 = vpop.f32.mrb[0].mxu0
      %v7529 = vadd.f32 0.0, %v7528
      %v7530 = vpop.f32.mrb[0].mxu0
      %7531 = vmatprep.mubr.f32.mxu0 0.0
      %7532 = vmatmul.mubr.f32.gmra.mrb[0].mxu0 %v7390
      %v7533 = vpop.f32.mrb[0].mxu0
      %v7534 = vadd.f32 0.0, %v7533
      %v7535 = vpop.f32.mrb[0].mxu0
      %7536 = vmatprep.mubr.f32.mxu0 0.0
      %7537 = vmatmul.mubr.f32.gmra.mrb[0].mxu0 %v7391
      %v7538 = vpop.f32.mrb[0].mxu0
      %v7539 = vadd.f32 0.0, %v7538
      %v7540 = vpop.f32.mrb[0].mxu0
      %7541 = vmatprep.mubr.f32.mxu0 0.0
      %7542 = vmatmul.mubr.f32.gmra.mrb[0].mxu0 %v7392
      %v7543 = vpop.f32.mrb[0].mxu0
      %v7544 = vadd.f32 0.0, %v7543
      %v7545 = vpop.f32.mrb[0].mxu0
      %7546 = vmatprep.mubr.f32.mxu0 0.0
      %7547 = vmatmul.mubr.f32.gmra.mrb[0].mxu0 %v7393
      %v7548 = vpop.f32.mrb[0].mxu0
      %v7549 = vadd.f32 0.0, %v7548
      %v7550 = vpop.f32.mrb[0].mxu0
      %7551 = vmatprep.mubr.f32.mxu0 0.0
      %7552 = vmatmul.mubr.f32.gmra.mrb[0].mxu0 %v7394
      %v7553 = vpop.f32.mrb[0].mxu0
      %v7554 = vadd.f32 0.0, %v7553
      %v7555 = vpop.f32.mrb[0].mxu0
      %7556 = vmatprep.mubr.f32.mxu0 0.0
      %7557 = vmatmul.mubr.f32.gmra.mrb[0].mxu0 %v7395
      %v7558 = vpop.f32.mrb[0].mxu0
      %v7559 = vadd.f32 0.0, %v7558
      %v7560 = vpop.f32.mrb[0].mxu0
      %7561 = vmatprep.mubr.f32.mxu0 0.0
      %7562 = vmatmul.mubr.f32.gmra.mrb[0].mxu0 %v7396
      %v7563 = vpop.f32.mrb[0].mxu0
      %v7564 = vadd.f32 0.0, %v7563
      %v7565 = vpop.f32.mrb[0].mxu0
      %7566 = vmatprep.mubr.f32.mxu0 0.0
      %7567 = vmatmul.mubr.f32.gmra.mrb[0].mxu0 %v7397
      %v7568 = vpop.f32.mrb[0].mxu0
      %v7569 = vadd.f32 0.0, %v7568
      %v7570 = vpop.f32.mrb[0].mxu0
      %7571 = vmatprep.mubr.f32.mxu0 0.0
      %7572 = vmatmul.mubr.f32.gmra.mrb[0].mxu0 %v7398
      %v7573 = vpop.f32.mrb[0].mxu0
      %v7574 = vadd.f32 0.0, %v7573
      %v7575 = vpop.f32.mrb[0].mxu0
      %7576 = vmatprep.mubr.f32.mxu0 0.0
      %7577 = vmatmul.mubr.f32.gmra.mrb[0].mxu0 %v7399
      %v7578 = vpop.f32.mrb[0].mxu0
      %v7579 = vadd.f32 0.0, %v7578
      %v7580 = vpop.f32.mrb[0].mxu0
      %7581 = vmatprep.mubr.f32.mxu0 0.0
      %7582 = vmatmul.mubr.f32.gmra.mrb[0].mxu0 %v7400
      %v7583 = vpop.f32.mrb[0].mxu0
      %v7584 = vadd.f32 0.0, %v7583
      %v7585 = vpop.f32.mrb[0].mxu0
      %7586 = vmatprep.mubr.f32.mxu0 0.0
      %7587 = vmatmul.mubr.f32.gmra.mrb[0].mxu0 %v7401
      %v7588 = vpop.f32.mrb[0].mxu0
      %v7589 = vadd.f32 0.0, %v7588
      %v7590 = vpop.f32.mrb[0].mxu0
      %7591 = vmatprep.mubr.f32.mxu0 0.0
      %7592 = vmatmul.mubr.f32.gmra.mrb[0].mxu0 %v7402
      %v7593 = vpop.f32.mrb[0].mxu0
      %v7594 = vadd.f32 0.0, %v7593
      %v7595 = vpop.f32.mrb[0].mxu0
      %7596 = vmatprep.mubr.f32.mxu0 0.0
      %7597 = vmatmul.mubr.f32.gmra.mrb[0].mxu0 %v7403
      %v7598 = vpop.f32.mrb[0].mxu0
      %v7599 = vadd.f32 0.0, %v7598
      %v7600 = vpop.f32.mrb[0].mxu0
      %7601 = vmatprep.mubr.f32.mxu0 0.0
      %7602 = vmatmul.mubr.f32.gmra.mrb[0].mxu0 %v7404
      %v7603 = vpop.f32.mrb[0].mxu0
      %v7604 = vadd.f32 0.0, %v7603
      %v7605 = vpop.f32.mrb[0].mxu0
      %7606 = vmatprep.mubr.f32.mxu0 0.0
      %7607 = vmatmul.mubr.f32.gmra.mrb[0].mxu0 %v7405
      %v7608 = vpop.f32.mrb[0].mxu0
      %v7609 = vadd.f32 0.0, %v7608
      %v7610 = vpop.f32.mrb[0].mxu0
      %7611 = vmatprep.mubr.f32.mxu0 0.0
      %7612 = vmatmul.mubr.f32.gmra.mrb[0].mxu0 %v7406
      %v7613 = vpop.f32.mrb[0].mxu0
      %v7614 = vadd.f32 0.0, %v7613
      %v7615 = vpop.f32.mrb[0].mxu0
      %7616 = vmatprep.mubr.f32.mxu0 0.0
      %7617 = vmatmul.mubr.f32.gmra.mrb[0].mxu0 %v7407
      %v7618 = vpop.f32.mrb[0].mxu0
      %v7619 = vadd.f32 0.0, %v7618
      %v7620 = vpop.f32.mrb[0].mxu0
      %7621 = vmatprep.mubr.f32.mxu0 0.0
      %7622 = vmatmul.mubr.f32.gmra.mrb[0].mxu0 %v7408
      %v7623 = vpop.f32.mrb[0].mxu0
      %v7624 = vadd.f32 0.0, %v7623
      %v7625 = vpop.f32.mrb[0].mxu0
      %7626 = vmatprep.mubr.f32.mxu0 0.0
      %7627 = vmatmul.mubr.f32.gmra.mrb[0].mxu0 %v7409
      %v7628 = vpop.f32.mrb[0].mxu0
      %v7629 = vadd.f32 0.0, %v7628
      %v7630 = vpop.f32.mrb[0].mxu0
      %7631 = vmatprep.mubr.f32.mxu0 0.0
      %7632 = vmatmul.mubr.f32.gmra.mrb[0].mxu0 %v7410
      %v7633 = vpop.f32.mrb[0].mxu0
      %v7634 = vadd.f32 0.0, %v7633
      %v7635 = vpop.f32.mrb[0].mxu0
      %7636 = vmatprep.mubr.f32.mxu0 0.0
      %7637 = vmatmul.mubr.f32.gmra.mrb[0].mxu0 %v7411
      %v7638 = vpop.f32.mrb[0].mxu0
      %v7639 = vadd.f32 0.0, %v7638
      %v7640 = vpop.f32.mrb[0].mxu0
      %7641 = vmatprep.mubr.f32.mxu0 0.0
      %7642 = vmatmul.mubr.f32.gmra.mrb[0].mxu0 %v7412
      %v7643 = vpop.f32.mrb[0].mxu0
      %v7644 = vadd.f32 0.0, %v7643
      %v7645 = vpop.f32.mrb[0].mxu0
      %7646 = vmatprep.mubr.f32.mxu0 0.0
      %7647 = vmatmul.mubr.f32.gmra.mrb[0].mxu0 %v7413
      %v7648 = vpop.f32.mrb[0].mxu0
      %v7649 = vadd.f32 0.0, %v7648
      %v7650 = vpop.f32.mrb[0].mxu0
      %7651 = vmatprep.mubr.f32.mxu0 0.0
      %7652 = vmatmul.mubr.f32.gmra.mrb[0].mxu0 %v7414
      %v7653 = vpop.f32.mrb[0].mxu0
      %v7654 = vadd.f32 0.0, %v7653
      %v7655 = vpop.f32.mrb[0].mxu0
      %7656 = vdwg.mxu0
      %v7657 = vadd.f32 %v7351, %v7499
      %v7658 = vadd.f32 %v7352, %v7504
      %v7659 = vadd.f32 %v7353, %v7509
      %v7660 = vadd.f32 %v7354, %v7514
      %v7661 = vadd.f32 %v7355, %v7519
      %v7662 = vadd.f32 %v7356, %v7524
      %v7663 = vadd.f32 %v7357, %v7529
      %v7664 = vadd.f32 %v7358, %v7534
      %v7665 = vadd.f32 %v7359, %v7539
      %v7666 = vadd.f32 %v7360, %v7544
      %v7667 = vadd.f32 %v7361, %v7549
      %v7668 = vadd.f32 %v7362, %v7554
      %v7669 = vadd.f32 %v7363, %v7559
      %v7670 = vadd.f32 %v7364, %v7564
      %v7671 = vadd.f32 %v7365, %v7569
      %v7672 = vadd.f32 %v7366, %v7574
      %v7673 = vadd.f32 %v7367, %v7579
      %v7674 = vadd.f32 %v7368, %v7584
      %v7675 = vadd.f32 %v7369, %v7589
      %v7676 = vadd.f32 %v7370, %v7594
      %v7677 = vadd.f32 %v7371, %v7599
      %v7678 = vadd.f32 %v7372, %v7604
      %v7679 = vadd.f32 %v7373, %v7609
      %v7680 = vadd.f32 %v7374, %v7614
      %v7681 = vadd.f32 %v7375, %v7619
      %v7682 = vadd.f32 %v7376, %v7624
      %v7683 = vadd.f32 %v7377, %v7629
      %v7684 = vadd.f32 %v7378, %v7634
      %v7685 = vadd.f32 %v7379, %v7639
      %v7686 = vadd.f32 %v7380, %v7644
      %v7687 = vadd.f32 %v7381, %v7649
      %v7688 = vadd.f32 %v7382, %v7654
      %v7689 = vld [vmem:[%s412 + $0x2] sm:$0xff]
      %v7690 = vld [vmem:[%s412 + $0xa] sm:$0xff]
      %v7691 = vld [vmem:[%s412 + $0x1a] sm:$0xff]
      %v7692 = vld [vmem:[%s412 + $0x22] sm:$0xff]
      %v7693 = vld [vmem:[%s412 + $0x32] sm:$0xff]
      %v7694 = vld [vmem:[%s412 + $0x3a] sm:$0xff]
      %v7695 = vld [vmem:[%s412 + $0x4a] sm:$0xff]
      %v7696 = vld [vmem:[%s412 + $0x52] sm:$0xff]
      %v7697 = vld [vmem:[%s412 + $0x62] sm:$0xff]
      %v7698 = vld [vmem:[%s412 + $0x6a] sm:$0xff]
      %v7699 = vld [vmem:[%s412 + $0x7a] sm:$0xff]
      %v7700 = vld [vmem:[%s412 + $0x82] sm:$0xff]
      %v7701 = vld [vmem:[%s412 + $0x92] sm:$0xff]
      %v7702 = vld [vmem:[%s412 + $0x9a] sm:$0xff]
      %v7703 = vld [vmem:[%s412 + $0xaa] sm:$0xff]
      %v7704 = vld [vmem:[%s412 + $0xb2] sm:$0xff]
      %v7705 = vld [vmem:[%s412 + $0xc2] sm:$0xff]
      %v7706 = vld [vmem:[%s412 + $0xca] sm:$0xff]
      %v7707 = vld [vmem:[%s412 + $0xda] sm:$0xff]
      %v7708 = vld [vmem:[%s412 + $0xe2] sm:$0xff]
      %v7709 = vld [vmem:[%s412 + $0xf2] sm:$0xff]
      %v7710 = vld [vmem:[%s412 + $0xfa] sm:$0xff]
      %v7711 = vld [vmem:[%s412 + $0x10a] sm:$0xff]
      %v7712 = vld [vmem:[%s412 + $0x112] sm:$0xff]
      %v7713 = vld [vmem:[%s412 + $0x122] sm:$0xff]
      %v7714 = vld [vmem:[%s412 + $0x12a] sm:$0xff]
      %v7715 = vld [vmem:[%s412 + $0x13a] sm:$0xff]
      %v7716 = vld [vmem:[%s412 + $0x142] sm:$0xff]
      %v7717 = vld [vmem:[%s412 + $0x152] sm:$0xff]
      %v7718 = vld [vmem:[%s412 + $0x15a] sm:$0xff]
      %v7719 = vld [vmem:[%s412 + $0x16a] sm:$0xff]
      %v7720 = vld [vmem:[%s412 + $0x172] sm:$0xff]
      %s7721 = scalar_lea.vmem %s6, 640
      %v7722 = vld [vmem:[%s7721] sm:$0xff]
      %v7723 = vld [vmem:[%s7721 + $0x8] sm:$0xff]
      %v7724 = vld [vmem:[%s7721 + $0x10] sm:$0xff]
      %v7725 = vld [vmem:[%s7721 + $0x18] sm:$0xff]
      %v7726 = vld [vmem:[%s7721 + $0x20] sm:$0xff]
      %v7727 = vld [vmem:[%s7721 + $0x28] sm:$0xff]
      %v7728 = vld [vmem:[%s7721 + $0x30] sm:$0xff]
      %v7729 = vld [vmem:[%s7721 + $0x38] sm:$0xff]
      %v7730 = vld [vmem:[%s7721 + $0x40] sm:$0xff]
      %v7731 = vld [vmem:[%s7721 + $0x48] sm:$0xff]
      %v7732 = vld [vmem:[%s7721 + $0x50] sm:$0xff]
      %v7733 = vld [vmem:[%s7721 + $0x58] sm:$0xff]
      %v7734 = vld [vmem:[%s7721 + $0x60] sm:$0xff]
      %v7735 = vld [vmem:[%s7721 + $0x68] sm:$0xff]
      %v7736 = vld [vmem:[%s7721 + $0x70] sm:$0xff]
      %v7737 = vld [vmem:[%s7721 + $0x78] sm:$0xff]
      %7738 = vmatprep.subr.mxu0 0.0
      %7739 = vmatpush1.msra.mxu0 %v7722
      %7740 = vmatprep.subr.mxu0 0.0
      %7741 = vmatpush1.msra.mxu0 %v7723
      %7742 = vmatprep.subr.mxu0 0.0
      %7743 = vmatpush1.msra.mxu0 %v7724
      %7744 = vmatprep.subr.mxu0 0.0
      %7745 = vmatpush1.msra.mxu0 %v7725
      %7746 = vmatprep.subr.mxu0 0.0
      %7747 = vmatpush1.msra.mxu0 %v7726
      %7748 = vmatprep.subr.mxu0 0.0
      %7749 = vmatpush1.msra.mxu0 %v7727
      %7750 = vmatprep.subr.mxu0 0.0
      %7751 = vmatpush1.msra.mxu0 %v7728
      %7752 = vmatprep.subr.mxu0 0.0
      %7753 = vmatpush1.msra.mxu0 %v7729
      %7754 = vmatprep.subr.mxu0 0.0
      %7755 = vmatpush1.msra.mxu0 %v7730
      %7756 = vmatprep.subr.mxu0 0.0
      %7757 = vmatpush1.msra.mxu0 %v7731
      %7758 = vmatprep.subr.mxu0 0.0
      %7759 = vmatpush1.msra.mxu0 %v7732
      %7760 = vmatprep.subr.mxu0 0.0
      %7761 = vmatpush1.msra.mxu0 %v7733
      %7762 = vmatprep.subr.mxu0 0.0
      %7763 = vmatpush1.msra.mxu0 %v7734
      %7764 = vmatprep.subr.mxu0 0.0
      %7765 = vmatpush1.msra.mxu0 %v7735
      %7766 = vmatprep.subr.mxu0 0.0
      %7767 = vmatpush1.msra.mxu0 %v7736
      %7768 = vmatprep.subr.mxu0 0.0
      %7769 = vmatpush1.msra.mxu0 %v7737
      %7770 = vmatprep.subr.mxu0 0.0
      %7771 = vmatpush1.msra.mxu0 0.0
      %7772 = vmatprep.subr.mxu0 0.0
      %7773 = vmatpush1.msra.mxu0 0.0
      %7774 = vmatprep.subr.mxu0 0.0
      %7775 = vmatpush1.msra.mxu0 0.0
      %7776 = vmatprep.subr.mxu0 0.0
      %7777 = vmatpush1.msra.mxu0 0.0
      %7778 = vmatprep.subr.mxu0 0.0
      %7779 = vmatpush1.msra.mxu0 0.0
      %7780 = vmatprep.subr.mxu0 0.0
      %7781 = vmatpush1.msra.mxu0 0.0
      %7782 = vmatprep.subr.mxu0 0.0
      %7783 = vmatpush1.msra.mxu0 0.0
      %7784 = vmatprep.subr.mxu0 0.0
      %7785 = vmatpush1.msra.mxu0 0.0
      %7786 = vmatprep.subr.mxu0 0.0
      %7787 = vmatpush1.msra.mxu0 0.0
      %7788 = vmatprep.subr.mxu0 0.0
      %7789 = vmatpush1.msra.mxu0 0.0
      %7790 = vmatprep.subr.mxu0 0.0
      %7791 = vmatpush1.msra.mxu0 0.0
      %7792 = vmatprep.subr.mxu0 0.0
      %7793 = vmatpush1.msra.mxu0 0.0
      %7794 = vmatprep.subr.mxu0 0.0
      %7795 = vmatpush1.msra.mxu0 0.0
      %7796 = vmatprep.subr.mxu0 0.0
      %7797 = vmatpush1.msra.mxu0 0.0
      %7798 = vmatprep.subr.mxu0 0.0
      %7799 = vmatpush1.msra.mxu0 0.0
      %7800 = vmatprep.subr.mxu0 0.0
      %7801 = vmatpush1.msra.mxu0 0.0
      %7802 = vmatprep.mubr.f32.mxu0 0.0
      %7803 = vmatmul.mubr.f32.gmra.mrb[0].mxu0 %v7689
      %v7804 = vpop.f32.mrb[0].mxu0
      %v7805 = vadd.f32 0.0, %v7804
      %v7806 = vpop.f32.mrb[0].mxu0
      %7807 = vmatprep.mubr.f32.mxu0 0.0
      %7808 = vmatmul.mubr.f32.gmra.mrb[0].mxu0 %v7690
      %v7809 = vpop.f32.mrb[0].mxu0
      %v7810 = vadd.f32 0.0, %v7809
      %v7811 = vpop.f32.mrb[0].mxu0
      %7812 = vmatprep.mubr.f32.mxu0 0.0
      %7813 = vmatmul.mubr.f32.gmra.mrb[0].mxu0 %v7691
      %v7814 = vpop.f32.mrb[0].mxu0
      %v7815 = vadd.f32 0.0, %v7814
      %v7816 = vpop.f32.mrb[0].mxu0
      %7817 = vmatprep.mubr.f32.mxu0 0.0
      %7818 = vmatmul.mubr.f32.gmra.mrb[0].mxu0 %v7692
      %v7819 = vpop.f32.mrb[0].mxu0
      %v7820 = vadd.f32 0.0, %v7819
      %v7821 = vpop.f32.mrb[0].mxu0
      %7822 = vmatprep.mubr.f32.mxu0 0.0
      %7823 = vmatmul.mubr.f32.gmra.mrb[0].mxu0 %v7693
      %v7824 = vpop.f32.mrb[0].mxu0
      %v7825 = vadd.f32 0.0, %v7824
      %v7826 = vpop.f32.mrb[0].mxu0
      %7827 = vmatprep.mubr.f32.mxu0 0.0
      %7828 = vmatmul.mubr.f32.gmra.mrb[0].mxu0 %v7694
      %v7829 = vpop.f32.mrb[0].mxu0
      %v7830 = vadd.f32 0.0, %v7829
      %v7831 = vpop.f32.mrb[0].mxu0
      %7832 = vmatprep.mubr.f32.mxu0 0.0
      %7833 = vmatmul.mubr.f32.gmra.mrb[0].mxu0 %v7695
      %v7834 = vpop.f32.mrb[0].mxu0
      %v7835 = vadd.f32 0.0, %v7834
      %v7836 = vpop.f32.mrb[0].mxu0
      %7837 = vmatprep.mubr.f32.mxu0 0.0
      %7838 = vmatmul.mubr.f32.gmra.mrb[0].mxu0 %v7696
      %v7839 = vpop.f32.mrb[0].mxu0
      %v7840 = vadd.f32 0.0, %v7839
      %v7841 = vpop.f32.mrb[0].mxu0
      %7842 = vmatprep.mubr.f32.mxu0 0.0
      %7843 = vmatmul.mubr.f32.gmra.mrb[0].mxu0 %v7697
      %v7844 = vpop.f32.mrb[0].mxu0
      %v7845 = vadd.f32 0.0, %v7844
      %v7846 = vpop.f32.mrb[0].mxu0
      %7847 = vmatprep.mubr.f32.mxu0 0.0
      %7848 = vmatmul.mubr.f32.gmra.mrb[0].mxu0 %v7698
      %v7849 = vpop.f32.mrb[0].mxu0
      %v7850 = vadd.f32 0.0, %v7849
      %v7851 = vpop.f32.mrb[0].mxu0
      %7852 = vmatprep.mubr.f32.mxu0 0.0
      %7853 = vmatmul.mubr.f32.gmra.mrb[0].mxu0 %v7699
      %v7854 = vpop.f32.mrb[0].mxu0
      %v7855 = vadd.f32 0.0, %v7854
      %v7856 = vpop.f32.mrb[0].mxu0
      %7857 = vmatprep.mubr.f32.mxu0 0.0
      %7858 = vmatmul.mubr.f32.gmra.mrb[0].mxu0 %v7700
      %v7859 = vpop.f32.mrb[0].mxu0
      %v7860 = vadd.f32 0.0, %v7859
      %v7861 = vpop.f32.mrb[0].mxu0
      %7862 = vmatprep.mubr.f32.mxu0 0.0
      %7863 = vmatmul.mubr.f32.gmra.mrb[0].mxu0 %v7701
      %v7864 = vpop.f32.mrb[0].mxu0
      %v7865 = vadd.f32 0.0, %v7864
      %v7866 = vpop.f32.mrb[0].mxu0
      %7867 = vmatprep.mubr.f32.mxu0 0.0
      %7868 = vmatmul.mubr.f32.gmra.mrb[0].mxu0 %v7702
      %v7869 = vpop.f32.mrb[0].mxu0
      %v7870 = vadd.f32 0.0, %v7869
      %v7871 = vpop.f32.mrb[0].mxu0
      %7872 = vmatprep.mubr.f32.mxu0 0.0
      %7873 = vmatmul.mubr.f32.gmra.mrb[0].mxu0 %v7703
      %v7874 = vpop.f32.mrb[0].mxu0
      %v7875 = vadd.f32 0.0, %v7874
      %v7876 = vpop.f32.mrb[0].mxu0
      %7877 = vmatprep.mubr.f32.mxu0 0.0
      %7878 = vmatmul.mubr.f32.gmra.mrb[0].mxu0 %v7704
      %v7879 = vpop.f32.mrb[0].mxu0
      %v7880 = vadd.f32 0.0, %v7879
      %v7881 = vpop.f32.mrb[0].mxu0
      %7882 = vmatprep.mubr.f32.mxu0 0.0
      %7883 = vmatmul.mubr.f32.gmra.mrb[0].mxu0 %v7705
      %v7884 = vpop.f32.mrb[0].mxu0
      %v7885 = vadd.f32 0.0, %v7884
      %v7886 = vpop.f32.mrb[0].mxu0
      %7887 = vmatprep.mubr.f32.mxu0 0.0
      %7888 = vmatmul.mubr.f32.gmra.mrb[0].mxu0 %v7706
      %v7889 = vpop.f32.mrb[0].mxu0
      %v7890 = vadd.f32 0.0, %v7889
      %v7891 = vpop.f32.mrb[0].mxu0
      %7892 = vmatprep.mubr.f32.mxu0 0.0
      %7893 = vmatmul.mubr.f32.gmra.mrb[0].mxu0 %v7707
      %v7894 = vpop.f32.mrb[0].mxu0
      %v7895 = vadd.f32 0.0, %v7894
      %v7896 = vpop.f32.mrb[0].mxu0
      %7897 = vmatprep.mubr.f32.mxu0 0.0
      %7898 = vmatmul.mubr.f32.gmra.mrb[0].mxu0 %v7708
      %v7899 = vpop.f32.mrb[0].mxu0
      %v7900 = vadd.f32 0.0, %v7899
      %v7901 = vpop.f32.mrb[0].mxu0
      %7902 = vmatprep.mubr.f32.mxu0 0.0
      %7903 = vmatmul.mubr.f32.gmra.mrb[0].mxu0 %v7709
      %v7904 = vpop.f32.mrb[0].mxu0
      %v7905 = vadd.f32 0.0, %v7904
      %v7906 = vpop.f32.mrb[0].mxu0
      %7907 = vmatprep.mubr.f32.mxu0 0.0
      %7908 = vmatmul.mubr.f32.gmra.mrb[0].mxu0 %v7710
      %v7909 = vpop.f32.mrb[0].mxu0
      %v7910 = vadd.f32 0.0, %v7909
      %v7911 = vpop.f32.mrb[0].mxu0
      %7912 = vmatprep.mubr.f32.mxu0 0.0
      %7913 = vmatmul.mubr.f32.gmra.mrb[0].mxu0 %v7711
      %v7914 = vpop.f32.mrb[0].mxu0
      %v7915 = vadd.f32 0.0, %v7914
      %v7916 = vpop.f32.mrb[0].mxu0
      %7917 = vmatprep.mubr.f32.mxu0 0.0
      %7918 = vmatmul.mubr.f32.gmra.mrb[0].mxu0 %v7712
      %v7919 = vpop.f32.mrb[0].mxu0
      %v7920 = vadd.f32 0.0, %v7919
      %v7921 = vpop.f32.mrb[0].mxu0
      %7922 = vmatprep.mubr.f32.mxu0 0.0
      %7923 = vmatmul.mubr.f32.gmra.mrb[0].mxu0 %v7713
      %v7924 = vpop.f32.mrb[0].mxu0
      %v7925 = vadd.f32 0.0, %v7924
      %v7926 = vpop.f32.mrb[0].mxu0
      %7927 = vmatprep.mubr.f32.mxu0 0.0
      %7928 = vmatmul.mubr.f32.gmra.mrb[0].mxu0 %v7714
      %v7929 = vpop.f32.mrb[0].mxu0
      %v7930 = vadd.f32 0.0, %v7929
      %v7931 = vpop.f32.mrb[0].mxu0
      %7932 = vmatprep.mubr.f32.mxu0 0.0
      %7933 = vmatmul.mubr.f32.gmra.mrb[0].mxu0 %v7715
      %v7934 = vpop.f32.mrb[0].mxu0
      %v7935 = vadd.f32 0.0, %v7934
      %v7936 = vpop.f32.mrb[0].mxu0
      %7937 = vmatprep.mubr.f32.mxu0 0.0
      %7938 = vmatmul.mubr.f32.gmra.mrb[0].mxu0 %v7716
      %v7939 = vpop.f32.mrb[0].mxu0
      %v7940 = vadd.f32 0.0, %v7939
      %v7941 = vpop.f32.mrb[0].mxu0
      %7942 = vmatprep.mubr.f32.mxu0 0.0
      %7943 = vmatmul.mubr.f32.gmra.mrb[0].mxu0 %v7717
      %v7944 = vpop.f32.mrb[0].mxu0
      %v7945 = vadd.f32 0.0, %v7944
      %v7946 = vpop.f32.mrb[0].mxu0
      %7947 = vmatprep.mubr.f32.mxu0 0.0
      %7948 = vmatmul.mubr.f32.gmra.mrb[0].mxu0 %v7718
      %v7949 = vpop.f32.mrb[0].mxu0
      %v7950 = vadd.f32 0.0, %v7949
      %v7951 = vpop.f32.mrb[0].mxu0
      %7952 = vmatprep.mubr.f32.mxu0 0.0
      %7953 = vmatmul.mubr.f32.gmra.mrb[0].mxu0 %v7719
      %v7954 = vpop.f32.mrb[0].mxu0
      %v7955 = vadd.f32 0.0, %v7954
      %v7956 = vpop.f32.mrb[0].mxu0
      %7957 = vmatprep.mubr.f32.mxu0 0.0
      %7958 = vmatmul.mubr.f32.gmra.mrb[0].mxu0 %v7720
      %v7959 = vpop.f32.mrb[0].mxu0
      %v7960 = vadd.f32 0.0, %v7959
      %v7961 = vpop.f32.mrb[0].mxu0
      %7962 = vdwg.mxu0
      %v7963 = vadd.f32 %v7657, %v7805
      %v7964 = vadd.f32 %v7658, %v7810
      %v7965 = vadd.f32 %v7659, %v7815
      %v7966 = vadd.f32 %v7660, %v7820
      %v7967 = vadd.f32 %v7661, %v7825
      %v7968 = vadd.f32 %v7662, %v7830
      %v7969 = vadd.f32 %v7663, %v7835
      %v7970 = vadd.f32 %v7664, %v7840
      %v7971 = vadd.f32 %v7665, %v7845
      %v7972 = vadd.f32 %v7666, %v7850
      %v7973 = vadd.f32 %v7667, %v7855
      %v7974 = vadd.f32 %v7668, %v7860
      %v7975 = vadd.f32 %v7669, %v7865
      %v7976 = vadd.f32 %v7670, %v7870
      %v7977 = vadd.f32 %v7671, %v7875
      %v7978 = vadd.f32 %v7672, %v7880
      %v7979 = vadd.f32 %v7673, %v7885
      %v7980 = vadd.f32 %v7674, %v7890
      %v7981 = vadd.f32 %v7675, %v7895
      %v7982 = vadd.f32 %v7676, %v7900
      %v7983 = vadd.f32 %v7677, %v7905
      %v7984 = vadd.f32 %v7678, %v7910
      %v7985 = vadd.f32 %v7679, %v7915
      %v7986 = vadd.f32 %v7680, %v7920
      %v7987 = vadd.f32 %v7681, %v7925
      %v7988 = vadd.f32 %v7682, %v7930
      %v7989 = vadd.f32 %v7683, %v7935
      %v7990 = vadd.f32 %v7684, %v7940
      %v7991 = vadd.f32 %v7685, %v7945
      %v7992 = vadd.f32 %v7686, %v7950
      %v7993 = vadd.f32 %v7687, %v7955
      %v7994 = vadd.f32 %v7688, %v7960
      %v7995 = vld [vmem:[%s2410] sm:$0xff]
      %v7996 = vld [vmem:[%s2410 + $0x8] sm:$0xff]
      %v7997 = vld [vmem:[%s2410 + $0x18] sm:$0xff]
      %v7998 = vld [vmem:[%s2410 + $0x20] sm:$0xff]
      %v7999 = vld [vmem:[%s2410 + $0x30] sm:$0xff]
      %v8000 = vld [vmem:[%s2410 + $0x38] sm:$0xff]
      %v8001 = vld [vmem:[%s2410 + $0x48] sm:$0xff]
      %v8002 = vld [vmem:[%s2410 + $0x50] sm:$0xff]
      %v8003 = vld [vmem:[%s2410 + $0x60] sm:$0xff]
      %v8004 = vld [vmem:[%s2410 + $0x68] sm:$0xff]
      %v8005 = vld [vmem:[%s2410 + $0x78] sm:$0xff]
      %v8006 = vld [vmem:[%s2410 + $0x80] sm:$0xff]
      %v8007 = vld [vmem:[%s2410 + $0x90] sm:$0xff]
      %v8008 = vld [vmem:[%s2410 + $0x98] sm:$0xff]
      %v8009 = vld [vmem:[%s2410 + $0xa8] sm:$0xff]
      %v8010 = vld [vmem:[%s2410 + $0xb0] sm:$0xff]
      %v8011 = vld [vmem:[%s2410 + $0xc0] sm:$0xff]
      %v8012 = vld [vmem:[%s2410 + $0xc8] sm:$0xff]
      %v8013 = vld [vmem:[%s2410 + $0xd8] sm:$0xff]
      %v8014 = vld [vmem:[%s2410 + $0xe0] sm:$0xff]
      %v8015 = vld [vmem:[%s2410 + $0xf0] sm:$0xff]
      %v8016 = vld [vmem:[%s2410 + $0xf8] sm:$0xff]
      %v8017 = vld [vmem:[%s2410 + $0x108] sm:$0xff]
      %v8018 = vld [vmem:[%s2410 + $0x110] sm:$0xff]
      %v8019 = vld [vmem:[%s2410 + $0x120] sm:$0xff]
      %v8020 = vld [vmem:[%s2410 + $0x128] sm:$0xff]
      %v8021 = vld [vmem:[%s2410 + $0x138] sm:$0xff]
      %v8022 = vld [vmem:[%s2410 + $0x140] sm:$0xff]
      %v8023 = vld [vmem:[%s2410 + $0x150] sm:$0xff]
      %v8024 = vld [vmem:[%s2410 + $0x158] sm:$0xff]
      %v8025 = vld [vmem:[%s2410 + $0x168] sm:$0xff]
      %v8026 = vld [vmem:[%s2410 + $0x170] sm:$0xff]
      %s8027 = scalar_lea.vmem %s6, 768
      %v8028 = vld [vmem:[%s8027] sm:$0xff]
      %v8029 = vld [vmem:[%s8027 + $0x8] sm:$0xff]
      %v8030 = vld [vmem:[%s8027 + $0x10] sm:$0xff]
      %v8031 = vld [vmem:[%s8027 + $0x18] sm:$0xff]
      %v8032 = vld [vmem:[%s8027 + $0x20] sm:$0xff]
      %v8033 = vld [vmem:[%s8027 + $0x28] sm:$0xff]
      %v8034 = vld [vmem:[%s8027 + $0x30] sm:$0xff]
      %v8035 = vld [vmem:[%s8027 + $0x38] sm:$0xff]
      %v8036 = vld [vmem:[%s8027 + $0x40] sm:$0xff]
      %v8037 = vld [vmem:[%s8027 + $0x48] sm:$0xff]
      %v8038 = vld [vmem:[%s8027 + $0x50] sm:$0xff]
      %v8039 = vld [vmem:[%s8027 + $0x58] sm:$0xff]
      %v8040 = vld [vmem:[%s8027 + $0x60] sm:$0xff]
      %v8041 = vld [vmem:[%s8027 + $0x68] sm:$0xff]
      %v8042 = vld [vmem:[%s8027 + $0x70] sm:$0xff]
      %v8043 = vld [vmem:[%s8027 + $0x78] sm:$0xff]
      %8044 = vmatprep.subr.mxu0 0.0
      %8045 = vmatpush1.msra.mxu0 %v8028
      %8046 = vmatprep.subr.mxu0 0.0
      %8047 = vmatpush1.msra.mxu0 %v8029
      %8048 = vmatprep.subr.mxu0 0.0
      %8049 = vmatpush1.msra.mxu0 %v8030
      %8050 = vmatprep.subr.mxu0 0.0
      %8051 = vmatpush1.msra.mxu0 %v8031
      %8052 = vmatprep.subr.mxu0 0.0
      %8053 = vmatpush1.msra.mxu0 %v8032
      %8054 = vmatprep.subr.mxu0 0.0
      %8055 = vmatpush1.msra.mxu0 %v8033
      %8056 = vmatprep.subr.mxu0 0.0
      %8057 = vmatpush1.msra.mxu0 %v8034
      %8058 = vmatprep.subr.mxu0 0.0
      %8059 = vmatpush1.msra.mxu0 %v8035
      %8060 = vmatprep.subr.mxu0 0.0
      %8061 = vmatpush1.msra.mxu0 %v8036
      %8062 = vmatprep.subr.mxu0 0.0
      %8063 = vmatpush1.msra.mxu0 %v8037
      %8064 = vmatprep.subr.mxu0 0.0
      %8065 = vmatpush1.msra.mxu0 %v8038
      %8066 = vmatprep.subr.mxu0 0.0
      %8067 = vmatpush1.msra.mxu0 %v8039
      %8068 = vmatprep.subr.mxu0 0.0
      %8069 = vmatpush1.msra.mxu0 %v8040
      %8070 = vmatprep.subr.mxu0 0.0
      %8071 = vmatpush1.msra.mxu0 %v8041
      %8072 = vmatprep.subr.mxu0 0.0
      %8073 = vmatpush1.msra.mxu0 %v8042
      %8074 = vmatprep.subr.mxu0 0.0
      %8075 = vmatpush1.msra.mxu0 %v8043
      %8076 = vmatprep.subr.mxu0 0.0
      %8077 = vmatpush1.msra.mxu0 0.0
      %8078 = vmatprep.subr.mxu0 0.0
      %8079 = vmatpush1.msra.mxu0 0.0
      %8080 = vmatprep.subr.mxu0 0.0
      %8081 = vmatpush1.msra.mxu0 0.0
      %8082 = vmatprep.subr.mxu0 0.0
      %8083 = vmatpush1.msra.mxu0 0.0
      %8084 = vmatprep.subr.mxu0 0.0
      %8085 = vmatpush1.msra.mxu0 0.0
      %8086 = vmatprep.subr.mxu0 0.0
      %8087 = vmatpush1.msra.mxu0 0.0
      %8088 = vmatprep.subr.mxu0 0.0
      %8089 = vmatpush1.msra.mxu0 0.0
      %8090 = vmatprep.subr.mxu0 0.0
      %8091 = vmatpush1.msra.mxu0 0.0
      %8092 = vmatprep.subr.mxu0 0.0
      %8093 = vmatpush1.msra.mxu0 0.0
      %8094 = vmatprep.subr.mxu0 0.0
      %8095 = vmatpush1.msra.mxu0 0.0
      %8096 = vmatprep.subr.mxu0 0.0
      %8097 = vmatpush1.msra.mxu0 0.0
      %8098 = vmatprep.subr.mxu0 0.0
      %8099 = vmatpush1.msra.mxu0 0.0
      %8100 = vmatprep.subr.mxu0 0.0
      %8101 = vmatpush1.msra.mxu0 0.0
      %8102 = vmatprep.subr.mxu0 0.0
      %8103 = vmatpush1.msra.mxu0 0.0
      %8104 = vmatprep.subr.mxu0 0.0
      %8105 = vmatpush1.msra.mxu0 0.0
      %8106 = vmatprep.subr.mxu0 0.0
      %8107 = vmatpush1.msra.mxu0 0.0
      %8108 = vmatprep.mubr.f32.mxu0 0.0
      %8109 = vmatmul.mubr.f32.gmra.mrb[0].mxu0 %v7995
      %v8110 = vpop.f32.mrb[0].mxu0
      %v8111 = vadd.f32 0.0, %v8110
      %v8112 = vpop.f32.mrb[0].mxu0
      %8113 = vmatprep.mubr.f32.mxu0 0.0
      %8114 = vmatmul.mubr.f32.gmra.mrb[0].mxu0 %v7996
      %v8115 = vpop.f32.mrb[0].mxu0
      %v8116 = vadd.f32 0.0, %v8115
      %v8117 = vpop.f32.mrb[0].mxu0
      %8118 = vmatprep.mubr.f32.mxu0 0.0
      %8119 = vmatmul.mubr.f32.gmra.mrb[0].mxu0 %v7997
      %v8120 = vpop.f32.mrb[0].mxu0
      %v8121 = vadd.f32 0.0, %v8120
      %v8122 = vpop.f32.mrb[0].mxu0
      %8123 = vmatprep.mubr.f32.mxu0 0.0
      %8124 = vmatmul.mubr.f32.gmra.mrb[0].mxu0 %v7998
      %v8125 = vpop.f32.mrb[0].mxu0
      %v8126 = vadd.f32 0.0, %v8125
      %v8127 = vpop.f32.mrb[0].mxu0
      %8128 = vmatprep.mubr.f32.mxu0 0.0
      %8129 = vmatmul.mubr.f32.gmra.mrb[0].mxu0 %v7999
      %v8130 = vpop.f32.mrb[0].mxu0
      %v8131 = vadd.f32 0.0, %v8130
      %v8132 = vpop.f32.mrb[0].mxu0
      %8133 = vmatprep.mubr.f32.mxu0 0.0
      %8134 = vmatmul.mubr.f32.gmra.mrb[0].mxu0 %v8000
      %v8135 = vpop.f32.mrb[0].mxu0
      %v8136 = vadd.f32 0.0, %v8135
      %v8137 = vpop.f32.mrb[0].mxu0
      %8138 = vmatprep.mubr.f32.mxu0 0.0
      %8139 = vmatmul.mubr.f32.gmra.mrb[0].mxu0 %v8001
      %v8140 = vpop.f32.mrb[0].mxu0
      %v8141 = vadd.f32 0.0, %v8140
      %v8142 = vpop.f32.mrb[0].mxu0
      %8143 = vmatprep.mubr.f32.mxu0 0.0
      %8144 = vmatmul.mubr.f32.gmra.mrb[0].mxu0 %v8002
      %v8145 = vpop.f32.mrb[0].mxu0
      %v8146 = vadd.f32 0.0, %v8145
      %v8147 = vpop.f32.mrb[0].mxu0
      %8148 = vmatprep.mubr.f32.mxu0 0.0
      %8149 = vmatmul.mubr.f32.gmra.mrb[0].mxu0 %v8003
      %v8150 = vpop.f32.mrb[0].mxu0
      %v8151 = vadd.f32 0.0, %v8150
      %v8152 = vpop.f32.mrb[0].mxu0
      %8153 = vmatprep.mubr.f32.mxu0 0.0
      %8154 = vmatmul.mubr.f32.gmra.mrb[0].mxu0 %v8004
      %v8155 = vpop.f32.mrb[0].mxu0
      %v8156 = vadd.f32 0.0, %v8155
      %v8157 = vpop.f32.mrb[0].mxu0
      %8158 = vmatprep.mubr.f32.mxu0 0.0
      %8159 = vmatmul.mubr.f32.gmra.mrb[0].mxu0 %v8005
      %v8160 = vpop.f32.mrb[0].mxu0
      %v8161 = vadd.f32 0.0, %v8160
      %v8162 = vpop.f32.mrb[0].mxu0
      %8163 = vmatprep.mubr.f32.mxu0 0.0
      %8164 = vmatmul.mubr.f32.gmra.mrb[0].mxu0 %v8006
      %v8165 = vpop.f32.mrb[0].mxu0
      %v8166 = vadd.f32 0.0, %v8165
      %v8167 = vpop.f32.mrb[0].mxu0
      %8168 = vmatprep.mubr.f32.mxu0 0.0
      %8169 = vmatmul.mubr.f32.gmra.mrb[0].mxu0 %v8007
      %v8170 = vpop.f32.mrb[0].mxu0
      %v8171 = vadd.f32 0.0, %v8170
      %v8172 = vpop.f32.mrb[0].mxu0
      %8173 = vmatprep.mubr.f32.mxu0 0.0
      %8174 = vmatmul.mubr.f32.gmra.mrb[0].mxu0 %v8008
      %v8175 = vpop.f32.mrb[0].mxu0
      %v8176 = vadd.f32 0.0, %v8175
      %v8177 = vpop.f32.mrb[0].mxu0
      %8178 = vmatprep.mubr.f32.mxu0 0.0
      %8179 = vmatmul.mubr.f32.gmra.mrb[0].mxu0 %v8009
      %v8180 = vpop.f32.mrb[0].mxu0
      %v8181 = vadd.f32 0.0, %v8180
      %v8182 = vpop.f32.mrb[0].mxu0
      %8183 = vmatprep.mubr.f32.mxu0 0.0
      %8184 = vmatmul.mubr.f32.gmra.mrb[0].mxu0 %v8010
      %v8185 = vpop.f32.mrb[0].mxu0
      %v8186 = vadd.f32 0.0, %v8185
      %v8187 = vpop.f32.mrb[0].mxu0
      %8188 = vmatprep.mubr.f32.mxu0 0.0
      %8189 = vmatmul.mubr.f32.gmra.mrb[0].mxu0 %v8011
      %v8190 = vpop.f32.mrb[0].mxu0
      %v8191 = vadd.f32 0.0, %v8190
      %v8192 = vpop.f32.mrb[0].mxu0
      %8193 = vmatprep.mubr.f32.mxu0 0.0
      %8194 = vmatmul.mubr.f32.gmra.mrb[0].mxu0 %v8012
      %v8195 = vpop.f32.mrb[0].mxu0
      %v8196 = vadd.f32 0.0, %v8195
      %v8197 = vpop.f32.mrb[0].mxu0
      %8198 = vmatprep.mubr.f32.mxu0 0.0
      %8199 = vmatmul.mubr.f32.gmra.mrb[0].mxu0 %v8013
      %v8200 = vpop.f32.mrb[0].mxu0
      %v8201 = vadd.f32 0.0, %v8200
      %v8202 = vpop.f32.mrb[0].mxu0
      %8203 = vmatprep.mubr.f32.mxu0 0.0
      %8204 = vmatmul.mubr.f32.gmra.mrb[0].mxu0 %v8014
      %v8205 = vpop.f32.mrb[0].mxu0
      %v8206 = vadd.f32 0.0, %v8205
      %v8207 = vpop.f32.mrb[0].mxu0
      %8208 = vmatprep.mubr.f32.mxu0 0.0
      %8209 = vmatmul.mubr.f32.gmra.mrb[0].mxu0 %v8015
      %v8210 = vpop.f32.mrb[0].mxu0
      %v8211 = vadd.f32 0.0, %v8210
      %v8212 = vpop.f32.mrb[0].mxu0
      %8213 = vmatprep.mubr.f32.mxu0 0.0
      %8214 = vmatmul.mubr.f32.gmra.mrb[0].mxu0 %v8016
      %v8215 = vpop.f32.mrb[0].mxu0
      %v8216 = vadd.f32 0.0, %v8215
      %v8217 = vpop.f32.mrb[0].mxu0
      %8218 = vmatprep.mubr.f32.mxu0 0.0
      %8219 = vmatmul.mubr.f32.gmra.mrb[0].mxu0 %v8017
      %v8220 = vpop.f32.mrb[0].mxu0
      %v8221 = vadd.f32 0.0, %v8220
      %v8222 = vpop.f32.mrb[0].mxu0
      %8223 = vmatprep.mubr.f32.mxu0 0.0
      %8224 = vmatmul.mubr.f32.gmra.mrb[0].mxu0 %v8018
      %v8225 = vpop.f32.mrb[0].mxu0
      %v8226 = vadd.f32 0.0, %v8225
      %v8227 = vpop.f32.mrb[0].mxu0
      %8228 = vmatprep.mubr.f32.mxu0 0.0
      %8229 = vmatmul.mubr.f32.gmra.mrb[0].mxu0 %v8019
      %v8230 = vpop.f32.mrb[0].mxu0
      %v8231 = vadd.f32 0.0, %v8230
      %v8232 = vpop.f32.mrb[0].mxu0
      %8233 = vmatprep.mubr.f32.mxu0 0.0
      %8234 = vmatmul.mubr.f32.gmra.mrb[0].mxu0 %v8020
      %v8235 = vpop.f32.mrb[0].mxu0
      %v8236 = vadd.f32 0.0, %v8235
      %v8237 = vpop.f32.mrb[0].mxu0
      %8238 = vmatprep.mubr.f32.mxu0 0.0
      %8239 = vmatmul.mubr.f32.gmra.mrb[0].mxu0 %v8021
      %v8240 = vpop.f32.mrb[0].mxu0
      %v8241 = vadd.f32 0.0, %v8240
      %v8242 = vpop.f32.mrb[0].mxu0
      %8243 = vmatprep.mubr.f32.mxu0 0.0
      %8244 = vmatmul.mubr.f32.gmra.mrb[0].mxu0 %v8022
      %v8245 = vpop.f32.mrb[0].mxu0
      %v8246 = vadd.f32 0.0, %v8245
      %v8247 = vpop.f32.mrb[0].mxu0
      %8248 = vmatprep.mubr.f32.mxu0 0.0
      %8249 = vmatmul.mubr.f32.gmra.mrb[0].mxu0 %v8023
      %v8250 = vpop.f32.mrb[0].mxu0
      %v8251 = vadd.f32 0.0, %v8250
      %v8252 = vpop.f32.mrb[0].mxu0
      %8253 = vmatprep.mubr.f32.mxu0 0.0
      %8254 = vmatmul.mubr.f32.gmra.mrb[0].mxu0 %v8024
      %v8255 = vpop.f32.mrb[0].mxu0
      %v8256 = vadd.f32 0.0, %v8255
      %v8257 = vpop.f32.mrb[0].mxu0
      %8258 = vmatprep.mubr.f32.mxu0 0.0
      %8259 = vmatmul.mubr.f32.gmra.mrb[0].mxu0 %v8025
      %v8260 = vpop.f32.mrb[0].mxu0
      %v8261 = vadd.f32 0.0, %v8260
      %v8262 = vpop.f32.mrb[0].mxu0
      %8263 = vmatprep.mubr.f32.mxu0 0.0
      %8264 = vmatmul.mubr.f32.gmra.mrb[0].mxu0 %v8026
      %v8265 = vpop.f32.mrb[0].mxu0
      %v8266 = vadd.f32 0.0, %v8265
      %v8267 = vpop.f32.mrb[0].mxu0
      %8268 = vdwg.mxu0
      %v8269 = vadd.f32 %v7963, %v8111
      %v8270 = vadd.f32 %v7964, %v8116
      %v8271 = vadd.f32 %v7965, %v8121
      %v8272 = vadd.f32 %v7966, %v8126
      %v8273 = vadd.f32 %v7967, %v8131
      %v8274 = vadd.f32 %v7968, %v8136
      %v8275 = vadd.f32 %v7969, %v8141
      %v8276 = vadd.f32 %v7970, %v8146
      %v8277 = vadd.f32 %v7971, %v8151
      %v8278 = vadd.f32 %v7972, %v8156
      %v8279 = vadd.f32 %v7973, %v8161
      %v8280 = vadd.f32 %v7974, %v8166
      %v8281 = vadd.f32 %v7975, %v8171
      %v8282 = vadd.f32 %v7976, %v8176
      %v8283 = vadd.f32 %v7977, %v8181
      %v8284 = vadd.f32 %v7978, %v8186
      %v8285 = vadd.f32 %v7979, %v8191
      %v8286 = vadd.f32 %v7980, %v8196
      %v8287 = vadd.f32 %v7981, %v8201
      %v8288 = vadd.f32 %v7982, %v8206
      %v8289 = vadd.f32 %v7983, %v8211
      %v8290 = vadd.f32 %v7984, %v8216
      %v8291 = vadd.f32 %v7985, %v8221
      %v8292 = vadd.f32 %v7986, %v8226
      %v8293 = vadd.f32 %v7987, %v8231
      %v8294 = vadd.f32 %v7988, %v8236
      %v8295 = vadd.f32 %v7989, %v8241
      %v8296 = vadd.f32 %v7990, %v8246
      %v8297 = vadd.f32 %v7991, %v8251
      %v8298 = vadd.f32 %v7992, %v8256
      %v8299 = vadd.f32 %v7993, %v8261
      %v8300 = vadd.f32 %v7994, %v8266
      %v8301 = vld [vmem:[%s2410 + $0x1] sm:$0xff]
      %v8302 = vld [vmem:[%s2410 + $0x9] sm:$0xff]
      %v8303 = vld [vmem:[%s2410 + $0x19] sm:$0xff]
      %v8304 = vld [vmem:[%s2410 + $0x21] sm:$0xff]
      %v8305 = vld [vmem:[%s2410 + $0x31] sm:$0xff]
      %v8306 = vld [vmem:[%s2410 + $0x39] sm:$0xff]
      %v8307 = vld [vmem:[%s2410 + $0x49] sm:$0xff]
      %v8308 = vld [vmem:[%s2410 + $0x51] sm:$0xff]
      %v8309 = vld [vmem:[%s2410 + $0x61] sm:$0xff]
      %v8310 = vld [vmem:[%s2410 + $0x69] sm:$0xff]
      %v8311 = vld [vmem:[%s2410 + $0x79] sm:$0xff]
      %v8312 = vld [vmem:[%s2410 + $0x81] sm:$0xff]
      %v8313 = vld [vmem:[%s2410 + $0x91] sm:$0xff]
      %v8314 = vld [vmem:[%s2410 + $0x99] sm:$0xff]
      %v8315 = vld [vmem:[%s2410 + $0xa9] sm:$0xff]
      %v8316 = vld [vmem:[%s2410 + $0xb1] sm:$0xff]
      %v8317 = vld [vmem:[%s2410 + $0xc1] sm:$0xff]
      %v8318 = vld [vmem:[%s2410 + $0xc9] sm:$0xff]
      %v8319 = vld [vmem:[%s2410 + $0xd9] sm:$0xff]
      %v8320 = vld [vmem:[%s2410 + $0xe1] sm:$0xff]
      %v8321 = vld [vmem:[%s2410 + $0xf1] sm:$0xff]
      %v8322 = vld [vmem:[%s2410 + $0xf9] sm:$0xff]
      %v8323 = vld [vmem:[%s2410 + $0x109] sm:$0xff]
      %v8324 = vld [vmem:[%s2410 + $0x111] sm:$0xff]
      %v8325 = vld [vmem:[%s2410 + $0x121] sm:$0xff]
      %v8326 = vld [vmem:[%s2410 + $0x129] sm:$0xff]
      %v8327 = vld [vmem:[%s2410 + $0x139] sm:$0xff]
      %v8328 = vld [vmem:[%s2410 + $0x141] sm:$0xff]
      %v8329 = vld [vmem:[%s2410 + $0x151] sm:$0xff]
      %v8330 = vld [vmem:[%s2410 + $0x159] sm:$0xff]
      %v8331 = vld [vmem:[%s2410 + $0x169] sm:$0xff]
      %v8332 = vld [vmem:[%s2410 + $0x171] sm:$0xff]
      %s8333 = scalar_lea.vmem %s6, 896
      %v8334 = vld [vmem:[%s8333] sm:$0xff]
      %v8335 = vld [vmem:[%s8333 + $0x8] sm:$0xff]
      %v8336 = vld [vmem:[%s8333 + $0x10] sm:$0xff]
      %v8337 = vld [vmem:[%s8333 + $0x18] sm:$0xff]
      %v8338 = vld [vmem:[%s8333 + $0x20] sm:$0xff]
      %v8339 = vld [vmem:[%s8333 + $0x28] sm:$0xff]
      %v8340 = vld [vmem:[%s8333 + $0x30] sm:$0xff]
      %v8341 = vld [vmem:[%s8333 + $0x38] sm:$0xff]
      %v8342 = vld [vmem:[%s8333 + $0x40] sm:$0xff]
      %v8343 = vld [vmem:[%s8333 + $0x48] sm:$0xff]
      %v8344 = vld [vmem:[%s8333 + $0x50] sm:$0xff]
      %v8345 = vld [vmem:[%s8333 + $0x58] sm:$0xff]
      %v8346 = vld [vmem:[%s8333 + $0x60] sm:$0xff]
      %v8347 = vld [vmem:[%s8333 + $0x68] sm:$0xff]
      %v8348 = vld [vmem:[%s8333 + $0x70] sm:$0xff]
      %v8349 = vld [vmem:[%s8333 + $0x78] sm:$0xff]
      %8350 = vmatprep.subr.mxu0 0.0
      %8351 = vmatpush1.msra.mxu0 %v8334
      %8352 = vmatprep.subr.mxu0 0.0
      %8353 = vmatpush1.msra.mxu0 %v8335
      %8354 = vmatprep.subr.mxu0 0.0
      %8355 = vmatpush1.msra.mxu0 %v8336
      %8356 = vmatprep.subr.mxu0 0.0
      %8357 = vmatpush1.msra.mxu0 %v8337
      %8358 = vmatprep.subr.mxu0 0.0
      %8359 = vmatpush1.msra.mxu0 %v8338
      %8360 = vmatprep.subr.mxu0 0.0
      %8361 = vmatpush1.msra.mxu0 %v8339
      %8362 = vmatprep.subr.mxu0 0.0
      %8363 = vmatpush1.msra.mxu0 %v8340
      %8364 = vmatprep.subr.mxu0 0.0
      %8365 = vmatpush1.msra.mxu0 %v8341
      %8366 = vmatprep.subr.mxu0 0.0
      %8367 = vmatpush1.msra.mxu0 %v8342
      %8368 = vmatprep.subr.mxu0 0.0
      %8369 = vmatpush1.msra.mxu0 %v8343
      %8370 = vmatprep.subr.mxu0 0.0
      %8371 = vmatpush1.msra.mxu0 %v8344
      %8372 = vmatprep.subr.mxu0 0.0
      %8373 = vmatpush1.msra.mxu0 %v8345
      %8374 = vmatprep.subr.mxu0 0.0
      %8375 = vmatpush1.msra.mxu0 %v8346
      %8376 = vmatprep.subr.mxu0 0.0
      %8377 = vmatpush1.msra.mxu0 %v8347
      %8378 = vmatprep.subr.mxu0 0.0
      %8379 = vmatpush1.msra.mxu0 %v8348
      %8380 = vmatprep.subr.mxu0 0.0
      %8381 = vmatpush1.msra.mxu0 %v8349
      %8382 = vmatprep.subr.mxu0 0.0
      %8383 = vmatpush1.msra.mxu0 0.0
      %8384 = vmatprep.subr.mxu0 0.0
      %8385 = vmatpush1.msra.mxu0 0.0
      %8386 = vmatprep.subr.mxu0 0.0
      %8387 = vmatpush1.msra.mxu0 0.0
      %8388 = vmatprep.subr.mxu0 0.0
      %8389 = vmatpush1.msra.mxu0 0.0
      %8390 = vmatprep.subr.mxu0 0.0
      %8391 = vmatpush1.msra.mxu0 0.0
      %8392 = vmatprep.subr.mxu0 0.0
      %8393 = vmatpush1.msra.mxu0 0.0
      %8394 = vmatprep.subr.mxu0 0.0
      %8395 = vmatpush1.msra.mxu0 0.0
      %8396 = vmatprep.subr.mxu0 0.0
      %8397 = vmatpush1.msra.mxu0 0.0
      %8398 = vmatprep.subr.mxu0 0.0
      %8399 = vmatpush1.msra.mxu0 0.0
      %8400 = vmatprep.subr.mxu0 0.0
      %8401 = vmatpush1.msra.mxu0 0.0
      %8402 = vmatprep.subr.mxu0 0.0
      %8403 = vmatpush1.msra.mxu0 0.0
      %8404 = vmatprep.subr.mxu0 0.0
      %8405 = vmatpush1.msra.mxu0 0.0
      %8406 = vmatprep.subr.mxu0 0.0
      %8407 = vmatpush1.msra.mxu0 0.0
      %8408 = vmatprep.subr.mxu0 0.0
      %8409 = vmatpush1.msra.mxu0 0.0
      %8410 = vmatprep.subr.mxu0 0.0
      %8411 = vmatpush1.msra.mxu0 0.0
      %8412 = vmatprep.subr.mxu0 0.0
      %8413 = vmatpush1.msra.mxu0 0.0
      %8414 = vmatprep.mubr.f32.mxu0 0.0
      %8415 = vmatmul.mubr.f32.gmra.mrb[0].mxu0 %v8301
      %v8416 = vpop.f32.mrb[0].mxu0
      %v8417 = vadd.f32 0.0, %v8416
      %v8418 = vpop.f32.mrb[0].mxu0
      %8419 = vmatprep.mubr.f32.mxu0 0.0
      %8420 = vmatmul.mubr.f32.gmra.mrb[0].mxu0 %v8302
      %v8421 = vpop.f32.mrb[0].mxu0
      %v8422 = vadd.f32 0.0, %v8421
      %v8423 = vpop.f32.mrb[0].mxu0
      %8424 = vmatprep.mubr.f32.mxu0 0.0
      %8425 = vmatmul.mubr.f32.gmra.mrb[0].mxu0 %v8303
      %v8426 = vpop.f32.mrb[0].mxu0
      %v8427 = vadd.f32 0.0, %v8426
      %v8428 = vpop.f32.mrb[0].mxu0
      %8429 = vmatprep.mubr.f32.mxu0 0.0
      %8430 = vmatmul.mubr.f32.gmra.mrb[0].mxu0 %v8304
      %v8431 = vpop.f32.mrb[0].mxu0
      %v8432 = vadd.f32 0.0, %v8431
      %v8433 = vpop.f32.mrb[0].mxu0
      %8434 = vmatprep.mubr.f32.mxu0 0.0
      %8435 = vmatmul.mubr.f32.gmra.mrb[0].mxu0 %v8305
      %v8436 = vpop.f32.mrb[0].mxu0
      %v8437 = vadd.f32 0.0, %v8436
      %v8438 = vpop.f32.mrb[0].mxu0
      %8439 = vmatprep.mubr.f32.mxu0 0.0
      %8440 = vmatmul.mubr.f32.gmra.mrb[0].mxu0 %v8306
      %v8441 = vpop.f32.mrb[0].mxu0
      %v8442 = vadd.f32 0.0, %v8441
      %v8443 = vpop.f32.mrb[0].mxu0
      %8444 = vmatprep.mubr.f32.mxu0 0.0
      %8445 = vmatmul.mubr.f32.gmra.mrb[0].mxu0 %v8307
      %v8446 = vpop.f32.mrb[0].mxu0
      %v8447 = vadd.f32 0.0, %v8446
      %v8448 = vpop.f32.mrb[0].mxu0
      %8449 = vmatprep.mubr.f32.mxu0 0.0
      %8450 = vmatmul.mubr.f32.gmra.mrb[0].mxu0 %v8308
      %v8451 = vpop.f32.mrb[0].mxu0
      %v8452 = vadd.f32 0.0, %v8451
      %v8453 = vpop.f32.mrb[0].mxu0
      %8454 = vmatprep.mubr.f32.mxu0 0.0
      %8455 = vmatmul.mubr.f32.gmra.mrb[0].mxu0 %v8309
      %v8456 = vpop.f32.mrb[0].mxu0
      %v8457 = vadd.f32 0.0, %v8456
      %v8458 = vpop.f32.mrb[0].mxu0
      %8459 = vmatprep.mubr.f32.mxu0 0.0
      %8460 = vmatmul.mubr.f32.gmra.mrb[0].mxu0 %v8310
      %v8461 = vpop.f32.mrb[0].mxu0
      %v8462 = vadd.f32 0.0, %v8461
      %v8463 = vpop.f32.mrb[0].mxu0
      %8464 = vmatprep.mubr.f32.mxu0 0.0
      %8465 = vmatmul.mubr.f32.gmra.mrb[0].mxu0 %v8311
      %v8466 = vpop.f32.mrb[0].mxu0
      %v8467 = vadd.f32 0.0, %v8466
      %v8468 = vpop.f32.mrb[0].mxu0
      %8469 = vmatprep.mubr.f32.mxu0 0.0
      %8470 = vmatmul.mubr.f32.gmra.mrb[0].mxu0 %v8312
      %v8471 = vpop.f32.mrb[0].mxu0
      %v8472 = vadd.f32 0.0, %v8471
      %v8473 = vpop.f32.mrb[0].mxu0
      %8474 = vmatprep.mubr.f32.mxu0 0.0
      %8475 = vmatmul.mubr.f32.gmra.mrb[0].mxu0 %v8313
      %v8476 = vpop.f32.mrb[0].mxu0
      %v8477 = vadd.f32 0.0, %v8476
      %v8478 = vpop.f32.mrb[0].mxu0
      %8479 = vmatprep.mubr.f32.mxu0 0.0
      %8480 = vmatmul.mubr.f32.gmra.mrb[0].mxu0 %v8314
      %v8481 = vpop.f32.mrb[0].mxu0
      %v8482 = vadd.f32 0.0, %v8481
      %v8483 = vpop.f32.mrb[0].mxu0
      %8484 = vmatprep.mubr.f32.mxu0 0.0
      %8485 = vmatmul.mubr.f32.gmra.mrb[0].mxu0 %v8315
      %v8486 = vpop.f32.mrb[0].mxu0
      %v8487 = vadd.f32 0.0, %v8486
      %v8488 = vpop.f32.mrb[0].mxu0
      %8489 = vmatprep.mubr.f32.mxu0 0.0
      %8490 = vmatmul.mubr.f32.gmra.mrb[0].mxu0 %v8316
      %v8491 = vpop.f32.mrb[0].mxu0
      %v8492 = vadd.f32 0.0, %v8491
      %v8493 = vpop.f32.mrb[0].mxu0
      %8494 = vmatprep.mubr.f32.mxu0 0.0
      %8495 = vmatmul.mubr.f32.gmra.mrb[0].mxu0 %v8317
      %v8496 = vpop.f32.mrb[0].mxu0
      %v8497 = vadd.f32 0.0, %v8496
      %v8498 = vpop.f32.mrb[0].mxu0
      %8499 = vmatprep.mubr.f32.mxu0 0.0
      %8500 = vmatmul.mubr.f32.gmra.mrb[0].mxu0 %v8318
      %v8501 = vpop.f32.mrb[0].mxu0
      %v8502 = vadd.f32 0.0, %v8501
      %v8503 = vpop.f32.mrb[0].mxu0
      %8504 = vmatprep.mubr.f32.mxu0 0.0
      %8505 = vmatmul.mubr.f32.gmra.mrb[0].mxu0 %v8319
      %v8506 = vpop.f32.mrb[0].mxu0
      %v8507 = vadd.f32 0.0, %v8506
      %v8508 = vpop.f32.mrb[0].mxu0
      %8509 = vmatprep.mubr.f32.mxu0 0.0
      %8510 = vmatmul.mubr.f32.gmra.mrb[0].mxu0 %v8320
      %v8511 = vpop.f32.mrb[0].mxu0
      %v8512 = vadd.f32 0.0, %v8511
      %v8513 = vpop.f32.mrb[0].mxu0
      %8514 = vmatprep.mubr.f32.mxu0 0.0
      %8515 = vmatmul.mubr.f32.gmra.mrb[0].mxu0 %v8321
      %v8516 = vpop.f32.mrb[0].mxu0
      %v8517 = vadd.f32 0.0, %v8516
      %v8518 = vpop.f32.mrb[0].mxu0
      %8519 = vmatprep.mubr.f32.mxu0 0.0
      %8520 = vmatmul.mubr.f32.gmra.mrb[0].mxu0 %v8322
      %v8521 = vpop.f32.mrb[0].mxu0
      %v8522 = vadd.f32 0.0, %v8521
      %v8523 = vpop.f32.mrb[0].mxu0
      %8524 = vmatprep.mubr.f32.mxu0 0.0
      %8525 = vmatmul.mubr.f32.gmra.mrb[0].mxu0 %v8323
      %v8526 = vpop.f32.mrb[0].mxu0
      %v8527 = vadd.f32 0.0, %v8526
      %v8528 = vpop.f32.mrb[0].mxu0
      %8529 = vmatprep.mubr.f32.mxu0 0.0
      %8530 = vmatmul.mubr.f32.gmra.mrb[0].mxu0 %v8324
      %v8531 = vpop.f32.mrb[0].mxu0
      %v8532 = vadd.f32 0.0, %v8531
      %v8533 = vpop.f32.mrb[0].mxu0
      %8534 = vmatprep.mubr.f32.mxu0 0.0
      %8535 = vmatmul.mubr.f32.gmra.mrb[0].mxu0 %v8325
      %v8536 = vpop.f32.mrb[0].mxu0
      %v8537 = vadd.f32 0.0, %v8536
      %v8538 = vpop.f32.mrb[0].mxu0
      %8539 = vmatprep.mubr.f32.mxu0 0.0
      %8540 = vmatmul.mubr.f32.gmra.mrb[0].mxu0 %v8326
      %v8541 = vpop.f32.mrb[0].mxu0
      %v8542 = vadd.f32 0.0, %v8541
      %v8543 = vpop.f32.mrb[0].mxu0
      %8544 = vmatprep.mubr.f32.mxu0 0.0
      %8545 = vmatmul.mubr.f32.gmra.mrb[0].mxu0 %v8327
      %v8546 = vpop.f32.mrb[0].mxu0
      %v8547 = vadd.f32 0.0, %v8546
      %v8548 = vpop.f32.mrb[0].mxu0
      %8549 = vmatprep.mubr.f32.mxu0 0.0
      %8550 = vmatmul.mubr.f32.gmra.mrb[0].mxu0 %v8328
      %v8551 = vpop.f32.mrb[0].mxu0
      %v8552 = vadd.f32 0.0, %v8551
      %v8553 = vpop.f32.mrb[0].mxu0
      %8554 = vmatprep.mubr.f32.mxu0 0.0
      %8555 = vmatmul.mubr.f32.gmra.mrb[0].mxu0 %v8329
      %v8556 = vpop.f32.mrb[0].mxu0
      %v8557 = vadd.f32 0.0, %v8556
      %v8558 = vpop.f32.mrb[0].mxu0
      %8559 = vmatprep.mubr.f32.mxu0 0.0
      %8560 = vmatmul.mubr.f32.gmra.mrb[0].mxu0 %v8330
      %v8561 = vpop.f32.mrb[0].mxu0
      %v8562 = vadd.f32 0.0, %v8561
      %v8563 = vpop.f32.mrb[0].mxu0
      %8564 = vmatprep.mubr.f32.mxu0 0.0
      %8565 = vmatmul.mubr.f32.gmra.mrb[0].mxu0 %v8331
      %v8566 = vpop.f32.mrb[0].mxu0
      %v8567 = vadd.f32 0.0, %v8566
      %v8568 = vpop.f32.mrb[0].mxu0
      %8569 = vmatprep.mubr.f32.mxu0 0.0
      %8570 = vmatmul.mubr.f32.gmra.mrb[0].mxu0 %v8332
      %v8571 = vpop.f32.mrb[0].mxu0
      %v8572 = vadd.f32 0.0, %v8571
      %v8573 = vpop.f32.mrb[0].mxu0
      %8574 = vdwg.mxu0
      %v8575 = vadd.f32 %v8269, %v8417
      %v8576 = vadd.f32 %v8270, %v8422
      %v8577 = vadd.f32 %v8271, %v8427
      %v8578 = vadd.f32 %v8272, %v8432
      %v8579 = vadd.f32 %v8273, %v8437
      %v8580 = vadd.f32 %v8274, %v8442
      %v8581 = vadd.f32 %v8275, %v8447
      %v8582 = vadd.f32 %v8276, %v8452
      %v8583 = vadd.f32 %v8277, %v8457
      %v8584 = vadd.f32 %v8278, %v8462
      %v8585 = vadd.f32 %v8279, %v8467
      %v8586 = vadd.f32 %v8280, %v8472
      %v8587 = vadd.f32 %v8281, %v8477
      %v8588 = vadd.f32 %v8282, %v8482
      %v8589 = vadd.f32 %v8283, %v8487
      %v8590 = vadd.f32 %v8284, %v8492
      %v8591 = vadd.f32 %v8285, %v8497
      %v8592 = vadd.f32 %v8286, %v8502
      %v8593 = vadd.f32 %v8287, %v8507
      %v8594 = vadd.f32 %v8288, %v8512
      %v8595 = vadd.f32 %v8289, %v8517
      %v8596 = vadd.f32 %v8290, %v8522
      %v8597 = vadd.f32 %v8291, %v8527
      %v8598 = vadd.f32 %v8292, %v8532
      %v8599 = vadd.f32 %v8293, %v8537
      %v8600 = vadd.f32 %v8294, %v8542
      %v8601 = vadd.f32 %v8295, %v8547
      %v8602 = vadd.f32 %v8296, %v8552
      %v8603 = vadd.f32 %v8297, %v8557
      %v8604 = vadd.f32 %v8298, %v8562
      %v8605 = vadd.f32 %v8299, %v8567
      %v8606 = vadd.f32 %v8300, %v8572
      %v8607 = vld [vmem:[%s2410 + $0x2] sm:$0xff]
      %v8608 = vld [vmem:[%s2410 + $0xa] sm:$0xff]
      %v8609 = vld [vmem:[%s2410 + $0x1a] sm:$0xff]
      %v8610 = vld [vmem:[%s2410 + $0x22] sm:$0xff]
      %v8611 = vld [vmem:[%s2410 + $0x32] sm:$0xff]
      %v8612 = vld [vmem:[%s2410 + $0x3a] sm:$0xff]
      %v8613 = vld [vmem:[%s2410 + $0x4a] sm:$0xff]
      %v8614 = vld [vmem:[%s2410 + $0x52] sm:$0xff]
      %v8615 = vld [vmem:[%s2410 + $0x62] sm:$0xff]
      %v8616 = vld [vmem:[%s2410 + $0x6a] sm:$0xff]
      %v8617 = vld [vmem:[%s2410 + $0x7a] sm:$0xff]
      %v8618 = vld [vmem:[%s2410 + $0x82] sm:$0xff]
      %v8619 = vld [vmem:[%s2410 + $0x92] sm:$0xff]
      %v8620 = vld [vmem:[%s2410 + $0x9a] sm:$0xff]
      %v8621 = vld [vmem:[%s2410 + $0xaa] sm:$0xff]
      %v8622 = vld [vmem:[%s2410 + $0xb2] sm:$0xff]
      %v8623 = vld [vmem:[%s2410 + $0xc2] sm:$0xff]
      %v8624 = vld [vmem:[%s2410 + $0xca] sm:$0xff]
      %v8625 = vld [vmem:[%s2410 + $0xda] sm:$0xff]
      %v8626 = vld [vmem:[%s2410 + $0xe2] sm:$0xff]
      %v8627 = vld [vmem:[%s2410 + $0xf2] sm:$0xff]
      %v8628 = vld [vmem:[%s2410 + $0xfa] sm:$0xff]
      %v8629 = vld [vmem:[%s2410 + $0x10a] sm:$0xff]
      %v8630 = vld [vmem:[%s2410 + $0x112] sm:$0xff]
      %v8631 = vld [vmem:[%s2410 + $0x122] sm:$0xff]
      %v8632 = vld [vmem:[%s2410 + $0x12a] sm:$0xff]
      %v8633 = vld [vmem:[%s2410 + $0x13a] sm:$0xff]
      %v8634 = vld [vmem:[%s2410 + $0x142] sm:$0xff]
      %v8635 = vld [vmem:[%s2410 + $0x152] sm:$0xff]
      %v8636 = vld [vmem:[%s2410 + $0x15a] sm:$0xff]
      %v8637 = vld [vmem:[%s2410 + $0x16a] sm:$0xff]
      %v8638 = vld [vmem:[%s2410 + $0x172] sm:$0xff]
      %s8639 = scalar_lea.vmem %s6, 1024
      %v8640 = vld [vmem:[%s8639] sm:$0xff]
      %v8641 = vld [vmem:[%s8639 + $0x8] sm:$0xff]
      %v8642 = vld [vmem:[%s8639 + $0x10] sm:$0xff]
      %v8643 = vld [vmem:[%s8639 + $0x18] sm:$0xff]
      %v8644 = vld [vmem:[%s8639 + $0x20] sm:$0xff]
      %v8645 = vld [vmem:[%s8639 + $0x28] sm:$0xff]
      %v8646 = vld [vmem:[%s8639 + $0x30] sm:$0xff]
      %v8647 = vld [vmem:[%s8639 + $0x38] sm:$0xff]
      %v8648 = vld [vmem:[%s8639 + $0x40] sm:$0xff]
      %v8649 = vld [vmem:[%s8639 + $0x48] sm:$0xff]
      %v8650 = vld [vmem:[%s8639 + $0x50] sm:$0xff]
      %v8651 = vld [vmem:[%s8639 + $0x58] sm:$0xff]
      %v8652 = vld [vmem:[%s8639 + $0x60] sm:$0xff]
      %v8653 = vld [vmem:[%s8639 + $0x68] sm:$0xff]
      %v8654 = vld [vmem:[%s8639 + $0x70] sm:$0xff]
      %v8655 = vld [vmem:[%s8639 + $0x78] sm:$0xff]
      %8656 = vmatprep.subr.mxu0 0.0
      %8657 = vmatpush1.msra.mxu0 %v8640
      %8658 = vmatprep.subr.mxu0 0.0
      %8659 = vmatpush1.msra.mxu0 %v8641
      %8660 = vmatprep.subr.mxu0 0.0
      %8661 = vmatpush1.msra.mxu0 %v8642
      %8662 = vmatprep.subr.mxu0 0.0
      %8663 = vmatpush1.msra.mxu0 %v8643
      %8664 = vmatprep.subr.mxu0 0.0
      %8665 = vmatpush1.msra.mxu0 %v8644
      %8666 = vmatprep.subr.mxu0 0.0
      %8667 = vmatpush1.msra.mxu0 %v8645
      %8668 = vmatprep.subr.mxu0 0.0
      %8669 = vmatpush1.msra.mxu0 %v8646
      %8670 = vmatprep.subr.mxu0 0.0
      %8671 = vmatpush1.msra.mxu0 %v8647
      %8672 = vmatprep.subr.mxu0 0.0
      %8673 = vmatpush1.msra.mxu0 %v8648
      %8674 = vmatprep.subr.mxu0 0.0
      %8675 = vmatpush1.msra.mxu0 %v8649
      %8676 = vmatprep.subr.mxu0 0.0
      %8677 = vmatpush1.msra.mxu0 %v8650
      %8678 = vmatprep.subr.mxu0 0.0
      %8679 = vmatpush1.msra.mxu0 %v8651
      %8680 = vmatprep.subr.mxu0 0.0
      %8681 = vmatpush1.msra.mxu0 %v8652
      %8682 = vmatprep.subr.mxu0 0.0
      %8683 = vmatpush1.msra.mxu0 %v8653
      %8684 = vmatprep.subr.mxu0 0.0
      %8685 = vmatpush1.msra.mxu0 %v8654
      %8686 = vmatprep.subr.mxu0 0.0
      %8687 = vmatpush1.msra.mxu0 %v8655
      %8688 = vmatprep.subr.mxu0 0.0
      %8689 = vmatpush1.msra.mxu0 0.0
      %8690 = vmatprep.subr.mxu0 0.0
      %8691 = vmatpush1.msra.mxu0 0.0
      %8692 = vmatprep.subr.mxu0 0.0
      %8693 = vmatpush1.msra.mxu0 0.0
      %8694 = vmatprep.subr.mxu0 0.0
      %8695 = vmatpush1.msra.mxu0 0.0
      %8696 = vmatprep.subr.mxu0 0.0
      %8697 = vmatpush1.msra.mxu0 0.0
      %8698 = vmatprep.subr.mxu0 0.0
      %8699 = vmatpush1.msra.mxu0 0.0
      %8700 = vmatprep.subr.mxu0 0.0
      %8701 = vmatpush1.msra.mxu0 0.0
      %8702 = vmatprep.subr.mxu0 0.0
      %8703 = vmatpush1.msra.mxu0 0.0
      %8704 = vmatprep.subr.mxu0 0.0
      %8705 = vmatpush1.msra.mxu0 0.0
      %8706 = vmatprep.subr.mxu0 0.0
      %8707 = vmatpush1.msra.mxu0 0.0
      %8708 = vmatprep.subr.mxu0 0.0
      %8709 = vmatpush1.msra.mxu0 0.0
      %8710 = vmatprep.subr.mxu0 0.0
      %8711 = vmatpush1.msra.mxu0 0.0
      %8712 = vmatprep.subr.mxu0 0.0
      %8713 = vmatpush1.msra.mxu0 0.0
      %8714 = vmatprep.subr.mxu0 0.0
      %8715 = vmatpush1.msra.mxu0 0.0
      %8716 = vmatprep.subr.mxu0 0.0
      %8717 = vmatpush1.msra.mxu0 0.0
      %8718 = vmatprep.subr.mxu0 0.0
      %8719 = vmatpush1.msra.mxu0 0.0
      %8720 = vmatprep.mubr.f32.mxu0 0.0
      %8721 = vmatmul.mubr.f32.gmra.mrb[0].mxu0 %v8607
      %v8722 = vpop.f32.mrb[0].mxu0
      %v8723 = vadd.f32 0.0, %v8722
      %v8724 = vpop.f32.mrb[0].mxu0
      %8725 = vmatprep.mubr.f32.mxu0 0.0
      %8726 = vmatmul.mubr.f32.gmra.mrb[0].mxu0 %v8608
      %v8727 = vpop.f32.mrb[0].mxu0
      %v8728 = vadd.f32 0.0, %v8727
      %v8729 = vpop.f32.mrb[0].mxu0
      %8730 = vmatprep.mubr.f32.mxu0 0.0
      %8731 = vmatmul.mubr.f32.gmra.mrb[0].mxu0 %v8609
      %v8732 = vpop.f32.mrb[0].mxu0
      %v8733 = vadd.f32 0.0, %v8732
      %v8734 = vpop.f32.mrb[0].mxu0
      %8735 = vmatprep.mubr.f32.mxu0 0.0
      %8736 = vmatmul.mubr.f32.gmra.mrb[0].mxu0 %v8610
      %v8737 = vpop.f32.mrb[0].mxu0
      %v8738 = vadd.f32 0.0, %v8737
      %v8739 = vpop.f32.mrb[0].mxu0
      %8740 = vmatprep.mubr.f32.mxu0 0.0
      %8741 = vmatmul.mubr.f32.gmra.mrb[0].mxu0 %v8611
      %v8742 = vpop.f32.mrb[0].mxu0
      %v8743 = vadd.f32 0.0, %v8742
      %v8744 = vpop.f32.mrb[0].mxu0
      %8745 = vmatprep.mubr.f32.mxu0 0.0
      %8746 = vmatmul.mubr.f32.gmra.mrb[0].mxu0 %v8612
      %v8747 = vpop.f32.mrb[0].mxu0
      %v8748 = vadd.f32 0.0, %v8747
      %v8749 = vpop.f32.mrb[0].mxu0
      %8750 = vmatprep.mubr.f32.mxu0 0.0
      %8751 = vmatmul.mubr.f32.gmra.mrb[0].mxu0 %v8613
      %v8752 = vpop.f32.mrb[0].mxu0
      %v8753 = vadd.f32 0.0, %v8752
      %v8754 = vpop.f32.mrb[0].mxu0
      %8755 = vmatprep.mubr.f32.mxu0 0.0
      %8756 = vmatmul.mubr.f32.gmra.mrb[0].mxu0 %v8614
      %v8757 = vpop.f32.mrb[0].mxu0
      %v8758 = vadd.f32 0.0, %v8757
      %v8759 = vpop.f32.mrb[0].mxu0
      %8760 = vmatprep.mubr.f32.mxu0 0.0
      %8761 = vmatmul.mubr.f32.gmra.mrb[0].mxu0 %v8615
      %v8762 = vpop.f32.mrb[0].mxu0
      %v8763 = vadd.f32 0.0, %v8762
      %v8764 = vpop.f32.mrb[0].mxu0
      %8765 = vmatprep.mubr.f32.mxu0 0.0
      %8766 = vmatmul.mubr.f32.gmra.mrb[0].mxu0 %v8616
      %v8767 = vpop.f32.mrb[0].mxu0
      %v8768 = vadd.f32 0.0, %v8767
      %v8769 = vpop.f32.mrb[0].mxu0
      %8770 = vmatprep.mubr.f32.mxu0 0.0
      %8771 = vmatmul.mubr.f32.gmra.mrb[0].mxu0 %v8617
      %v8772 = vpop.f32.mrb[0].mxu0
      %v8773 = vadd.f32 0.0, %v8772
      %v8774 = vpop.f32.mrb[0].mxu0
      %8775 = vmatprep.mubr.f32.mxu0 0.0
      %8776 = vmatmul.mubr.f32.gmra.mrb[0].mxu0 %v8618
      %v8777 = vpop.f32.mrb[0].mxu0
      %v8778 = vadd.f32 0.0, %v8777
      %v8779 = vpop.f32.mrb[0].mxu0
      %8780 = vmatprep.mubr.f32.mxu0 0.0
      %8781 = vmatmul.mubr.f32.gmra.mrb[0].mxu0 %v8619
      %v8782 = vpop.f32.mrb[0].mxu0
      %v8783 = vadd.f32 0.0, %v8782
      %v8784 = vpop.f32.mrb[0].mxu0
      %8785 = vmatprep.mubr.f32.mxu0 0.0
      %8786 = vmatmul.mubr.f32.gmra.mrb[0].mxu0 %v8620
      %v8787 = vpop.f32.mrb[0].mxu0
      %v8788 = vadd.f32 0.0, %v8787
      %v8789 = vpop.f32.mrb[0].mxu0
      %8790 = vmatprep.mubr.f32.mxu0 0.0
      %8791 = vmatmul.mubr.f32.gmra.mrb[0].mxu0 %v8621
      %v8792 = vpop.f32.mrb[0].mxu0
      %v8793 = vadd.f32 0.0, %v8792
      %v8794 = vpop.f32.mrb[0].mxu0
      %8795 = vmatprep.mubr.f32.mxu0 0.0
      %8796 = vmatmul.mubr.f32.gmra.mrb[0].mxu0 %v8622
      %v8797 = vpop.f32.mrb[0].mxu0
      %v8798 = vadd.f32 0.0, %v8797
      %v8799 = vpop.f32.mrb[0].mxu0
      %8800 = vmatprep.mubr.f32.mxu0 0.0
      %8801 = vmatmul.mubr.f32.gmra.mrb[0].mxu0 %v8623
      %v8802 = vpop.f32.mrb[0].mxu0
      %v8803 = vadd.f32 0.0, %v8802
      %v8804 = vpop.f32.mrb[0].mxu0
      %8805 = vmatprep.mubr.f32.mxu0 0.0
      %8806 = vmatmul.mubr.f32.gmra.mrb[0].mxu0 %v8624
      %v8807 = vpop.f32.mrb[0].mxu0
      %v8808 = vadd.f32 0.0, %v8807
      %v8809 = vpop.f32.mrb[0].mxu0
      %8810 = vmatprep.mubr.f32.mxu0 0.0
      %8811 = vmatmul.mubr.f32.gmra.mrb[0].mxu0 %v8625
      %v8812 = vpop.f32.mrb[0].mxu0
      %v8813 = vadd.f32 0.0, %v8812
      %v8814 = vpop.f32.mrb[0].mxu0
      %8815 = vmatprep.mubr.f32.mxu0 0.0
      %8816 = vmatmul.mubr.f32.gmra.mrb[0].mxu0 %v8626
      %v8817 = vpop.f32.mrb[0].mxu0
      %v8818 = vadd.f32 0.0, %v8817
      %v8819 = vpop.f32.mrb[0].mxu0
      %8820 = vmatprep.mubr.f32.mxu0 0.0
      %8821 = vmatmul.mubr.f32.gmra.mrb[0].mxu0 %v8627
      %v8822 = vpop.f32.mrb[0].mxu0
      %v8823 = vadd.f32 0.0, %v8822
      %v8824 = vpop.f32.mrb[0].mxu0
      %8825 = vmatprep.mubr.f32.mxu0 0.0
      %8826 = vmatmul.mubr.f32.gmra.mrb[0].mxu0 %v8628
      %v8827 = vpop.f32.mrb[0].mxu0
      %v8828 = vadd.f32 0.0, %v8827
      %v8829 = vpop.f32.mrb[0].mxu0
      %8830 = vmatprep.mubr.f32.mxu0 0.0
      %8831 = vmatmul.mubr.f32.gmra.mrb[0].mxu0 %v8629
      %v8832 = vpop.f32.mrb[0].mxu0
      %v8833 = vadd.f32 0.0, %v8832
      %v8834 = vpop.f32.mrb[0].mxu0
      %8835 = vmatprep.mubr.f32.mxu0 0.0
      %8836 = vmatmul.mubr.f32.gmra.mrb[0].mxu0 %v8630
      %v8837 = vpop.f32.mrb[0].mxu0
      %v8838 = vadd.f32 0.0, %v8837
      %v8839 = vpop.f32.mrb[0].mxu0
      %8840 = vmatprep.mubr.f32.mxu0 0.0
      %8841 = vmatmul.mubr.f32.gmra.mrb[0].mxu0 %v8631
      %v8842 = vpop.f32.mrb[0].mxu0
      %v8843 = vadd.f32 0.0, %v8842
      %v8844 = vpop.f32.mrb[0].mxu0
      %8845 = vmatprep.mubr.f32.mxu0 0.0
      %8846 = vmatmul.mubr.f32.gmra.mrb[0].mxu0 %v8632
      %v8847 = vpop.f32.mrb[0].mxu0
      %v8848 = vadd.f32 0.0, %v8847
      %v8849 = vpop.f32.mrb[0].mxu0
      %8850 = vmatprep.mubr.f32.mxu0 0.0
      %8851 = vmatmul.mubr.f32.gmra.mrb[0].mxu0 %v8633
      %v8852 = vpop.f32.mrb[0].mxu0
      %v8853 = vadd.f32 0.0, %v8852
      %v8854 = vpop.f32.mrb[0].mxu0
      %8855 = vmatprep.mubr.f32.mxu0 0.0
      %8856 = vmatmul.mubr.f32.gmra.mrb[0].mxu0 %v8634
      %v8857 = vpop.f32.mrb[0].mxu0
      %v8858 = vadd.f32 0.0, %v8857
      %v8859 = vpop.f32.mrb[0].mxu0
      %8860 = vmatprep.mubr.f32.mxu0 0.0
      %8861 = vmatmul.mubr.f32.gmra.mrb[0].mxu0 %v8635
      %v8862 = vpop.f32.mrb[0].mxu0
      %v8863 = vadd.f32 0.0, %v8862
      %v8864 = vpop.f32.mrb[0].mxu0
      %8865 = vmatprep.mubr.f32.mxu0 0.0
      %8866 = vmatmul.mubr.f32.gmra.mrb[0].mxu0 %v8636
      %v8867 = vpop.f32.mrb[0].mxu0
      %v8868 = vadd.f32 0.0, %v8867
      %v8869 = vpop.f32.mrb[0].mxu0
      %8870 = vmatprep.mubr.f32.mxu0 0.0
      %8871 = vmatmul.mubr.f32.gmra.mrb[0].mxu0 %v8637
      %v8872 = vpop.f32.mrb[0].mxu0
      %v8873 = vadd.f32 0.0, %v8872
      %v8874 = vpop.f32.mrb[0].mxu0
      %8875 = vmatprep.mubr.f32.mxu0 0.0
      %8876 = vmatmul.mubr.f32.gmra.mrb[0].mxu0 %v8638
      %v8877 = vpop.f32.mrb[0].mxu0
      %v8878 = vadd.f32 0.0, %v8877
      %v8879 = vpop.f32.mrb[0].mxu0
      %8880 = vdwg.mxu0
      %v8881 = vadd.f32 %v8575, %v8723
      %v8882 = vadd.f32 %v8576, %v8728
      %v8883 = vadd.f32 %v8577, %v8733
      %v8884 = vadd.f32 %v8578, %v8738
      %v8885 = vadd.f32 %v8579, %v8743
      %v8886 = vadd.f32 %v8580, %v8748
      %v8887 = vadd.f32 %v8581, %v8753
      %v8888 = vadd.f32 %v8582, %v8758
      %v8889 = vadd.f32 %v8583, %v8763
      %v8890 = vadd.f32 %v8584, %v8768
      %v8891 = vadd.f32 %v8585, %v8773
      %v8892 = vadd.f32 %v8586, %v8778
      %v8893 = vadd.f32 %v8587, %v8783
      %v8894 = vadd.f32 %v8588, %v8788
      %v8895 = vadd.f32 %v8589, %v8793
      %v8896 = vadd.f32 %v8590, %v8798
      %v8897 = vadd.f32 %v8591, %v8803
      %v8898 = vadd.f32 %v8592, %v8808
      %v8899 = vadd.f32 %v8593, %v8813
      %v8900 = vadd.f32 %v8594, %v8818
      %v8901 = vadd.f32 %v8595, %v8823
      %v8902 = vadd.f32 %v8596, %v8828
      %v8903 = vadd.f32 %v8597, %v8833
      %v8904 = vadd.f32 %v8598, %v8838
      %v8905 = vadd.f32 %v8599, %v8843
      %v8906 = vadd.f32 %v8600, %v8848
      %v8907 = vadd.f32 %v8601, %v8853
      %v8908 = vadd.f32 %v8602, %v8858
      %v8909 = vadd.f32 %v8603, %v8863
      %v8910 = vadd.f32 %v8604, %v8868
      %v8911 = vadd.f32 %v8605, %v8873
      %v8912 = vadd.f32 %v8606, %v8878
      %v8913 = vld [vmem:[%s7] sm:$0x1]
      %v8915 = vlaneseq
      %v8916 = vshrl.u32 %v8915, 7
      %v8917 = vsub.s32 0, %v8916
      %v8918 = vrot.slane %v8913, %v8917
      %v8920 = vadd.f32 %v8881, %v8918
      %v8921 = vadd.f32 %v8882, %v8918
      %v8922 = vadd.f32 %v8883, %v8918
      %v8923 = vadd.f32 %v8884, %v8918
      %v8924 = vadd.f32 %v8885, %v8918
      %v8925 = vadd.f32 %v8886, %v8918
      %v8926 = vadd.f32 %v8887, %v8918
      %v8927 = vadd.f32 %v8888, %v8918
      %v8928 = vadd.f32 %v8889, %v8918
      %v8929 = vadd.f32 %v8890, %v8918
      %v8930 = vadd.f32 %v8891, %v8918
      %v8931 = vadd.f32 %v8892, %v8918
      %v8932 = vadd.f32 %v8893, %v8918
      %v8933 = vadd.f32 %v8894, %v8918
      %v8934 = vadd.f32 %v8895, %v8918
      %v8935 = vadd.f32 %v8896, %v8918
      %v8936 = vadd.f32 %v8897, %v8918
      %v8937 = vadd.f32 %v8898, %v8918
      %v8938 = vadd.f32 %v8899, %v8918
      %v8939 = vadd.f32 %v8900, %v8918
      %v8940 = vadd.f32 %v8901, %v8918
      %v8941 = vadd.f32 %v8902, %v8918
      %v8942 = vadd.f32 %v8903, %v8918
      %v8943 = vadd.f32 %v8904, %v8918
      %v8944 = vadd.f32 %v8905, %v8918
      %v8945 = vadd.f32 %v8906, %v8918
      %v8946 = vadd.f32 %v8907, %v8918
      %v8947 = vadd.f32 %v8908, %v8918
      %v8948 = vadd.f32 %v8909, %v8918
      %v8949 = vadd.f32 %v8910, %v8918
      %v8950 = vadd.f32 %v8911, %v8918
      %v8951 = vadd.f32 %v8912, %v8918
      %v8952 = vmax.f32 %v8920, 0.0
      %v8953 = vmax.f32 %v8921, 0.0
      %v8954 = vmax.f32 %v8922, 0.0
      %v8955 = vmax.f32 %v8923, 0.0
      %v8956 = vmax.f32 %v8924, 0.0
      %v8957 = vmax.f32 %v8925, 0.0
      %v8958 = vmax.f32 %v8926, 0.0
      %v8959 = vmax.f32 %v8927, 0.0
      %v8960 = vmax.f32 %v8928, 0.0
      %v8961 = vmax.f32 %v8929, 0.0
      %v8962 = vmax.f32 %v8930, 0.0
      %v8963 = vmax.f32 %v8931, 0.0
      %v8964 = vmax.f32 %v8932, 0.0
      %v8965 = vmax.f32 %v8933, 0.0
      %v8966 = vmax.f32 %v8934, 0.0
      %v8967 = vmax.f32 %v8935, 0.0
      %v8968 = vmax.f32 %v8936, 0.0
      %v8969 = vmax.f32 %v8937, 0.0
      %v8970 = vmax.f32 %v8938, 0.0
      %v8971 = vmax.f32 %v8939, 0.0
      %v8972 = vmax.f32 %v8940, 0.0
      %v8973 = vmax.f32 %v8941, 0.0
      %v8974 = vmax.f32 %v8942, 0.0
      %v8975 = vmax.f32 %v8943, 0.0
      %v8976 = vmax.f32 %v8944, 0.0
      %v8977 = vmax.f32 %v8945, 0.0
      %v8978 = vmax.f32 %v8946, 0.0
      %v8979 = vmax.f32 %v8947, 0.0
      %v8980 = vmax.f32 %v8948, 0.0
      %v8981 = vmax.f32 %v8949, 0.0
      %v8982 = vmax.f32 %v8950, 0.0
      %v8983 = vmax.f32 %v8951, 0.0
      %8984 = vst.msk [vmem:[%s325] sm:$0xff] %vm413, %v8952
      %8985 = vst.msk [vmem:[%s325 + $0x8] sm:$0xff] %vm413, %v8953
      %8986 = vst.msk [vmem:[%s325 + $0x10] sm:$0xff] %vm413, %v8954
      %8987 = vst.msk [vmem:[%s325 + $0x18] sm:$0xff] %vm413, %v8955
      %8988 = vst.msk [vmem:[%s325 + $0x20] sm:$0xff] %vm413, %v8956
      %8989 = vst.msk [vmem:[%s325 + $0x28] sm:$0xff] %vm413, %v8957
      %8990 = vst.msk [vmem:[%s325 + $0x30] sm:$0xff] %vm413, %v8958
      %8991 = vst.msk [vmem:[%s325 + $0x38] sm:$0xff] %vm413, %v8959
      %8992 = vst.msk [vmem:[%s325 + $0x40] sm:$0xff] %vm413, %v8960
      %8993 = vst.msk [vmem:[%s325 + $0x48] sm:$0xff] %vm413, %v8961
      %8994 = vst.msk [vmem:[%s325 + $0x50] sm:$0xff] %vm413, %v8962
      %8995 = vst.msk [vmem:[%s325 + $0x58] sm:$0xff] %vm413, %v8963
      %8996 = vst.msk [vmem:[%s325 + $0x60] sm:$0xff] %vm413, %v8964
      %8997 = vst.msk [vmem:[%s325 + $0x68] sm:$0xff] %vm413, %v8965
      %8998 = vst.msk [vmem:[%s325 + $0x70] sm:$0xff] %vm413, %v8966
      %8999 = vst.msk [vmem:[%s325 + $0x78] sm:$0xff] %vm413, %v8967
      %9000 = vst.msk [vmem:[%s325 + $0x80] sm:$0xff] %vm413, %v8968
      %9001 = vst.msk [vmem:[%s325 + $0x88] sm:$0xff] %vm413, %v8969
      %9002 = vst.msk [vmem:[%s325 + $0x90] sm:$0xff] %vm413, %v8970
      %9003 = vst.msk [vmem:[%s325 + $0x98] sm:$0xff] %vm413, %v8971
      %9004 = vst.msk [vmem:[%s325 + $0xa0] sm:$0xff] %vm413, %v8972
      %9005 = vst.msk [vmem:[%s325 + $0xa8] sm:$0xff] %vm413, %v8973
      %9006 = vst.msk [vmem:[%s325 + $0xb0] sm:$0xff] %vm413, %v8974
      %9007 = vst.msk [vmem:[%s325 + $0xb8] sm:$0xff] %vm413, %v8975
      %9008 = vst.msk [vmem:[%s325 + $0xc0] sm:$0xff] %vm413, %v8976
      %9009 = vst.msk [vmem:[%s325 + $0xc8] sm:$0xff] %vm413, %v8977
      %9010 = vst.msk [vmem:[%s325 + $0xd0] sm:$0xff] %vm413, %v8978
      %9011 = vst.msk [vmem:[%s325 + $0xd8] sm:$0xff] %vm413, %v8979
      %9012 = vst.msk [vmem:[%s325 + $0xe0] sm:$0xff] %vm413, %v8980
      %9013 = vst.msk [vmem:[%s325 + $0xe8] sm:$0xff] %vm413, %v8981
      %9014 = vst.msk [vmem:[%s325 + $0xf0] sm:$0xff] %vm413, %v8982
      %9015 = vst.msk [vmem:[%s325 + $0xf8] sm:$0xff] %vm413, %v8983
      %p9016 = scmp.lt.s32.totalorder %s19, 1
      %s9017 = scalar_select %p9016, %s19, 1
      %s9018 = smul.addr %s9017, 32
      %s9019 = smul.addr %s9018, 8
      %s9020 = scalar_lea.vmem %s8, %s9019
      // Predicated region
      $region53: #{upconv_block_forward.1} parent=51 // pred_check
        %p9021 = pneg %p215
      $region54: #{upconv_block_forward.1} parent=51 // pred_check_branch
        %9023 = sbr.rel (%p9021) target = $region56
      $region55: #{upconv_block_forward.1} parent=51 // pred_region
        _
      $region56: #{upconv_block_forward.1} parent=51 // pred_fallthru
        _
    $region52: #{upconv_block_forward.1} parent=5 // pred_fallthru
      _
    %p9024 = scmp.le.s32.totalorder 2, %s14
    // Predicated region
    $region57: #{upconv_block_forward.1} parent=5 // pred_check
      %p9025 = pneg %p9024
    $region58: #{upconv_block_forward.1} parent=5 // pred_check_branch
      %9027 = sbr.rel (%p9025) target = $region60
    $region59: #{upconv_block_forward.1} parent=5 // pred_region
      %s9028 = ssub.s32 %s14, 2
      // Predicated region
      $region61: #{upconv_block_forward.1} parent=59 // pred_check
        %p9029 = pneg %p221
      $region62: #{upconv_block_forward.1} parent=59 // pred_check_branch
        %9031 = sbr.rel (%p9029) target = $region64
      $region63: #{upconv_block_forward.1} parent=59 // pred_region
        %p9032 = scmp.lt.s32.totalorder %s20, 1
        %s9033 = scalar_select %p9032, %s20, 1
        %s9034 = smul.addr %s9033, 32
        %s9035 = smul.addr %s9034, 8
        %s9036 = scalar_lea.vmem %s8, %s9035
      $region64: #{upconv_block_forward.1} parent=59 // pred_fallthru
        _
    $region60: #{upconv_block_forward.1} parent=5 // pred_fallthru
      _
  $region6: #{upconv_block_forward.1} parent=0 // loop_footer
    %s18 = sadd.s32 1, %s14
  $region7: #{upconv_block_forward.1} parent=0 // loop_footer_branch
    %13 = sbr.rel target = $region3
  $region8: #{upconv_block_forward.1} parent=0 // loop_exit
    _

</llo_original>
